<compile_context>
chip_gen: v7x
topology: tpu7x:2x2x1
jax: 0.10.0
libtpu: 0.0.40
codegen_flags: <defaults>
</compile_context>

<pallas_src>
import functools

import jax
import jax.numpy as jnp
from jax.experimental import pallas as pl
from jax.experimental.pallas import tpu as pltpu


# ----------------------------------------------------------------------------
# Fused Pallas kernel: QKV conv -> fast attention -> conv_fuse -> +residual
# ----------------------------------------------------------------------------
def _fanet_fused_kernel(x_ref, wqkv_ref, bqkv_ref, wf_ref, bf_ref, o_ref,
                        xpad_ref, slab_ref, ypad_ref, *, H, W, Cin, Cp):
    n = H * W
    f32 = jnp.float32
    bf16 = jnp.bfloat16

    # ---- 'same' padding in VMEM (no HBM pad pass) ---------------------------
    xpad_ref[...] = jnp.zeros_like(xpad_ref)
    xpad_ref[1:H + 1, 1:W + 1, :] = x_ref[0]

    # ---- im2col slab: (n, 9*Cin), tap-major columns -------------------------
    for kh in range(3):
        for kw in range(3):
            t = kh * 3 + kw
            slab_ref[:, t * Cin:(t + 1) * Cin] = (
                xpad_ref[kh:kh + H, kw:kw + W, :].reshape(n, Cin))
    slab = slab_ref[...]                                    # (n, 9*Cin) bf16

    # ---- Q/K/V conv (+folded-BN bias): one K=9*Cin matmul per head ----------
    def conv_head(lo):
        w = wqkv_ref[:, lo:lo + Cp]                         # free 128-lane split
        b = bqkv_ref[:, lo:lo + Cp]
        return jnp.dot(slab, w, preferred_element_type=f32) + b

    def l2n(a):                                             # F.normalize(dim=C)
        ssq = jnp.sum(a * a, axis=-1, keepdims=True)
        return (a * jax.lax.rsqrt(jnp.maximum(ssq, 1e-24))).astype(bf16)

    qn = l2n(conv_head(0))                                  # (n, Cp) bf16
    kn = l2n(conv_head(Cp))                                 # (n, Cp) bf16
    vb = conv_head(2 * Cp).astype(bf16)                     # (n, Cp) residual too

    # ---- fast attention, re-associated to the (Cp, Cp) context form ---------
    # torch: y = Q (K^T V) / n  ==  (Q K^T) V / n ; channels-last: y = V @ ctx
    ctx = jax.lax.dot_general(kn, qn, (((0,), (0,)), ((), ())),
                              preferred_element_type=f32) * (1.0 / n)
    y = jnp.dot(vb, ctx.astype(bf16), preferred_element_type=f32)   # (n, Cp)

    # ---- conv_fuse (+folded BN) + ReLU, then += residual (torch order) ------
    ypad_ref[...] = jnp.zeros_like(ypad_ref)
    ypad_ref[1:H + 1, 1:W + 1, :] = y.reshape(H, W, Cp).astype(bf16)

    acc = jnp.zeros((n, Cp), f32)
    for kh in range(3):
        for kw in range(3):
            patch = ypad_ref[kh:kh + H, kw:kw + W, :].reshape(n, Cp)
            acc = acc + jnp.dot(patch, wf_ref[kh * 3 + kw],
                                preferred_element_type=f32)
    acc = jnp.maximum(acc + bf_ref[...], 0.0)               # act_type='relu'
    acc = acc + vb.astype(f32)                              # y += residual (x_v)
    o_ref[0] = acc.astype(o_ref.dtype)


# ----------------------------------------------------------------------------
# Wrapper (layout glue + pallas_call plumbing)
# ----------------------------------------------------------------------------
def _round_up(v, m):
    return (v + m - 1) // m * m


def fast_attention_forward(x_nchw, p):
    """Full FastAttention forward. Input/output are NCHW like the torch module."""
    x = jnp.transpose(x_nchw, (0, 2, 3, 1))                 # NCHW -> NHWC
    B, H, W, Cin = x.shape
    C = p["wq"].shape[-1]
    Cp = _round_up(C, 128)                                  # lane-dense channels
    n = H * W

    def pad_w(w):                                           # (3,3,ci,C) -> (9*ci, Cp)
        ci = w.shape[2]
        w = jnp.pad(w, ((0, 0), (0, 0), (0, 0), (0, Cp - C)))
        return w.reshape(9 * ci, Cp)

    def pad_b(b):
        return jnp.pad(b, (0, Cp - C))

    # Fused QKV folded-BN weight: q/k/v heads sit on 128-lane boundaries; pad
    # lanes are zero so the L2 norms, ctx and valid output lanes are unchanged.
    wqkv = jnp.concatenate([pad_w(p["wq"]), pad_w(p["wk"]), pad_w(p["wv"])],
                           axis=-1).astype(jnp.bfloat16)    # (9*Cin, 3*Cp)
    bqkv = jnp.concatenate([pad_b(p["bq"]), pad_b(p["bk"]), pad_b(p["bv"])]
                           ).reshape(1, 3 * Cp).astype(jnp.float32)

    wf = jnp.pad(p["wf"], ((0, 0), (0, 0), (0, Cp - C), (0, Cp - C)))
    wf = wf.reshape(9, Cp, Cp).astype(jnp.bfloat16)
    bff = pad_b(p["bf"]).reshape(1, Cp).astype(jnp.float32)

    kernel = functools.partial(_fanet_fused_kernel, H=H, W=W, Cin=Cin, Cp=Cp)
    out = pl.pallas_call(
        kernel,
        out_shape=jax.ShapeDtypeStruct((B, n, Cp), jnp.float32),
        grid=(B,),
        in_specs=[
            pl.BlockSpec((1, H, W, Cin), lambda b: (b, 0, 0, 0)),
            pl.BlockSpec((9 * Cin, 3 * Cp), lambda b: (0, 0)),
            pl.BlockSpec((1, 3 * Cp), lambda b: (0, 0)),
            pl.BlockSpec((9, Cp, Cp), lambda b: (0, 0, 0)),
            pl.BlockSpec((1, Cp), lambda b: (0, 0)),
        ],
        out_specs=pl.BlockSpec((1, n, Cp), lambda b: (b, 0, 0)),
        scratch_shapes=[
            pltpu.VMEM((H + 2, W + 2, Cin), jnp.bfloat16),   # padded input
            pltpu.VMEM((n, 9 * Cin), jnp.bfloat16),          # im2col slab
            pltpu.VMEM((H + 2, W + 2, Cp), jnp.bfloat16),    # padded y
        ],
        compiler_params=pltpu.CompilerParams(
            dimension_semantics=("parallel",),
            vmem_limit_bytes=48 * 1024 * 1024),              # budget under v7x 64 MiB
    )(x.astype(jnp.bfloat16), wqkv, bqkv, wf, bff)

    out = out[:, :, :C].reshape(B, H, W, C)                  # drop zero pad lanes
    return jnp.transpose(out, (0, 3, 1, 2))                  # NHWC -> NCHW


# ----------------------------------------------------------------------------
# Deterministic parameter construction (Conv2d 3x3 no-bias + BatchNorm folded)
# ----------------------------------------------------------------------------
def make_folded_conv_bn(key, cin, cout, eps=1e-5):
    kw, kg, kb, km, kv = jax.random.split(key, 5)
    w = jax.random.normal(kw, (3, 3, cin, cout), jnp.float32) / jnp.sqrt(9.0 * cin)
    gamma = jax.random.uniform(kg, (cout,), jnp.float32, 0.5, 1.5)
    beta = 0.1 * jax.random.normal(kb, (cout,), jnp.float32)
    mean = 0.1 * jax.random.normal(km, (cout,), jnp.float32)
    var = jax.random.uniform(kv, (cout,), jnp.float32, 0.5, 1.5)
    scale = gamma / jnp.sqrt(var + eps)
    w_folded = w * scale[None, None, None, :]
    b_folded = beta - mean * scale
    return w_folded, b_folded


# ----------------------------------------------------------------------------
# Pure-JAX reference (mirrors the PyTorch forward) for a sanity check
# ----------------------------------------------------------------------------
def reference_forward(x_nchw, p):
    hp = jax.lax.Precision.HIGHEST

    def cba(x_nhwc, w, b, relu=False):
        y = jax.lax.conv_general_dilated(
            x_nhwc, w, (1, 1), "SAME",
            dimension_numbers=("NHWC", "HWIO", "NHWC"), precision=hp) + b
        return jnp.maximum(y, 0.0) if relu else y

    x = jnp.transpose(x_nchw, (0, 2, 3, 1))
    xq = cba(x, p["wq"], p["bq"])
    xk = cba(x, p["wk"], p["bk"])
    xv = cba(x, p["wv"], p["bv"])
    B, H, W, C = xq.shape
    n = H * W

    def to_cn(a):  # (B,H,W,C) -> (B,C,n)
        return jnp.transpose(a.reshape(B, n, C), (0, 2, 1))

    q, k, v = to_cn(xq), to_cn(xk), to_cn(xv)
    qn = q / jnp.maximum(jnp.sqrt(jnp.sum(q * q, axis=1, keepdims=True)), 1e-12)
    kn = k / jnp.maximum(jnp.sqrt(jnp.sum(k * k, axis=1, keepdims=True)), 1e-12)
    inner = jnp.einsum("bcn,bcm->bnm", kn, v, precision=hp)      # K^T @ V
    y = jnp.einsum("bcn,bnm->bcm", qn, inner, precision=hp) / n  # Q @ (...)
    y_nhwc = jnp.transpose(y, (0, 2, 1)).reshape(B, H, W, C)
    y_out = cba(y_nhwc, p["wf"], p["bf"], relu=True) + xv
    return jnp.transpose(y_out, (0, 3, 1, 2))


# ----------------------------------------------------------------------------
if __name__ == "__main__":
    B, Cin, Cout, H, W = 2, 32, 32, 16, 16

    root = jax.random.PRNGKey(0)
    kx, kq, kk, kv, kf = jax.random.split(root, 5)

    x = jax.random.normal(kx, (B, Cin, H, W), jnp.float32)  # NCHW input, like torch

    wq, bq = make_folded_conv_bn(kq, Cin, Cout)
    wk, bk = make_folded_conv_bn(kk, Cin, Cout)
    wv, bv = make_folded_conv_bn(kv, Cin, Cout)
    wf, bf = make_folded_conv_bn(kf, Cout, Cout)
    params = dict(wq=wq, bq=bq, wk=wk, bk=bk, wv=wv, bv=bv, wf=wf, bf=bf)

    out = jax.jit(fast_attention_forward)(x, params)
    out = jax.block_until_ready(out)

    ref = reference_forward(x, params)
    assert out.shape == (B, Cout, H, W)
    # bf16 MXU operands (convs + attention) with f32 accumulation vs an f32
    # HIGHEST-precision reference -> allow modest absolute/relative slack.
    err = float(jnp.max(jnp.abs(out - ref)))
    assert jnp.allclose(out, ref, rtol=2e-2, atol=4e-2), err

    print("KERNEL_OK")
</pallas_src>

<mosaic_0001>
module attributes {stable_mosaic.version = 11 : i64} {
  func.func @_fanet_fused_kernel(%arg0: i32, %arg1: memref<1x16x16x32xbf16, #tpu.memory_space<vmem>>, %arg2: memref<288x384xbf16, #tpu.memory_space<vmem>>, %arg3: memref<1x384xf32, #tpu.memory_space<vmem>>, %arg4: memref<9x128x128xbf16, #tpu.memory_space<vmem>>, %arg5: memref<1x128xf32, #tpu.memory_space<vmem>>, %arg6: memref<1x256x128xf32, #tpu.memory_space<vmem>>, %arg7: memref<18x18x32xbf16, #tpu.memory_space<vmem>>, %arg8: memref<256x288xbf16, #tpu.memory_space<vmem>>, %arg9: memref<18x18x128xbf16, #tpu.memory_space<vmem>>) attributes {dimension_semantics = [#tpu.dimension_semantics<parallel>], iteration_bounds = array<i64: 2>, scalar_prefetch = 0 : i64, scratch_operands = 3 : i64, tpu.core_type = #tpu.core_type<tc>, window_params = [{transform_indices = @transform_0, window_bounds = array<i64: 1, 16, 16, 32>}, {pipeline_mode = #tpu.pipeline_mode<synchronous>, transform_indices = @transform_1, window_bounds = array<i64: 288, 384>}, {pipeline_mode = #tpu.pipeline_mode<synchronous>, transform_indices = @transform_2, window_bounds = array<i64: 1, 384>}, {pipeline_mode = #tpu.pipeline_mode<synchronous>, transform_indices = @transform_3, window_bounds = array<i64: 9, 128, 128>}, {pipeline_mode = #tpu.pipeline_mode<synchronous>, transform_indices = @transform_4, window_bounds = array<i64: 1, 128>}, {transform_indices = @transform_5, window_bounds = array<i64: 1, 256, 128>}]} {
    %cst = arith.constant 0.000000e+00 : bf16
    %0 = vector.broadcast %cst : bf16 to vector<18x18x32xbf16>
    %c0 = arith.constant 0 : index
    %c0_0 = arith.constant 0 : index
    %c0_1 = arith.constant 0 : index
    %1 = vector.load %arg7[%c0, %c0_0, %c0_1] : memref<18x18x32xbf16, #tpu.memory_space<vmem>>, vector<18x18x32xbf16>
    tpu.vector_store %arg7[%c0, %c0_0, %c0_1], %0 {strides = array<i32>} : memref<18x18x32xbf16, #tpu.memory_space<vmem>>, vector<18x18x32xbf16>,
    %c0_2 = arith.constant 0 : index
    %c0_3 = arith.constant 0 : index
    %c0_4 = arith.constant 0 : index
    %c0_5 = arith.constant 0 : index
    %2 = vector.load %arg1[%c0_2, %c0_3, %c0_4, %c0_5] : memref<1x16x16x32xbf16, #tpu.memory_space<vmem>>, vector<1x16x16x32xbf16>
    %3 = vector.shape_cast %2 : vector<1x16x16x32xbf16> to vector<16x16x32xbf16>
    %c1 = arith.constant 1 : index
    %c1_6 = arith.constant 1 : index
    %c0_7 = arith.constant 0 : index
    %4 = vector.load %arg7[%c1, %c1_6, %c0_7] : memref<18x18x32xbf16, #tpu.memory_space<vmem>>, vector<16x16x32xbf16>
    tpu.vector_store %arg7[%c1, %c1_6, %c0_7], %3 {strides = array<i32>} : memref<18x18x32xbf16, #tpu.memory_space<vmem>>, vector<16x16x32xbf16>,
    %c0_8 = arith.constant 0 : index
    %c0_9 = arith.constant 0 : index
    %c0_10 = arith.constant 0 : index
    %5 = vector.load %arg7[%c0_8, %c0_9, %c0_10] : memref<18x18x32xbf16, #tpu.memory_space<vmem>>, vector<16x16x32xbf16>
    %6 = vector.shape_cast %5 : vector<16x16x32xbf16> to vector<256x32xbf16>
    %c0_11 = arith.constant 0 : index
    %c0_12 = arith.constant 0 : index
    %7 = vector.load %arg8[%c0_11, %c0_12] : memref<256x288xbf16, #tpu.memory_space<vmem>>, vector<256x32xbf16>
    tpu.vector_store %arg8[%c0_11, %c0_12], %6 {strides = array<i32>} : memref<256x288xbf16, #tpu.memory_space<vmem>>, vector<256x32xbf16>,
    %c0_13 = arith.constant 0 : index
    %c1_14 = arith.constant 1 : index
    %c0_15 = arith.constant 0 : index
    %8 = vector.load %arg7[%c0_13, %c1_14, %c0_15] : memref<18x18x32xbf16, #tpu.memory_space<vmem>>, vector<16x16x32xbf16>
    %9 = vector.shape_cast %8 : vector<16x16x32xbf16> to vector<256x32xbf16>
    %c0_16 = arith.constant 0 : index
    %c32 = arith.constant 32 : index
    %10 = vector.load %arg8[%c0_16, %c32] : memref<256x288xbf16, #tpu.memory_space<vmem>>, vector<256x32xbf16>
    tpu.vector_store %arg8[%c0_16, %c32], %9 {strides = array<i32>} : memref<256x288xbf16, #tpu.memory_space<vmem>>, vector<256x32xbf16>,
    %c0_17 = arith.constant 0 : index
    %c2 = arith.constant 2 : index
    %c0_18 = arith.constant 0 : index
    %11 = vector.load %arg7[%c0_17, %c2, %c0_18] : memref<18x18x32xbf16, #tpu.memory_space<vmem>>, vector<16x16x32xbf16>
    %12 = vector.shape_cast %11 : vector<16x16x32xbf16> to vector<256x32xbf16>
    %c0_19 = arith.constant 0 : index
    %c64 = arith.constant 64 : index
    %13 = vector.load %arg8[%c0_19, %c64] : memref<256x288xbf16, #tpu.memory_space<vmem>>, vector<256x32xbf16>
    tpu.vector_store %arg8[%c0_19, %c64], %12 {strides = array<i32>} : memref<256x288xbf16, #tpu.memory_space<vmem>>, vector<256x32xbf16>,
    %c1_20 = arith.constant 1 : index
    %c0_21 = arith.constant 0 : index
    %c0_22 = arith.constant 0 : index
    %14 = vector.load %arg7[%c1_20, %c0_21, %c0_22] : memref<18x18x32xbf16, #tpu.memory_space<vmem>>, vector<16x16x32xbf16>
    %15 = vector.shape_cast %14 : vector<16x16x32xbf16> to vector<256x32xbf16>
    %c0_23 = arith.constant 0 : index
    %c96 = arith.constant 96 : index
    %16 = vector.load %arg8[%c0_23, %c96] : memref<256x288xbf16, #tpu.memory_space<vmem>>, vector<256x32xbf16>
    tpu.vector_store %arg8[%c0_23, %c96], %15 {strides = array<i32>} : memref<256x288xbf16, #tpu.memory_space<vmem>>, vector<256x32xbf16>,
    %c1_24 = arith.constant 1 : index
    %c1_25 = arith.constant 1 : index
    %c0_26 = arith.constant 0 : index
    %17 = vector.load %arg7[%c1_24, %c1_25, %c0_26] : memref<18x18x32xbf16, #tpu.memory_space<vmem>>, vector<16x16x32xbf16>
    %18 = vector.shape_cast %17 : vector<16x16x32xbf16> to vector<256x32xbf16>
    %c0_27 = arith.constant 0 : index
    %c128 = arith.constant 128 : index
    %19 = vector.load %arg8[%c0_27, %c128] : memref<256x288xbf16, #tpu.memory_space<vmem>>, vector<256x32xbf16>
    tpu.vector_store %arg8[%c0_27, %c128], %18 {strides = array<i32>} : memref<256x288xbf16, #tpu.memory_space<vmem>>, vector<256x32xbf16>,
    %c1_28 = arith.constant 1 : index
    %c2_29 = arith.constant 2 : index
    %c0_30 = arith.constant 0 : index
    %20 = vector.load %arg7[%c1_28, %c2_29, %c0_30] : memref<18x18x32xbf16, #tpu.memory_space<vmem>>, vector<16x16x32xbf16>
    %21 = vector.shape_cast %20 : vector<16x16x32xbf16> to vector<256x32xbf16>
    %c0_31 = arith.constant 0 : index
    %c160 = arith.constant 160 : index
    %22 = vector.load %arg8[%c0_31, %c160] : memref<256x288xbf16, #tpu.memory_space<vmem>>, vector<256x32xbf16>
    tpu.vector_store %arg8[%c0_31, %c160], %21 {strides = array<i32>} : memref<256x288xbf16, #tpu.memory_space<vmem>>, vector<256x32xbf16>,
    %c2_32 = arith.constant 2 : index
    %c0_33 = arith.constant 0 : index
    %c0_34 = arith.constant 0 : index
    %23 = vector.load %arg7[%c2_32, %c0_33, %c0_34] : memref<18x18x32xbf16, #tpu.memory_space<vmem>>, vector<16x16x32xbf16>
    %24 = vector.shape_cast %23 : vector<16x16x32xbf16> to vector<256x32xbf16>
    %c0_35 = arith.constant 0 : index
    %c192 = arith.constant 192 : index
    %25 = vector.load %arg8[%c0_35, %c192] : memref<256x288xbf16, #tpu.memory_space<vmem>>, vector<256x32xbf16>
    tpu.vector_store %arg8[%c0_35, %c192], %24 {strides = array<i32>} : memref<256x288xbf16, #tpu.memory_space<vmem>>, vector<256x32xbf16>,
    %c2_36 = arith.constant 2 : index
    %c1_37 = arith.constant 1 : index
    %c0_38 = arith.constant 0 : index
    %26 = vector.load %arg7[%c2_36, %c1_37, %c0_38] : memref<18x18x32xbf16, #tpu.memory_space<vmem>>, vector<16x16x32xbf16>
    %27 = vector.shape_cast %26 : vector<16x16x32xbf16> to vector<256x32xbf16>
    %c0_39 = arith.constant 0 : index
    %c224 = arith.constant 224 : index
    %28 = vector.load %arg8[%c0_39, %c224] : memref<256x288xbf16, #tpu.memory_space<vmem>>, vector<256x32xbf16>
    tpu.vector_store %arg8[%c0_39, %c224], %27 {strides = array<i32>} : memref<256x288xbf16, #tpu.memory_space<vmem>>, vector<256x32xbf16>,
    %c2_40 = arith.constant 2 : index
    %c2_41 = arith.constant 2 : index
    %c0_42 = arith.constant 0 : index
    %29 = vector.load %arg7[%c2_40, %c2_41, %c0_42] : memref<18x18x32xbf16, #tpu.memory_space<vmem>>, vector<16x16x32xbf16>
    %30 = vector.shape_cast %29 : vector<16x16x32xbf16> to vector<256x32xbf16>
    %c0_43 = arith.constant 0 : index
    %c256 = arith.constant 256 : index
    %31 = vector.load %arg8[%c0_43, %c256] : memref<256x288xbf16, #tpu.memory_space<vmem>>, vector<256x32xbf16>
    tpu.vector_store %arg8[%c0_43, %c256], %30 {strides = array<i32>} : memref<256x288xbf16, #tpu.memory_space<vmem>>, vector<256x32xbf16>,
    %c0_44 = arith.constant 0 : index
    %c0_45 = arith.constant 0 : index
    %32 = vector.load %arg8[%c0_44, %c0_45] : memref<256x288xbf16, #tpu.memory_space<vmem>>, vector<256x288xbf16>
    %c0_46 = arith.constant 0 : index
    %c0_47 = arith.constant 0 : index
    %33 = vector.load %arg2[%c0_46, %c0_47] : memref<288x384xbf16, #tpu.memory_space<vmem>>, vector<288x128xbf16>
    %c0_48 = arith.constant 0 : index
    %c0_49 = arith.constant 0 : index
    %34 = vector.load %arg3[%c0_48, %c0_49] : memref<1x384xf32, #tpu.memory_space<vmem>>, vector<1x128xf32>
    %cst_50 = arith.constant dense<0.000000e+00> : vector<256x128xf32>
    %35 = tpu.matmul %32, %33, %cst_50 {dimension_numbers = #tpu.dot_dimension_numbers<[1], [0], [0], [1], [0, 0, 1, 1], [], []>} : vector<256x288xbf16>, vector<288x128xbf16>, vector<256x128xf32> -> vector<256x128xf32>
    %36 = vector.broadcast %34 : vector<1x128xf32> to vector<256x128xf32>
    %37 = arith.addf %35, %36 : vector<256x128xf32>
    %38 = arith.mulf %37, %37 : vector<256x128xf32>
    %cst_51 = arith.constant dense<0.000000e+00> : vector<256xf32>
    %39 = vector.multi_reduction <add>, %38, %cst_51 [1] : vector<256x128xf32> to vector<256xf32>
    %40 = vector.shape_cast %39 : vector<256xf32> to vector<256x1xf32>
    %cst_52 = arith.constant 1.000000e-24 : f32
    %41 = vector.broadcast %cst_52 : f32 to vector<256x1xf32>
    %42 = arith.maximumf %40, %41 : vector<256x1xf32>
    %43 = math.rsqrt %42 : vector<256x1xf32>
    %44 = vector.broadcast %43 : vector<256x1xf32> to vector<256x128xf32>
    %45 = arith.mulf %37, %44 : vector<256x128xf32>
    %46 = arith.truncf %45 : vector<256x128xf32> to vector<256x128xbf16>
    %c0_53 = arith.constant 0 : index
    %c128_54 = arith.constant 128 : index
    %47 = vector.load %arg2[%c0_53, %c128_54] : memref<288x384xbf16, #tpu.memory_space<vmem>>, vector<288x128xbf16>
    %c0_55 = arith.constant 0 : index
    %c128_56 = arith.constant 128 : index
    %48 = vector.load %arg3[%c0_55, %c128_56] : memref<1x384xf32, #tpu.memory_space<vmem>>, vector<1x128xf32>
    %cst_57 = arith.constant dense<0.000000e+00> : vector<256x128xf32>
    %49 = tpu.matmul %32, %47, %cst_57 {dimension_numbers = #tpu.dot_dimension_numbers<[1], [0], [0], [1], [0, 0, 1, 1], [], []>} : vector<256x288xbf16>, vector<288x128xbf16>, vector<256x128xf32> -> vector<256x128xf32>
    %50 = vector.broadcast %48 : vector<1x128xf32> to vector<256x128xf32>
    %51 = arith.addf %49, %50 : vector<256x128xf32>
    %52 = arith.mulf %51, %51 : vector<256x128xf32>
    %cst_58 = arith.constant dense<0.000000e+00> : vector<256xf32>
    %53 = vector.multi_reduction <add>, %52, %cst_58 [1] : vector<256x128xf32> to vector<256xf32>
    %54 = vector.shape_cast %53 : vector<256xf32> to vector<256x1xf32>
    %cst_59 = arith.constant 1.000000e-24 : f32
    %55 = vector.broadcast %cst_59 : f32 to vector<256x1xf32>
    %56 = arith.maximumf %54, %55 : vector<256x1xf32>
    %57 = math.rsqrt %56 : vector<256x1xf32>
    %58 = vector.broadcast %57 : vector<256x1xf32> to vector<256x128xf32>
    %59 = arith.mulf %51, %58 : vector<256x128xf32>
    %60 = arith.truncf %59 : vector<256x128xf32> to vector<256x128xbf16>
    %c0_60 = arith.constant 0 : index
    %c256_61 = arith.constant 256 : index
    %61 = vector.load %arg2[%c0_60, %c256_61] : memref<288x384xbf16, #tpu.memory_space<vmem>>, vector<288x128xbf16>
    %c0_62 = arith.constant 0 : index
    %c256_63 = arith.constant 256 : index
    %62 = vector.load %arg3[%c0_62, %c256_63] : memref<1x384xf32, #tpu.memory_space<vmem>>, vector<1x128xf32>
    %cst_64 = arith.constant dense<0.000000e+00> : vector<256x128xf32>
    %63 = tpu.matmul %32, %61, %cst_64 {dimension_numbers = #tpu.dot_dimension_numbers<[1], [0], [0], [1], [0, 0, 1, 1], [], []>} : vector<256x288xbf16>, vector<288x128xbf16>, vector<256x128xf32> -> vector<256x128xf32>
    %64 = vector.broadcast %62 : vector<1x128xf32> to vector<256x128xf32>
    %65 = arith.addf %63, %64 : vector<256x128xf32>
    %66 = arith.truncf %65 : vector<256x128xf32> to vector<256x128xbf16>
    %cst_65 = arith.constant dense<0.000000e+00> : vector<128x128xf32>
    %67 = tpu.matmul %60, %46, %cst_65 {dimension_numbers = #tpu.dot_dimension_numbers<[0], [0], [1], [1], [0, 1, 1, 1], [], []>} : vector<256x128xbf16>, vector<256x128xbf16>, vector<128x128xf32> -> vector<128x128xf32>
    %cst_66 = arith.constant 3.906250e-03 : f32
    %68 = vector.broadcast %cst_66 : f32 to vector<128x128xf32>
    %69 = arith.mulf %67, %68 : vector<128x128xf32>
    %70 = arith.truncf %69 : vector<128x128xf32> to vector<128x128xbf16>
    %cst_67 = arith.constant dense<0.000000e+00> : vector<256x128xf32>
    %71 = tpu.matmul %66, %70, %cst_67 {dimension_numbers = #tpu.dot_dimension_numbers<[1], [0], [0], [1], [0, 0, 1, 1], [], []>} : vector<256x128xbf16>, vector<128x128xbf16>, vector<256x128xf32> -> vector<256x128xf32>
    %cst_68 = arith.constant 0.000000e+00 : bf16
    %72 = vector.broadcast %cst_68 : bf16 to vector<18x18x128xbf16>
    %c0_69 = arith.constant 0 : index
    %c0_70 = arith.constant 0 : index
    %c0_71 = arith.constant 0 : index
    %73 = vector.load %arg9[%c0_69, %c0_70, %c0_71] : memref<18x18x128xbf16, #tpu.memory_space<vmem>>, vector<18x18x128xbf16>
    tpu.vector_store %arg9[%c0_69, %c0_70, %c0_71], %72 {strides = array<i32>} : memref<18x18x128xbf16, #tpu.memory_space<vmem>>, vector<18x18x128xbf16>,
    %74 = vector.shape_cast %71 : vector<256x128xf32> to vector<16x16x128xf32>
    %75 = arith.truncf %74 : vector<16x16x128xf32> to vector<16x16x128xbf16>
    %c1_72 = arith.constant 1 : index
    %c1_73 = arith.constant 1 : index
    %c0_74 = arith.constant 0 : index
    %76 = vector.load %arg9[%c1_72, %c1_73, %c0_74] : memref<18x18x128xbf16, #tpu.memory_space<vmem>>, vector<16x16x128xbf16>
    tpu.vector_store %arg9[%c1_72, %c1_73, %c0_74], %75 {strides = array<i32>} : memref<18x18x128xbf16, #tpu.memory_space<vmem>>, vector<16x16x128xbf16>,
    %cst_75 = arith.constant 0.000000e+00 : f32
    %77 = vector.broadcast %cst_75 : f32 to vector<256x128xf32>
    %c0_76 = arith.constant 0 : index
    %c0_77 = arith.constant 0 : index
    %c0_78 = arith.constant 0 : index
    %78 = vector.load %arg9[%c0_76, %c0_77, %c0_78] : memref<18x18x128xbf16, #tpu.memory_space<vmem>>, vector<16x16x128xbf16>
    %79 = vector.shape_cast %78 : vector<16x16x128xbf16> to vector<256x128xbf16>
    %c0_79 = arith.constant 0 : index
    %c0_80 = arith.constant 0 : index
    %c0_81 = arith.constant 0 : index
    %80 = vector.load %arg4[%c0_79, %c0_80, %c0_81] : memref<9x128x128xbf16, #tpu.memory_space<vmem>>, vector<1x128x128xbf16>
    %81 = vector.shape_cast %80 : vector<1x128x128xbf16> to vector<128x128xbf16>
    %cst_82 = arith.constant dense<0.000000e+00> : vector<256x128xf32>
    %82 = tpu.matmul %79, %81, %cst_82 {dimension_numbers = #tpu.dot_dimension_numbers<[1], [0], [0], [1], [0, 0, 1, 1], [], []>} : vector<256x128xbf16>, vector<128x128xbf16>, vector<256x128xf32> -> vector<256x128xf32>
    %83 = arith.addf %77, %82 : vector<256x128xf32>
    %c0_83 = arith.constant 0 : index
    %c1_84 = arith.constant 1 : index
    %c0_85 = arith.constant 0 : index
    %84 = vector.load %arg9[%c0_83, %c1_84, %c0_85] : memref<18x18x128xbf16, #tpu.memory_space<vmem>>, vector<16x16x128xbf16>
    %85 = vector.shape_cast %84 : vector<16x16x128xbf16> to vector<256x128xbf16>
    %c1_86 = arith.constant 1 : index
    %c0_87 = arith.constant 0 : index
    %c0_88 = arith.constant 0 : index
    %86 = vector.load %arg4[%c1_86, %c0_87, %c0_88] : memref<9x128x128xbf16, #tpu.memory_space<vmem>>, vector<1x128x128xbf16>
    %87 = vector.shape_cast %86 : vector<1x128x128xbf16> to vector<128x128xbf16>
    %cst_89 = arith.constant dense<0.000000e+00> : vector<256x128xf32>
    %88 = tpu.matmul %85, %87, %cst_89 {dimension_numbers = #tpu.dot_dimension_numbers<[1], [0], [0], [1], [0, 0, 1, 1], [], []>} : vector<256x128xbf16>, vector<128x128xbf16>, vector<256x128xf32> -> vector<256x128xf32>
    %89 = arith.addf %83, %88 : vector<256x128xf32>
    %c0_90 = arith.constant 0 : index
    %c2_91 = arith.constant 2 : index
    %c0_92 = arith.constant 0 : index
    %90 = vector.load %arg9[%c0_90, %c2_91, %c0_92] : memref<18x18x128xbf16, #tpu.memory_space<vmem>>, vector<16x16x128xbf16>
    %91 = vector.shape_cast %90 : vector<16x16x128xbf16> to vector<256x128xbf16>
    %c2_93 = arith.constant 2 : index
    %c0_94 = arith.constant 0 : index
    %c0_95 = arith.constant 0 : index
    %92 = vector.load %arg4[%c2_93, %c0_94, %c0_95] : memref<9x128x128xbf16, #tpu.memory_space<vmem>>, vector<1x128x128xbf16>
    %93 = vector.shape_cast %92 : vector<1x128x128xbf16> to vector<128x128xbf16>
    %cst_96 = arith.constant dense<0.000000e+00> : vector<256x128xf32>
    %94 = tpu.matmul %91, %93, %cst_96 {dimension_numbers = #tpu.dot_dimension_numbers<[1], [0], [0], [1], [0, 0, 1, 1], [], []>} : vector<256x128xbf16>, vector<128x128xbf16>, vector<256x128xf32> -> vector<256x128xf32>
    %95 = arith.addf %89, %94 : vector<256x128xf32>
    %c1_97 = arith.constant 1 : index
    %c0_98 = arith.constant 0 : index
    %c0_99 = arith.constant 0 : index
    %96 = vector.load %arg9[%c1_97, %c0_98, %c0_99] : memref<18x18x128xbf16, #tpu.memory_space<vmem>>, vector<16x16x128xbf16>
    %97 = vector.shape_cast %96 : vector<16x16x128xbf16> to vector<256x128xbf16>
    %c3 = arith.constant 3 : index
    %c0_100 = arith.constant 0 : index
    %c0_101 = arith.constant 0 : index
    %98 = vector.load %arg4[%c3, %c0_100, %c0_101] : memref<9x128x128xbf16, #tpu.memory_space<vmem>>, vector<1x128x128xbf16>
    %99 = vector.shape_cast %98 : vector<1x128x128xbf16> to vector<128x128xbf16>
    %cst_102 = arith.constant dense<0.000000e+00> : vector<256x128xf32>
    %100 = tpu.matmul %97, %99, %cst_102 {dimension_numbers = #tpu.dot_dimension_numbers<[1], [0], [0], [1], [0, 0, 1, 1], [], []>} : vector<256x128xbf16>, vector<128x128xbf16>, vector<256x128xf32> -> vector<256x128xf32>
    %101 = arith.addf %95, %100 : vector<256x128xf32>
    %c1_103 = arith.constant 1 : index
    %c1_104 = arith.constant 1 : index
    %c0_105 = arith.constant 0 : index
    %102 = vector.load %arg9[%c1_103, %c1_104, %c0_105] : memref<18x18x128xbf16, #tpu.memory_space<vmem>>, vector<16x16x128xbf16>
    %103 = vector.shape_cast %102 : vector<16x16x128xbf16> to vector<256x128xbf16>
    %c4 = arith.constant 4 : index
    %c0_106 = arith.constant 0 : index
    %c0_107 = arith.constant 0 : index
    %104 = vector.load %arg4[%c4, %c0_106, %c0_107] : memref<9x128x128xbf16, #tpu.memory_space<vmem>>, vector<1x128x128xbf16>
    %105 = vector.shape_cast %104 : vector<1x128x128xbf16> to vector<128x128xbf16>
    %cst_108 = arith.constant dense<0.000000e+00> : vector<256x128xf32>
    %106 = tpu.matmul %103, %105, %cst_108 {dimension_numbers = #tpu.dot_dimension_numbers<[1], [0], [0], [1], [0, 0, 1, 1], [], []>} : vector<256x128xbf16>, vector<128x128xbf16>, vector<256x128xf32> -> vector<256x128xf32>
    %107 = arith.addf %101, %106 : vector<256x128xf32>
    %c1_109 = arith.constant 1 : index
    %c2_110 = arith.constant 2 : index
    %c0_111 = arith.constant 0 : index
    %108 = vector.load %arg9[%c1_109, %c2_110, %c0_111] : memref<18x18x128xbf16, #tpu.memory_space<vmem>>, vector<16x16x128xbf16>
    %109 = vector.shape_cast %108 : vector<16x16x128xbf16> to vector<256x128xbf16>
    %c5 = arith.constant 5 : index
    %c0_112 = arith.constant 0 : index
    %c0_113 = arith.constant 0 : index
    %110 = vector.load %arg4[%c5, %c0_112, %c0_113] : memref<9x128x128xbf16, #tpu.memory_space<vmem>>, vector<1x128x128xbf16>
    %111 = vector.shape_cast %110 : vector<1x128x128xbf16> to vector<128x128xbf16>
    %cst_114 = arith.constant dense<0.000000e+00> : vector<256x128xf32>
    %112 = tpu.matmul %109, %111, %cst_114 {dimension_numbers = #tpu.dot_dimension_numbers<[1], [0], [0], [1], [0, 0, 1, 1], [], []>} : vector<256x128xbf16>, vector<128x128xbf16>, vector<256x128xf32> -> vector<256x128xf32>
    %113 = arith.addf %107, %112 : vector<256x128xf32>
    %c2_115 = arith.constant 2 : index
    %c0_116 = arith.constant 0 : index
    %c0_117 = arith.constant 0 : index
    %114 = vector.load %arg9[%c2_115, %c0_116, %c0_117] : memref<18x18x128xbf16, #tpu.memory_space<vmem>>, vector<16x16x128xbf16>
    %115 = vector.shape_cast %114 : vector<16x16x128xbf16> to vector<256x128xbf16>
    %c6 = arith.constant 6 : index
    %c0_118 = arith.constant 0 : index
    %c0_119 = arith.constant 0 : index
    %116 = vector.load %arg4[%c6, %c0_118, %c0_119] : memref<9x128x128xbf16, #tpu.memory_space<vmem>>, vector<1x128x128xbf16>
    %117 = vector.shape_cast %116 : vector<1x128x128xbf16> to vector<128x128xbf16>
    %cst_120 = arith.constant dense<0.000000e+00> : vector<256x128xf32>
    %118 = tpu.matmul %115, %117, %cst_120 {dimension_numbers = #tpu.dot_dimension_numbers<[1], [0], [0], [1], [0, 0, 1, 1], [], []>} : vector<256x128xbf16>, vector<128x128xbf16>, vector<256x128xf32> -> vector<256x128xf32>
    %119 = arith.addf %113, %118 : vector<256x128xf32>
    %c2_121 = arith.constant 2 : index
    %c1_122 = arith.constant 1 : index
    %c0_123 = arith.constant 0 : index
    %120 = vector.load %arg9[%c2_121, %c1_122, %c0_123] : memref<18x18x128xbf16, #tpu.memory_space<vmem>>, vector<16x16x128xbf16>
    %121 = vector.shape_cast %120 : vector<16x16x128xbf16> to vector<256x128xbf16>
    %c7 = arith.constant 7 : index
    %c0_124 = arith.constant 0 : index
    %c0_125 = arith.constant 0 : index
    %122 = vector.load %arg4[%c7, %c0_124, %c0_125] : memref<9x128x128xbf16, #tpu.memory_space<vmem>>, vector<1x128x128xbf16>
    %123 = vector.shape_cast %122 : vector<1x128x128xbf16> to vector<128x128xbf16>
    %cst_126 = arith.constant dense<0.000000e+00> : vector<256x128xf32>
    %124 = tpu.matmul %121, %123, %cst_126 {dimension_numbers = #tpu.dot_dimension_numbers<[1], [0], [0], [1], [0, 0, 1, 1], [], []>} : vector<256x128xbf16>, vector<128x128xbf16>, vector<256x128xf32> -> vector<256x128xf32>
    %125 = arith.addf %119, %124 : vector<256x128xf32>
    %c2_127 = arith.constant 2 : index
    %c2_128 = arith.constant 2 : index
    %c0_129 = arith.constant 0 : index
    %126 = vector.load %arg9[%c2_127, %c2_128, %c0_129] : memref<18x18x128xbf16, #tpu.memory_space<vmem>>, vector<16x16x128xbf16>
    %127 = vector.shape_cast %126 : vector<16x16x128xbf16> to vector<256x128xbf16>
    %c8 = arith.constant 8 : index
    %c0_130 = arith.constant 0 : index
    %c0_131 = arith.constant 0 : index
    %128 = vector.load %arg4[%c8, %c0_130, %c0_131] : memref<9x128x128xbf16, #tpu.memory_space<vmem>>, vector<1x128x128xbf16>
    %129 = vector.shape_cast %128 : vector<1x128x128xbf16> to vector<128x128xbf16>
    %cst_132 = arith.constant dense<0.000000e+00> : vector<256x128xf32>
    %130 = tpu.matmul %127, %129, %cst_132 {dimension_numbers = #tpu.dot_dimension_numbers<[1], [0], [0], [1], [0, 0, 1, 1], [], []>} : vector<256x128xbf16>, vector<128x128xbf16>, vector<256x128xf32> -> vector<256x128xf32>
    %131 = arith.addf %125, %130 : vector<256x128xf32>
    %c0_133 = arith.constant 0 : index
    %c0_134 = arith.constant 0 : index
    %132 = vector.load %arg5[%c0_133, %c0_134] : memref<1x128xf32, #tpu.memory_space<vmem>>, vector<1x128xf32>
    %133 = vector.broadcast %132 : vector<1x128xf32> to vector<256x128xf32>
    %134 = arith.addf %131, %133 : vector<256x128xf32>
    %cst_135 = arith.constant 0.000000e+00 : f32
    %135 = vector.broadcast %cst_135 : f32 to vector<256x128xf32>
    %136 = arith.maximumf %134, %135 : vector<256x128xf32>
    %137 = arith.extf %66 : vector<256x128xbf16> to vector<256x128xf32>
    %138 = arith.addf %136, %137 : vector<256x128xf32>
    %c0_136 = arith.constant 0 : index
    %c0_137 = arith.constant 0 : index
    %c0_138 = arith.constant 0 : index
    %139 = vector.load %arg6[%c0_136, %c0_137, %c0_138] : memref<1x256x128xf32, #tpu.memory_space<vmem>>, vector<1x256x128xf32>
    %140 = vector.shape_cast %139 : vector<1x256x128xf32> to vector<256x128xf32>
    %141 = vector.shape_cast %138 : vector<256x128xf32> to vector<1x256x128xf32>
    tpu.vector_store %arg6[%c0_136, %c0_137, %c0_138], %141 {strides = array<i32>} : memref<1x256x128xf32, #tpu.memory_space<vmem>>, vector<1x256x128xf32>,
    return
  }
  func.func @transform_0(%arg0: i32) -> (i32, i32, i32, i32) {
    %c0_i32 = arith.constant 0 : i32
    %c0_i32_0 = arith.constant 0 : i32
    %c0_i32_1 = arith.constant 0 : i32
    %c0_i32_2 = arith.constant 0 : i32
    return %arg0, %c0_i32, %c0_i32_0, %c0_i32_1 : i32, i32, i32, i32
  }
  func.func @transform_1(%arg0: i32) -> (i32, i32) {
    %c0_i32 = arith.constant 0 : i32
    %c0_i32_0 = arith.constant 0 : i32
    %c0_i32_1 = arith.constant 0 : i32
    return %c0_i32, %c0_i32_0 : i32, i32
  }
  func.func @transform_2(%arg0: i32) -> (i32, i32) {
    %c0_i32 = arith.constant 0 : i32
    %c0_i32_0 = arith.constant 0 : i32
    %c0_i32_1 = arith.constant 0 : i32
    return %c0_i32, %c0_i32_0 : i32, i32
  }
  func.func @transform_3(%arg0: i32) -> (i32, i32, i32) {
    %c0_i32 = arith.constant 0 : i32
    %c0_i32_0 = arith.constant 0 : i32
    %c0_i32_1 = arith.constant 0 : i32
    %c0_i32_2 = arith.constant 0 : i32
    return %c0_i32, %c0_i32_0, %c0_i32_1 : i32, i32, i32
  }
  func.func @transform_4(%arg0: i32) -> (i32, i32) {
    %c0_i32 = arith.constant 0 : i32
    %c0_i32_0 = arith.constant 0 : i32
    %c0_i32_1 = arith.constant 0 : i32
    return %c0_i32, %c0_i32_0 : i32, i32
  }
  func.func @transform_5(%arg0: i32) -> (i32, i32, i32) {
    %c0_i32 = arith.constant 0 : i32
    %c0_i32_0 = arith.constant 0 : i32
    %c0_i32_1 = arith.constant 0 : i32
    return %arg0, %c0_i32, %c0_i32_0 : i32, i32, i32
  }
}

</mosaic_0001>

<llo_original>
// kernel: fast_attention_forward.1
$region0: #{fast_attention_forward.1}
  #allocation0 [shape = 'u32[]', space=smem, size = 0x4, offset = 0x4, fixed_abs, tag = 'smem constant byte address 0x4 - core index']
  #allocation1 [shape = 'u32[144,128]{1,0:T(1,128)}', space=vmem, size = 0x12000, scoped, tag = 'internal scratch']
  #allocation2 [shape = 'bf16[18,18,32]{2,1,0:T(8,128)(2,1)}', space=vmem, size = 0x1b000, scoped, tag = 'scratch operand']
  #allocation3 [shape = 'bf16[256,288]{1,0:T(16,128)(2,1)}', space=vmem, size = 0x30000, scoped, tag = 'scratch operand']
  #allocation4 [shape = 'bf16[18,18,128]{2,1,0:T(8,128)(2,1)}', space=vmem, size = 0x1b000, scoped, tag = 'scratch operand']
  %s0 = inlined_call_operand.vmem [shape: bf16[2,16,16,32], index: 0, kind: input, shape index: {}]
  %s1 = inlined_call_operand.vmem [shape: bf16[288,384], index: 1, kind: input, shape index: {}]
  %s2 = inlined_call_operand.vmem [shape: f32[1,384], index: 2, kind: input, shape index: {}]
  %s3 = inlined_call_operand.vmem [shape: bf16[9,128,128], index: 3, kind: input, shape index: {}]
  %s4 = inlined_call_operand.vmem [shape: f32[1,128], index: 4, kind: input, shape index: {}]
  %s5 = inlined_call_operand.hbm [shape: f32[2,256,128], index: 5, kind: output, shape index: {}]
  %s6 = sld [smem:[#allocation0]]
  $region53: #{fast_attention_forward.1} parent=0
    _
  %s8 = ssub.s32 1, %s6
  %s9 = scalar_select 0, %s8, %s6
  $region1: #{fast_attention_forward.1} parent=0
    #allocation5 [shape = 'u8[262144]{0}', space=vmem, size = 0x40000, scoped, tag = 'output window, operand 0']
    #allocation6 [shape = 's32[2]{0}', space=sflag, size = 0x8, scoped, tag = 'scoped memory for fast_attention_forward.1']
    %10 = vsyncpa [#allocation6], 0
    %s11 = scalar_lea.sflag [#allocation6], 1
    %12 = vsyncpa %s11, 0
    loop: start=0, step=1, limit=4
    $region2: #{fast_attention_forward.1} parent=1 // loop_pre_header
      _
    $region3: #{fast_attention_forward.1} parent=1 // loop_header
      %s14 = sphi 0, %s18
      %p15 = scmp.ge.s32.totalorder %s14, 4
      %s24 = sphi 0, %s26
      %s27 = sphi 0, %s24
      %s28 = sphi 0, %s27
      %s44 = sphi 0, %s28
      %s48 = sphi 0, %s48
      %s50 = sphi 0, %s48
      %s51 = sphi 0, %s50
      %s65 = sphi 0, %s51
      %s69 = sphi 0, %s69
      %s71 = sphi 0, %s69
      %s72 = sphi 0, %s71
      %s86 = sphi 0, %s72
      %s90 = sphi 0, %s90
      %s92 = sphi 0, %s90
      %s93 = sphi 0, %s92
      %s107 = sphi 0, %s93
      %s111 = sphi 0, %s111
      %s113 = sphi 0, %s111
      %s114 = sphi 0, %s113
      %s128 = sphi 0, %s114
      %s134 = sphi 0, %s136
      %s137 = sphi 0, %s134
      %s138 = sphi 0, %s137
      %s154 = sphi 0, %s138
    $region4: #{fast_attention_forward.1} parent=1 // loop_header_branch
      %17 = sbr.rel (%p15) target = $region8
    $region5: #{fast_attention_forward.1} parent=1 // loop_body
      %s19 = ssub.s32 %s14, 1
      %s20 = ssub.s32 %s14, 2
      %s21 = sadd.s32 %s14, 1
      %s22 = ssub.s32 %s14, %s21
      %p23 = scmp.eq.s32.totalorder %s22, 0
      %s25 = sadd.s32 %s24, 1
      %s26 = scalar_select %p23, %s24, %s25
      %p29 = pneg %p23
      %p30 = scmp.eq.s32.totalorder %s14, 1
      %p31 = por %p29, %p30
      %p32 = scmp.ne.s32.totalorder %s24, %s27
      %p33 = scmp.eq.s32.totalorder %s14, 0
      %p34 = por %p32, %p33
      %p35 = scmp.ne.s32.totalorder %s24, %s27
      %p36 = scmp.eq.s32.totalorder %s19, 1
      %p37 = por %p35, %p36
      %p38 = scmp.ne.s32.totalorder %s27, %s28
      %p39 = scmp.eq.s32.totalorder %s19, 0
      %p40 = por %p38, %p39
      %p41 = scmp.ne.s32.totalorder %s27, %s28
      %p42 = scmp.eq.s32.totalorder %s20, 1
      %p43 = por %p41, %p42
      %p45 = scmp.ne.s32.totalorder %s28, %s44
      %p46 = scmp.eq.s32.totalorder %s20, 0
      %p47 = por %p45, %p46
      %s49 = sadd.s32 %s48, 1
      %p52 = scmp.eq.s32.totalorder %s14, 1
      %p53 = scmp.ne.s32.totalorder %s48, %s50
      %p54 = scmp.eq.s32.totalorder %s14, 0
      %p55 = por %p53, %p54
      %p56 = scmp.ne.s32.totalorder %s48, %s50
      %p57 = scmp.eq.s32.totalorder %s19, 1
      %p58 = por %p56, %p57
      %p59 = scmp.ne.s32.totalorder %s50, %s51
      %p60 = scmp.eq.s32.totalorder %s19, 0
      %p61 = por %p59, %p60
      %p62 = scmp.ne.s32.totalorder %s50, %s51
      %p63 = scmp.eq.s32.totalorder %s20, 1
      %p64 = por %p62, %p63
      %p66 = scmp.ne.s32.totalorder %s51, %s65
      %p67 = scmp.eq.s32.totalorder %s20, 0
      %p68 = por %p66, %p67
      %s70 = sadd.s32 %s69, 1
      %p73 = scmp.eq.s32.totalorder %s14, 1
      %p74 = scmp.ne.s32.totalorder %s69, %s71
      %p75 = scmp.eq.s32.totalorder %s14, 0
      %p76 = por %p74, %p75
      %p77 = scmp.ne.s32.totalorder %s69, %s71
      %p78 = scmp.eq.s32.totalorder %s19, 1
      %p79 = por %p77, %p78
      %p80 = scmp.ne.s32.totalorder %s71, %s72
      %p81 = scmp.eq.s32.totalorder %s19, 0
      %p82 = por %p80, %p81
      %p83 = scmp.ne.s32.totalorder %s71, %s72
      %p84 = scmp.eq.s32.totalorder %s20, 1
      %p85 = por %p83, %p84
      %p87 = scmp.ne.s32.totalorder %s72, %s86
      %p88 = scmp.eq.s32.totalorder %s20, 0
      %p89 = por %p87, %p88
      %s91 = sadd.s32 %s90, 1
      %p94 = scmp.eq.s32.totalorder %s14, 1
      %p95 = scmp.ne.s32.totalorder %s90, %s92
      %p96 = scmp.eq.s32.totalorder %s14, 0
      %p97 = por %p95, %p96
      %p98 = scmp.ne.s32.totalorder %s90, %s92
      %p99 = scmp.eq.s32.totalorder %s19, 1
      %p100 = por %p98, %p99
      %p101 = scmp.ne.s32.totalorder %s92, %s93
      %p102 = scmp.eq.s32.totalorder %s19, 0
      %p103 = por %p101, %p102
      %p104 = scmp.ne.s32.totalorder %s92, %s93
      %p105 = scmp.eq.s32.totalorder %s20, 1
      %p106 = por %p104, %p105
      %p108 = scmp.ne.s32.totalorder %s93, %s107
      %p109 = scmp.eq.s32.totalorder %s20, 0
      %p110 = por %p108, %p109
      %s112 = sadd.s32 %s111, 1
      %p115 = scmp.eq.s32.totalorder %s14, 1
      %p116 = scmp.ne.s32.totalorder %s111, %s113
      %p117 = scmp.eq.s32.totalorder %s14, 0
      %p118 = por %p116, %p117
      %p119 = scmp.ne.s32.totalorder %s111, %s113
      %p120 = scmp.eq.s32.totalorder %s19, 1
      %p121 = por %p119, %p120
      %p122 = scmp.ne.s32.totalorder %s113, %s114
      %p123 = scmp.eq.s32.totalorder %s19, 0
      %p124 = por %p122, %p123
      %p125 = scmp.ne.s32.totalorder %s113, %s114
      %p126 = scmp.eq.s32.totalorder %s20, 1
      %p127 = por %p125, %p126
      %p129 = scmp.ne.s32.totalorder %s114, %s128
      %p130 = scmp.eq.s32.totalorder %s20, 0
      %p131 = por %p129, %p130
      %s132 = ssub.s32 %s14, %s21
      %p133 = scmp.eq.s32.totalorder %s132, 0
      %s135 = sadd.s32 %s134, 1
      %s136 = scalar_select %p133, %s134, %s135
      %p139 = pneg %p133
      %p140 = scmp.eq.s32.totalorder %s14, 1
      %p141 = por %p139, %p140
      %p142 = scmp.ne.s32.totalorder %s134, %s137
      %p143 = scmp.eq.s32.totalorder %s14, 0
      %p144 = por %p142, %p143
      %p145 = scmp.ne.s32.totalorder %s134, %s137
      %p146 = scmp.eq.s32.totalorder %s19, 1
      %p147 = por %p145, %p146
      %p148 = scmp.ne.s32.totalorder %s137, %s138
      %p149 = scmp.eq.s32.totalorder %s19, 0
      %p150 = por %p148, %p149
      %p151 = scmp.ne.s32.totalorder %s137, %s138
      %p152 = scmp.eq.s32.totalorder %s20, 1
      %p153 = por %p151, %p152
      %p155 = scmp.ne.s32.totalorder %s138, %s154
      %p156 = scmp.eq.s32.totalorder %s20, 0
      %p157 = por %p155, %p156
      %p158 = scmp.le.s32.totalorder 1, %s14
      %p159 = scmp.lt.s32.totalorder %s14, 3
      %p160 = pnand %p158, %p159
      %p161 = pneg %p160
      // Predicated region
      $region9: #{fast_attention_forward.1} parent=5 // pred_check
        _
      $region10: #{fast_attention_forward.1} parent=5 // pred_check_branch
        %163 = sbr.rel (%p160) target = $region12
      $region11: #{fast_attention_forward.1} parent=5 // pred_region
        %s164 = ssub.s32 %s14, 1
        // Predicated region
        $region13: #{fast_attention_forward.1} parent=11 // pred_check
          %p165 = pneg %p61
        $region14: #{fast_attention_forward.1} parent=11 // pred_check_branch
          %167 = sbr.rel (%p165) target = $region16
        $region15: #{fast_attention_forward.1} parent=11 // pred_region
          _
        $region16: #{fast_attention_forward.1} parent=11 // pred_fallthru
          _
        // Predicated region
        $region17: #{fast_attention_forward.1} parent=11 // pred_check
          %p168 = pneg %p82
        $region18: #{fast_attention_forward.1} parent=11 // pred_check_branch
          %170 = sbr.rel (%p168) target = $region20
        $region19: #{fast_attention_forward.1} parent=11 // pred_region
          _
        $region20: #{fast_attention_forward.1} parent=11 // pred_fallthru
          _
        // Predicated region
        $region21: #{fast_attention_forward.1} parent=11 // pred_check
          %p171 = pneg %p103
        $region22: #{fast_attention_forward.1} parent=11 // pred_check_branch
          %173 = sbr.rel (%p171) target = $region24
        $region23: #{fast_attention_forward.1} parent=11 // pred_region
          _
        $region24: #{fast_attention_forward.1} parent=11 // pred_fallthru
          _
        // Predicated region
        $region25: #{fast_attention_forward.1} parent=11 // pred_check
          %p174 = pneg %p124
        $region26: #{fast_attention_forward.1} parent=11 // pred_check_branch
          %176 = sbr.rel (%p174) target = $region28
        $region27: #{fast_attention_forward.1} parent=11 // pred_region
          _
        $region28: #{fast_attention_forward.1} parent=11 // pred_fallthru
          _
      $region12: #{fast_attention_forward.1} parent=5 // pred_fallthru
        _
      %p177 = scmp.lt.s32.totalorder %s14, 2
      // Predicated region
      $region29: #{fast_attention_forward.1} parent=5 // pred_check
        %p178 = pneg %p177
      $region30: #{fast_attention_forward.1} parent=5 // pred_check_branch
        %180 = sbr.rel (%p178) target = $region32
      $region31: #{fast_attention_forward.1} parent=5 // pred_region
        // Predicated region
        $region33: #{fast_attention_forward.1} parent=31 // pred_check
          %p181 = pneg %p34
        $region34: #{fast_attention_forward.1} parent=31 // pred_check_branch
          %183 = sbr.rel (%p181) target = $region36
        $region35: #{fast_attention_forward.1} parent=31 // pred_region
          %p184 = scmp.lt.s32.totalorder %s14, 1
          %s185 = scalar_select %p184, %s14, 1
          %s186 = smul.addr %s185, 32
          %s187 = smul.addr %s186, 4
          %s188 = scalar_lea.vmem %s0, %s187
        $region36: #{fast_attention_forward.1} parent=31 // pred_fallthru
          _
      $region32: #{fast_attention_forward.1} parent=5 // pred_fallthru
        _
      %p189 = scmp.le.s32.totalorder 1, %s14
      %p190 = scmp.lt.s32.totalorder %s14, 3
      %p191 = pnand %p189, %p190
      %p192 = pneg %p191
      // Predicated region
      $region37: #{fast_attention_forward.1} parent=5 // pred_check
        _
      $region38: #{fast_attention_forward.1} parent=5 // pred_check_branch
        %194 = sbr.rel (%p191) target = $region40
      $region39: #{fast_attention_forward.1} parent=5 // pred_region
        %s195 = ssub.s32 %s14, 1
        %p196 = scmp.lt.s32.totalorder %s19, 1
        %s197 = scalar_select %p196, %s19, 1
        %s198 = smul.addr %s197, 32
        %s199 = smul.addr %s198, 4
        %s200 = scalar_lea.vmem %s0, %s199
        %p201 = pneg %p40
        %p202 = pneg %p37
        %p203 = pneg %p61
        %p204 = pneg %p58
        %p205 = pneg %p82
        %p206 = pneg %p79
        %p207 = pneg %p103
        %p208 = pneg %p100
        %p209 = pneg %p124
        %p210 = pneg %p121
        %p211 = pneg %p150
        %p212 = pneg %p147
        %s213 = sand.u32 %s137, 1
        %s214 = scalar_lea.sflag [#allocation6], %s213
        %s215 = sand.u32 %s137, 1
        %s216 = smul.addr %s215, 256
        %s217 = scalar_lea.vmem [#allocation5], %s216
        %p218 = scmp.lt.s32.totalorder %s19, 1
        %s219 = scalar_select %p218, %s19, 1
        %s220 = smul.addr %s219, 32
        %s221 = smul.addr %s220, 4
        %s222 = scalar_lea.vmem %s0, %s221
        %vm224 = vcmask 257024
        %225 = vst.msk [vmem:[#allocation2] sm:$0xf] %vm224, 0
        %226 = vst.msk [vmem:[#allocation2 + $0x4] sm:$0xf] %vm224, 0
        %vm227 = vcmask 253952
        %228 = vst.msk [vmem:[#allocation2 + $0x8] sm:$0x1] %vm227, 0
        %229 = vst.msk [vmem:[#allocation2 + $0xc] sm:$0xf] %vm224, 0
        %230 = vst.msk [vmem:[#allocation2 + $0x10] sm:$0xf] %vm224, 0
        %231 = vst.msk [vmem:[#allocation2 + $0x14] sm:$0x1] %vm227, 0
        %232 = vst.msk [vmem:[#allocation2 + $0x18] sm:$0xf] %vm224, 0
        %233 = vst.msk [vmem:[#allocation2 + $0x1c] sm:$0xf] %vm224, 0
        %234 = vst.msk [vmem:[#allocation2 + $0x20] sm:$0x1] %vm227, 0
        %235 = vst.msk [vmem:[#allocation2 + $0x24] sm:$0xf] %vm224, 0
        %236 = vst.msk [vmem:[#allocation2 + $0x28] sm:$0xf] %vm224, 0
        %237 = vst.msk [vmem:[#allocation2 + $0x2c] sm:$0x1] %vm227, 0
        %238 = vst.msk [vmem:[#allocation2 + $0x30] sm:$0xf] %vm224, 0
        %239 = vst.msk [vmem:[#allocation2 + $0x34] sm:$0xf] %vm224, 0
        %240 = vst.msk [vmem:[#allocation2 + $0x38] sm:$0x1] %vm227, 0
        %241 = vst.msk [vmem:[#allocation2 + $0x3c] sm:$0xf] %vm224, 0
        %242 = vst.msk [vmem:[#allocation2 + $0x40] sm:$0xf] %vm224, 0
        %243 = vst.msk [vmem:[#allocation2 + $0x44] sm:$0x1] %vm227, 0
        %244 = vst.msk [vmem:[#allocation2 + $0x48] sm:$0xf] %vm224, 0
        %245 = vst.msk [vmem:[#allocation2 + $0x4c] sm:$0xf] %vm224, 0
        %246 = vst.msk [vmem:[#allocation2 + $0x50] sm:$0x1] %vm227, 0
        %247 = vst.msk [vmem:[#allocation2 + $0x54] sm:$0xf] %vm224, 0
        %248 = vst.msk [vmem:[#allocation2 + $0x58] sm:$0xf] %vm224, 0
        %249 = vst.msk [vmem:[#allocation2 + $0x5c] sm:$0x1] %vm227, 0
        %250 = vst.msk [vmem:[#allocation2 + $0x60] sm:$0xf] %vm224, 0
        %251 = vst.msk [vmem:[#allocation2 + $0x64] sm:$0xf] %vm224, 0
        %252 = vst.msk [vmem:[#allocation2 + $0x68] sm:$0x1] %vm227, 0
        %253 = vst.msk [vmem:[#allocation2 + $0x6c] sm:$0xf] %vm224, 0
        %254 = vst.msk [vmem:[#allocation2 + $0x70] sm:$0xf] %vm224, 0
        %255 = vst.msk [vmem:[#allocation2 + $0x74] sm:$0x1] %vm227, 0
        %256 = vst.msk [vmem:[#allocation2 + $0x78] sm:$0xf] %vm224, 0
        %257 = vst.msk [vmem:[#allocation2 + $0x7c] sm:$0xf] %vm224, 0
        %258 = vst.msk [vmem:[#allocation2 + $0x80] sm:$0x1] %vm227, 0
        %259 = vst.msk [vmem:[#allocation2 + $0x84] sm:$0xf] %vm224, 0
        %260 = vst.msk [vmem:[#allocation2 + $0x88] sm:$0xf] %vm224, 0
        %261 = vst.msk [vmem:[#allocation2 + $0x8c] sm:$0x1] %vm227, 0
        %262 = vst.msk [vmem:[#allocation2 + $0x90] sm:$0xf] %vm224, 0
        %263 = vst.msk [vmem:[#allocation2 + $0x94] sm:$0xf] %vm224, 0
        %264 = vst.msk [vmem:[#allocation2 + $0x98] sm:$0x1] %vm227, 0
        %265 = vst.msk [vmem:[#allocation2 + $0x9c] sm:$0xf] %vm224, 0
        %266 = vst.msk [vmem:[#allocation2 + $0xa0] sm:$0xf] %vm224, 0
        %267 = vst.msk [vmem:[#allocation2 + $0xa4] sm:$0x1] %vm227, 0
        %268 = vst.msk [vmem:[#allocation2 + $0xa8] sm:$0xf] %vm224, 0
        %269 = vst.msk [vmem:[#allocation2 + $0xac] sm:$0xf] %vm224, 0
        %270 = vst.msk [vmem:[#allocation2 + $0xb0] sm:$0x1] %vm227, 0
        %271 = vst.msk [vmem:[#allocation2 + $0xb4] sm:$0xf] %vm224, 0
        %272 = vst.msk [vmem:[#allocation2 + $0xb8] sm:$0xf] %vm224, 0
        %273 = vst.msk [vmem:[#allocation2 + $0xbc] sm:$0x1] %vm227, 0
        %274 = vst.msk [vmem:[#allocation2 + $0xc0] sm:$0xf] %vm224, 0
        %275 = vst.msk [vmem:[#allocation2 + $0xc4] sm:$0xf] %vm224, 0
        %276 = vst.msk [vmem:[#allocation2 + $0xc8] sm:$0x1] %vm227, 0
        %277 = vst.msk [vmem:[#allocation2 + $0xcc] sm:$0xf] %vm224, 0
        %278 = vst.msk [vmem:[#allocation2 + $0xd0] sm:$0xf] %vm224, 0
        %279 = vst.msk [vmem:[#allocation2 + $0xd4] sm:$0x1] %vm227, 0
        %v280 = vld [vmem:[%s222] sm:$0xf]
        %v281 = vld [vmem:[%s222 + $0x4] sm:$0xf]
        %v282 = vld [vmem:[%s222 + $0x8] sm:$0xf]
        %v283 = vld [vmem:[%s222 + $0xc] sm:$0xf]
        %v284 = vld [vmem:[%s222 + $0x10] sm:$0xf]
        %v285 = vld [vmem:[%s222 + $0x14] sm:$0xf]
        %v286 = vld [vmem:[%s222 + $0x18] sm:$0xf]
        %v287 = vld [vmem:[%s222 + $0x1c] sm:$0xf]
        %v288 = vld [vmem:[%s222 + $0x20] sm:$0xf]
        %v289 = vld [vmem:[%s222 + $0x24] sm:$0xf]
        %v290 = vld [vmem:[%s222 + $0x28] sm:$0xf]
        %v291 = vld [vmem:[%s222 + $0x2c] sm:$0xf]
        %v292 = vld [vmem:[%s222 + $0x30] sm:$0xf]
        %v293 = vld [vmem:[%s222 + $0x34] sm:$0xf]
        %v294 = vld [vmem:[%s222 + $0x38] sm:$0xf]
        %v295 = vld [vmem:[%s222 + $0x3c] sm:$0xf]
        %v296 = vld [vmem:[%s222 + $0x40] sm:$0xf]
        %v297 = vld [vmem:[%s222 + $0x44] sm:$0xf]
        %v298 = vld [vmem:[%s222 + $0x48] sm:$0xf]
        %v299 = vld [vmem:[%s222 + $0x4c] sm:$0xf]
        %v300 = vld [vmem:[%s222 + $0x50] sm:$0xf]
        %v301 = vld [vmem:[%s222 + $0x54] sm:$0xf]
        %v302 = vld [vmem:[%s222 + $0x58] sm:$0xf]
        %v303 = vld [vmem:[%s222 + $0x5c] sm:$0xf]
        %v304 = vld [vmem:[%s222 + $0x60] sm:$0xf]
        %v305 = vld [vmem:[%s222 + $0x64] sm:$0xf]
        %v306 = vld [vmem:[%s222 + $0x68] sm:$0xf]
        %v307 = vld [vmem:[%s222 + $0x6c] sm:$0xf]
        %v308 = vld [vmem:[%s222 + $0x70] sm:$0xf]
        %v309 = vld [vmem:[%s222 + $0x74] sm:$0xf]
        %v310 = vld [vmem:[%s222 + $0x78] sm:$0xf]
        %v311 = vld [vmem:[%s222 + $0x7c] sm:$0xf]
        %vm312 = vsmask.f32 256
        %vm313 = vsmask.f32 4368
        %vm314 = vmor %vm312, %vm313
        %v316 = vshrl.u32 %v280, 16
        %v318 = vrot.slane %v316, 7
        %v319 = vshll.u32 %v280, 16
        %v321 = vor.u32 %v318, %v319
        %v322 = vrot.slane %v318, 4
        %v324 = vshrl.u32 %v281, 16
        %v326 = vrot.slane %v324, 7
        %v327 = vshll.u32 %v281, 16
        %v329 = vor.u32 %v326, %v327
        %v330 = vsel %vm314, %v322, %v329
        %v331 = vrot.slane %v326, 4
        %v333 = vshrl.u32 %v282, 16
        %v335 = vrot.slane %v333, 7
        %v336 = vshll.u32 %v282, 16
        %v338 = vor.u32 %v335, %v336
        %v339 = vrot.slane %v335, 4
        %v341 = vshrl.u32 %v283, 16
        %v343 = vrot.slane %v341, 7
        %v344 = vshll.u32 %v283, 16
        %v346 = vor.u32 %v343, %v344
        %v347 = vsel %vm314, %v339, %v346
        %v348 = vrot.slane %v343, 4
        %v350 = vshrl.u32 %v284, 16
        %v352 = vrot.slane %v350, 7
        %v353 = vshll.u32 %v284, 16
        %v355 = vor.u32 %v352, %v353
        %v356 = vrot.slane %v352, 4
        %v358 = vshrl.u32 %v285, 16
        %v360 = vrot.slane %v358, 7
        %v361 = vshll.u32 %v285, 16
        %v363 = vor.u32 %v360, %v361
        %v364 = vsel %vm314, %v356, %v363
        %v365 = vrot.slane %v360, 4
        %v367 = vshrl.u32 %v286, 16
        %v369 = vrot.slane %v367, 7
        %v370 = vshll.u32 %v286, 16
        %v372 = vor.u32 %v369, %v370
        %v373 = vrot.slane %v369, 4
        %v375 = vshrl.u32 %v287, 16
        %v377 = vrot.slane %v375, 7
        %v378 = vshll.u32 %v287, 16
        %v380 = vor.u32 %v377, %v378
        %v381 = vsel %vm314, %v373, %v380
        %v382 = vrot.slane %v377, 4
        %v384 = vshrl.u32 %v288, 16
        %v386 = vrot.slane %v384, 7
        %v387 = vshll.u32 %v288, 16
        %v389 = vor.u32 %v386, %v387
        %v390 = vrot.slane %v386, 4
        %v392 = vshrl.u32 %v289, 16
        %v394 = vrot.slane %v392, 7
        %v395 = vshll.u32 %v289, 16
        %v397 = vor.u32 %v394, %v395
        %v398 = vsel %vm314, %v390, %v397
        %v399 = vrot.slane %v394, 4
        %v401 = vshrl.u32 %v290, 16
        %v403 = vrot.slane %v401, 7
        %v404 = vshll.u32 %v290, 16
        %v406 = vor.u32 %v403, %v404
        %v407 = vrot.slane %v403, 4
        %v409 = vshrl.u32 %v291, 16
        %v411 = vrot.slane %v409, 7
        %v412 = vshll.u32 %v291, 16
        %v414 = vor.u32 %v411, %v412
        %v415 = vsel %vm314, %v407, %v414
        %v416 = vrot.slane %v411, 4
        %v418 = vshrl.u32 %v292, 16
        %v420 = vrot.slane %v418, 7
        %v421 = vshll.u32 %v292, 16
        %v423 = vor.u32 %v420, %v421
        %v424 = vrot.slane %v420, 4
        %v426 = vshrl.u32 %v293, 16
        %v428 = vrot.slane %v426, 7
        %v429 = vshll.u32 %v293, 16
        %v431 = vor.u32 %v428, %v429
        %v432 = vsel %vm314, %v424, %v431
        %v433 = vrot.slane %v428, 4
        %v435 = vshrl.u32 %v294, 16
        %v437 = vrot.slane %v435, 7
        %v438 = vshll.u32 %v294, 16
        %v440 = vor.u32 %v437, %v438
        %v441 = vrot.slane %v437, 4
        %v443 = vshrl.u32 %v295, 16
        %v445 = vrot.slane %v443, 7
        %v446 = vshll.u32 %v295, 16
        %v448 = vor.u32 %v445, %v446
        %v449 = vsel %vm314, %v441, %v448
        %v450 = vrot.slane %v445, 4
        %v452 = vshrl.u32 %v296, 16
        %v454 = vrot.slane %v452, 7
        %v455 = vshll.u32 %v296, 16
        %v457 = vor.u32 %v454, %v455
        %v458 = vrot.slane %v454, 4
        %v460 = vshrl.u32 %v297, 16
        %v462 = vrot.slane %v460, 7
        %v463 = vshll.u32 %v297, 16
        %v465 = vor.u32 %v462, %v463
        %v466 = vsel %vm314, %v458, %v465
        %v467 = vrot.slane %v462, 4
        %v469 = vshrl.u32 %v298, 16
        %v471 = vrot.slane %v469, 7
        %v472 = vshll.u32 %v298, 16
        %v474 = vor.u32 %v471, %v472
        %v475 = vrot.slane %v471, 4
        %v477 = vshrl.u32 %v299, 16
        %v479 = vrot.slane %v477, 7
        %v480 = vshll.u32 %v299, 16
        %v482 = vor.u32 %v479, %v480
        %v483 = vsel %vm314, %v475, %v482
        %v484 = vrot.slane %v479, 4
        %v486 = vshrl.u32 %v300, 16
        %v488 = vrot.slane %v486, 7
        %v489 = vshll.u32 %v300, 16
        %v491 = vor.u32 %v488, %v489
        %v492 = vrot.slane %v488, 4
        %v494 = vshrl.u32 %v301, 16
        %v496 = vrot.slane %v494, 7
        %v497 = vshll.u32 %v301, 16
        %v499 = vor.u32 %v496, %v497
        %v500 = vsel %vm314, %v492, %v499
        %v501 = vrot.slane %v496, 4
        %v503 = vshrl.u32 %v302, 16
        %v505 = vrot.slane %v503, 7
        %v506 = vshll.u32 %v302, 16
        %v508 = vor.u32 %v505, %v506
        %v509 = vrot.slane %v505, 4
        %v511 = vshrl.u32 %v303, 16
        %v513 = vrot.slane %v511, 7
        %v514 = vshll.u32 %v303, 16
        %v516 = vor.u32 %v513, %v514
        %v517 = vsel %vm314, %v509, %v516
        %v518 = vrot.slane %v513, 4
        %v520 = vshrl.u32 %v304, 16
        %v522 = vrot.slane %v520, 7
        %v523 = vshll.u32 %v304, 16
        %v525 = vor.u32 %v522, %v523
        %v526 = vrot.slane %v522, 4
        %v528 = vshrl.u32 %v305, 16
        %v530 = vrot.slane %v528, 7
        %v531 = vshll.u32 %v305, 16
        %v533 = vor.u32 %v530, %v531
        %v534 = vsel %vm314, %v526, %v533
        %v535 = vrot.slane %v530, 4
        %v537 = vshrl.u32 %v306, 16
        %v539 = vrot.slane %v537, 7
        %v540 = vshll.u32 %v306, 16
        %v542 = vor.u32 %v539, %v540
        %v543 = vrot.slane %v539, 4
        %v545 = vshrl.u32 %v307, 16
        %v547 = vrot.slane %v545, 7
        %v548 = vshll.u32 %v307, 16
        %v550 = vor.u32 %v547, %v548
        %v551 = vsel %vm314, %v543, %v550
        %v552 = vrot.slane %v547, 4
        %v554 = vshrl.u32 %v308, 16
        %v556 = vrot.slane %v554, 7
        %v557 = vshll.u32 %v308, 16
        %v559 = vor.u32 %v556, %v557
        %v560 = vrot.slane %v556, 4
        %v562 = vshrl.u32 %v309, 16
        %v564 = vrot.slane %v562, 7
        %v565 = vshll.u32 %v309, 16
        %v567 = vor.u32 %v564, %v565
        %v568 = vsel %vm314, %v560, %v567
        %v569 = vrot.slane %v564, 4
        %v571 = vshrl.u32 %v310, 16
        %v573 = vrot.slane %v571, 7
        %v574 = vshll.u32 %v310, 16
        %v576 = vor.u32 %v573, %v574
        %v577 = vrot.slane %v573, 4
        %v579 = vshrl.u32 %v311, 16
        %v581 = vrot.slane %v579, 7
        %v582 = vshll.u32 %v311, 16
        %v584 = vor.u32 %v581, %v582
        %v585 = vsel %vm314, %v577, %v584
        %v586 = vrot.slane %v581, 4
        %s635 = scalar_lea.vmem [#allocation2], 12
        %vm636 = vcmask 257024
        %vm637 = vsmask.f32 7938
        %vm638 = vmand %vm636, %vm637
        %v639 = vld [vmem:[%s635] sm:$0xf]
        %v640 = vsel %vm638, %v321, %v639
        %641 = vst [vmem:[%s635] sm:$0xf] %v640
        %642 = vst.msk [vmem:[%s635 + $0x4] sm:$0xf] %vm224, %v330
        %vm643 = vcmask 253952
        %vm644 = vmand %vm643, %vm312
        %v645 = vld [vmem:[%s635 + $0x8] sm:$0x1]
        %v646 = vsel %vm644, %v331, %v645
        %647 = vst [vmem:[%s635 + $0x8] sm:$0x1] %v646
        %v648 = vld [vmem:[%s635 + $0xc] sm:$0xf]
        %v649 = vsel %vm638, %v338, %v648
        %650 = vst [vmem:[%s635 + $0xc] sm:$0xf] %v649
        %651 = vst.msk [vmem:[%s635 + $0x10] sm:$0xf] %vm224, %v347
        %v652 = vld [vmem:[%s635 + $0x14] sm:$0x1]
        %v653 = vsel %vm644, %v348, %v652
        %654 = vst [vmem:[%s635 + $0x14] sm:$0x1] %v653
        %v655 = vld [vmem:[%s635 + $0x18] sm:$0xf]
        %v656 = vsel %vm638, %v355, %v655
        %657 = vst [vmem:[%s635 + $0x18] sm:$0xf] %v656
        %658 = vst.msk [vmem:[%s635 + $0x1c] sm:$0xf] %vm224, %v364
        %v659 = vld [vmem:[%s635 + $0x20] sm:$0x1]
        %v660 = vsel %vm644, %v365, %v659
        %661 = vst [vmem:[%s635 + $0x20] sm:$0x1] %v660
        %v662 = vld [vmem:[%s635 + $0x24] sm:$0xf]
        %v663 = vsel %vm638, %v372, %v662
        %664 = vst [vmem:[%s635 + $0x24] sm:$0xf] %v663
        %665 = vst.msk [vmem:[%s635 + $0x28] sm:$0xf] %vm224, %v381
        %v666 = vld [vmem:[%s635 + $0x2c] sm:$0x1]
        %v667 = vsel %vm644, %v382, %v666
        %668 = vst [vmem:[%s635 + $0x2c] sm:$0x1] %v667
        %v669 = vld [vmem:[%s635 + $0x30] sm:$0xf]
        %v670 = vsel %vm638, %v389, %v669
        %671 = vst [vmem:[%s635 + $0x30] sm:$0xf] %v670
        %672 = vst.msk [vmem:[%s635 + $0x34] sm:$0xf] %vm224, %v398
        %v673 = vld [vmem:[%s635 + $0x38] sm:$0x1]
        %v674 = vsel %vm644, %v399, %v673
        %675 = vst [vmem:[%s635 + $0x38] sm:$0x1] %v674
        %v676 = vld [vmem:[%s635 + $0x3c] sm:$0xf]
        %v677 = vsel %vm638, %v406, %v676
        %678 = vst [vmem:[%s635 + $0x3c] sm:$0xf] %v677
        %679 = vst.msk [vmem:[%s635 + $0x40] sm:$0xf] %vm224, %v415
        %v680 = vld [vmem:[%s635 + $0x44] sm:$0x1]
        %v681 = vsel %vm644, %v416, %v680
        %682 = vst [vmem:[%s635 + $0x44] sm:$0x1] %v681
        %v683 = vld [vmem:[%s635 + $0x48] sm:$0xf]
        %v684 = vsel %vm638, %v423, %v683
        %685 = vst [vmem:[%s635 + $0x48] sm:$0xf] %v684
        %686 = vst.msk [vmem:[%s635 + $0x4c] sm:$0xf] %vm224, %v432
        %v687 = vld [vmem:[%s635 + $0x50] sm:$0x1]
        %v688 = vsel %vm644, %v433, %v687
        %689 = vst [vmem:[%s635 + $0x50] sm:$0x1] %v688
        %v690 = vld [vmem:[%s635 + $0x54] sm:$0xf]
        %v691 = vsel %vm638, %v440, %v690
        %692 = vst [vmem:[%s635 + $0x54] sm:$0xf] %v691
        %693 = vst.msk [vmem:[%s635 + $0x58] sm:$0xf] %vm224, %v449
        %v694 = vld [vmem:[%s635 + $0x5c] sm:$0x1]
        %v695 = vsel %vm644, %v450, %v694
        %696 = vst [vmem:[%s635 + $0x5c] sm:$0x1] %v695
        %v697 = vld [vmem:[%s635 + $0x60] sm:$0xf]
        %v698 = vsel %vm638, %v457, %v697
        %699 = vst [vmem:[%s635 + $0x60] sm:$0xf] %v698
        %700 = vst.msk [vmem:[%s635 + $0x64] sm:$0xf] %vm224, %v466
        %v701 = vld [vmem:[%s635 + $0x68] sm:$0x1]
        %v702 = vsel %vm644, %v467, %v701
        %703 = vst [vmem:[%s635 + $0x68] sm:$0x1] %v702
        %v704 = vld [vmem:[%s635 + $0x6c] sm:$0xf]
        %v705 = vsel %vm638, %v474, %v704
        %706 = vst [vmem:[%s635 + $0x6c] sm:$0xf] %v705
        %707 = vst.msk [vmem:[%s635 + $0x70] sm:$0xf] %vm224, %v483
        %v708 = vld [vmem:[%s635 + $0x74] sm:$0x1]
        %v709 = vsel %vm644, %v484, %v708
        %710 = vst [vmem:[%s635 + $0x74] sm:$0x1] %v709
        %v711 = vld [vmem:[%s635 + $0x78] sm:$0xf]
        %v712 = vsel %vm638, %v491, %v711
        %713 = vst [vmem:[%s635 + $0x78] sm:$0xf] %v712
        %714 = vst.msk [vmem:[%s635 + $0x7c] sm:$0xf] %vm224, %v500
        %v715 = vld [vmem:[%s635 + $0x80] sm:$0x1]
        %v716 = vsel %vm644, %v501, %v715
        %717 = vst [vmem:[%s635 + $0x80] sm:$0x1] %v716
        %v718 = vld [vmem:[%s635 + $0x84] sm:$0xf]
        %v719 = vsel %vm638, %v508, %v718
        %720 = vst [vmem:[%s635 + $0x84] sm:$0xf] %v719
        %721 = vst.msk [vmem:[%s635 + $0x88] sm:$0xf] %vm224, %v517
        %v722 = vld [vmem:[%s635 + $0x8c] sm:$0x1]
        %v723 = vsel %vm644, %v518, %v722
        %724 = vst [vmem:[%s635 + $0x8c] sm:$0x1] %v723
        %v725 = vld [vmem:[%s635 + $0x90] sm:$0xf]
        %v726 = vsel %vm638, %v525, %v725
        %727 = vst [vmem:[%s635 + $0x90] sm:$0xf] %v726
        %728 = vst.msk [vmem:[%s635 + $0x94] sm:$0xf] %vm224, %v534
        %v729 = vld [vmem:[%s635 + $0x98] sm:$0x1]
        %v730 = vsel %vm644, %v535, %v729
        %731 = vst [vmem:[%s635 + $0x98] sm:$0x1] %v730
        %v732 = vld [vmem:[%s635 + $0x9c] sm:$0xf]
        %v733 = vsel %vm638, %v542, %v732
        %734 = vst [vmem:[%s635 + $0x9c] sm:$0xf] %v733
        %735 = vst.msk [vmem:[%s635 + $0xa0] sm:$0xf] %vm224, %v551
        %v736 = vld [vmem:[%s635 + $0xa4] sm:$0x1]
        %v737 = vsel %vm644, %v552, %v736
        %738 = vst [vmem:[%s635 + $0xa4] sm:$0x1] %v737
        %v739 = vld [vmem:[%s635 + $0xa8] sm:$0xf]
        %v740 = vsel %vm638, %v559, %v739
        %741 = vst [vmem:[%s635 + $0xa8] sm:$0xf] %v740
        %742 = vst.msk [vmem:[%s635 + $0xac] sm:$0xf] %vm224, %v568
        %v743 = vld [vmem:[%s635 + $0xb0] sm:$0x1]
        %v744 = vsel %vm644, %v569, %v743
        %745 = vst [vmem:[%s635 + $0xb0] sm:$0x1] %v744
        %v746 = vld [vmem:[%s635 + $0xb4] sm:$0xf]
        %v747 = vsel %vm638, %v576, %v746
        %748 = vst [vmem:[%s635 + $0xb4] sm:$0xf] %v747
        %749 = vst.msk [vmem:[%s635 + $0xb8] sm:$0xf] %vm224, %v585
        %v750 = vld [vmem:[%s635 + $0xbc] sm:$0x1]
        %v751 = vsel %vm644, %v586, %v750
        %752 = vst [vmem:[%s635 + $0xbc] sm:$0x1] %v751
        %v753 = vld [vmem:[#allocation2] sm:$0xf]
        %v754 = vld [vmem:[#allocation2 + $0x4] sm:$0xf]
        %v755 = vld [vmem:[#allocation2 + $0xc] sm:$0xf]
        %v756 = vld [vmem:[#allocation2 + $0x10] sm:$0xf]
        %v757 = vld [vmem:[#allocation2 + $0x18] sm:$0xf]
        %v758 = vld [vmem:[#allocation2 + $0x1c] sm:$0xf]
        %v759 = vld [vmem:[#allocation2 + $0x24] sm:$0xf]
        %v760 = vld [vmem:[#allocation2 + $0x28] sm:$0xf]
        %v761 = vld [vmem:[#allocation2 + $0x30] sm:$0xf]
        %v762 = vld [vmem:[#allocation2 + $0x34] sm:$0xf]
        %v763 = vld [vmem:[#allocation2 + $0x3c] sm:$0xf]
        %v764 = vld [vmem:[#allocation2 + $0x40] sm:$0xf]
        %v765 = vld [vmem:[#allocation2 + $0x48] sm:$0xf]
        %v766 = vld [vmem:[#allocation2 + $0x4c] sm:$0xf]
        %v767 = vld [vmem:[#allocation2 + $0x54] sm:$0xf]
        %v768 = vld [vmem:[#allocation2 + $0x58] sm:$0xf]
        %v769 = vld [vmem:[#allocation2 + $0x60] sm:$0xf]
        %v770 = vld [vmem:[#allocation2 + $0x64] sm:$0xf]
        %v771 = vld [vmem:[#allocation2 + $0x6c] sm:$0xf]
        %v772 = vld [vmem:[#allocation2 + $0x70] sm:$0xf]
        %v773 = vld [vmem:[#allocation2 + $0x78] sm:$0xf]
        %v774 = vld [vmem:[#allocation2 + $0x7c] sm:$0xf]
        %v775 = vld [vmem:[#allocation2 + $0x84] sm:$0xf]
        %v776 = vld [vmem:[#allocation2 + $0x88] sm:$0xf]
        %v777 = vld [vmem:[#allocation2 + $0x90] sm:$0xf]
        %v778 = vld [vmem:[#allocation2 + $0x94] sm:$0xf]
        %v779 = vld [vmem:[#allocation2 + $0x9c] sm:$0xf]
        %v780 = vld [vmem:[#allocation2 + $0xa0] sm:$0xf]
        %v781 = vld [vmem:[#allocation2 + $0xa8] sm:$0xf]
        %v782 = vld [vmem:[#allocation2 + $0xac] sm:$0xf]
        %v783 = vld [vmem:[#allocation2 + $0xb4] sm:$0xf]
        %v784 = vld [vmem:[#allocation2 + $0xb8] sm:$0xf]
        %v817 = vunpack.c.l.b16 %v753
        %v818 = vunpack.c.l.b16 %v754
        %v819 = vunpack.c.l.b16 %v755
        %v820 = vunpack.c.l.b16 %v756
        %v821 = vunpack.c.l.b16 %v757
        %v822 = vunpack.c.l.b16 %v758
        %v823 = vunpack.c.l.b16 %v759
        %v824 = vunpack.c.l.b16 %v760
        %v825 = vunpack.c.l.b16 %v761
        %v826 = vunpack.c.l.b16 %v762
        %v827 = vunpack.c.l.b16 %v763
        %v828 = vunpack.c.l.b16 %v764
        %v829 = vunpack.c.l.b16 %v765
        %v830 = vunpack.c.l.b16 %v766
        %v831 = vunpack.c.l.b16 %v767
        %v832 = vunpack.c.l.b16 %v768
        %v833 = vunpack.c.l.b16 %v769
        %v834 = vunpack.c.l.b16 %v770
        %v835 = vunpack.c.l.b16 %v771
        %v836 = vunpack.c.l.b16 %v772
        %v837 = vunpack.c.l.b16 %v773
        %v838 = vunpack.c.l.b16 %v774
        %v839 = vunpack.c.l.b16 %v775
        %v840 = vunpack.c.l.b16 %v776
        %v841 = vunpack.c.l.b16 %v777
        %v842 = vunpack.c.l.b16 %v778
        %v843 = vunpack.c.l.b16 %v779
        %v844 = vunpack.c.l.b16 %v780
        %v845 = vunpack.c.l.b16 %v781
        %v846 = vunpack.c.l.b16 %v782
        %v847 = vunpack.c.l.b16 %v783
        %v848 = vunpack.c.l.b16 %v784
        %v849 = vpack.c.b16 %v818, %v817
        %v850 = vpack.c.b16 %v820, %v819
        %v851 = vpack.c.b16 %v822, %v821
        %v852 = vpack.c.b16 %v824, %v823
        %v853 = vpack.c.b16 %v826, %v825
        %v854 = vpack.c.b16 %v828, %v827
        %v855 = vpack.c.b16 %v830, %v829
        %v856 = vpack.c.b16 %v832, %v831
        %v857 = vpack.c.b16 %v834, %v833
        %v858 = vpack.c.b16 %v836, %v835
        %v859 = vpack.c.b16 %v838, %v837
        %v860 = vpack.c.b16 %v840, %v839
        %v861 = vpack.c.b16 %v842, %v841
        %v862 = vpack.c.b16 %v844, %v843
        %v863 = vpack.c.b16 %v846, %v845
        %v864 = vpack.c.b16 %v848, %v847
        %vm881 = vcmask 261120
        %882 = vst.msk [vmem:[#allocation3] sm:$0xff] %vm881, %v849
        %883 = vst.msk [vmem:[#allocation3 + $0x18] sm:$0xff] %vm881, %v850
        %884 = vst.msk [vmem:[#allocation3 + $0x30] sm:$0xff] %vm881, %v851
        %885 = vst.msk [vmem:[#allocation3 + $0x48] sm:$0xff] %vm881, %v852
        %886 = vst.msk [vmem:[#allocation3 + $0x60] sm:$0xff] %vm881, %v853
        %887 = vst.msk [vmem:[#allocation3 + $0x78] sm:$0xff] %vm881, %v854
        %888 = vst.msk [vmem:[#allocation3 + $0x90] sm:$0xff] %vm881, %v855
        %889 = vst.msk [vmem:[#allocation3 + $0xa8] sm:$0xff] %vm881, %v856
        %890 = vst.msk [vmem:[#allocation3 + $0xc0] sm:$0xff] %vm881, %v857
        %891 = vst.msk [vmem:[#allocation3 + $0xd8] sm:$0xff] %vm881, %v858
        %892 = vst.msk [vmem:[#allocation3 + $0xf0] sm:$0xff] %vm881, %v859
        %893 = vst.msk [vmem:[#allocation3 + $0x108] sm:$0xff] %vm881, %v860
        %894 = vst.msk [vmem:[#allocation3 + $0x120] sm:$0xff] %vm881, %v861
        %895 = vst.msk [vmem:[#allocation3 + $0x138] sm:$0xff] %vm881, %v862
        %896 = vst.msk [vmem:[#allocation3 + $0x150] sm:$0xff] %vm881, %v863
        %897 = vst.msk [vmem:[#allocation3 + $0x168] sm:$0xff] %vm881, %v864
        %v898 = vld [vmem:[#allocation2] sm:$0xf]
        %v899 = vld [vmem:[#allocation2 + $0x4] sm:$0xf]
        %v900 = vld [vmem:[#allocation2 + $0x8] sm:$0x1]
        %v901 = vld [vmem:[#allocation2 + $0xc] sm:$0xf]
        %v902 = vld [vmem:[#allocation2 + $0x10] sm:$0xf]
        %v903 = vld [vmem:[#allocation2 + $0x14] sm:$0x1]
        %v904 = vld [vmem:[#allocation2 + $0x18] sm:$0xf]
        %v905 = vld [vmem:[#allocation2 + $0x1c] sm:$0xf]
        %v906 = vld [vmem:[#allocation2 + $0x20] sm:$0x1]
        %v907 = vld [vmem:[#allocation2 + $0x24] sm:$0xf]
        %v908 = vld [vmem:[#allocation2 + $0x28] sm:$0xf]
        %v909 = vld [vmem:[#allocation2 + $0x2c] sm:$0x1]
        %v910 = vld [vmem:[#allocation2 + $0x30] sm:$0xf]
        %v911 = vld [vmem:[#allocation2 + $0x34] sm:$0xf]
        %v912 = vld [vmem:[#allocation2 + $0x38] sm:$0x1]
        %v913 = vld [vmem:[#allocation2 + $0x3c] sm:$0xf]
        %v914 = vld [vmem:[#allocation2 + $0x40] sm:$0xf]
        %v915 = vld [vmem:[#allocation2 + $0x44] sm:$0x1]
        %v916 = vld [vmem:[#allocation2 + $0x48] sm:$0xf]
        %v917 = vld [vmem:[#allocation2 + $0x4c] sm:$0xf]
        %v918 = vld [vmem:[#allocation2 + $0x50] sm:$0x1]
        %v919 = vld [vmem:[#allocation2 + $0x54] sm:$0xf]
        %v920 = vld [vmem:[#allocation2 + $0x58] sm:$0xf]
        %v921 = vld [vmem:[#allocation2 + $0x5c] sm:$0x1]
        %v922 = vld [vmem:[#allocation2 + $0x60] sm:$0xf]
        %v923 = vld [vmem:[#allocation2 + $0x64] sm:$0xf]
        %v924 = vld [vmem:[#allocation2 + $0x68] sm:$0x1]
        %v925 = vld [vmem:[#allocation2 + $0x6c] sm:$0xf]
        %v926 = vld [vmem:[#allocation2 + $0x70] sm:$0xf]
        %v927 = vld [vmem:[#allocation2 + $0x74] sm:$0x1]
        %v928 = vld [vmem:[#allocation2 + $0x78] sm:$0xf]
        %v929 = vld [vmem:[#allocation2 + $0x7c] sm:$0xf]
        %v930 = vld [vmem:[#allocation2 + $0x80] sm:$0x1]
        %v931 = vld [vmem:[#allocation2 + $0x84] sm:$0xf]
        %v932 = vld [vmem:[#allocation2 + $0x88] sm:$0xf]
        %v933 = vld [vmem:[#allocation2 + $0x8c] sm:$0x1]
        %v934 = vld [vmem:[#allocation2 + $0x90] sm:$0xf]
        %v935 = vld [vmem:[#allocation2 + $0x94] sm:$0xf]
        %v936 = vld [vmem:[#allocation2 + $0x98] sm:$0x1]
        %v937 = vld [vmem:[#allocation2 + $0x9c] sm:$0xf]
        %v938 = vld [vmem:[#allocation2 + $0xa0] sm:$0xf]
        %v939 = vld [vmem:[#allocation2 + $0xa4] sm:$0x1]
        %v940 = vld [vmem:[#allocation2 + $0xa8] sm:$0xf]
        %v941 = vld [vmem:[#allocation2 + $0xac] sm:$0xf]
        %v942 = vld [vmem:[#allocation2 + $0xb0] sm:$0x1]
        %v943 = vld [vmem:[#allocation2 + $0xb4] sm:$0xf]
        %v944 = vld [vmem:[#allocation2 + $0xb8] sm:$0xf]
        %v945 = vld [vmem:[#allocation2 + $0xbc] sm:$0x1]
        %vm946 = vsmask.f32 3328
        %vm947 = vsmask.f32 7440
        %vm948 = vmor %vm946, %vm947
        %v950 = vshrl.u32 %v898, 16
        %v952 = vrot.slane %v950, 4
        %v953 = vshll.u32 %v898, 16
        %v955 = vrot.slane %v953, 5
        %v956 = vor.u32 %v952, %v955
        %v957 = vrot.slane %v956, 4
        %v959 = vshll.u32 %v899, 16
        %v961 = vrot.slane %v959, 5
        %v962 = vsel %vm948, %v957, %v961
        %v963 = vshrl.u32 %v899, 16
        %v965 = vrot.slane %v963, 4
        %v966 = vor.u32 %v965, %v961
        %v967 = vrot.slane %v966, 4
        %v969 = vshll.u32 %v900, 16
        %v971 = vrot.slane %v969, 5
        %v972 = vsel %vm948, %v967, %v971
        %v974 = vshrl.u32 %v901, 16
        %v976 = vrot.slane %v974, 4
        %v977 = vshll.u32 %v901, 16
        %v979 = vrot.slane %v977, 5
        %v980 = vor.u32 %v976, %v979
        %v981 = vrot.slane %v980, 4
        %v983 = vshll.u32 %v902, 16
        %v985 = vrot.slane %v983, 5
        %v986 = vsel %vm948, %v981, %v985
        %v987 = vshrl.u32 %v902, 16
        %v989 = vrot.slane %v987, 4
        %v990 = vor.u32 %v989, %v985
        %v991 = vrot.slane %v990, 4
        %v993 = vshll.u32 %v903, 16
        %v995 = vrot.slane %v993, 5
        %v996 = vsel %vm948, %v991, %v995
        %v998 = vshrl.u32 %v904, 16
        %v1000 = vrot.slane %v998, 4
        %v1001 = vshll.u32 %v904, 16
        %v1003 = vrot.slane %v1001, 5
        %v1004 = vor.u32 %v1000, %v1003
        %v1005 = vrot.slane %v1004, 4
        %v1007 = vshll.u32 %v905, 16
        %v1009 = vrot.slane %v1007, 5
        %v1010 = vsel %vm948, %v1005, %v1009
        %v1011 = vshrl.u32 %v905, 16
        %v1013 = vrot.slane %v1011, 4
        %v1014 = vor.u32 %v1013, %v1009
        %v1015 = vrot.slane %v1014, 4
        %v1017 = vshll.u32 %v906, 16
        %v1019 = vrot.slane %v1017, 5
        %v1020 = vsel %vm948, %v1015, %v1019
        %v1022 = vshrl.u32 %v907, 16
        %v1024 = vrot.slane %v1022, 4
        %v1025 = vshll.u32 %v907, 16
        %v1027 = vrot.slane %v1025, 5
        %v1028 = vor.u32 %v1024, %v1027
        %v1029 = vrot.slane %v1028, 4
        %v1031 = vshll.u32 %v908, 16
        %v1033 = vrot.slane %v1031, 5
        %v1034 = vsel %vm948, %v1029, %v1033
        %v1035 = vshrl.u32 %v908, 16
        %v1037 = vrot.slane %v1035, 4
        %v1038 = vor.u32 %v1037, %v1033
        %v1039 = vrot.slane %v1038, 4
        %v1041 = vshll.u32 %v909, 16
        %v1043 = vrot.slane %v1041, 5
        %v1044 = vsel %vm948, %v1039, %v1043
        %v1046 = vshrl.u32 %v910, 16
        %v1048 = vrot.slane %v1046, 4
        %v1049 = vshll.u32 %v910, 16
        %v1051 = vrot.slane %v1049, 5
        %v1052 = vor.u32 %v1048, %v1051
        %v1053 = vrot.slane %v1052, 4
        %v1055 = vshll.u32 %v911, 16
        %v1057 = vrot.slane %v1055, 5
        %v1058 = vsel %vm948, %v1053, %v1057
        %v1059 = vshrl.u32 %v911, 16
        %v1061 = vrot.slane %v1059, 4
        %v1062 = vor.u32 %v1061, %v1057
        %v1063 = vrot.slane %v1062, 4
        %v1065 = vshll.u32 %v912, 16
        %v1067 = vrot.slane %v1065, 5
        %v1068 = vsel %vm948, %v1063, %v1067
        %v1070 = vshrl.u32 %v913, 16
        %v1072 = vrot.slane %v1070, 4
        %v1073 = vshll.u32 %v913, 16
        %v1075 = vrot.slane %v1073, 5
        %v1076 = vor.u32 %v1072, %v1075
        %v1077 = vrot.slane %v1076, 4
        %v1079 = vshll.u32 %v914, 16
        %v1081 = vrot.slane %v1079, 5
        %v1082 = vsel %vm948, %v1077, %v1081
        %v1083 = vshrl.u32 %v914, 16
        %v1085 = vrot.slane %v1083, 4
        %v1086 = vor.u32 %v1085, %v1081
        %v1087 = vrot.slane %v1086, 4
        %v1089 = vshll.u32 %v915, 16
        %v1091 = vrot.slane %v1089, 5
        %v1092 = vsel %vm948, %v1087, %v1091
        %v1094 = vshrl.u32 %v916, 16
        %v1096 = vrot.slane %v1094, 4
        %v1097 = vshll.u32 %v916, 16
        %v1099 = vrot.slane %v1097, 5
        %v1100 = vor.u32 %v1096, %v1099
        %v1101 = vrot.slane %v1100, 4
        %v1103 = vshll.u32 %v917, 16
        %v1105 = vrot.slane %v1103, 5
        %v1106 = vsel %vm948, %v1101, %v1105
        %v1107 = vshrl.u32 %v917, 16
        %v1109 = vrot.slane %v1107, 4
        %v1110 = vor.u32 %v1109, %v1105
        %v1111 = vrot.slane %v1110, 4
        %v1113 = vshll.u32 %v918, 16
        %v1115 = vrot.slane %v1113, 5
        %v1116 = vsel %vm948, %v1111, %v1115
        %v1118 = vshrl.u32 %v919, 16
        %v1120 = vrot.slane %v1118, 4
        %v1121 = vshll.u32 %v919, 16
        %v1123 = vrot.slane %v1121, 5
        %v1124 = vor.u32 %v1120, %v1123
        %v1125 = vrot.slane %v1124, 4
        %v1127 = vshll.u32 %v920, 16
        %v1129 = vrot.slane %v1127, 5
        %v1130 = vsel %vm948, %v1125, %v1129
        %v1131 = vshrl.u32 %v920, 16
        %v1133 = vrot.slane %v1131, 4
        %v1134 = vor.u32 %v1133, %v1129
        %v1135 = vrot.slane %v1134, 4
        %v1137 = vshll.u32 %v921, 16
        %v1139 = vrot.slane %v1137, 5
        %v1140 = vsel %vm948, %v1135, %v1139
        %v1142 = vshrl.u32 %v922, 16
        %v1144 = vrot.slane %v1142, 4
        %v1145 = vshll.u32 %v922, 16
        %v1147 = vrot.slane %v1145, 5
        %v1148 = vor.u32 %v1144, %v1147
        %v1149 = vrot.slane %v1148, 4
        %v1151 = vshll.u32 %v923, 16
        %v1153 = vrot.slane %v1151, 5
        %v1154 = vsel %vm948, %v1149, %v1153
        %v1155 = vshrl.u32 %v923, 16
        %v1157 = vrot.slane %v1155, 4
        %v1158 = vor.u32 %v1157, %v1153
        %v1159 = vrot.slane %v1158, 4
        %v1161 = vshll.u32 %v924, 16
        %v1163 = vrot.slane %v1161, 5
        %v1164 = vsel %vm948, %v1159, %v1163
        %v1166 = vshrl.u32 %v925, 16
        %v1168 = vrot.slane %v1166, 4
        %v1169 = vshll.u32 %v925, 16
        %v1171 = vrot.slane %v1169, 5
        %v1172 = vor.u32 %v1168, %v1171
        %v1173 = vrot.slane %v1172, 4
        %v1175 = vshll.u32 %v926, 16
        %v1177 = vrot.slane %v1175, 5
        %v1178 = vsel %vm948, %v1173, %v1177
        %v1179 = vshrl.u32 %v926, 16
        %v1181 = vrot.slane %v1179, 4
        %v1182 = vor.u32 %v1181, %v1177
        %v1183 = vrot.slane %v1182, 4
        %v1185 = vshll.u32 %v927, 16
        %v1187 = vrot.slane %v1185, 5
        %v1188 = vsel %vm948, %v1183, %v1187
        %v1190 = vshrl.u32 %v928, 16
        %v1192 = vrot.slane %v1190, 4
        %v1193 = vshll.u32 %v928, 16
        %v1195 = vrot.slane %v1193, 5
        %v1196 = vor.u32 %v1192, %v1195
        %v1197 = vrot.slane %v1196, 4
        %v1199 = vshll.u32 %v929, 16
        %v1201 = vrot.slane %v1199, 5
        %v1202 = vsel %vm948, %v1197, %v1201
        %v1203 = vshrl.u32 %v929, 16
        %v1205 = vrot.slane %v1203, 4
        %v1206 = vor.u32 %v1205, %v1201
        %v1207 = vrot.slane %v1206, 4
        %v1209 = vshll.u32 %v930, 16
        %v1211 = vrot.slane %v1209, 5
        %v1212 = vsel %vm948, %v1207, %v1211
        %v1214 = vshrl.u32 %v931, 16
        %v1216 = vrot.slane %v1214, 4
        %v1217 = vshll.u32 %v931, 16
        %v1219 = vrot.slane %v1217, 5
        %v1220 = vor.u32 %v1216, %v1219
        %v1221 = vrot.slane %v1220, 4
        %v1223 = vshll.u32 %v932, 16
        %v1225 = vrot.slane %v1223, 5
        %v1226 = vsel %vm948, %v1221, %v1225
        %v1227 = vshrl.u32 %v932, 16
        %v1229 = vrot.slane %v1227, 4
        %v1230 = vor.u32 %v1229, %v1225
        %v1231 = vrot.slane %v1230, 4
        %v1233 = vshll.u32 %v933, 16
        %v1235 = vrot.slane %v1233, 5
        %v1236 = vsel %vm948, %v1231, %v1235
        %v1238 = vshrl.u32 %v934, 16
        %v1240 = vrot.slane %v1238, 4
        %v1241 = vshll.u32 %v934, 16
        %v1243 = vrot.slane %v1241, 5
        %v1244 = vor.u32 %v1240, %v1243
        %v1245 = vrot.slane %v1244, 4
        %v1247 = vshll.u32 %v935, 16
        %v1249 = vrot.slane %v1247, 5
        %v1250 = vsel %vm948, %v1245, %v1249
        %v1251 = vshrl.u32 %v935, 16
        %v1253 = vrot.slane %v1251, 4
        %v1254 = vor.u32 %v1253, %v1249
        %v1255 = vrot.slane %v1254, 4
        %v1257 = vshll.u32 %v936, 16
        %v1259 = vrot.slane %v1257, 5
        %v1260 = vsel %vm948, %v1255, %v1259
        %v1262 = vshrl.u32 %v937, 16
        %v1264 = vrot.slane %v1262, 4
        %v1265 = vshll.u32 %v937, 16
        %v1267 = vrot.slane %v1265, 5
        %v1268 = vor.u32 %v1264, %v1267
        %v1269 = vrot.slane %v1268, 4
        %v1271 = vshll.u32 %v938, 16
        %v1273 = vrot.slane %v1271, 5
        %v1274 = vsel %vm948, %v1269, %v1273
        %v1275 = vshrl.u32 %v938, 16
        %v1277 = vrot.slane %v1275, 4
        %v1278 = vor.u32 %v1277, %v1273
        %v1279 = vrot.slane %v1278, 4
        %v1281 = vshll.u32 %v939, 16
        %v1283 = vrot.slane %v1281, 5
        %v1284 = vsel %vm948, %v1279, %v1283
        %v1286 = vshrl.u32 %v940, 16
        %v1288 = vrot.slane %v1286, 4
        %v1289 = vshll.u32 %v940, 16
        %v1291 = vrot.slane %v1289, 5
        %v1292 = vor.u32 %v1288, %v1291
        %v1293 = vrot.slane %v1292, 4
        %v1295 = vshll.u32 %v941, 16
        %v1297 = vrot.slane %v1295, 5
        %v1298 = vsel %vm948, %v1293, %v1297
        %v1299 = vshrl.u32 %v941, 16
        %v1301 = vrot.slane %v1299, 4
        %v1302 = vor.u32 %v1301, %v1297
        %v1303 = vrot.slane %v1302, 4
        %v1305 = vshll.u32 %v942, 16
        %v1307 = vrot.slane %v1305, 5
        %v1308 = vsel %vm948, %v1303, %v1307
        %v1310 = vshrl.u32 %v943, 16
        %v1312 = vrot.slane %v1310, 4
        %v1313 = vshll.u32 %v943, 16
        %v1315 = vrot.slane %v1313, 5
        %v1316 = vor.u32 %v1312, %v1315
        %v1317 = vrot.slane %v1316, 4
        %v1319 = vshll.u32 %v944, 16
        %v1321 = vrot.slane %v1319, 5
        %v1322 = vsel %vm948, %v1317, %v1321
        %v1323 = vshrl.u32 %v944, 16
        %v1325 = vrot.slane %v1323, 4
        %v1326 = vor.u32 %v1325, %v1321
        %v1327 = vrot.slane %v1326, 4
        %v1329 = vshll.u32 %v945, 16
        %v1331 = vrot.slane %v1329, 5
        %v1332 = vsel %vm948, %v1327, %v1331
        %v1333 = vunpack.c.l.b16 %v962
        %v1334 = vunpack.c.l.b16 %v972
        %v1335 = vunpack.c.l.b16 %v986
        %v1336 = vunpack.c.l.b16 %v996
        %v1337 = vunpack.c.l.b16 %v1010
        %v1338 = vunpack.c.l.b16 %v1020
        %v1339 = vunpack.c.l.b16 %v1034
        %v1340 = vunpack.c.l.b16 %v1044
        %v1341 = vunpack.c.l.b16 %v1058
        %v1342 = vunpack.c.l.b16 %v1068
        %v1343 = vunpack.c.l.b16 %v1082
        %v1344 = vunpack.c.l.b16 %v1092
        %v1345 = vunpack.c.l.b16 %v1106
        %v1346 = vunpack.c.l.b16 %v1116
        %v1347 = vunpack.c.l.b16 %v1130
        %v1348 = vunpack.c.l.b16 %v1140
        %v1349 = vunpack.c.l.b16 %v1154
        %v1350 = vunpack.c.l.b16 %v1164
        %v1351 = vunpack.c.l.b16 %v1178
        %v1352 = vunpack.c.l.b16 %v1188
        %v1353 = vunpack.c.l.b16 %v1202
        %v1354 = vunpack.c.l.b16 %v1212
        %v1355 = vunpack.c.l.b16 %v1226
        %v1356 = vunpack.c.l.b16 %v1236
        %v1357 = vunpack.c.l.b16 %v1250
        %v1358 = vunpack.c.l.b16 %v1260
        %v1359 = vunpack.c.l.b16 %v1274
        %v1360 = vunpack.c.l.b16 %v1284
        %v1361 = vunpack.c.l.b16 %v1298
        %v1362 = vunpack.c.l.b16 %v1308
        %v1363 = vunpack.c.l.b16 %v1322
        %v1364 = vunpack.c.l.b16 %v1332
        %v1365 = vpack.c.b16 %v1334, %v1333
        %v1366 = vpack.c.b16 %v1336, %v1335
        %v1367 = vpack.c.b16 %v1338, %v1337
        %v1368 = vpack.c.b16 %v1340, %v1339
        %v1369 = vpack.c.b16 %v1342, %v1341
        %v1370 = vpack.c.b16 %v1344, %v1343
        %v1371 = vpack.c.b16 %v1346, %v1345
        %v1372 = vpack.c.b16 %v1348, %v1347
        %v1373 = vpack.c.b16 %v1350, %v1349
        %v1374 = vpack.c.b16 %v1352, %v1351
        %v1375 = vpack.c.b16 %v1354, %v1353
        %v1376 = vpack.c.b16 %v1356, %v1355
        %v1377 = vpack.c.b16 %v1358, %v1357
        %v1378 = vpack.c.b16 %v1360, %v1359
        %v1379 = vpack.c.b16 %v1362, %v1361
        %v1380 = vpack.c.b16 %v1364, %v1363
        %1381 = vrot.lane.b32.xlu0 %v1365, 32
        %v1382 = vpop.permute.xlu0 %1381
        %1383 = vrot.lane.b32.xlu0 %v1366, 32
        %v1384 = vpop.permute.xlu0 %1383
        %1385 = vrot.lane.b32.xlu0 %v1367, 32
        %v1386 = vpop.permute.xlu0 %1385
        %1387 = vrot.lane.b32.xlu0 %v1368, 32
        %v1388 = vpop.permute.xlu0 %1387
        %1389 = vrot.lane.b32.xlu0 %v1369, 32
        %v1390 = vpop.permute.xlu0 %1389
        %1391 = vrot.lane.b32.xlu0 %v1370, 32
        %v1392 = vpop.permute.xlu0 %1391
        %1393 = vrot.lane.b32.xlu0 %v1371, 32
        %v1394 = vpop.permute.xlu0 %1393
        %1395 = vrot.lane.b32.xlu0 %v1372, 32
        %v1396 = vpop.permute.xlu0 %1395
        %1397 = vrot.lane.b32.xlu0 %v1373, 32
        %v1398 = vpop.permute.xlu0 %1397
        %1399 = vrot.lane.b32.xlu0 %v1374, 32
        %v1400 = vpop.permute.xlu0 %1399
        %1401 = vrot.lane.b32.xlu0 %v1375, 32
        %v1402 = vpop.permute.xlu0 %1401
        %1403 = vrot.lane.b32.xlu0 %v1376, 32
        %v1404 = vpop.permute.xlu0 %1403
        %1405 = vrot.lane.b32.xlu0 %v1377, 32
        %v1406 = vpop.permute.xlu0 %1405
        %1407 = vrot.lane.b32.xlu0 %v1378, 32
        %v1408 = vpop.permute.xlu0 %1407
        %1409 = vrot.lane.b32.xlu0 %v1379, 32
        %v1410 = vpop.permute.xlu0 %1409
        %1411 = vrot.lane.b32.xlu0 %v1380, 32
        %v1412 = vpop.permute.xlu0 %1411
        %vm1429 = vcmask 523520
        %1430 = vst.msk [vmem:[#allocation3] sm:$0xff] %vm1429, %v1382
        %1431 = vst.msk [vmem:[#allocation3 + $0x18] sm:$0xff] %vm1429, %v1384
        %1432 = vst.msk [vmem:[#allocation3 + $0x30] sm:$0xff] %vm1429, %v1386
        %1433 = vst.msk [vmem:[#allocation3 + $0x48] sm:$0xff] %vm1429, %v1388
        %1434 = vst.msk [vmem:[#allocation3 + $0x60] sm:$0xff] %vm1429, %v1390
        %1435 = vst.msk [vmem:[#allocation3 + $0x78] sm:$0xff] %vm1429, %v1392
        %1436 = vst.msk [vmem:[#allocation3 + $0x90] sm:$0xff] %vm1429, %v1394
        %1437 = vst.msk [vmem:[#allocation3 + $0xa8] sm:$0xff] %vm1429, %v1396
        %1438 = vst.msk [vmem:[#allocation3 + $0xc0] sm:$0xff] %vm1429, %v1398
        %1439 = vst.msk [vmem:[#allocation3 + $0xd8] sm:$0xff] %vm1429, %v1400
        %1440 = vst.msk [vmem:[#allocation3 + $0xf0] sm:$0xff] %vm1429, %v1402
        %1441 = vst.msk [vmem:[#allocation3 + $0x108] sm:$0xff] %vm1429, %v1404
        %1442 = vst.msk [vmem:[#allocation3 + $0x120] sm:$0xff] %vm1429, %v1406
        %1443 = vst.msk [vmem:[#allocation3 + $0x138] sm:$0xff] %vm1429, %v1408
        %1444 = vst.msk [vmem:[#allocation3 + $0x150] sm:$0xff] %vm1429, %v1410
        %1445 = vst.msk [vmem:[#allocation3 + $0x168] sm:$0xff] %vm1429, %v1412
        %v1446 = vld [vmem:[#allocation2] sm:$0xe]
        %v1447 = vld [vmem:[#allocation2 + $0x4] sm:$0xf]
        %v1448 = vld [vmem:[#allocation2 + $0x8] sm:$0x1]
        %v1449 = vld [vmem:[#allocation2 + $0xc] sm:$0xe]
        %v1450 = vld [vmem:[#allocation2 + $0x10] sm:$0xf]
        %v1451 = vld [vmem:[#allocation2 + $0x14] sm:$0x1]
        %v1452 = vld [vmem:[#allocation2 + $0x18] sm:$0xe]
        %v1453 = vld [vmem:[#allocation2 + $0x1c] sm:$0xf]
        %v1454 = vld [vmem:[#allocation2 + $0x20] sm:$0x1]
        %v1455 = vld [vmem:[#allocation2 + $0x24] sm:$0xe]
        %v1456 = vld [vmem:[#allocation2 + $0x28] sm:$0xf]
        %v1457 = vld [vmem:[#allocation2 + $0x2c] sm:$0x1]
        %v1458 = vld [vmem:[#allocation2 + $0x30] sm:$0xe]
        %v1459 = vld [vmem:[#allocation2 + $0x34] sm:$0xf]
        %v1460 = vld [vmem:[#allocation2 + $0x38] sm:$0x1]
        %v1461 = vld [vmem:[#allocation2 + $0x3c] sm:$0xe]
        %v1462 = vld [vmem:[#allocation2 + $0x40] sm:$0xf]
        %v1463 = vld [vmem:[#allocation2 + $0x44] sm:$0x1]
        %v1464 = vld [vmem:[#allocation2 + $0x48] sm:$0xe]
        %v1465 = vld [vmem:[#allocation2 + $0x4c] sm:$0xf]
        %v1466 = vld [vmem:[#allocation2 + $0x50] sm:$0x1]
        %v1467 = vld [vmem:[#allocation2 + $0x54] sm:$0xe]
        %v1468 = vld [vmem:[#allocation2 + $0x58] sm:$0xf]
        %v1469 = vld [vmem:[#allocation2 + $0x5c] sm:$0x1]
        %v1470 = vld [vmem:[#allocation2 + $0x60] sm:$0xe]
        %v1471 = vld [vmem:[#allocation2 + $0x64] sm:$0xf]
        %v1472 = vld [vmem:[#allocation2 + $0x68] sm:$0x1]
        %v1473 = vld [vmem:[#allocation2 + $0x6c] sm:$0xe]
        %v1474 = vld [vmem:[#allocation2 + $0x70] sm:$0xf]
        %v1475 = vld [vmem:[#allocation2 + $0x74] sm:$0x1]
        %v1476 = vld [vmem:[#allocation2 + $0x78] sm:$0xe]
        %v1477 = vld [vmem:[#allocation2 + $0x7c] sm:$0xf]
        %v1478 = vld [vmem:[#allocation2 + $0x80] sm:$0x1]
        %v1479 = vld [vmem:[#allocation2 + $0x84] sm:$0xe]
        %v1480 = vld [vmem:[#allocation2 + $0x88] sm:$0xf]
        %v1481 = vld [vmem:[#allocation2 + $0x8c] sm:$0x1]
        %v1482 = vld [vmem:[#allocation2 + $0x90] sm:$0xe]
        %v1483 = vld [vmem:[#allocation2 + $0x94] sm:$0xf]
        %v1484 = vld [vmem:[#allocation2 + $0x98] sm:$0x1]
        %v1485 = vld [vmem:[#allocation2 + $0x9c] sm:$0xe]
        %v1486 = vld [vmem:[#allocation2 + $0xa0] sm:$0xf]
        %v1487 = vld [vmem:[#allocation2 + $0xa4] sm:$0x1]
        %v1488 = vld [vmem:[#allocation2 + $0xa8] sm:$0xe]
        %v1489 = vld [vmem:[#allocation2 + $0xac] sm:$0xf]
        %v1490 = vld [vmem:[#allocation2 + $0xb0] sm:$0x1]
        %v1491 = vld [vmem:[#allocation2 + $0xb4] sm:$0xe]
        %v1492 = vld [vmem:[#allocation2 + $0xb8] sm:$0xf]
        %v1493 = vld [vmem:[#allocation2 + $0xbc] sm:$0x1]
        %vm1542 = vcmask 1042432
        %vm1543 = vcmask 1046532
        %vm1544 = vmor %vm1542, %vm1543
        %v1545 = vrot.slane %v1446, 5
        %v1546 = vrot.slane %v1545, 4
        %v1547 = vrot.slane %v1447, 5
        %v1548 = vsel %vm1544, %v1546, %v1547
        %v1549 = vrot.slane %v1547, 4
        %v1550 = vrot.slane %v1448, 5
        %v1551 = vsel %vm1544, %v1549, %v1550
        %v1552 = vrot.slane %v1449, 5
        %v1553 = vrot.slane %v1552, 4
        %v1554 = vrot.slane %v1450, 5
        %v1555 = vsel %vm1544, %v1553, %v1554
        %v1556 = vrot.slane %v1554, 4
        %v1557 = vrot.slane %v1451, 5
        %v1558 = vsel %vm1544, %v1556, %v1557
        %v1559 = vrot.slane %v1452, 5
        %v1560 = vrot.slane %v1559, 4
        %v1561 = vrot.slane %v1453, 5
        %v1562 = vsel %vm1544, %v1560, %v1561
        %v1563 = vrot.slane %v1561, 4
        %v1564 = vrot.slane %v1454, 5
        %v1565 = vsel %vm1544, %v1563, %v1564
        %v1566 = vrot.slane %v1455, 5
        %v1567 = vrot.slane %v1566, 4
        %v1568 = vrot.slane %v1456, 5
        %v1569 = vsel %vm1544, %v1567, %v1568
        %v1570 = vrot.slane %v1568, 4
        %v1571 = vrot.slane %v1457, 5
        %v1572 = vsel %vm1544, %v1570, %v1571
        %v1573 = vrot.slane %v1458, 5
        %v1574 = vrot.slane %v1573, 4
        %v1575 = vrot.slane %v1459, 5
        %v1576 = vsel %vm1544, %v1574, %v1575
        %v1577 = vrot.slane %v1575, 4
        %v1578 = vrot.slane %v1460, 5
        %v1579 = vsel %vm1544, %v1577, %v1578
        %v1580 = vrot.slane %v1461, 5
        %v1581 = vrot.slane %v1580, 4
        %v1582 = vrot.slane %v1462, 5
        %v1583 = vsel %vm1544, %v1581, %v1582
        %v1584 = vrot.slane %v1582, 4
        %v1585 = vrot.slane %v1463, 5
        %v1586 = vsel %vm1544, %v1584, %v1585
        %v1587 = vrot.slane %v1464, 5
        %v1588 = vrot.slane %v1587, 4
        %v1589 = vrot.slane %v1465, 5
        %v1590 = vsel %vm1544, %v1588, %v1589
        %v1591 = vrot.slane %v1589, 4
        %v1592 = vrot.slane %v1466, 5
        %v1593 = vsel %vm1544, %v1591, %v1592
        %v1594 = vrot.slane %v1467, 5
        %v1595 = vrot.slane %v1594, 4
        %v1596 = vrot.slane %v1468, 5
        %v1597 = vsel %vm1544, %v1595, %v1596
        %v1598 = vrot.slane %v1596, 4
        %v1599 = vrot.slane %v1469, 5
        %v1600 = vsel %vm1544, %v1598, %v1599
        %v1601 = vrot.slane %v1470, 5
        %v1602 = vrot.slane %v1601, 4
        %v1603 = vrot.slane %v1471, 5
        %v1604 = vsel %vm1544, %v1602, %v1603
        %v1605 = vrot.slane %v1603, 4
        %v1606 = vrot.slane %v1472, 5
        %v1607 = vsel %vm1544, %v1605, %v1606
        %v1608 = vrot.slane %v1473, 5
        %v1609 = vrot.slane %v1608, 4
        %v1610 = vrot.slane %v1474, 5
        %v1611 = vsel %vm1544, %v1609, %v1610
        %v1612 = vrot.slane %v1610, 4
        %v1613 = vrot.slane %v1475, 5
        %v1614 = vsel %vm1544, %v1612, %v1613
        %v1615 = vrot.slane %v1476, 5
        %v1616 = vrot.slane %v1615, 4
        %v1617 = vrot.slane %v1477, 5
        %v1618 = vsel %vm1544, %v1616, %v1617
        %v1619 = vrot.slane %v1617, 4
        %v1620 = vrot.slane %v1478, 5
        %v1621 = vsel %vm1544, %v1619, %v1620
        %v1622 = vrot.slane %v1479, 5
        %v1623 = vrot.slane %v1622, 4
        %v1624 = vrot.slane %v1480, 5
        %v1625 = vsel %vm1544, %v1623, %v1624
        %v1626 = vrot.slane %v1624, 4
        %v1627 = vrot.slane %v1481, 5
        %v1628 = vsel %vm1544, %v1626, %v1627
        %v1629 = vrot.slane %v1482, 5
        %v1630 = vrot.slane %v1629, 4
        %v1631 = vrot.slane %v1483, 5
        %v1632 = vsel %vm1544, %v1630, %v1631
        %v1633 = vrot.slane %v1631, 4
        %v1634 = vrot.slane %v1484, 5
        %v1635 = vsel %vm1544, %v1633, %v1634
        %v1636 = vrot.slane %v1485, 5
        %v1637 = vrot.slane %v1636, 4
        %v1638 = vrot.slane %v1486, 5
        %v1639 = vsel %vm1544, %v1637, %v1638
        %v1640 = vrot.slane %v1638, 4
        %v1641 = vrot.slane %v1487, 5
        %v1642 = vsel %vm1544, %v1640, %v1641
        %v1643 = vrot.slane %v1488, 5
        %v1644 = vrot.slane %v1643, 4
        %v1645 = vrot.slane %v1489, 5
        %v1646 = vsel %vm1544, %v1644, %v1645
        %v1647 = vrot.slane %v1645, 4
        %v1648 = vrot.slane %v1490, 5
        %v1649 = vsel %vm1544, %v1647, %v1648
        %v1650 = vrot.slane %v1491, 5
        %v1651 = vrot.slane %v1650, 4
        %v1652 = vrot.slane %v1492, 5
        %v1653 = vsel %vm1544, %v1651, %v1652
        %v1654 = vrot.slane %v1652, 4
        %v1655 = vrot.slane %v1493, 5
        %v1656 = vsel %vm1544, %v1654, %v1655
        %v1657 = vunpack.c.l.b16 %v1548
        %v1658 = vunpack.c.l.b16 %v1551
        %v1659 = vunpack.c.l.b16 %v1555
        %v1660 = vunpack.c.l.b16 %v1558
        %v1661 = vunpack.c.l.b16 %v1562
        %v1662 = vunpack.c.l.b16 %v1565
        %v1663 = vunpack.c.l.b16 %v1569
        %v1664 = vunpack.c.l.b16 %v1572
        %v1665 = vunpack.c.l.b16 %v1576
        %v1666 = vunpack.c.l.b16 %v1579
        %v1667 = vunpack.c.l.b16 %v1583
        %v1668 = vunpack.c.l.b16 %v1586
        %v1669 = vunpack.c.l.b16 %v1590
        %v1670 = vunpack.c.l.b16 %v1593
        %v1671 = vunpack.c.l.b16 %v1597
        %v1672 = vunpack.c.l.b16 %v1600
        %v1673 = vunpack.c.l.b16 %v1604
        %v1674 = vunpack.c.l.b16 %v1607
        %v1675 = vunpack.c.l.b16 %v1611
        %v1676 = vunpack.c.l.b16 %v1614
        %v1677 = vunpack.c.l.b16 %v1618
        %v1678 = vunpack.c.l.b16 %v1621
        %v1679 = vunpack.c.l.b16 %v1625
        %v1680 = vunpack.c.l.b16 %v1628
        %v1681 = vunpack.c.l.b16 %v1632
        %v1682 = vunpack.c.l.b16 %v1635
        %v1683 = vunpack.c.l.b16 %v1639
        %v1684 = vunpack.c.l.b16 %v1642
        %v1685 = vunpack.c.l.b16 %v1646
        %v1686 = vunpack.c.l.b16 %v1649
        %v1687 = vunpack.c.l.b16 %v1653
        %v1688 = vunpack.c.l.b16 %v1656
        %v1689 = vpack.c.b16 %v1658, %v1657
        %v1690 = vpack.c.b16 %v1660, %v1659
        %v1691 = vpack.c.b16 %v1662, %v1661
        %v1692 = vpack.c.b16 %v1664, %v1663
        %v1693 = vpack.c.b16 %v1666, %v1665
        %v1694 = vpack.c.b16 %v1668, %v1667
        %v1695 = vpack.c.b16 %v1670, %v1669
        %v1696 = vpack.c.b16 %v1672, %v1671
        %v1697 = vpack.c.b16 %v1674, %v1673
        %v1698 = vpack.c.b16 %v1676, %v1675
        %v1699 = vpack.c.b16 %v1678, %v1677
        %v1700 = vpack.c.b16 %v1680, %v1679
        %v1701 = vpack.c.b16 %v1682, %v1681
        %v1702 = vpack.c.b16 %v1684, %v1683
        %v1703 = vpack.c.b16 %v1686, %v1685
        %v1704 = vpack.c.b16 %v1688, %v1687
        %1705 = vrot.lane.b32.xlu0 %v1689, 64
        %v1706 = vpop.permute.xlu0 %1705
        %1707 = vrot.lane.b32.xlu0 %v1690, 64
        %v1708 = vpop.permute.xlu0 %1707
        %1709 = vrot.lane.b32.xlu0 %v1691, 64
        %v1710 = vpop.permute.xlu0 %1709
        %1711 = vrot.lane.b32.xlu0 %v1692, 64
        %v1712 = vpop.permute.xlu0 %1711
        %1713 = vrot.lane.b32.xlu0 %v1693, 64
        %v1714 = vpop.permute.xlu0 %1713
        %1715 = vrot.lane.b32.xlu0 %v1694, 64
        %v1716 = vpop.permute.xlu0 %1715
        %1717 = vrot.lane.b32.xlu0 %v1695, 64
        %v1718 = vpop.permute.xlu0 %1717
        %1719 = vrot.lane.b32.xlu0 %v1696, 64
        %v1720 = vpop.permute.xlu0 %1719
        %1721 = vrot.lane.b32.xlu0 %v1697, 64
        %v1722 = vpop.permute.xlu0 %1721
        %1723 = vrot.lane.b32.xlu0 %v1698, 64
        %v1724 = vpop.permute.xlu0 %1723
        %1725 = vrot.lane.b32.xlu0 %v1699, 64
        %v1726 = vpop.permute.xlu0 %1725
        %1727 = vrot.lane.b32.xlu0 %v1700, 64
        %v1728 = vpop.permute.xlu0 %1727
        %1729 = vrot.lane.b32.xlu0 %v1701, 64
        %v1730 = vpop.permute.xlu0 %1729
        %1731 = vrot.lane.b32.xlu0 %v1702, 64
        %v1732 = vpop.permute.xlu0 %1731
        %1733 = vrot.lane.b32.xlu0 %v1703, 64
        %v1734 = vpop.permute.xlu0 %1733
        %1735 = vrot.lane.b32.xlu0 %v1704, 64
        %v1736 = vpop.permute.xlu0 %1735
        %vm1753 = vcmask 785920
        %1754 = vst.msk [vmem:[#allocation3] sm:$0xff] %vm1753, %v1706
        %1755 = vst.msk [vmem:[#allocation3 + $0x18] sm:$0xff] %vm1753, %v1708
        %1756 = vst.msk [vmem:[#allocation3 + $0x30] sm:$0xff] %vm1753, %v1710
        %1757 = vst.msk [vmem:[#allocation3 + $0x48] sm:$0xff] %vm1753, %v1712
        %1758 = vst.msk [vmem:[#allocation3 + $0x60] sm:$0xff] %vm1753, %v1714
        %1759 = vst.msk [vmem:[#allocation3 + $0x78] sm:$0xff] %vm1753, %v1716
        %1760 = vst.msk [vmem:[#allocation3 + $0x90] sm:$0xff] %vm1753, %v1718
        %1761 = vst.msk [vmem:[#allocation3 + $0xa8] sm:$0xff] %vm1753, %v1720
        %1762 = vst.msk [vmem:[#allocation3 + $0xc0] sm:$0xff] %vm1753, %v1722
        %1763 = vst.msk [vmem:[#allocation3 + $0xd8] sm:$0xff] %vm1753, %v1724
        %1764 = vst.msk [vmem:[#allocation3 + $0xf0] sm:$0xff] %vm1753, %v1726
        %1765 = vst.msk [vmem:[#allocation3 + $0x108] sm:$0xff] %vm1753, %v1728
        %1766 = vst.msk [vmem:[#allocation3 + $0x120] sm:$0xff] %vm1753, %v1730
        %1767 = vst.msk [vmem:[#allocation3 + $0x138] sm:$0xff] %vm1753, %v1732
        %1768 = vst.msk [vmem:[#allocation3 + $0x150] sm:$0xff] %vm1753, %v1734
        %1769 = vst.msk [vmem:[#allocation3 + $0x168] sm:$0xff] %vm1753, %v1736
        %v1770 = vld [vmem:[%s635] sm:$0xf]
        %v1771 = vld [vmem:[%s635 + $0x4] sm:$0xf]
        %v1772 = vld [vmem:[%s635 + $0xc] sm:$0xf]
        %v1773 = vld [vmem:[%s635 + $0x10] sm:$0xf]
        %v1774 = vld [vmem:[%s635 + $0x18] sm:$0xf]
        %v1775 = vld [vmem:[%s635 + $0x1c] sm:$0xf]
        %v1776 = vld [vmem:[%s635 + $0x24] sm:$0xf]
        %v1777 = vld [vmem:[%s635 + $0x28] sm:$0xf]
        %v1778 = vld [vmem:[%s635 + $0x30] sm:$0xf]
        %v1779 = vld [vmem:[%s635 + $0x34] sm:$0xf]
        %v1780 = vld [vmem:[%s635 + $0x3c] sm:$0xf]
        %v1781 = vld [vmem:[%s635 + $0x40] sm:$0xf]
        %v1782 = vld [vmem:[%s635 + $0x48] sm:$0xf]
        %v1783 = vld [vmem:[%s635 + $0x4c] sm:$0xf]
        %v1784 = vld [vmem:[%s635 + $0x54] sm:$0xf]
        %v1785 = vld [vmem:[%s635 + $0x58] sm:$0xf]
        %v1786 = vld [vmem:[%s635 + $0x60] sm:$0xf]
        %v1787 = vld [vmem:[%s635 + $0x64] sm:$0xf]
        %v1788 = vld [vmem:[%s635 + $0x6c] sm:$0xf]
        %v1789 = vld [vmem:[%s635 + $0x70] sm:$0xf]
        %v1790 = vld [vmem:[%s635 + $0x78] sm:$0xf]
        %v1791 = vld [vmem:[%s635 + $0x7c] sm:$0xf]
        %v1792 = vld [vmem:[%s635 + $0x84] sm:$0xf]
        %v1793 = vld [vmem:[%s635 + $0x88] sm:$0xf]
        %v1794 = vld [vmem:[%s635 + $0x90] sm:$0xf]
        %v1795 = vld [vmem:[%s635 + $0x94] sm:$0xf]
        %v1796 = vld [vmem:[%s635 + $0x9c] sm:$0xf]
        %v1797 = vld [vmem:[%s635 + $0xa0] sm:$0xf]
        %v1798 = vld [vmem:[%s635 + $0xa8] sm:$0xf]
        %v1799 = vld [vmem:[%s635 + $0xac] sm:$0xf]
        %v1800 = vld [vmem:[%s635 + $0xb4] sm:$0xf]
        %v1801 = vld [vmem:[%s635 + $0xb8] sm:$0xf]
        %v1834 = vunpack.c.l.b16 %v1770
        %v1835 = vunpack.c.l.b16 %v1771
        %v1836 = vunpack.c.l.b16 %v1772
        %v1837 = vunpack.c.l.b16 %v1773
        %v1838 = vunpack.c.l.b16 %v1774
        %v1839 = vunpack.c.l.b16 %v1775
        %v1840 = vunpack.c.l.b16 %v1776
        %v1841 = vunpack.c.l.b16 %v1777
        %v1842 = vunpack.c.l.b16 %v1778
        %v1843 = vunpack.c.l.b16 %v1779
        %v1844 = vunpack.c.l.b16 %v1780
        %v1845 = vunpack.c.l.b16 %v1781
        %v1846 = vunpack.c.l.b16 %v1782
        %v1847 = vunpack.c.l.b16 %v1783
        %v1848 = vunpack.c.l.b16 %v1784
        %v1849 = vunpack.c.l.b16 %v1785
        %v1850 = vunpack.c.l.b16 %v1786
        %v1851 = vunpack.c.l.b16 %v1787
        %v1852 = vunpack.c.l.b16 %v1788
        %v1853 = vunpack.c.l.b16 %v1789
        %v1854 = vunpack.c.l.b16 %v1790
        %v1855 = vunpack.c.l.b16 %v1791
        %v1856 = vunpack.c.l.b16 %v1792
        %v1857 = vunpack.c.l.b16 %v1793
        %v1858 = vunpack.c.l.b16 %v1794
        %v1859 = vunpack.c.l.b16 %v1795
        %v1860 = vunpack.c.l.b16 %v1796
        %v1861 = vunpack.c.l.b16 %v1797
        %v1862 = vunpack.c.l.b16 %v1798
        %v1863 = vunpack.c.l.b16 %v1799
        %v1864 = vunpack.c.l.b16 %v1800
        %v1865 = vunpack.c.l.b16 %v1801
        %v1866 = vpack.c.b16 %v1835, %v1834
        %v1867 = vpack.c.b16 %v1837, %v1836
        %v1868 = vpack.c.b16 %v1839, %v1838
        %v1869 = vpack.c.b16 %v1841, %v1840
        %v1870 = vpack.c.b16 %v1843, %v1842
        %v1871 = vpack.c.b16 %v1845, %v1844
        %v1872 = vpack.c.b16 %v1847, %v1846
        %v1873 = vpack.c.b16 %v1849, %v1848
        %v1874 = vpack.c.b16 %v1851, %v1850
        %v1875 = vpack.c.b16 %v1853, %v1852
        %v1876 = vpack.c.b16 %v1855, %v1854
        %v1877 = vpack.c.b16 %v1857, %v1856
        %v1878 = vpack.c.b16 %v1859, %v1858
        %v1879 = vpack.c.b16 %v1861, %v1860
        %v1880 = vpack.c.b16 %v1863, %v1862
        %v1881 = vpack.c.b16 %v1865, %v1864
        %1882 = vrot.lane.b32.xlu0 %v1866, 96
        %v1883 = vpop.permute.xlu0 %1882
        %1884 = vrot.lane.b32.xlu0 %v1867, 96
        %v1885 = vpop.permute.xlu0 %1884
        %1886 = vrot.lane.b32.xlu0 %v1868, 96
        %v1887 = vpop.permute.xlu0 %1886
        %1888 = vrot.lane.b32.xlu0 %v1869, 96
        %v1889 = vpop.permute.xlu0 %1888
        %1890 = vrot.lane.b32.xlu0 %v1870, 96
        %v1891 = vpop.permute.xlu0 %1890
        %1892 = vrot.lane.b32.xlu0 %v1871, 96
        %v1893 = vpop.permute.xlu0 %1892
        %1894 = vrot.lane.b32.xlu0 %v1872, 96
        %v1895 = vpop.permute.xlu0 %1894
        %1896 = vrot.lane.b32.xlu0 %v1873, 96
        %v1897 = vpop.permute.xlu0 %1896
        %1898 = vrot.lane.b32.xlu0 %v1874, 96
        %v1899 = vpop.permute.xlu0 %1898
        %1900 = vrot.lane.b32.xlu0 %v1875, 96
        %v1901 = vpop.permute.xlu0 %1900
        %1902 = vrot.lane.b32.xlu0 %v1876, 96
        %v1903 = vpop.permute.xlu0 %1902
        %1904 = vrot.lane.b32.xlu0 %v1877, 96
        %v1905 = vpop.permute.xlu0 %1904
        %1906 = vrot.lane.b32.xlu0 %v1878, 96
        %v1907 = vpop.permute.xlu0 %1906
        %1908 = vrot.lane.b32.xlu0 %v1879, 96
        %v1909 = vpop.permute.xlu0 %1908
        %1910 = vrot.lane.b32.xlu0 %v1880, 96
        %v1911 = vpop.permute.xlu0 %1910
        %1912 = vrot.lane.b32.xlu0 %v1881, 96
        %v1913 = vpop.permute.xlu0 %1912
        %vm1930 = vcmask 1048320
        %1931 = vst.msk [vmem:[#allocation3] sm:$0xff] %vm1930, %v1883
        %1932 = vst.msk [vmem:[#allocation3 + $0x18] sm:$0xff] %vm1930, %v1885
        %1933 = vst.msk [vmem:[#allocation3 + $0x30] sm:$0xff] %vm1930, %v1887
        %1934 = vst.msk [vmem:[#allocation3 + $0x48] sm:$0xff] %vm1930, %v1889
        %1935 = vst.msk [vmem:[#allocation3 + $0x60] sm:$0xff] %vm1930, %v1891
        %1936 = vst.msk [vmem:[#allocation3 + $0x78] sm:$0xff] %vm1930, %v1893
        %1937 = vst.msk [vmem:[#allocation3 + $0x90] sm:$0xff] %vm1930, %v1895
        %1938 = vst.msk [vmem:[#allocation3 + $0xa8] sm:$0xff] %vm1930, %v1897
        %1939 = vst.msk [vmem:[#allocation3 + $0xc0] sm:$0xff] %vm1930, %v1899
        %1940 = vst.msk [vmem:[#allocation3 + $0xd8] sm:$0xff] %vm1930, %v1901
        %1941 = vst.msk [vmem:[#allocation3 + $0xf0] sm:$0xff] %vm1930, %v1903
        %1942 = vst.msk [vmem:[#allocation3 + $0x108] sm:$0xff] %vm1930, %v1905
        %1943 = vst.msk [vmem:[#allocation3 + $0x120] sm:$0xff] %vm1930, %v1907
        %1944 = vst.msk [vmem:[#allocation3 + $0x138] sm:$0xff] %vm1930, %v1909
        %1945 = vst.msk [vmem:[#allocation3 + $0x150] sm:$0xff] %vm1930, %v1911
        %1946 = vst.msk [vmem:[#allocation3 + $0x168] sm:$0xff] %vm1930, %v1913
        %v1947 = vld [vmem:[%s635] sm:$0xf]
        %v1948 = vld [vmem:[%s635 + $0x4] sm:$0xf]
        %v1949 = vld [vmem:[%s635 + $0x8] sm:$0x1]
        %v1950 = vld [vmem:[%s635 + $0xc] sm:$0xf]
        %v1951 = vld [vmem:[%s635 + $0x10] sm:$0xf]
        %v1952 = vld [vmem:[%s635 + $0x14] sm:$0x1]
        %v1953 = vld [vmem:[%s635 + $0x18] sm:$0xf]
        %v1954 = vld [vmem:[%s635 + $0x1c] sm:$0xf]
        %v1955 = vld [vmem:[%s635 + $0x20] sm:$0x1]
        %v1956 = vld [vmem:[%s635 + $0x24] sm:$0xf]
        %v1957 = vld [vmem:[%s635 + $0x28] sm:$0xf]
        %v1958 = vld [vmem:[%s635 + $0x2c] sm:$0x1]
        %v1959 = vld [vmem:[%s635 + $0x30] sm:$0xf]
        %v1960 = vld [vmem:[%s635 + $0x34] sm:$0xf]
        %v1961 = vld [vmem:[%s635 + $0x38] sm:$0x1]
        %v1962 = vld [vmem:[%s635 + $0x3c] sm:$0xf]
        %v1963 = vld [vmem:[%s635 + $0x40] sm:$0xf]
        %v1964 = vld [vmem:[%s635 + $0x44] sm:$0x1]
        %v1965 = vld [vmem:[%s635 + $0x48] sm:$0xf]
        %v1966 = vld [vmem:[%s635 + $0x4c] sm:$0xf]
        %v1967 = vld [vmem:[%s635 + $0x50] sm:$0x1]
        %v1968 = vld [vmem:[%s635 + $0x54] sm:$0xf]
        %v1969 = vld [vmem:[%s635 + $0x58] sm:$0xf]
        %v1970 = vld [vmem:[%s635 + $0x5c] sm:$0x1]
        %v1971 = vld [vmem:[%s635 + $0x60] sm:$0xf]
        %v1972 = vld [vmem:[%s635 + $0x64] sm:$0xf]
        %v1973 = vld [vmem:[%s635 + $0x68] sm:$0x1]
        %v1974 = vld [vmem:[%s635 + $0x6c] sm:$0xf]
        %v1975 = vld [vmem:[%s635 + $0x70] sm:$0xf]
        %v1976 = vld [vmem:[%s635 + $0x74] sm:$0x1]
        %v1977 = vld [vmem:[%s635 + $0x78] sm:$0xf]
        %v1978 = vld [vmem:[%s635 + $0x7c] sm:$0xf]
        %v1979 = vld [vmem:[%s635 + $0x80] sm:$0x1]
        %v1980 = vld [vmem:[%s635 + $0x84] sm:$0xf]
        %v1981 = vld [vmem:[%s635 + $0x88] sm:$0xf]
        %v1982 = vld [vmem:[%s635 + $0x8c] sm:$0x1]
        %v1983 = vld [vmem:[%s635 + $0x90] sm:$0xf]
        %v1984 = vld [vmem:[%s635 + $0x94] sm:$0xf]
        %v1985 = vld [vmem:[%s635 + $0x98] sm:$0x1]
        %v1986 = vld [vmem:[%s635 + $0x9c] sm:$0xf]
        %v1987 = vld [vmem:[%s635 + $0xa0] sm:$0xf]
        %v1988 = vld [vmem:[%s635 + $0xa4] sm:$0x1]
        %v1989 = vld [vmem:[%s635 + $0xa8] sm:$0xf]
        %v1990 = vld [vmem:[%s635 + $0xac] sm:$0xf]
        %v1991 = vld [vmem:[%s635 + $0xb0] sm:$0x1]
        %v1992 = vld [vmem:[%s635 + $0xb4] sm:$0xf]
        %v1993 = vld [vmem:[%s635 + $0xb8] sm:$0xf]
        %v1994 = vld [vmem:[%s635 + $0xbc] sm:$0x1]
        %v1996 = vshrl.u32 %v1947, 16
        %v1998 = vrot.slane %v1996, 4
        %v1999 = vshll.u32 %v1947, 16
        %v2001 = vrot.slane %v1999, 5
        %v2002 = vor.u32 %v1998, %v2001
        %v2003 = vrot.slane %v2002, 4
        %v2005 = vshll.u32 %v1948, 16
        %v2007 = vrot.slane %v2005, 5
        %v2008 = vsel %vm948, %v2003, %v2007
        %v2009 = vshrl.u32 %v1948, 16
        %v2011 = vrot.slane %v2009, 4
        %v2012 = vor.u32 %v2011, %v2007
        %v2013 = vrot.slane %v2012, 4
        %v2015 = vshll.u32 %v1949, 16
        %v2017 = vrot.slane %v2015, 5
        %v2018 = vsel %vm948, %v2013, %v2017
        %v2020 = vshrl.u32 %v1950, 16
        %v2022 = vrot.slane %v2020, 4
        %v2023 = vshll.u32 %v1950, 16
        %v2025 = vrot.slane %v2023, 5
        %v2026 = vor.u32 %v2022, %v2025
        %v2027 = vrot.slane %v2026, 4
        %v2029 = vshll.u32 %v1951, 16
        %v2031 = vrot.slane %v2029, 5
        %v2032 = vsel %vm948, %v2027, %v2031
        %v2033 = vshrl.u32 %v1951, 16
        %v2035 = vrot.slane %v2033, 4
        %v2036 = vor.u32 %v2035, %v2031
        %v2037 = vrot.slane %v2036, 4
        %v2039 = vshll.u32 %v1952, 16
        %v2041 = vrot.slane %v2039, 5
        %v2042 = vsel %vm948, %v2037, %v2041
        %v2044 = vshrl.u32 %v1953, 16
        %v2046 = vrot.slane %v2044, 4
        %v2047 = vshll.u32 %v1953, 16
        %v2049 = vrot.slane %v2047, 5
        %v2050 = vor.u32 %v2046, %v2049
        %v2051 = vrot.slane %v2050, 4
        %v2053 = vshll.u32 %v1954, 16
        %v2055 = vrot.slane %v2053, 5
        %v2056 = vsel %vm948, %v2051, %v2055
        %v2057 = vshrl.u32 %v1954, 16
        %v2059 = vrot.slane %v2057, 4
        %v2060 = vor.u32 %v2059, %v2055
        %v2061 = vrot.slane %v2060, 4
        %v2063 = vshll.u32 %v1955, 16
        %v2065 = vrot.slane %v2063, 5
        %v2066 = vsel %vm948, %v2061, %v2065
        %v2068 = vshrl.u32 %v1956, 16
        %v2070 = vrot.slane %v2068, 4
        %v2071 = vshll.u32 %v1956, 16
        %v2073 = vrot.slane %v2071, 5
        %v2074 = vor.u32 %v2070, %v2073
        %v2075 = vrot.slane %v2074, 4
        %v2077 = vshll.u32 %v1957, 16
        %v2079 = vrot.slane %v2077, 5
        %v2080 = vsel %vm948, %v2075, %v2079
        %v2081 = vshrl.u32 %v1957, 16
        %v2083 = vrot.slane %v2081, 4
        %v2084 = vor.u32 %v2083, %v2079
        %v2085 = vrot.slane %v2084, 4
        %v2087 = vshll.u32 %v1958, 16
        %v2089 = vrot.slane %v2087, 5
        %v2090 = vsel %vm948, %v2085, %v2089
        %v2092 = vshrl.u32 %v1959, 16
        %v2094 = vrot.slane %v2092, 4
        %v2095 = vshll.u32 %v1959, 16
        %v2097 = vrot.slane %v2095, 5
        %v2098 = vor.u32 %v2094, %v2097
        %v2099 = vrot.slane %v2098, 4
        %v2101 = vshll.u32 %v1960, 16
        %v2103 = vrot.slane %v2101, 5
        %v2104 = vsel %vm948, %v2099, %v2103
        %v2105 = vshrl.u32 %v1960, 16
        %v2107 = vrot.slane %v2105, 4
        %v2108 = vor.u32 %v2107, %v2103
        %v2109 = vrot.slane %v2108, 4
        %v2111 = vshll.u32 %v1961, 16
        %v2113 = vrot.slane %v2111, 5
        %v2114 = vsel %vm948, %v2109, %v2113
        %v2116 = vshrl.u32 %v1962, 16
        %v2118 = vrot.slane %v2116, 4
        %v2119 = vshll.u32 %v1962, 16
        %v2121 = vrot.slane %v2119, 5
        %v2122 = vor.u32 %v2118, %v2121
        %v2123 = vrot.slane %v2122, 4
        %v2125 = vshll.u32 %v1963, 16
        %v2127 = vrot.slane %v2125, 5
        %v2128 = vsel %vm948, %v2123, %v2127
        %v2129 = vshrl.u32 %v1963, 16
        %v2131 = vrot.slane %v2129, 4
        %v2132 = vor.u32 %v2131, %v2127
        %v2133 = vrot.slane %v2132, 4
        %v2135 = vshll.u32 %v1964, 16
        %v2137 = vrot.slane %v2135, 5
        %v2138 = vsel %vm948, %v2133, %v2137
        %v2140 = vshrl.u32 %v1965, 16
        %v2142 = vrot.slane %v2140, 4
        %v2143 = vshll.u32 %v1965, 16
        %v2145 = vrot.slane %v2143, 5
        %v2146 = vor.u32 %v2142, %v2145
        %v2147 = vrot.slane %v2146, 4
        %v2149 = vshll.u32 %v1966, 16
        %v2151 = vrot.slane %v2149, 5
        %v2152 = vsel %vm948, %v2147, %v2151
        %v2153 = vshrl.u32 %v1966, 16
        %v2155 = vrot.slane %v2153, 4
        %v2156 = vor.u32 %v2155, %v2151
        %v2157 = vrot.slane %v2156, 4
        %v2159 = vshll.u32 %v1967, 16
        %v2161 = vrot.slane %v2159, 5
        %v2162 = vsel %vm948, %v2157, %v2161
        %v2164 = vshrl.u32 %v1968, 16
        %v2166 = vrot.slane %v2164, 4
        %v2167 = vshll.u32 %v1968, 16
        %v2169 = vrot.slane %v2167, 5
        %v2170 = vor.u32 %v2166, %v2169
        %v2171 = vrot.slane %v2170, 4
        %v2173 = vshll.u32 %v1969, 16
        %v2175 = vrot.slane %v2173, 5
        %v2176 = vsel %vm948, %v2171, %v2175
        %v2177 = vshrl.u32 %v1969, 16
        %v2179 = vrot.slane %v2177, 4
        %v2180 = vor.u32 %v2179, %v2175
        %v2181 = vrot.slane %v2180, 4
        %v2183 = vshll.u32 %v1970, 16
        %v2185 = vrot.slane %v2183, 5
        %v2186 = vsel %vm948, %v2181, %v2185
        %v2188 = vshrl.u32 %v1971, 16
        %v2190 = vrot.slane %v2188, 4
        %v2191 = vshll.u32 %v1971, 16
        %v2193 = vrot.slane %v2191, 5
        %v2194 = vor.u32 %v2190, %v2193
        %v2195 = vrot.slane %v2194, 4
        %v2197 = vshll.u32 %v1972, 16
        %v2199 = vrot.slane %v2197, 5
        %v2200 = vsel %vm948, %v2195, %v2199
        %v2201 = vshrl.u32 %v1972, 16
        %v2203 = vrot.slane %v2201, 4
        %v2204 = vor.u32 %v2203, %v2199
        %v2205 = vrot.slane %v2204, 4
        %v2207 = vshll.u32 %v1973, 16
        %v2209 = vrot.slane %v2207, 5
        %v2210 = vsel %vm948, %v2205, %v2209
        %v2212 = vshrl.u32 %v1974, 16
        %v2214 = vrot.slane %v2212, 4
        %v2215 = vshll.u32 %v1974, 16
        %v2217 = vrot.slane %v2215, 5
        %v2218 = vor.u32 %v2214, %v2217
        %v2219 = vrot.slane %v2218, 4
        %v2221 = vshll.u32 %v1975, 16
        %v2223 = vrot.slane %v2221, 5
        %v2224 = vsel %vm948, %v2219, %v2223
        %v2225 = vshrl.u32 %v1975, 16
        %v2227 = vrot.slane %v2225, 4
        %v2228 = vor.u32 %v2227, %v2223
        %v2229 = vrot.slane %v2228, 4
        %v2231 = vshll.u32 %v1976, 16
        %v2233 = vrot.slane %v2231, 5
        %v2234 = vsel %vm948, %v2229, %v2233
        %v2236 = vshrl.u32 %v1977, 16
        %v2238 = vrot.slane %v2236, 4
        %v2239 = vshll.u32 %v1977, 16
        %v2241 = vrot.slane %v2239, 5
        %v2242 = vor.u32 %v2238, %v2241
        %v2243 = vrot.slane %v2242, 4
        %v2245 = vshll.u32 %v1978, 16
        %v2247 = vrot.slane %v2245, 5
        %v2248 = vsel %vm948, %v2243, %v2247
        %v2249 = vshrl.u32 %v1978, 16
        %v2251 = vrot.slane %v2249, 4
        %v2252 = vor.u32 %v2251, %v2247
        %v2253 = vrot.slane %v2252, 4
        %v2255 = vshll.u32 %v1979, 16
        %v2257 = vrot.slane %v2255, 5
        %v2258 = vsel %vm948, %v2253, %v2257
        %v2260 = vshrl.u32 %v1980, 16
        %v2262 = vrot.slane %v2260, 4
        %v2263 = vshll.u32 %v1980, 16
        %v2265 = vrot.slane %v2263, 5
        %v2266 = vor.u32 %v2262, %v2265
        %v2267 = vrot.slane %v2266, 4
        %v2269 = vshll.u32 %v1981, 16
        %v2271 = vrot.slane %v2269, 5
        %v2272 = vsel %vm948, %v2267, %v2271
        %v2273 = vshrl.u32 %v1981, 16
        %v2275 = vrot.slane %v2273, 4
        %v2276 = vor.u32 %v2275, %v2271
        %v2277 = vrot.slane %v2276, 4
        %v2279 = vshll.u32 %v1982, 16
        %v2281 = vrot.slane %v2279, 5
        %v2282 = vsel %vm948, %v2277, %v2281
        %v2284 = vshrl.u32 %v1983, 16
        %v2286 = vrot.slane %v2284, 4
        %v2287 = vshll.u32 %v1983, 16
        %v2289 = vrot.slane %v2287, 5
        %v2290 = vor.u32 %v2286, %v2289
        %v2291 = vrot.slane %v2290, 4
        %v2293 = vshll.u32 %v1984, 16
        %v2295 = vrot.slane %v2293, 5
        %v2296 = vsel %vm948, %v2291, %v2295
        %v2297 = vshrl.u32 %v1984, 16
        %v2299 = vrot.slane %v2297, 4
        %v2300 = vor.u32 %v2299, %v2295
        %v2301 = vrot.slane %v2300, 4
        %v2303 = vshll.u32 %v1985, 16
        %v2305 = vrot.slane %v2303, 5
        %v2306 = vsel %vm948, %v2301, %v2305
        %v2308 = vshrl.u32 %v1986, 16
        %v2310 = vrot.slane %v2308, 4
        %v2311 = vshll.u32 %v1986, 16
        %v2313 = vrot.slane %v2311, 5
        %v2314 = vor.u32 %v2310, %v2313
        %v2315 = vrot.slane %v2314, 4
        %v2317 = vshll.u32 %v1987, 16
        %v2319 = vrot.slane %v2317, 5
        %v2320 = vsel %vm948, %v2315, %v2319
        %v2321 = vshrl.u32 %v1987, 16
        %v2323 = vrot.slane %v2321, 4
        %v2324 = vor.u32 %v2323, %v2319
        %v2325 = vrot.slane %v2324, 4
        %v2327 = vshll.u32 %v1988, 16
        %v2329 = vrot.slane %v2327, 5
        %v2330 = vsel %vm948, %v2325, %v2329
        %v2332 = vshrl.u32 %v1989, 16
        %v2334 = vrot.slane %v2332, 4
        %v2335 = vshll.u32 %v1989, 16
        %v2337 = vrot.slane %v2335, 5
        %v2338 = vor.u32 %v2334, %v2337
        %v2339 = vrot.slane %v2338, 4
        %v2341 = vshll.u32 %v1990, 16
        %v2343 = vrot.slane %v2341, 5
        %v2344 = vsel %vm948, %v2339, %v2343
        %v2345 = vshrl.u32 %v1990, 16
        %v2347 = vrot.slane %v2345, 4
        %v2348 = vor.u32 %v2347, %v2343
        %v2349 = vrot.slane %v2348, 4
        %v2351 = vshll.u32 %v1991, 16
        %v2353 = vrot.slane %v2351, 5
        %v2354 = vsel %vm948, %v2349, %v2353
        %v2356 = vshrl.u32 %v1992, 16
        %v2358 = vrot.slane %v2356, 4
        %v2359 = vshll.u32 %v1992, 16
        %v2361 = vrot.slane %v2359, 5
        %v2362 = vor.u32 %v2358, %v2361
        %v2363 = vrot.slane %v2362, 4
        %v2365 = vshll.u32 %v1993, 16
        %v2367 = vrot.slane %v2365, 5
        %v2368 = vsel %vm948, %v2363, %v2367
        %v2369 = vshrl.u32 %v1993, 16
        %v2371 = vrot.slane %v2369, 4
        %v2372 = vor.u32 %v2371, %v2367
        %v2373 = vrot.slane %v2372, 4
        %v2375 = vshll.u32 %v1994, 16
        %v2377 = vrot.slane %v2375, 5
        %v2378 = vsel %vm948, %v2373, %v2377
        %v2379 = vunpack.c.l.b16 %v2008
        %v2380 = vunpack.c.l.b16 %v2018
        %v2381 = vunpack.c.l.b16 %v2032
        %v2382 = vunpack.c.l.b16 %v2042
        %v2383 = vunpack.c.l.b16 %v2056
        %v2384 = vunpack.c.l.b16 %v2066
        %v2385 = vunpack.c.l.b16 %v2080
        %v2386 = vunpack.c.l.b16 %v2090
        %v2387 = vunpack.c.l.b16 %v2104
        %v2388 = vunpack.c.l.b16 %v2114
        %v2389 = vunpack.c.l.b16 %v2128
        %v2390 = vunpack.c.l.b16 %v2138
        %v2391 = vunpack.c.l.b16 %v2152
        %v2392 = vunpack.c.l.b16 %v2162
        %v2393 = vunpack.c.l.b16 %v2176
        %v2394 = vunpack.c.l.b16 %v2186
        %v2395 = vunpack.c.l.b16 %v2200
        %v2396 = vunpack.c.l.b16 %v2210
        %v2397 = vunpack.c.l.b16 %v2224
        %v2398 = vunpack.c.l.b16 %v2234
        %v2399 = vunpack.c.l.b16 %v2248
        %v2400 = vunpack.c.l.b16 %v2258
        %v2401 = vunpack.c.l.b16 %v2272
        %v2402 = vunpack.c.l.b16 %v2282
        %v2403 = vunpack.c.l.b16 %v2296
        %v2404 = vunpack.c.l.b16 %v2306
        %v2405 = vunpack.c.l.b16 %v2320
        %v2406 = vunpack.c.l.b16 %v2330
        %v2407 = vunpack.c.l.b16 %v2344
        %v2408 = vunpack.c.l.b16 %v2354
        %v2409 = vunpack.c.l.b16 %v2368
        %v2410 = vunpack.c.l.b16 %v2378
        %v2411 = vpack.c.b16 %v2380, %v2379
        %v2412 = vpack.c.b16 %v2382, %v2381
        %v2413 = vpack.c.b16 %v2384, %v2383
        %v2414 = vpack.c.b16 %v2386, %v2385
        %v2415 = vpack.c.b16 %v2388, %v2387
        %v2416 = vpack.c.b16 %v2390, %v2389
        %v2417 = vpack.c.b16 %v2392, %v2391
        %v2418 = vpack.c.b16 %v2394, %v2393
        %v2419 = vpack.c.b16 %v2396, %v2395
        %v2420 = vpack.c.b16 %v2398, %v2397
        %v2421 = vpack.c.b16 %v2400, %v2399
        %v2422 = vpack.c.b16 %v2402, %v2401
        %v2423 = vpack.c.b16 %v2404, %v2403
        %v2424 = vpack.c.b16 %v2406, %v2405
        %v2425 = vpack.c.b16 %v2408, %v2407
        %v2426 = vpack.c.b16 %v2410, %v2409
        %2443 = vst.msk [vmem:[#allocation3 + $0x8] sm:$0xff] %vm881, %v2411
        %2444 = vst.msk [vmem:[#allocation3 + $0x20] sm:$0xff] %vm881, %v2412
        %2445 = vst.msk [vmem:[#allocation3 + $0x38] sm:$0xff] %vm881, %v2413
        %2446 = vst.msk [vmem:[#allocation3 + $0x50] sm:$0xff] %vm881, %v2414
        %2447 = vst.msk [vmem:[#allocation3 + $0x68] sm:$0xff] %vm881, %v2415
        %2448 = vst.msk [vmem:[#allocation3 + $0x80] sm:$0xff] %vm881, %v2416
        %2449 = vst.msk [vmem:[#allocation3 + $0x98] sm:$0xff] %vm881, %v2417
        %2450 = vst.msk [vmem:[#allocation3 + $0xb0] sm:$0xff] %vm881, %v2418
        %2451 = vst.msk [vmem:[#allocation3 + $0xc8] sm:$0xff] %vm881, %v2419
        %2452 = vst.msk [vmem:[#allocation3 + $0xe0] sm:$0xff] %vm881, %v2420
        %2453 = vst.msk [vmem:[#allocation3 + $0xf8] sm:$0xff] %vm881, %v2421
        %2454 = vst.msk [vmem:[#allocation3 + $0x110] sm:$0xff] %vm881, %v2422
        %2455 = vst.msk [vmem:[#allocation3 + $0x128] sm:$0xff] %vm881, %v2423
        %2456 = vst.msk [vmem:[#allocation3 + $0x140] sm:$0xff] %vm881, %v2424
        %2457 = vst.msk [vmem:[#allocation3 + $0x158] sm:$0xff] %vm881, %v2425
        %2458 = vst.msk [vmem:[#allocation3 + $0x170] sm:$0xff] %vm881, %v2426
        %v2459 = vld [vmem:[%s635] sm:$0xe]
        %v2460 = vld [vmem:[%s635 + $0x4] sm:$0xf]
        %v2461 = vld [vmem:[%s635 + $0x8] sm:$0x1]
        %v2462 = vld [vmem:[%s635 + $0xc] sm:$0xe]
        %v2463 = vld [vmem:[%s635 + $0x10] sm:$0xf]
        %v2464 = vld [vmem:[%s635 + $0x14] sm:$0x1]
        %v2465 = vld [vmem:[%s635 + $0x18] sm:$0xe]
        %v2466 = vld [vmem:[%s635 + $0x1c] sm:$0xf]
        %v2467 = vld [vmem:[%s635 + $0x20] sm:$0x1]
        %v2468 = vld [vmem:[%s635 + $0x24] sm:$0xe]
        %v2469 = vld [vmem:[%s635 + $0x28] sm:$0xf]
        %v2470 = vld [vmem:[%s635 + $0x2c] sm:$0x1]
        %v2471 = vld [vmem:[%s635 + $0x30] sm:$0xe]
        %v2472 = vld [vmem:[%s635 + $0x34] sm:$0xf]
        %v2473 = vld [vmem:[%s635 + $0x38] sm:$0x1]
        %v2474 = vld [vmem:[%s635 + $0x3c] sm:$0xe]
        %v2475 = vld [vmem:[%s635 + $0x40] sm:$0xf]
        %v2476 = vld [vmem:[%s635 + $0x44] sm:$0x1]
        %v2477 = vld [vmem:[%s635 + $0x48] sm:$0xe]
        %v2478 = vld [vmem:[%s635 + $0x4c] sm:$0xf]
        %v2479 = vld [vmem:[%s635 + $0x50] sm:$0x1]
        %v2480 = vld [vmem:[%s635 + $0x54] sm:$0xe]
        %v2481 = vld [vmem:[%s635 + $0x58] sm:$0xf]
        %v2482 = vld [vmem:[%s635 + $0x5c] sm:$0x1]
        %v2483 = vld [vmem:[%s635 + $0x60] sm:$0xe]
        %v2484 = vld [vmem:[%s635 + $0x64] sm:$0xf]
        %v2485 = vld [vmem:[%s635 + $0x68] sm:$0x1]
        %v2486 = vld [vmem:[%s635 + $0x6c] sm:$0xe]
        %v2487 = vld [vmem:[%s635 + $0x70] sm:$0xf]
        %v2488 = vld [vmem:[%s635 + $0x74] sm:$0x1]
        %v2489 = vld [vmem:[%s635 + $0x78] sm:$0xe]
        %v2490 = vld [vmem:[%s635 + $0x7c] sm:$0xf]
        %v2491 = vld [vmem:[%s635 + $0x80] sm:$0x1]
        %v2492 = vld [vmem:[%s635 + $0x84] sm:$0xe]
        %v2493 = vld [vmem:[%s635 + $0x88] sm:$0xf]
        %v2494 = vld [vmem:[%s635 + $0x8c] sm:$0x1]
        %v2495 = vld [vmem:[%s635 + $0x90] sm:$0xe]
        %v2496 = vld [vmem:[%s635 + $0x94] sm:$0xf]
        %v2497 = vld [vmem:[%s635 + $0x98] sm:$0x1]
        %v2498 = vld [vmem:[%s635 + $0x9c] sm:$0xe]
        %v2499 = vld [vmem:[%s635 + $0xa0] sm:$0xf]
        %v2500 = vld [vmem:[%s635 + $0xa4] sm:$0x1]
        %v2501 = vld [vmem:[%s635 + $0xa8] sm:$0xe]
        %v2502 = vld [vmem:[%s635 + $0xac] sm:$0xf]
        %v2503 = vld [vmem:[%s635 + $0xb0] sm:$0x1]
        %v2504 = vld [vmem:[%s635 + $0xb4] sm:$0xe]
        %v2505 = vld [vmem:[%s635 + $0xb8] sm:$0xf]
        %v2506 = vld [vmem:[%s635 + $0xbc] sm:$0x1]
        %v2555 = vrot.slane %v2459, 5
        %v2556 = vrot.slane %v2555, 4
        %v2557 = vrot.slane %v2460, 5
        %v2558 = vsel %vm1544, %v2556, %v2557
        %v2559 = vrot.slane %v2557, 4
        %v2560 = vrot.slane %v2461, 5
        %v2561 = vsel %vm1544, %v2559, %v2560
        %v2562 = vrot.slane %v2462, 5
        %v2563 = vrot.slane %v2562, 4
        %v2564 = vrot.slane %v2463, 5
        %v2565 = vsel %vm1544, %v2563, %v2564
        %v2566 = vrot.slane %v2564, 4
        %v2567 = vrot.slane %v2464, 5
        %v2568 = vsel %vm1544, %v2566, %v2567
        %v2569 = vrot.slane %v2465, 5
        %v2570 = vrot.slane %v2569, 4
        %v2571 = vrot.slane %v2466, 5
        %v2572 = vsel %vm1544, %v2570, %v2571
        %v2573 = vrot.slane %v2571, 4
        %v2574 = vrot.slane %v2467, 5
        %v2575 = vsel %vm1544, %v2573, %v2574
        %v2576 = vrot.slane %v2468, 5
        %v2577 = vrot.slane %v2576, 4
        %v2578 = vrot.slane %v2469, 5
        %v2579 = vsel %vm1544, %v2577, %v2578
        %v2580 = vrot.slane %v2578, 4
        %v2581 = vrot.slane %v2470, 5
        %v2582 = vsel %vm1544, %v2580, %v2581
        %v2583 = vrot.slane %v2471, 5
        %v2584 = vrot.slane %v2583, 4
        %v2585 = vrot.slane %v2472, 5
        %v2586 = vsel %vm1544, %v2584, %v2585
        %v2587 = vrot.slane %v2585, 4
        %v2588 = vrot.slane %v2473, 5
        %v2589 = vsel %vm1544, %v2587, %v2588
        %v2590 = vrot.slane %v2474, 5
        %v2591 = vrot.slane %v2590, 4
        %v2592 = vrot.slane %v2475, 5
        %v2593 = vsel %vm1544, %v2591, %v2592
        %v2594 = vrot.slane %v2592, 4
        %v2595 = vrot.slane %v2476, 5
        %v2596 = vsel %vm1544, %v2594, %v2595
        %v2597 = vrot.slane %v2477, 5
        %v2598 = vrot.slane %v2597, 4
        %v2599 = vrot.slane %v2478, 5
        %v2600 = vsel %vm1544, %v2598, %v2599
        %v2601 = vrot.slane %v2599, 4
        %v2602 = vrot.slane %v2479, 5
        %v2603 = vsel %vm1544, %v2601, %v2602
        %v2604 = vrot.slane %v2480, 5
        %v2605 = vrot.slane %v2604, 4
        %v2606 = vrot.slane %v2481, 5
        %v2607 = vsel %vm1544, %v2605, %v2606
        %v2608 = vrot.slane %v2606, 4
        %v2609 = vrot.slane %v2482, 5
        %v2610 = vsel %vm1544, %v2608, %v2609
        %v2611 = vrot.slane %v2483, 5
        %v2612 = vrot.slane %v2611, 4
        %v2613 = vrot.slane %v2484, 5
        %v2614 = vsel %vm1544, %v2612, %v2613
        %v2615 = vrot.slane %v2613, 4
        %v2616 = vrot.slane %v2485, 5
        %v2617 = vsel %vm1544, %v2615, %v2616
        %v2618 = vrot.slane %v2486, 5
        %v2619 = vrot.slane %v2618, 4
        %v2620 = vrot.slane %v2487, 5
        %v2621 = vsel %vm1544, %v2619, %v2620
        %v2622 = vrot.slane %v2620, 4
        %v2623 = vrot.slane %v2488, 5
        %v2624 = vsel %vm1544, %v2622, %v2623
        %v2625 = vrot.slane %v2489, 5
        %v2626 = vrot.slane %v2625, 4
        %v2627 = vrot.slane %v2490, 5
        %v2628 = vsel %vm1544, %v2626, %v2627
        %v2629 = vrot.slane %v2627, 4
        %v2630 = vrot.slane %v2491, 5
        %v2631 = vsel %vm1544, %v2629, %v2630
        %v2632 = vrot.slane %v2492, 5
        %v2633 = vrot.slane %v2632, 4
        %v2634 = vrot.slane %v2493, 5
        %v2635 = vsel %vm1544, %v2633, %v2634
        %v2636 = vrot.slane %v2634, 4
        %v2637 = vrot.slane %v2494, 5
        %v2638 = vsel %vm1544, %v2636, %v2637
        %v2639 = vrot.slane %v2495, 5
        %v2640 = vrot.slane %v2639, 4
        %v2641 = vrot.slane %v2496, 5
        %v2642 = vsel %vm1544, %v2640, %v2641
        %v2643 = vrot.slane %v2641, 4
        %v2644 = vrot.slane %v2497, 5
        %v2645 = vsel %vm1544, %v2643, %v2644
        %v2646 = vrot.slane %v2498, 5
        %v2647 = vrot.slane %v2646, 4
        %v2648 = vrot.slane %v2499, 5
        %v2649 = vsel %vm1544, %v2647, %v2648
        %v2650 = vrot.slane %v2648, 4
        %v2651 = vrot.slane %v2500, 5
        %v2652 = vsel %vm1544, %v2650, %v2651
        %v2653 = vrot.slane %v2501, 5
        %v2654 = vrot.slane %v2653, 4
        %v2655 = vrot.slane %v2502, 5
        %v2656 = vsel %vm1544, %v2654, %v2655
        %v2657 = vrot.slane %v2655, 4
        %v2658 = vrot.slane %v2503, 5
        %v2659 = vsel %vm1544, %v2657, %v2658
        %v2660 = vrot.slane %v2504, 5
        %v2661 = vrot.slane %v2660, 4
        %v2662 = vrot.slane %v2505, 5
        %v2663 = vsel %vm1544, %v2661, %v2662
        %v2664 = vrot.slane %v2662, 4
        %v2665 = vrot.slane %v2506, 5
        %v2666 = vsel %vm1544, %v2664, %v2665
        %v2667 = vunpack.c.l.b16 %v2558
        %v2668 = vunpack.c.l.b16 %v2561
        %v2669 = vunpack.c.l.b16 %v2565
        %v2670 = vunpack.c.l.b16 %v2568
        %v2671 = vunpack.c.l.b16 %v2572
        %v2672 = vunpack.c.l.b16 %v2575
        %v2673 = vunpack.c.l.b16 %v2579
        %v2674 = vunpack.c.l.b16 %v2582
        %v2675 = vunpack.c.l.b16 %v2586
        %v2676 = vunpack.c.l.b16 %v2589
        %v2677 = vunpack.c.l.b16 %v2593
        %v2678 = vunpack.c.l.b16 %v2596
        %v2679 = vunpack.c.l.b16 %v2600
        %v2680 = vunpack.c.l.b16 %v2603
        %v2681 = vunpack.c.l.b16 %v2607
        %v2682 = vunpack.c.l.b16 %v2610
        %v2683 = vunpack.c.l.b16 %v2614
        %v2684 = vunpack.c.l.b16 %v2617
        %v2685 = vunpack.c.l.b16 %v2621
        %v2686 = vunpack.c.l.b16 %v2624
        %v2687 = vunpack.c.l.b16 %v2628
        %v2688 = vunpack.c.l.b16 %v2631
        %v2689 = vunpack.c.l.b16 %v2635
        %v2690 = vunpack.c.l.b16 %v2638
        %v2691 = vunpack.c.l.b16 %v2642
        %v2692 = vunpack.c.l.b16 %v2645
        %v2693 = vunpack.c.l.b16 %v2649
        %v2694 = vunpack.c.l.b16 %v2652
        %v2695 = vunpack.c.l.b16 %v2656
        %v2696 = vunpack.c.l.b16 %v2659
        %v2697 = vunpack.c.l.b16 %v2663
        %v2698 = vunpack.c.l.b16 %v2666
        %v2699 = vpack.c.b16 %v2668, %v2667
        %v2700 = vpack.c.b16 %v2670, %v2669
        %v2701 = vpack.c.b16 %v2672, %v2671
        %v2702 = vpack.c.b16 %v2674, %v2673
        %v2703 = vpack.c.b16 %v2676, %v2675
        %v2704 = vpack.c.b16 %v2678, %v2677
        %v2705 = vpack.c.b16 %v2680, %v2679
        %v2706 = vpack.c.b16 %v2682, %v2681
        %v2707 = vpack.c.b16 %v2684, %v2683
        %v2708 = vpack.c.b16 %v2686, %v2685
        %v2709 = vpack.c.b16 %v2688, %v2687
        %v2710 = vpack.c.b16 %v2690, %v2689
        %v2711 = vpack.c.b16 %v2692, %v2691
        %v2712 = vpack.c.b16 %v2694, %v2693
        %v2713 = vpack.c.b16 %v2696, %v2695
        %v2714 = vpack.c.b16 %v2698, %v2697
        %2715 = vrot.lane.b32.xlu0 %v2699, 32
        %v2716 = vpop.permute.xlu0 %2715
        %2717 = vrot.lane.b32.xlu0 %v2700, 32
        %v2718 = vpop.permute.xlu0 %2717
        %2719 = vrot.lane.b32.xlu0 %v2701, 32
        %v2720 = vpop.permute.xlu0 %2719
        %2721 = vrot.lane.b32.xlu0 %v2702, 32
        %v2722 = vpop.permute.xlu0 %2721
        %2723 = vrot.lane.b32.xlu0 %v2703, 32
        %v2724 = vpop.permute.xlu0 %2723
        %2725 = vrot.lane.b32.xlu0 %v2704, 32
        %v2726 = vpop.permute.xlu0 %2725
        %2727 = vrot.lane.b32.xlu0 %v2705, 32
        %v2728 = vpop.permute.xlu0 %2727
        %2729 = vrot.lane.b32.xlu0 %v2706, 32
        %v2730 = vpop.permute.xlu0 %2729
        %2731 = vrot.lane.b32.xlu0 %v2707, 32
        %v2732 = vpop.permute.xlu0 %2731
        %2733 = vrot.lane.b32.xlu0 %v2708, 32
        %v2734 = vpop.permute.xlu0 %2733
        %2735 = vrot.lane.b32.xlu0 %v2709, 32
        %v2736 = vpop.permute.xlu0 %2735
        %2737 = vrot.lane.b32.xlu0 %v2710, 32
        %v2738 = vpop.permute.xlu0 %2737
        %2739 = vrot.lane.b32.xlu0 %v2711, 32
        %v2740 = vpop.permute.xlu0 %2739
        %2741 = vrot.lane.b32.xlu0 %v2712, 32
        %v2742 = vpop.permute.xlu0 %2741
        %2743 = vrot.lane.b32.xlu0 %v2713, 32
        %v2744 = vpop.permute.xlu0 %2743
        %2745 = vrot.lane.b32.xlu0 %v2714, 32
        %v2746 = vpop.permute.xlu0 %2745
        %2763 = vst.msk [vmem:[#allocation3 + $0x8] sm:$0xff] %vm1429, %v2716
        %2764 = vst.msk [vmem:[#allocation3 + $0x20] sm:$0xff] %vm1429, %v2718
        %2765 = vst.msk [vmem:[#allocation3 + $0x38] sm:$0xff] %vm1429, %v2720
        %2766 = vst.msk [vmem:[#allocation3 + $0x50] sm:$0xff] %vm1429, %v2722
        %2767 = vst.msk [vmem:[#allocation3 + $0x68] sm:$0xff] %vm1429, %v2724
        %2768 = vst.msk [vmem:[#allocation3 + $0x80] sm:$0xff] %vm1429, %v2726
        %2769 = vst.msk [vmem:[#allocation3 + $0x98] sm:$0xff] %vm1429, %v2728
        %2770 = vst.msk [vmem:[#allocation3 + $0xb0] sm:$0xff] %vm1429, %v2730
        %2771 = vst.msk [vmem:[#allocation3 + $0xc8] sm:$0xff] %vm1429, %v2732
        %2772 = vst.msk [vmem:[#allocation3 + $0xe0] sm:$0xff] %vm1429, %v2734
        %2773 = vst.msk [vmem:[#allocation3 + $0xf8] sm:$0xff] %vm1429, %v2736
        %2774 = vst.msk [vmem:[#allocation3 + $0x110] sm:$0xff] %vm1429, %v2738
        %2775 = vst.msk [vmem:[#allocation3 + $0x128] sm:$0xff] %vm1429, %v2740
        %2776 = vst.msk [vmem:[#allocation3 + $0x140] sm:$0xff] %vm1429, %v2742
        %2777 = vst.msk [vmem:[#allocation3 + $0x158] sm:$0xff] %vm1429, %v2744
        %2778 = vst.msk [vmem:[#allocation3 + $0x170] sm:$0xff] %vm1429, %v2746
        %s2779 = scalar_lea.vmem [#allocation2], 24
        %v2780 = vld [vmem:[%s2779] sm:$0xf]
        %v2781 = vld [vmem:[%s2779 + $0x4] sm:$0xf]
        %v2782 = vld [vmem:[%s2779 + $0xc] sm:$0xf]
        %v2783 = vld [vmem:[%s2779 + $0x10] sm:$0xf]
        %v2784 = vld [vmem:[%s2779 + $0x18] sm:$0xf]
        %v2785 = vld [vmem:[%s2779 + $0x1c] sm:$0xf]
        %v2786 = vld [vmem:[%s2779 + $0x24] sm:$0xf]
        %v2787 = vld [vmem:[%s2779 + $0x28] sm:$0xf]
        %v2788 = vld [vmem:[%s2779 + $0x30] sm:$0xf]
        %v2789 = vld [vmem:[%s2779 + $0x34] sm:$0xf]
        %v2790 = vld [vmem:[%s2779 + $0x3c] sm:$0xf]
        %v2791 = vld [vmem:[%s2779 + $0x40] sm:$0xf]
        %v2792 = vld [vmem:[%s2779 + $0x48] sm:$0xf]
        %v2793 = vld [vmem:[%s2779 + $0x4c] sm:$0xf]
        %v2794 = vld [vmem:[%s2779 + $0x54] sm:$0xf]
        %v2795 = vld [vmem:[%s2779 + $0x58] sm:$0xf]
        %v2796 = vld [vmem:[%s2779 + $0x60] sm:$0xf]
        %v2797 = vld [vmem:[%s2779 + $0x64] sm:$0xf]
        %v2798 = vld [vmem:[%s2779 + $0x6c] sm:$0xf]
        %v2799 = vld [vmem:[%s2779 + $0x70] sm:$0xf]
        %v2800 = vld [vmem:[%s2779 + $0x78] sm:$0xf]
        %v2801 = vld [vmem:[%s2779 + $0x7c] sm:$0xf]
        %v2802 = vld [vmem:[%s2779 + $0x84] sm:$0xf]
        %v2803 = vld [vmem:[%s2779 + $0x88] sm:$0xf]
        %v2804 = vld [vmem:[%s2779 + $0x90] sm:$0xf]
        %v2805 = vld [vmem:[%s2779 + $0x94] sm:$0xf]
        %v2806 = vld [vmem:[%s2779 + $0x9c] sm:$0xf]
        %v2807 = vld [vmem:[%s2779 + $0xa0] sm:$0xf]
        %v2808 = vld [vmem:[%s2779 + $0xa8] sm:$0xf]
        %v2809 = vld [vmem:[%s2779 + $0xac] sm:$0xf]
        %v2810 = vld [vmem:[%s2779 + $0xb4] sm:$0xf]
        %v2811 = vld [vmem:[%s2779 + $0xb8] sm:$0xf]
        %v2844 = vunpack.c.l.b16 %v2780
        %v2845 = vunpack.c.l.b16 %v2781
        %v2846 = vunpack.c.l.b16 %v2782
        %v2847 = vunpack.c.l.b16 %v2783
        %v2848 = vunpack.c.l.b16 %v2784
        %v2849 = vunpack.c.l.b16 %v2785
        %v2850 = vunpack.c.l.b16 %v2786
        %v2851 = vunpack.c.l.b16 %v2787
        %v2852 = vunpack.c.l.b16 %v2788
        %v2853 = vunpack.c.l.b16 %v2789
        %v2854 = vunpack.c.l.b16 %v2790
        %v2855 = vunpack.c.l.b16 %v2791
        %v2856 = vunpack.c.l.b16 %v2792
        %v2857 = vunpack.c.l.b16 %v2793
        %v2858 = vunpack.c.l.b16 %v2794
        %v2859 = vunpack.c.l.b16 %v2795
        %v2860 = vunpack.c.l.b16 %v2796
        %v2861 = vunpack.c.l.b16 %v2797
        %v2862 = vunpack.c.l.b16 %v2798
        %v2863 = vunpack.c.l.b16 %v2799
        %v2864 = vunpack.c.l.b16 %v2800
        %v2865 = vunpack.c.l.b16 %v2801
        %v2866 = vunpack.c.l.b16 %v2802
        %v2867 = vunpack.c.l.b16 %v2803
        %v2868 = vunpack.c.l.b16 %v2804
        %v2869 = vunpack.c.l.b16 %v2805
        %v2870 = vunpack.c.l.b16 %v2806
        %v2871 = vunpack.c.l.b16 %v2807
        %v2872 = vunpack.c.l.b16 %v2808
        %v2873 = vunpack.c.l.b16 %v2809
        %v2874 = vunpack.c.l.b16 %v2810
        %v2875 = vunpack.c.l.b16 %v2811
        %v2876 = vpack.c.b16 %v2845, %v2844
        %v2877 = vpack.c.b16 %v2847, %v2846
        %v2878 = vpack.c.b16 %v2849, %v2848
        %v2879 = vpack.c.b16 %v2851, %v2850
        %v2880 = vpack.c.b16 %v2853, %v2852
        %v2881 = vpack.c.b16 %v2855, %v2854
        %v2882 = vpack.c.b16 %v2857, %v2856
        %v2883 = vpack.c.b16 %v2859, %v2858
        %v2884 = vpack.c.b16 %v2861, %v2860
        %v2885 = vpack.c.b16 %v2863, %v2862
        %v2886 = vpack.c.b16 %v2865, %v2864
        %v2887 = vpack.c.b16 %v2867, %v2866
        %v2888 = vpack.c.b16 %v2869, %v2868
        %v2889 = vpack.c.b16 %v2871, %v2870
        %v2890 = vpack.c.b16 %v2873, %v2872
        %v2891 = vpack.c.b16 %v2875, %v2874
        %2892 = vrot.lane.b32.xlu0 %v2876, 64
        %v2893 = vpop.permute.xlu0 %2892
        %2894 = vrot.lane.b32.xlu0 %v2877, 64
        %v2895 = vpop.permute.xlu0 %2894
        %2896 = vrot.lane.b32.xlu0 %v2878, 64
        %v2897 = vpop.permute.xlu0 %2896
        %2898 = vrot.lane.b32.xlu0 %v2879, 64
        %v2899 = vpop.permute.xlu0 %2898
        %2900 = vrot.lane.b32.xlu0 %v2880, 64
        %v2901 = vpop.permute.xlu0 %2900
        %2902 = vrot.lane.b32.xlu0 %v2881, 64
        %v2903 = vpop.permute.xlu0 %2902
        %2904 = vrot.lane.b32.xlu0 %v2882, 64
        %v2905 = vpop.permute.xlu0 %2904
        %2906 = vrot.lane.b32.xlu0 %v2883, 64
        %v2907 = vpop.permute.xlu0 %2906
        %2908 = vrot.lane.b32.xlu0 %v2884, 64
        %v2909 = vpop.permute.xlu0 %2908
        %2910 = vrot.lane.b32.xlu0 %v2885, 64
        %v2911 = vpop.permute.xlu0 %2910
        %2912 = vrot.lane.b32.xlu0 %v2886, 64
        %v2913 = vpop.permute.xlu0 %2912
        %2914 = vrot.lane.b32.xlu0 %v2887, 64
        %v2915 = vpop.permute.xlu0 %2914
        %2916 = vrot.lane.b32.xlu0 %v2888, 64
        %v2917 = vpop.permute.xlu0 %2916
        %2918 = vrot.lane.b32.xlu0 %v2889, 64
        %v2919 = vpop.permute.xlu0 %2918
        %2920 = vrot.lane.b32.xlu0 %v2890, 64
        %v2921 = vpop.permute.xlu0 %2920
        %2922 = vrot.lane.b32.xlu0 %v2891, 64
        %v2923 = vpop.permute.xlu0 %2922
        %2940 = vst.msk [vmem:[#allocation3 + $0x8] sm:$0xff] %vm1753, %v2893
        %2941 = vst.msk [vmem:[#allocation3 + $0x20] sm:$0xff] %vm1753, %v2895
        %2942 = vst.msk [vmem:[#allocation3 + $0x38] sm:$0xff] %vm1753, %v2897
        %2943 = vst.msk [vmem:[#allocation3 + $0x50] sm:$0xff] %vm1753, %v2899
        %2944 = vst.msk [vmem:[#allocation3 + $0x68] sm:$0xff] %vm1753, %v2901
        %2945 = vst.msk [vmem:[#allocation3 + $0x80] sm:$0xff] %vm1753, %v2903
        %2946 = vst.msk [vmem:[#allocation3 + $0x98] sm:$0xff] %vm1753, %v2905
        %2947 = vst.msk [vmem:[#allocation3 + $0xb0] sm:$0xff] %vm1753, %v2907
        %2948 = vst.msk [vmem:[#allocation3 + $0xc8] sm:$0xff] %vm1753, %v2909
        %2949 = vst.msk [vmem:[#allocation3 + $0xe0] sm:$0xff] %vm1753, %v2911
        %2950 = vst.msk [vmem:[#allocation3 + $0xf8] sm:$0xff] %vm1753, %v2913
        %2951 = vst.msk [vmem:[#allocation3 + $0x110] sm:$0xff] %vm1753, %v2915
        %2952 = vst.msk [vmem:[#allocation3 + $0x128] sm:$0xff] %vm1753, %v2917
        %2953 = vst.msk [vmem:[#allocation3 + $0x140] sm:$0xff] %vm1753, %v2919
        %2954 = vst.msk [vmem:[#allocation3 + $0x158] sm:$0xff] %vm1753, %v2921
        %2955 = vst.msk [vmem:[#allocation3 + $0x170] sm:$0xff] %vm1753, %v2923
        %v2956 = vld [vmem:[%s2779] sm:$0xf]
        %v2957 = vld [vmem:[%s2779 + $0x4] sm:$0xf]
        %v2958 = vld [vmem:[%s2779 + $0x8] sm:$0x1]
        %v2959 = vld [vmem:[%s2779 + $0xc] sm:$0xf]
        %v2960 = vld [vmem:[%s2779 + $0x10] sm:$0xf]
        %v2961 = vld [vmem:[%s2779 + $0x14] sm:$0x1]
        %v2962 = vld [vmem:[%s2779 + $0x18] sm:$0xf]
        %v2963 = vld [vmem:[%s2779 + $0x1c] sm:$0xf]
        %v2964 = vld [vmem:[%s2779 + $0x20] sm:$0x1]
        %v2965 = vld [vmem:[%s2779 + $0x24] sm:$0xf]
        %v2966 = vld [vmem:[%s2779 + $0x28] sm:$0xf]
        %v2967 = vld [vmem:[%s2779 + $0x2c] sm:$0x1]
        %v2968 = vld [vmem:[%s2779 + $0x30] sm:$0xf]
        %v2969 = vld [vmem:[%s2779 + $0x34] sm:$0xf]
        %v2970 = vld [vmem:[%s2779 + $0x38] sm:$0x1]
        %v2971 = vld [vmem:[%s2779 + $0x3c] sm:$0xf]
        %v2972 = vld [vmem:[%s2779 + $0x40] sm:$0xf]
        %v2973 = vld [vmem:[%s2779 + $0x44] sm:$0x1]
        %v2974 = vld [vmem:[%s2779 + $0x48] sm:$0xf]
        %v2975 = vld [vmem:[%s2779 + $0x4c] sm:$0xf]
        %v2976 = vld [vmem:[%s2779 + $0x50] sm:$0x1]
        %v2977 = vld [vmem:[%s2779 + $0x54] sm:$0xf]
        %v2978 = vld [vmem:[%s2779 + $0x58] sm:$0xf]
        %v2979 = vld [vmem:[%s2779 + $0x5c] sm:$0x1]
        %v2980 = vld [vmem:[%s2779 + $0x60] sm:$0xf]
        %v2981 = vld [vmem:[%s2779 + $0x64] sm:$0xf]
        %v2982 = vld [vmem:[%s2779 + $0x68] sm:$0x1]
        %v2983 = vld [vmem:[%s2779 + $0x6c] sm:$0xf]
        %v2984 = vld [vmem:[%s2779 + $0x70] sm:$0xf]
        %v2985 = vld [vmem:[%s2779 + $0x74] sm:$0x1]
        %v2986 = vld [vmem:[%s2779 + $0x78] sm:$0xf]
        %v2987 = vld [vmem:[%s2779 + $0x7c] sm:$0xf]
        %v2988 = vld [vmem:[%s2779 + $0x80] sm:$0x1]
        %v2989 = vld [vmem:[%s2779 + $0x84] sm:$0xf]
        %v2990 = vld [vmem:[%s2779 + $0x88] sm:$0xf]
        %v2991 = vld [vmem:[%s2779 + $0x8c] sm:$0x1]
        %v2992 = vld [vmem:[%s2779 + $0x90] sm:$0xf]
        %v2993 = vld [vmem:[%s2779 + $0x94] sm:$0xf]
        %v2994 = vld [vmem:[%s2779 + $0x98] sm:$0x1]
        %v2995 = vld [vmem:[%s2779 + $0x9c] sm:$0xf]
        %v2996 = vld [vmem:[%s2779 + $0xa0] sm:$0xf]
        %v2997 = vld [vmem:[%s2779 + $0xa4] sm:$0x1]
        %v2998 = vld [vmem:[%s2779 + $0xa8] sm:$0xf]
        %v2999 = vld [vmem:[%s2779 + $0xac] sm:$0xf]
        %v3000 = vld [vmem:[%s2779 + $0xb0] sm:$0x1]
        %v3001 = vld [vmem:[%s2779 + $0xb4] sm:$0xf]
        %v3002 = vld [vmem:[%s2779 + $0xb8] sm:$0xf]
        %v3003 = vld [vmem:[%s2779 + $0xbc] sm:$0x1]
        %v3005 = vshrl.u32 %v2956, 16
        %v3007 = vrot.slane %v3005, 4
        %v3008 = vshll.u32 %v2956, 16
        %v3010 = vrot.slane %v3008, 5
        %v3011 = vor.u32 %v3007, %v3010
        %v3012 = vrot.slane %v3011, 4
        %v3014 = vshll.u32 %v2957, 16
        %v3016 = vrot.slane %v3014, 5
        %v3017 = vsel %vm948, %v3012, %v3016
        %v3018 = vshrl.u32 %v2957, 16
        %v3020 = vrot.slane %v3018, 4
        %v3021 = vor.u32 %v3020, %v3016
        %v3022 = vrot.slane %v3021, 4
        %v3024 = vshll.u32 %v2958, 16
        %v3026 = vrot.slane %v3024, 5
        %v3027 = vsel %vm948, %v3022, %v3026
        %v3029 = vshrl.u32 %v2959, 16
        %v3031 = vrot.slane %v3029, 4
        %v3032 = vshll.u32 %v2959, 16
        %v3034 = vrot.slane %v3032, 5
        %v3035 = vor.u32 %v3031, %v3034
        %v3036 = vrot.slane %v3035, 4
        %v3038 = vshll.u32 %v2960, 16
        %v3040 = vrot.slane %v3038, 5
        %v3041 = vsel %vm948, %v3036, %v3040
        %v3042 = vshrl.u32 %v2960, 16
        %v3044 = vrot.slane %v3042, 4
        %v3045 = vor.u32 %v3044, %v3040
        %v3046 = vrot.slane %v3045, 4
        %v3048 = vshll.u32 %v2961, 16
        %v3050 = vrot.slane %v3048, 5
        %v3051 = vsel %vm948, %v3046, %v3050
        %v3053 = vshrl.u32 %v2962, 16
        %v3055 = vrot.slane %v3053, 4
        %v3056 = vshll.u32 %v2962, 16
        %v3058 = vrot.slane %v3056, 5
        %v3059 = vor.u32 %v3055, %v3058
        %v3060 = vrot.slane %v3059, 4
        %v3062 = vshll.u32 %v2963, 16
        %v3064 = vrot.slane %v3062, 5
        %v3065 = vsel %vm948, %v3060, %v3064
        %v3066 = vshrl.u32 %v2963, 16
        %v3068 = vrot.slane %v3066, 4
        %v3069 = vor.u32 %v3068, %v3064
        %v3070 = vrot.slane %v3069, 4
        %v3072 = vshll.u32 %v2964, 16
        %v3074 = vrot.slane %v3072, 5
        %v3075 = vsel %vm948, %v3070, %v3074
        %v3077 = vshrl.u32 %v2965, 16
        %v3079 = vrot.slane %v3077, 4
        %v3080 = vshll.u32 %v2965, 16
        %v3082 = vrot.slane %v3080, 5
        %v3083 = vor.u32 %v3079, %v3082
        %v3084 = vrot.slane %v3083, 4
        %v3086 = vshll.u32 %v2966, 16
        %v3088 = vrot.slane %v3086, 5
        %v3089 = vsel %vm948, %v3084, %v3088
        %v3090 = vshrl.u32 %v2966, 16
        %v3092 = vrot.slane %v3090, 4
        %v3093 = vor.u32 %v3092, %v3088
        %v3094 = vrot.slane %v3093, 4
        %v3096 = vshll.u32 %v2967, 16
        %v3098 = vrot.slane %v3096, 5
        %v3099 = vsel %vm948, %v3094, %v3098
        %v3101 = vshrl.u32 %v2968, 16
        %v3103 = vrot.slane %v3101, 4
        %v3104 = vshll.u32 %v2968, 16
        %v3106 = vrot.slane %v3104, 5
        %v3107 = vor.u32 %v3103, %v3106
        %v3108 = vrot.slane %v3107, 4
        %v3110 = vshll.u32 %v2969, 16
        %v3112 = vrot.slane %v3110, 5
        %v3113 = vsel %vm948, %v3108, %v3112
        %v3114 = vshrl.u32 %v2969, 16
        %v3116 = vrot.slane %v3114, 4
        %v3117 = vor.u32 %v3116, %v3112
        %v3118 = vrot.slane %v3117, 4
        %v3120 = vshll.u32 %v2970, 16
        %v3122 = vrot.slane %v3120, 5
        %v3123 = vsel %vm948, %v3118, %v3122
        %v3125 = vshrl.u32 %v2971, 16
        %v3127 = vrot.slane %v3125, 4
        %v3128 = vshll.u32 %v2971, 16
        %v3130 = vrot.slane %v3128, 5
        %v3131 = vor.u32 %v3127, %v3130
        %v3132 = vrot.slane %v3131, 4
        %v3134 = vshll.u32 %v2972, 16
        %v3136 = vrot.slane %v3134, 5
        %v3137 = vsel %vm948, %v3132, %v3136
        %v3138 = vshrl.u32 %v2972, 16
        %v3140 = vrot.slane %v3138, 4
        %v3141 = vor.u32 %v3140, %v3136
        %v3142 = vrot.slane %v3141, 4
        %v3144 = vshll.u32 %v2973, 16
        %v3146 = vrot.slane %v3144, 5
        %v3147 = vsel %vm948, %v3142, %v3146
        %v3149 = vshrl.u32 %v2974, 16
        %v3151 = vrot.slane %v3149, 4
        %v3152 = vshll.u32 %v2974, 16
        %v3154 = vrot.slane %v3152, 5
        %v3155 = vor.u32 %v3151, %v3154
        %v3156 = vrot.slane %v3155, 4
        %v3158 = vshll.u32 %v2975, 16
        %v3160 = vrot.slane %v3158, 5
        %v3161 = vsel %vm948, %v3156, %v3160
        %v3162 = vshrl.u32 %v2975, 16
        %v3164 = vrot.slane %v3162, 4
        %v3165 = vor.u32 %v3164, %v3160
        %v3166 = vrot.slane %v3165, 4
        %v3168 = vshll.u32 %v2976, 16
        %v3170 = vrot.slane %v3168, 5
        %v3171 = vsel %vm948, %v3166, %v3170
        %v3173 = vshrl.u32 %v2977, 16
        %v3175 = vrot.slane %v3173, 4
        %v3176 = vshll.u32 %v2977, 16
        %v3178 = vrot.slane %v3176, 5
        %v3179 = vor.u32 %v3175, %v3178
        %v3180 = vrot.slane %v3179, 4
        %v3182 = vshll.u32 %v2978, 16
        %v3184 = vrot.slane %v3182, 5
        %v3185 = vsel %vm948, %v3180, %v3184
        %v3186 = vshrl.u32 %v2978, 16
        %v3188 = vrot.slane %v3186, 4
        %v3189 = vor.u32 %v3188, %v3184
        %v3190 = vrot.slane %v3189, 4
        %v3192 = vshll.u32 %v2979, 16
        %v3194 = vrot.slane %v3192, 5
        %v3195 = vsel %vm948, %v3190, %v3194
        %v3197 = vshrl.u32 %v2980, 16
        %v3199 = vrot.slane %v3197, 4
        %v3200 = vshll.u32 %v2980, 16
        %v3202 = vrot.slane %v3200, 5
        %v3203 = vor.u32 %v3199, %v3202
        %v3204 = vrot.slane %v3203, 4
        %v3206 = vshll.u32 %v2981, 16
        %v3208 = vrot.slane %v3206, 5
        %v3209 = vsel %vm948, %v3204, %v3208
        %v3210 = vshrl.u32 %v2981, 16
        %v3212 = vrot.slane %v3210, 4
        %v3213 = vor.u32 %v3212, %v3208
        %v3214 = vrot.slane %v3213, 4
        %v3216 = vshll.u32 %v2982, 16
        %v3218 = vrot.slane %v3216, 5
        %v3219 = vsel %vm948, %v3214, %v3218
        %v3221 = vshrl.u32 %v2983, 16
        %v3223 = vrot.slane %v3221, 4
        %v3224 = vshll.u32 %v2983, 16
        %v3226 = vrot.slane %v3224, 5
        %v3227 = vor.u32 %v3223, %v3226
        %v3228 = vrot.slane %v3227, 4
        %v3230 = vshll.u32 %v2984, 16
        %v3232 = vrot.slane %v3230, 5
        %v3233 = vsel %vm948, %v3228, %v3232
        %v3234 = vshrl.u32 %v2984, 16
        %v3236 = vrot.slane %v3234, 4
        %v3237 = vor.u32 %v3236, %v3232
        %v3238 = vrot.slane %v3237, 4
        %v3240 = vshll.u32 %v2985, 16
        %v3242 = vrot.slane %v3240, 5
        %v3243 = vsel %vm948, %v3238, %v3242
        %v3245 = vshrl.u32 %v2986, 16
        %v3247 = vrot.slane %v3245, 4
        %v3248 = vshll.u32 %v2986, 16
        %v3250 = vrot.slane %v3248, 5
        %v3251 = vor.u32 %v3247, %v3250
        %v3252 = vrot.slane %v3251, 4
        %v3254 = vshll.u32 %v2987, 16
        %v3256 = vrot.slane %v3254, 5
        %v3257 = vsel %vm948, %v3252, %v3256
        %v3258 = vshrl.u32 %v2987, 16
        %v3260 = vrot.slane %v3258, 4
        %v3261 = vor.u32 %v3260, %v3256
        %v3262 = vrot.slane %v3261, 4
        %v3264 = vshll.u32 %v2988, 16
        %v3266 = vrot.slane %v3264, 5
        %v3267 = vsel %vm948, %v3262, %v3266
        %v3269 = vshrl.u32 %v2989, 16
        %v3271 = vrot.slane %v3269, 4
        %v3272 = vshll.u32 %v2989, 16
        %v3274 = vrot.slane %v3272, 5
        %v3275 = vor.u32 %v3271, %v3274
        %v3276 = vrot.slane %v3275, 4
        %v3278 = vshll.u32 %v2990, 16
        %v3280 = vrot.slane %v3278, 5
        %v3281 = vsel %vm948, %v3276, %v3280
        %v3282 = vshrl.u32 %v2990, 16
        %v3284 = vrot.slane %v3282, 4
        %v3285 = vor.u32 %v3284, %v3280
        %v3286 = vrot.slane %v3285, 4
        %v3288 = vshll.u32 %v2991, 16
        %v3290 = vrot.slane %v3288, 5
        %v3291 = vsel %vm948, %v3286, %v3290
        %v3293 = vshrl.u32 %v2992, 16
        %v3295 = vrot.slane %v3293, 4
        %v3296 = vshll.u32 %v2992, 16
        %v3298 = vrot.slane %v3296, 5
        %v3299 = vor.u32 %v3295, %v3298
        %v3300 = vrot.slane %v3299, 4
        %v3302 = vshll.u32 %v2993, 16
        %v3304 = vrot.slane %v3302, 5
        %v3305 = vsel %vm948, %v3300, %v3304
        %v3306 = vshrl.u32 %v2993, 16
        %v3308 = vrot.slane %v3306, 4
        %v3309 = vor.u32 %v3308, %v3304
        %v3310 = vrot.slane %v3309, 4
        %v3312 = vshll.u32 %v2994, 16
        %v3314 = vrot.slane %v3312, 5
        %v3315 = vsel %vm948, %v3310, %v3314
        %v3317 = vshrl.u32 %v2995, 16
        %v3319 = vrot.slane %v3317, 4
        %v3320 = vshll.u32 %v2995, 16
        %v3322 = vrot.slane %v3320, 5
        %v3323 = vor.u32 %v3319, %v3322
        %v3324 = vrot.slane %v3323, 4
        %v3326 = vshll.u32 %v2996, 16
        %v3328 = vrot.slane %v3326, 5
        %v3329 = vsel %vm948, %v3324, %v3328
        %v3330 = vshrl.u32 %v2996, 16
        %v3332 = vrot.slane %v3330, 4
        %v3333 = vor.u32 %v3332, %v3328
        %v3334 = vrot.slane %v3333, 4
        %v3336 = vshll.u32 %v2997, 16
        %v3338 = vrot.slane %v3336, 5
        %v3339 = vsel %vm948, %v3334, %v3338
        %v3341 = vshrl.u32 %v2998, 16
        %v3343 = vrot.slane %v3341, 4
        %v3344 = vshll.u32 %v2998, 16
        %v3346 = vrot.slane %v3344, 5
        %v3347 = vor.u32 %v3343, %v3346
        %v3348 = vrot.slane %v3347, 4
        %v3350 = vshll.u32 %v2999, 16
        %v3352 = vrot.slane %v3350, 5
        %v3353 = vsel %vm948, %v3348, %v3352
        %v3354 = vshrl.u32 %v2999, 16
        %v3356 = vrot.slane %v3354, 4
        %v3357 = vor.u32 %v3356, %v3352
        %v3358 = vrot.slane %v3357, 4
        %v3360 = vshll.u32 %v3000, 16
        %v3362 = vrot.slane %v3360, 5
        %v3363 = vsel %vm948, %v3358, %v3362
        %v3365 = vshrl.u32 %v3001, 16
        %v3367 = vrot.slane %v3365, 4
        %v3368 = vshll.u32 %v3001, 16
        %v3370 = vrot.slane %v3368, 5
        %v3371 = vor.u32 %v3367, %v3370
        %v3372 = vrot.slane %v3371, 4
        %v3374 = vshll.u32 %v3002, 16
        %v3376 = vrot.slane %v3374, 5
        %v3377 = vsel %vm948, %v3372, %v3376
        %v3378 = vshrl.u32 %v3002, 16
        %v3380 = vrot.slane %v3378, 4
        %v3381 = vor.u32 %v3380, %v3376
        %v3382 = vrot.slane %v3381, 4
        %v3384 = vshll.u32 %v3003, 16
        %v3386 = vrot.slane %v3384, 5
        %v3387 = vsel %vm948, %v3382, %v3386
        %v3388 = vunpack.c.l.b16 %v3017
        %v3389 = vunpack.c.l.b16 %v3027
        %v3390 = vunpack.c.l.b16 %v3041
        %v3391 = vunpack.c.l.b16 %v3051
        %v3392 = vunpack.c.l.b16 %v3065
        %v3393 = vunpack.c.l.b16 %v3075
        %v3394 = vunpack.c.l.b16 %v3089
        %v3395 = vunpack.c.l.b16 %v3099
        %v3396 = vunpack.c.l.b16 %v3113
        %v3397 = vunpack.c.l.b16 %v3123
        %v3398 = vunpack.c.l.b16 %v3137
        %v3399 = vunpack.c.l.b16 %v3147
        %v3400 = vunpack.c.l.b16 %v3161
        %v3401 = vunpack.c.l.b16 %v3171
        %v3402 = vunpack.c.l.b16 %v3185
        %v3403 = vunpack.c.l.b16 %v3195
        %v3404 = vunpack.c.l.b16 %v3209
        %v3405 = vunpack.c.l.b16 %v3219
        %v3406 = vunpack.c.l.b16 %v3233
        %v3407 = vunpack.c.l.b16 %v3243
        %v3408 = vunpack.c.l.b16 %v3257
        %v3409 = vunpack.c.l.b16 %v3267
        %v3410 = vunpack.c.l.b16 %v3281
        %v3411 = vunpack.c.l.b16 %v3291
        %v3412 = vunpack.c.l.b16 %v3305
        %v3413 = vunpack.c.l.b16 %v3315
        %v3414 = vunpack.c.l.b16 %v3329
        %v3415 = vunpack.c.l.b16 %v3339
        %v3416 = vunpack.c.l.b16 %v3353
        %v3417 = vunpack.c.l.b16 %v3363
        %v3418 = vunpack.c.l.b16 %v3377
        %v3419 = vunpack.c.l.b16 %v3387
        %v3420 = vpack.c.b16 %v3389, %v3388
        %v3421 = vpack.c.b16 %v3391, %v3390
        %v3422 = vpack.c.b16 %v3393, %v3392
        %v3423 = vpack.c.b16 %v3395, %v3394
        %v3424 = vpack.c.b16 %v3397, %v3396
        %v3425 = vpack.c.b16 %v3399, %v3398
        %v3426 = vpack.c.b16 %v3401, %v3400
        %v3427 = vpack.c.b16 %v3403, %v3402
        %v3428 = vpack.c.b16 %v3405, %v3404
        %v3429 = vpack.c.b16 %v3407, %v3406
        %v3430 = vpack.c.b16 %v3409, %v3408
        %v3431 = vpack.c.b16 %v3411, %v3410
        %v3432 = vpack.c.b16 %v3413, %v3412
        %v3433 = vpack.c.b16 %v3415, %v3414
        %v3434 = vpack.c.b16 %v3417, %v3416
        %v3435 = vpack.c.b16 %v3419, %v3418
        %3436 = vrot.lane.b32.xlu0 %v3420, 96
        %v3437 = vpop.permute.xlu0 %3436
        %3438 = vrot.lane.b32.xlu0 %v3421, 96
        %v3439 = vpop.permute.xlu0 %3438
        %3440 = vrot.lane.b32.xlu0 %v3422, 96
        %v3441 = vpop.permute.xlu0 %3440
        %3442 = vrot.lane.b32.xlu0 %v3423, 96
        %v3443 = vpop.permute.xlu0 %3442
        %3444 = vrot.lane.b32.xlu0 %v3424, 96
        %v3445 = vpop.permute.xlu0 %3444
        %3446 = vrot.lane.b32.xlu0 %v3425, 96
        %v3447 = vpop.permute.xlu0 %3446
        %3448 = vrot.lane.b32.xlu0 %v3426, 96
        %v3449 = vpop.permute.xlu0 %3448
        %3450 = vrot.lane.b32.xlu0 %v3427, 96
        %v3451 = vpop.permute.xlu0 %3450
        %3452 = vrot.lane.b32.xlu0 %v3428, 96
        %v3453 = vpop.permute.xlu0 %3452
        %3454 = vrot.lane.b32.xlu0 %v3429, 96
        %v3455 = vpop.permute.xlu0 %3454
        %3456 = vrot.lane.b32.xlu0 %v3430, 96
        %v3457 = vpop.permute.xlu0 %3456
        %3458 = vrot.lane.b32.xlu0 %v3431, 96
        %v3459 = vpop.permute.xlu0 %3458
        %3460 = vrot.lane.b32.xlu0 %v3432, 96
        %v3461 = vpop.permute.xlu0 %3460
        %3462 = vrot.lane.b32.xlu0 %v3433, 96
        %v3463 = vpop.permute.xlu0 %3462
        %3464 = vrot.lane.b32.xlu0 %v3434, 96
        %v3465 = vpop.permute.xlu0 %3464
        %3466 = vrot.lane.b32.xlu0 %v3435, 96
        %v3467 = vpop.permute.xlu0 %3466
        %3484 = vst.msk [vmem:[#allocation3 + $0x8] sm:$0xff] %vm1930, %v3437
        %3485 = vst.msk [vmem:[#allocation3 + $0x20] sm:$0xff] %vm1930, %v3439
        %3486 = vst.msk [vmem:[#allocation3 + $0x38] sm:$0xff] %vm1930, %v3441
        %3487 = vst.msk [vmem:[#allocation3 + $0x50] sm:$0xff] %vm1930, %v3443
        %3488 = vst.msk [vmem:[#allocation3 + $0x68] sm:$0xff] %vm1930, %v3445
        %3489 = vst.msk [vmem:[#allocation3 + $0x80] sm:$0xff] %vm1930, %v3447
        %3490 = vst.msk [vmem:[#allocation3 + $0x98] sm:$0xff] %vm1930, %v3449
        %3491 = vst.msk [vmem:[#allocation3 + $0xb0] sm:$0xff] %vm1930, %v3451
        %3492 = vst.msk [vmem:[#allocation3 + $0xc8] sm:$0xff] %vm1930, %v3453
        %3493 = vst.msk [vmem:[#allocation3 + $0xe0] sm:$0xff] %vm1930, %v3455
        %3494 = vst.msk [vmem:[#allocation3 + $0xf8] sm:$0xff] %vm1930, %v3457
        %3495 = vst.msk [vmem:[#allocation3 + $0x110] sm:$0xff] %vm1930, %v3459
        %3496 = vst.msk [vmem:[#allocation3 + $0x128] sm:$0xff] %vm1930, %v3461
        %3497 = vst.msk [vmem:[#allocation3 + $0x140] sm:$0xff] %vm1930, %v3463
        %3498 = vst.msk [vmem:[#allocation3 + $0x158] sm:$0xff] %vm1930, %v3465
        %3499 = vst.msk [vmem:[#allocation3 + $0x170] sm:$0xff] %vm1930, %v3467
        %v3500 = vld [vmem:[%s2779] sm:$0xe]
        %v3501 = vld [vmem:[%s2779 + $0x4] sm:$0xf]
        %v3502 = vld [vmem:[%s2779 + $0x8] sm:$0x1]
        %v3503 = vld [vmem:[%s2779 + $0xc] sm:$0xe]
        %v3504 = vld [vmem:[%s2779 + $0x10] sm:$0xf]
        %v3505 = vld [vmem:[%s2779 + $0x14] sm:$0x1]
        %v3506 = vld [vmem:[%s2779 + $0x18] sm:$0xe]
        %v3507 = vld [vmem:[%s2779 + $0x1c] sm:$0xf]
        %v3508 = vld [vmem:[%s2779 + $0x20] sm:$0x1]
        %v3509 = vld [vmem:[%s2779 + $0x24] sm:$0xe]
        %v3510 = vld [vmem:[%s2779 + $0x28] sm:$0xf]
        %v3511 = vld [vmem:[%s2779 + $0x2c] sm:$0x1]
        %v3512 = vld [vmem:[%s2779 + $0x30] sm:$0xe]
        %v3513 = vld [vmem:[%s2779 + $0x34] sm:$0xf]
        %v3514 = vld [vmem:[%s2779 + $0x38] sm:$0x1]
        %v3515 = vld [vmem:[%s2779 + $0x3c] sm:$0xe]
        %v3516 = vld [vmem:[%s2779 + $0x40] sm:$0xf]
        %v3517 = vld [vmem:[%s2779 + $0x44] sm:$0x1]
        %v3518 = vld [vmem:[%s2779 + $0x48] sm:$0xe]
        %v3519 = vld [vmem:[%s2779 + $0x4c] sm:$0xf]
        %v3520 = vld [vmem:[%s2779 + $0x50] sm:$0x1]
        %v3521 = vld [vmem:[%s2779 + $0x54] sm:$0xe]
        %v3522 = vld [vmem:[%s2779 + $0x58] sm:$0xf]
        %v3523 = vld [vmem:[%s2779 + $0x5c] sm:$0x1]
        %v3524 = vld [vmem:[%s2779 + $0x60] sm:$0xe]
        %v3525 = vld [vmem:[%s2779 + $0x64] sm:$0xf]
        %v3526 = vld [vmem:[%s2779 + $0x68] sm:$0x1]
        %v3527 = vld [vmem:[%s2779 + $0x6c] sm:$0xe]
        %v3528 = vld [vmem:[%s2779 + $0x70] sm:$0xf]
        %v3529 = vld [vmem:[%s2779 + $0x74] sm:$0x1]
        %v3530 = vld [vmem:[%s2779 + $0x78] sm:$0xe]
        %v3531 = vld [vmem:[%s2779 + $0x7c] sm:$0xf]
        %v3532 = vld [vmem:[%s2779 + $0x80] sm:$0x1]
        %v3533 = vld [vmem:[%s2779 + $0x84] sm:$0xe]
        %v3534 = vld [vmem:[%s2779 + $0x88] sm:$0xf]
        %v3535 = vld [vmem:[%s2779 + $0x8c] sm:$0x1]
        %v3536 = vld [vmem:[%s2779 + $0x90] sm:$0xe]
        %v3537 = vld [vmem:[%s2779 + $0x94] sm:$0xf]
        %v3538 = vld [vmem:[%s2779 + $0x98] sm:$0x1]
        %v3539 = vld [vmem:[%s2779 + $0x9c] sm:$0xe]
        %v3540 = vld [vmem:[%s2779 + $0xa0] sm:$0xf]
        %v3541 = vld [vmem:[%s2779 + $0xa4] sm:$0x1]
        %v3542 = vld [vmem:[%s2779 + $0xa8] sm:$0xe]
        %v3543 = vld [vmem:[%s2779 + $0xac] sm:$0xf]
        %v3544 = vld [vmem:[%s2779 + $0xb0] sm:$0x1]
        %v3545 = vld [vmem:[%s2779 + $0xb4] sm:$0xe]
        %v3546 = vld [vmem:[%s2779 + $0xb8] sm:$0xf]
        %v3547 = vld [vmem:[%s2779 + $0xbc] sm:$0x1]
        %v3596 = vrot.slane %v3500, 5
        %v3597 = vrot.slane %v3596, 4
        %v3598 = vrot.slane %v3501, 5
        %v3599 = vsel %vm1544, %v3597, %v3598
        %v3600 = vrot.slane %v3598, 4
        %v3601 = vrot.slane %v3502, 5
        %v3602 = vsel %vm1544, %v3600, %v3601
        %v3603 = vrot.slane %v3503, 5
        %v3604 = vrot.slane %v3603, 4
        %v3605 = vrot.slane %v3504, 5
        %v3606 = vsel %vm1544, %v3604, %v3605
        %v3607 = vrot.slane %v3605, 4
        %v3608 = vrot.slane %v3505, 5
        %v3609 = vsel %vm1544, %v3607, %v3608
        %v3610 = vrot.slane %v3506, 5
        %v3611 = vrot.slane %v3610, 4
        %v3612 = vrot.slane %v3507, 5
        %v3613 = vsel %vm1544, %v3611, %v3612
        %v3614 = vrot.slane %v3612, 4
        %v3615 = vrot.slane %v3508, 5
        %v3616 = vsel %vm1544, %v3614, %v3615
        %v3617 = vrot.slane %v3509, 5
        %v3618 = vrot.slane %v3617, 4
        %v3619 = vrot.slane %v3510, 5
        %v3620 = vsel %vm1544, %v3618, %v3619
        %v3621 = vrot.slane %v3619, 4
        %v3622 = vrot.slane %v3511, 5
        %v3623 = vsel %vm1544, %v3621, %v3622
        %v3624 = vrot.slane %v3512, 5
        %v3625 = vrot.slane %v3624, 4
        %v3626 = vrot.slane %v3513, 5
        %v3627 = vsel %vm1544, %v3625, %v3626
        %v3628 = vrot.slane %v3626, 4
        %v3629 = vrot.slane %v3514, 5
        %v3630 = vsel %vm1544, %v3628, %v3629
        %v3631 = vrot.slane %v3515, 5
        %v3632 = vrot.slane %v3631, 4
        %v3633 = vrot.slane %v3516, 5
        %v3634 = vsel %vm1544, %v3632, %v3633
        %v3635 = vrot.slane %v3633, 4
        %v3636 = vrot.slane %v3517, 5
        %v3637 = vsel %vm1544, %v3635, %v3636
        %v3638 = vrot.slane %v3518, 5
        %v3639 = vrot.slane %v3638, 4
        %v3640 = vrot.slane %v3519, 5
        %v3641 = vsel %vm1544, %v3639, %v3640
        %v3642 = vrot.slane %v3640, 4
        %v3643 = vrot.slane %v3520, 5
        %v3644 = vsel %vm1544, %v3642, %v3643
        %v3645 = vrot.slane %v3521, 5
        %v3646 = vrot.slane %v3645, 4
        %v3647 = vrot.slane %v3522, 5
        %v3648 = vsel %vm1544, %v3646, %v3647
        %v3649 = vrot.slane %v3647, 4
        %v3650 = vrot.slane %v3523, 5
        %v3651 = vsel %vm1544, %v3649, %v3650
        %v3652 = vrot.slane %v3524, 5
        %v3653 = vrot.slane %v3652, 4
        %v3654 = vrot.slane %v3525, 5
        %v3655 = vsel %vm1544, %v3653, %v3654
        %v3656 = vrot.slane %v3654, 4
        %v3657 = vrot.slane %v3526, 5
        %v3658 = vsel %vm1544, %v3656, %v3657
        %v3659 = vrot.slane %v3527, 5
        %v3660 = vrot.slane %v3659, 4
        %v3661 = vrot.slane %v3528, 5
        %v3662 = vsel %vm1544, %v3660, %v3661
        %v3663 = vrot.slane %v3661, 4
        %v3664 = vrot.slane %v3529, 5
        %v3665 = vsel %vm1544, %v3663, %v3664
        %v3666 = vrot.slane %v3530, 5
        %v3667 = vrot.slane %v3666, 4
        %v3668 = vrot.slane %v3531, 5
        %v3669 = vsel %vm1544, %v3667, %v3668
        %v3670 = vrot.slane %v3668, 4
        %v3671 = vrot.slane %v3532, 5
        %v3672 = vsel %vm1544, %v3670, %v3671
        %v3673 = vrot.slane %v3533, 5
        %v3674 = vrot.slane %v3673, 4
        %v3675 = vrot.slane %v3534, 5
        %v3676 = vsel %vm1544, %v3674, %v3675
        %v3677 = vrot.slane %v3675, 4
        %v3678 = vrot.slane %v3535, 5
        %v3679 = vsel %vm1544, %v3677, %v3678
        %v3680 = vrot.slane %v3536, 5
        %v3681 = vrot.slane %v3680, 4
        %v3682 = vrot.slane %v3537, 5
        %v3683 = vsel %vm1544, %v3681, %v3682
        %v3684 = vrot.slane %v3682, 4
        %v3685 = vrot.slane %v3538, 5
        %v3686 = vsel %vm1544, %v3684, %v3685
        %v3687 = vrot.slane %v3539, 5
        %v3688 = vrot.slane %v3687, 4
        %v3689 = vrot.slane %v3540, 5
        %v3690 = vsel %vm1544, %v3688, %v3689
        %v3691 = vrot.slane %v3689, 4
        %v3692 = vrot.slane %v3541, 5
        %v3693 = vsel %vm1544, %v3691, %v3692
        %v3694 = vrot.slane %v3542, 5
        %v3695 = vrot.slane %v3694, 4
        %v3696 = vrot.slane %v3543, 5
        %v3697 = vsel %vm1544, %v3695, %v3696
        %v3698 = vrot.slane %v3696, 4
        %v3699 = vrot.slane %v3544, 5
        %v3700 = vsel %vm1544, %v3698, %v3699
        %v3701 = vrot.slane %v3545, 5
        %v3702 = vrot.slane %v3701, 4
        %v3703 = vrot.slane %v3546, 5
        %v3704 = vsel %vm1544, %v3702, %v3703
        %v3705 = vrot.slane %v3703, 4
        %v3706 = vrot.slane %v3547, 5
        %v3707 = vsel %vm1544, %v3705, %v3706
        %v3708 = vunpack.c.l.b16 %v3599
        %v3709 = vunpack.c.l.b16 %v3602
        %v3710 = vunpack.c.l.b16 %v3606
        %v3711 = vunpack.c.l.b16 %v3609
        %v3712 = vunpack.c.l.b16 %v3613
        %v3713 = vunpack.c.l.b16 %v3616
        %v3714 = vunpack.c.l.b16 %v3620
        %v3715 = vunpack.c.l.b16 %v3623
        %v3716 = vunpack.c.l.b16 %v3627
        %v3717 = vunpack.c.l.b16 %v3630
        %v3718 = vunpack.c.l.b16 %v3634
        %v3719 = vunpack.c.l.b16 %v3637
        %v3720 = vunpack.c.l.b16 %v3641
        %v3721 = vunpack.c.l.b16 %v3644
        %v3722 = vunpack.c.l.b16 %v3648
        %v3723 = vunpack.c.l.b16 %v3651
        %v3724 = vunpack.c.l.b16 %v3655
        %v3725 = vunpack.c.l.b16 %v3658
        %v3726 = vunpack.c.l.b16 %v3662
        %v3727 = vunpack.c.l.b16 %v3665
        %v3728 = vunpack.c.l.b16 %v3669
        %v3729 = vunpack.c.l.b16 %v3672
        %v3730 = vunpack.c.l.b16 %v3676
        %v3731 = vunpack.c.l.b16 %v3679
        %v3732 = vunpack.c.l.b16 %v3683
        %v3733 = vunpack.c.l.b16 %v3686
        %v3734 = vunpack.c.l.b16 %v3690
        %v3735 = vunpack.c.l.b16 %v3693
        %v3736 = vunpack.c.l.b16 %v3697
        %v3737 = vunpack.c.l.b16 %v3700
        %v3738 = vunpack.c.l.b16 %v3704
        %v3739 = vunpack.c.l.b16 %v3707
        %v3740 = vpack.c.b16 %v3709, %v3708
        %v3741 = vpack.c.b16 %v3711, %v3710
        %v3742 = vpack.c.b16 %v3713, %v3712
        %v3743 = vpack.c.b16 %v3715, %v3714
        %v3744 = vpack.c.b16 %v3717, %v3716
        %v3745 = vpack.c.b16 %v3719, %v3718
        %v3746 = vpack.c.b16 %v3721, %v3720
        %v3747 = vpack.c.b16 %v3723, %v3722
        %v3748 = vpack.c.b16 %v3725, %v3724
        %v3749 = vpack.c.b16 %v3727, %v3726
        %v3750 = vpack.c.b16 %v3729, %v3728
        %v3751 = vpack.c.b16 %v3731, %v3730
        %v3752 = vpack.c.b16 %v3733, %v3732
        %v3753 = vpack.c.b16 %v3735, %v3734
        %v3754 = vpack.c.b16 %v3737, %v3736
        %v3755 = vpack.c.b16 %v3739, %v3738
        %3772 = vst.msk [vmem:[#allocation3 + $0x10] sm:$0xff] %vm881, %v3740
        %3773 = vst.msk [vmem:[#allocation3 + $0x28] sm:$0xff] %vm881, %v3741
        %3774 = vst.msk [vmem:[#allocation3 + $0x40] sm:$0xff] %vm881, %v3742
        %3775 = vst.msk [vmem:[#allocation3 + $0x58] sm:$0xff] %vm881, %v3743
        %3776 = vst.msk [vmem:[#allocation3 + $0x70] sm:$0xff] %vm881, %v3744
        %3777 = vst.msk [vmem:[#allocation3 + $0x88] sm:$0xff] %vm881, %v3745
        %3778 = vst.msk [vmem:[#allocation3 + $0xa0] sm:$0xff] %vm881, %v3746
        %3779 = vst.msk [vmem:[#allocation3 + $0xb8] sm:$0xff] %vm881, %v3747
        %3780 = vst.msk [vmem:[#allocation3 + $0xd0] sm:$0xff] %vm881, %v3748
        %3781 = vst.msk [vmem:[#allocation3 + $0xe8] sm:$0xff] %vm881, %v3749
        %3782 = vst.msk [vmem:[#allocation3 + $0x100] sm:$0xff] %vm881, %v3750
        %3783 = vst.msk [vmem:[#allocation3 + $0x118] sm:$0xff] %vm881, %v3751
        %3784 = vst.msk [vmem:[#allocation3 + $0x130] sm:$0xff] %vm881, %v3752
        %3785 = vst.msk [vmem:[#allocation3 + $0x148] sm:$0xff] %vm881, %v3753
        %3786 = vst.msk [vmem:[#allocation3 + $0x160] sm:$0xff] %vm881, %v3754
        %3787 = vst.msk [vmem:[#allocation3 + $0x178] sm:$0xff] %vm881, %v3755
        %v3788 = vld [vmem:[#allocation3] sm:$0xff]
        %v3789 = vld [vmem:[#allocation3 + $0x8] sm:$0xff]
        %v3790 = vld [vmem:[#allocation3 + $0x10] sm:$0xff]
        %v3791 = vld [vmem:[#allocation3 + $0x18] sm:$0xff]
        %v3792 = vld [vmem:[#allocation3 + $0x20] sm:$0xff]
        %v3793 = vld [vmem:[#allocation3 + $0x28] sm:$0xff]
        %v3794 = vld [vmem:[#allocation3 + $0x30] sm:$0xff]
        %v3795 = vld [vmem:[#allocation3 + $0x38] sm:$0xff]
        %v3796 = vld [vmem:[#allocation3 + $0x40] sm:$0xff]
        %v3797 = vld [vmem:[#allocation3 + $0x48] sm:$0xff]
        %v3798 = vld [vmem:[#allocation3 + $0x50] sm:$0xff]
        %v3799 = vld [vmem:[#allocation3 + $0x58] sm:$0xff]
        %v3800 = vld [vmem:[#allocation3 + $0x60] sm:$0xff]
        %v3801 = vld [vmem:[#allocation3 + $0x68] sm:$0xff]
        %v3802 = vld [vmem:[#allocation3 + $0x70] sm:$0xff]
        %v3803 = vld [vmem:[#allocation3 + $0x78] sm:$0xff]
        %v3804 = vld [vmem:[#allocation3 + $0x80] sm:$0xff]
        %v3805 = vld [vmem:[#allocation3 + $0x88] sm:$0xff]
        %v3806 = vld [vmem:[#allocation3 + $0x90] sm:$0xff]
        %v3807 = vld [vmem:[#allocation3 + $0x98] sm:$0xff]
        %v3808 = vld [vmem:[#allocation3 + $0xa0] sm:$0xff]
        %v3809 = vld [vmem:[#allocation3 + $0xa8] sm:$0xff]
        %v3810 = vld [vmem:[#allocation3 + $0xb0] sm:$0xff]
        %v3811 = vld [vmem:[#allocation3 + $0xb8] sm:$0xff]
        %v3812 = vld [vmem:[#allocation3 + $0xc0] sm:$0xff]
        %v3813 = vld [vmem:[#allocation3 + $0xc8] sm:$0xff]
        %v3814 = vld [vmem:[#allocation3 + $0xd0] sm:$0xff]
        %v3815 = vld [vmem:[#allocation3 + $0xd8] sm:$0xff]
        %v3816 = vld [vmem:[#allocation3 + $0xe0] sm:$0xff]
        %v3817 = vld [vmem:[#allocation3 + $0xe8] sm:$0xff]
        %v3818 = vld [vmem:[#allocation3 + $0xf0] sm:$0xff]
        %v3819 = vld [vmem:[#allocation3 + $0xf8] sm:$0xff]
        %v3820 = vld [vmem:[#allocation3 + $0x100] sm:$0xff]
        %v3821 = vld [vmem:[#allocation3 + $0x108] sm:$0xff]
        %v3822 = vld [vmem:[#allocation3 + $0x110] sm:$0xff]
        %v3823 = vld [vmem:[#allocation3 + $0x118] sm:$0xff]
        %v3824 = vld [vmem:[#allocation3 + $0x120] sm:$0xff]
        %v3825 = vld [vmem:[#allocation3 + $0x128] sm:$0xff]
        %v3826 = vld [vmem:[#allocation3 + $0x130] sm:$0xff]
        %v3827 = vld [vmem:[#allocation3 + $0x138] sm:$0xff]
        %v3828 = vld [vmem:[#allocation3 + $0x140] sm:$0xff]
        %v3829 = vld [vmem:[#allocation3 + $0x148] sm:$0xff]
        %v3830 = vld [vmem:[#allocation3 + $0x150] sm:$0xff]
        %v3831 = vld [vmem:[#allocation3 + $0x158] sm:$0xff]
        %v3832 = vld [vmem:[#allocation3 + $0x160] sm:$0xff]
        %v3833 = vld [vmem:[#allocation3 + $0x168] sm:$0xff]
        %v3834 = vld [vmem:[#allocation3 + $0x170] sm:$0xff]
        %v3835 = vld [vmem:[#allocation3 + $0x178] sm:$0xff]
        %v3836 = vld [vmem:[%s1] sm:$0xf]
        %v3837 = vld [vmem:[%s1 + $0xc] sm:$0xf]
        %v3838 = vld [vmem:[%s1 + $0x18] sm:$0xf]
        %v3839 = vld [vmem:[%s1 + $0x24] sm:$0xf]
        %v3840 = vld [vmem:[%s1 + $0x30] sm:$0xf]
        %v3841 = vld [vmem:[%s1 + $0x3c] sm:$0xf]
        %v3842 = vld [vmem:[%s1 + $0x48] sm:$0xf]
        %v3843 = vld [vmem:[%s1 + $0x54] sm:$0xf]
        %v3844 = vld [vmem:[%s1 + $0x60] sm:$0xf]
        %v3845 = vld [vmem:[%s1 + $0x6c] sm:$0xf]
        %v3846 = vld [vmem:[%s1 + $0x78] sm:$0xf]
        %v3847 = vld [vmem:[%s1 + $0x84] sm:$0xf]
        %v3848 = vld [vmem:[%s1 + $0x90] sm:$0xf]
        %v3849 = vld [vmem:[%s1 + $0x9c] sm:$0xf]
        %v3850 = vld [vmem:[%s1 + $0xa8] sm:$0xf]
        %v3851 = vld [vmem:[%s1 + $0xb4] sm:$0xf]
        %v3852 = vld [vmem:[%s1 + $0xc0] sm:$0xf]
        %v3853 = vld [vmem:[%s1 + $0xcc] sm:$0xf]
        %v3854 = vld [vmem:[%s1 + $0xd8] sm:$0xf]
        %v3855 = vld [vmem:[%s1 + $0xe4] sm:$0xf]
        %v3856 = vld [vmem:[%s1 + $0xf0] sm:$0xf]
        %v3857 = vld [vmem:[%s1 + $0xfc] sm:$0xf]
        %v3858 = vld [vmem:[%s1 + $0x108] sm:$0xf]
        %v3859 = vld [vmem:[%s1 + $0x114] sm:$0xf]
        %v3860 = vld [vmem:[%s1 + $0x120] sm:$0xf]
        %v3861 = vld [vmem:[%s1 + $0x12c] sm:$0xf]
        %v3862 = vld [vmem:[%s1 + $0x138] sm:$0xf]
        %v3863 = vld [vmem:[%s1 + $0x144] sm:$0xf]
        %v3864 = vld [vmem:[%s1 + $0x150] sm:$0xf]
        %v3865 = vld [vmem:[%s1 + $0x15c] sm:$0xf]
        %v3866 = vld [vmem:[%s1 + $0x168] sm:$0xf]
        %v3867 = vld [vmem:[%s1 + $0x174] sm:$0xf]
        %v3868 = vld [vmem:[%s1 + $0x180] sm:$0xf]
        %v3869 = vld [vmem:[%s1 + $0x18c] sm:$0xf]
        %v3870 = vld [vmem:[%s1 + $0x198] sm:$0xf]
        %v3871 = vld [vmem:[%s1 + $0x1a4] sm:$0xf]
        %v3872 = vld [vmem:[%s2] sm:$0x1]
        %v3874 = vlaneseq
        %v3875 = vshrl.u32 %v3874, 7
        %v3876 = vsub.s32 0, %v3875
        %v3877 = vrot.slane %v3872, %v3876
        %v3915 = vunpack.c.l.b16 %v3836
        %v3916 = vunpack.c.l.b16 %v3837
        %v3917 = vunpack.c.l.b16 %v3838
        %v3918 = vunpack.c.l.b16 %v3839
        %v3919 = vunpack.c.l.b16 %v3840
        %v3920 = vunpack.c.l.b16 %v3841
        %v3921 = vunpack.c.l.b16 %v3842
        %v3922 = vunpack.c.l.b16 %v3843
        %v3923 = vunpack.c.l.b16 %v3844
        %v3924 = vunpack.c.l.b16 %v3845
        %v3925 = vunpack.c.l.b16 %v3846
        %v3926 = vunpack.c.l.b16 %v3847
        %v3927 = vunpack.c.l.b16 %v3848
        %v3928 = vunpack.c.l.b16 %v3849
        %v3929 = vunpack.c.l.b16 %v3850
        %v3930 = vunpack.c.l.b16 %v3851
        %v3931 = vunpack.c.l.b16 %v3852
        %v3932 = vunpack.c.l.b16 %v3853
        %v3933 = vunpack.c.l.b16 %v3854
        %v3934 = vunpack.c.l.b16 %v3855
        %v3935 = vunpack.c.l.b16 %v3856
        %v3936 = vunpack.c.l.b16 %v3857
        %v3937 = vunpack.c.l.b16 %v3858
        %v3938 = vunpack.c.l.b16 %v3859
        %v3939 = vunpack.c.l.b16 %v3860
        %v3940 = vunpack.c.l.b16 %v3861
        %v3941 = vunpack.c.l.b16 %v3862
        %v3942 = vunpack.c.l.b16 %v3863
        %v3943 = vunpack.c.l.b16 %v3864
        %v3944 = vunpack.c.l.b16 %v3865
        %v3945 = vunpack.c.l.b16 %v3866
        %v3946 = vunpack.c.l.b16 %v3867
        %v3947 = vunpack.c.l.b16 %v3868
        %v3948 = vunpack.c.l.b16 %v3869
        %v3949 = vunpack.c.l.b16 %v3870
        %v3950 = vunpack.c.l.b16 %v3871
        %v3951 = vpack.c.b16 %v3916, %v3915
        %v3952 = vpack.c.b16 %v3918, %v3917
        %v3953 = vpack.c.b16 %v3920, %v3919
        %v3954 = vpack.c.b16 %v3922, %v3921
        %v3955 = vpack.c.b16 %v3924, %v3923
        %v3956 = vpack.c.b16 %v3926, %v3925
        %v3957 = vpack.c.b16 %v3928, %v3927
        %v3958 = vpack.c.b16 %v3930, %v3929
        %v3959 = vpack.c.b16 %v3932, %v3931
        %v3960 = vpack.c.b16 %v3934, %v3933
        %v3961 = vpack.c.b16 %v3936, %v3935
        %v3962 = vpack.c.b16 %v3938, %v3937
        %v3963 = vpack.c.b16 %v3940, %v3939
        %v3964 = vpack.c.b16 %v3942, %v3941
        %v3965 = vpack.c.b16 %v3944, %v3943
        %v3966 = vpack.c.b16 %v3946, %v3945
        %v3967 = vpack.c.b16 %v3948, %v3947
        %v3968 = vpack.c.b16 %v3950, %v3949
        %v3988 = vsel %vm881, %v3790, 0
        %v3991 = vsel %vm881, %v3793, 0
        %v3994 = vsel %vm881, %v3796, 0
        %v3997 = vsel %vm881, %v3799, 0
        %v4000 = vsel %vm881, %v3802, 0
        %v4003 = vsel %vm881, %v3805, 0
        %v4006 = vsel %vm881, %v3808, 0
        %v4009 = vsel %vm881, %v3811, 0
        %v4012 = vsel %vm881, %v3814, 0
        %v4015 = vsel %vm881, %v3817, 0
        %v4018 = vsel %vm881, %v3820, 0
        %v4021 = vsel %vm881, %v3823, 0
        %v4024 = vsel %vm881, %v3826, 0
        %v4027 = vsel %vm881, %v3829, 0
        %v4030 = vsel %vm881, %v3832, 0
        %v4033 = vsel %vm881, %v3835, 0
        %4035 = vmatprep.subr.bf16.mxu0 0
        %4036 = vmatpush1.bf16.msra.mxu0 %v3951
        %4037 = vmatprep.subr.bf16.mxu0 0
        %4038 = vmatpush1.bf16.msra.mxu0 %v3952
        %4039 = vmatprep.subr.bf16.mxu0 0
        %4040 = vmatpush1.bf16.msra.mxu0 %v3953
        %4041 = vmatprep.subr.bf16.mxu0 0
        %4042 = vmatpush1.bf16.msra.mxu0 %v3954
        %4043 = vmatprep.subr.bf16.mxu0 0
        %4044 = vmatpush1.bf16.msra.mxu0 %v3955
        %4045 = vmatprep.subr.bf16.mxu0 0
        %4046 = vmatpush1.bf16.msra.mxu0 %v3956
        %4047 = vmatprep.subr.bf16.mxu0 0
        %4048 = vmatpush1.bf16.msra.mxu0 %v3957
        %4049 = vmatprep.subr.bf16.mxu0 0
        %4050 = vmatpush1.bf16.msra.mxu0 %v3958
        %4051 = vmatprep.subr.bf16.mxu0 0
        %4052 = vmatpush1.bf16.msra.mxu0 %v3959
        %4053 = vmatprep.subr.bf16.mxu0 0
        %4054 = vmatpush1.bf16.msra.mxu0 %v3960
        %4055 = vmatprep.subr.bf16.mxu0 0
        %4056 = vmatpush1.bf16.msra.mxu0 %v3961
        %4057 = vmatprep.subr.bf16.mxu0 0
        %4058 = vmatpush1.bf16.msra.mxu0 %v3962
        %4059 = vmatprep.subr.bf16.mxu0 0
        %4060 = vmatpush1.bf16.msra.mxu0 %v3963
        %4061 = vmatprep.subr.bf16.mxu0 0
        %4062 = vmatpush1.bf16.msra.mxu0 %v3964
        %4063 = vmatprep.subr.bf16.mxu0 0
        %4064 = vmatpush1.bf16.msra.mxu0 %v3965
        %4065 = vmatprep.subr.bf16.mxu0 0
        %4066 = vmatpush1.bf16.msra.mxu0 %v3966
        %4067 = vmatprep.mubr.bf16.mxu0 %v3789
        %4068 = vmatmul.mubr.bf16.gmra.mrb[0].mxu0 %v3788
        %v4069 = vpop.f32.mrb[0].mxu0
        %v4070 = vadd.f32 %v3877, %v4069
        %v4071 = vpop.f32.mrb[0].mxu0
        %v4072 = vpop.f32.mrb[0].mxu0
        %v4073 = vadd.f32 %v3877, %v4072
        %v4074 = vpop.f32.mrb[0].mxu0
        %4075 = vmatprep.mubr.bf16.mxu0 %v3792
        %4076 = vmatmul.mubr.bf16.gmra.mrb[0].mxu0 %v3791
        %v4077 = vpop.f32.mrb[0].mxu0
        %v4078 = vadd.f32 %v3877, %v4077
        %v4079 = vpop.f32.mrb[0].mxu0
        %v4080 = vpop.f32.mrb[0].mxu0
        %v4081 = vadd.f32 %v3877, %v4080
        %v4082 = vpop.f32.mrb[0].mxu0
        %4083 = vmatprep.mubr.bf16.mxu0 %v3795
        %4084 = vmatmul.mubr.bf16.gmra.mrb[0].mxu0 %v3794
        %v4085 = vpop.f32.mrb[0].mxu0
        %v4086 = vadd.f32 %v3877, %v4085
        %v4087 = vpop.f32.mrb[0].mxu0
        %v4088 = vpop.f32.mrb[0].mxu0
        %v4089 = vadd.f32 %v3877, %v4088
        %v4090 = vpop.f32.mrb[0].mxu0
        %4091 = vmatprep.mubr.bf16.mxu0 %v3798
        %4092 = vmatmul.mubr.bf16.gmra.mrb[0].mxu0 %v3797
        %v4093 = vpop.f32.mrb[0].mxu0
        %v4094 = vadd.f32 %v3877, %v4093
        %v4095 = vpop.f32.mrb[0].mxu0
        %v4096 = vpop.f32.mrb[0].mxu0
        %v4097 = vadd.f32 %v3877, %v4096
        %v4098 = vpop.f32.mrb[0].mxu0
        %4099 = vmatprep.mubr.bf16.mxu0 %v3801
        %4100 = vmatmul.mubr.bf16.gmra.mrb[0].mxu0 %v3800
        %v4101 = vpop.f32.mrb[0].mxu0
        %v4102 = vadd.f32 %v3877, %v4101
        %v4103 = vpop.f32.mrb[0].mxu0
        %v4104 = vpop.f32.mrb[0].mxu0
        %v4105 = vadd.f32 %v3877, %v4104
        %v4106 = vpop.f32.mrb[0].mxu0
        %4107 = vmatprep.mubr.bf16.mxu0 %v3804
        %4108 = vmatmul.mubr.bf16.gmra.mrb[0].mxu0 %v3803
        %v4109 = vpop.f32.mrb[0].mxu0
        %v4110 = vadd.f32 %v3877, %v4109
        %v4111 = vpop.f32.mrb[0].mxu0
        %v4112 = vpop.f32.mrb[0].mxu0
        %v4113 = vadd.f32 %v3877, %v4112
        %v4114 = vpop.f32.mrb[0].mxu0
        %4115 = vmatprep.mubr.bf16.mxu0 %v3807
        %4116 = vmatmul.mubr.bf16.gmra.mrb[0].mxu0 %v3806
        %v4117 = vpop.f32.mrb[0].mxu0
        %v4118 = vadd.f32 %v3877, %v4117
        %v4119 = vpop.f32.mrb[0].mxu0
        %v4120 = vpop.f32.mrb[0].mxu0
        %v4121 = vadd.f32 %v3877, %v4120
        %v4122 = vpop.f32.mrb[0].mxu0
        %4123 = vmatprep.mubr.bf16.mxu0 %v3810
        %4124 = vmatmul.mubr.bf16.gmra.mrb[0].mxu0 %v3809
        %v4125 = vpop.f32.mrb[0].mxu0
        %v4126 = vadd.f32 %v3877, %v4125
        %v4127 = vpop.f32.mrb[0].mxu0
        %v4128 = vpop.f32.mrb[0].mxu0
        %v4129 = vadd.f32 %v3877, %v4128
        %v4130 = vpop.f32.mrb[0].mxu0
        %4131 = vmatprep.mubr.bf16.mxu0 %v3813
        %4132 = vmatmul.mubr.bf16.gmra.mrb[0].mxu0 %v3812
        %v4133 = vpop.f32.mrb[0].mxu0
        %v4134 = vadd.f32 %v3877, %v4133
        %v4135 = vpop.f32.mrb[0].mxu0
        %v4136 = vpop.f32.mrb[0].mxu0
        %v4137 = vadd.f32 %v3877, %v4136
        %v4138 = vpop.f32.mrb[0].mxu0
        %4139 = vmatprep.mubr.bf16.mxu0 %v3816
        %4140 = vmatmul.mubr.bf16.gmra.mrb[0].mxu0 %v3815
        %v4141 = vpop.f32.mrb[0].mxu0
        %v4142 = vadd.f32 %v3877, %v4141
        %v4143 = vpop.f32.mrb[0].mxu0
        %v4144 = vpop.f32.mrb[0].mxu0
        %v4145 = vadd.f32 %v3877, %v4144
        %v4146 = vpop.f32.mrb[0].mxu0
        %4147 = vmatprep.mubr.bf16.mxu0 %v3819
        %4148 = vmatmul.mubr.bf16.gmra.mrb[0].mxu0 %v3818
        %v4149 = vpop.f32.mrb[0].mxu0
        %v4150 = vadd.f32 %v3877, %v4149
        %v4151 = vpop.f32.mrb[0].mxu0
        %v4152 = vpop.f32.mrb[0].mxu0
        %v4153 = vadd.f32 %v3877, %v4152
        %v4154 = vpop.f32.mrb[0].mxu0
        %4155 = vmatprep.mubr.bf16.mxu0 %v3822
        %4156 = vmatmul.mubr.bf16.gmra.mrb[0].mxu0 %v3821
        %v4157 = vpop.f32.mrb[0].mxu0
        %v4158 = vadd.f32 %v3877, %v4157
        %v4159 = vpop.f32.mrb[0].mxu0
        %v4160 = vpop.f32.mrb[0].mxu0
        %v4161 = vadd.f32 %v3877, %v4160
        %v4162 = vpop.f32.mrb[0].mxu0
        %4163 = vmatprep.mubr.bf16.mxu0 %v3825
        %4164 = vmatmul.mubr.bf16.gmra.mrb[0].mxu0 %v3824
        %v4165 = vpop.f32.mrb[0].mxu0
        %v4166 = vadd.f32 %v3877, %v4165
        %v4167 = vpop.f32.mrb[0].mxu0
        %v4168 = vpop.f32.mrb[0].mxu0
        %v4169 = vadd.f32 %v3877, %v4168
        %v4170 = vpop.f32.mrb[0].mxu0
        %4171 = vmatprep.mubr.bf16.mxu0 %v3828
        %4172 = vmatmul.mubr.bf16.gmra.mrb[0].mxu0 %v3827
        %v4173 = vpop.f32.mrb[0].mxu0
        %v4174 = vadd.f32 %v3877, %v4173
        %v4175 = vpop.f32.mrb[0].mxu0
        %v4176 = vpop.f32.mrb[0].mxu0
        %v4177 = vadd.f32 %v3877, %v4176
        %v4178 = vpop.f32.mrb[0].mxu0
        %4179 = vmatprep.mubr.bf16.mxu0 %v3831
        %4180 = vmatmul.mubr.bf16.gmra.mrb[0].mxu0 %v3830
        %v4181 = vpop.f32.mrb[0].mxu0
        %v4182 = vadd.f32 %v3877, %v4181
        %v4183 = vpop.f32.mrb[0].mxu0
        %v4184 = vpop.f32.mrb[0].mxu0
        %v4185 = vadd.f32 %v3877, %v4184
        %v4186 = vpop.f32.mrb[0].mxu0
        %4187 = vmatprep.mubr.bf16.mxu0 %v3834
        %4188 = vmatmul.mubr.bf16.gmra.mrb[0].mxu0 %v3833
        %v4189 = vpop.f32.mrb[0].mxu0
        %v4190 = vadd.f32 %v3877, %v4189
        %v4191 = vpop.f32.mrb[0].mxu0
        %v4192 = vpop.f32.mrb[0].mxu0
        %v4193 = vadd.f32 %v3877, %v4192
        %v4194 = vpop.f32.mrb[0].mxu0
        %4195 = vdwg.mxu0
        %4196 = vmatprep.subr.bf16.mxu0 0
        %4197 = vmatpush1.bf16.msra.mxu0 %v3967
        %4198 = vmatprep.subr.bf16.mxu0 0
        %4199 = vmatpush1.bf16.msra.mxu0 %v3968
        %4200 = vmatprep.subr.bf16.mxu0 0
        %4201 = vmatpush1.bf16.msra.mxu0 0
        %4202 = vmatprep.subr.bf16.mxu0 0
        %4203 = vmatpush1.bf16.msra.mxu0 0
        %4204 = vmatprep.subr.bf16.mxu0 0
        %4205 = vmatpush1.bf16.msra.mxu0 0
        %4206 = vmatprep.subr.bf16.mxu0 0
        %4207 = vmatpush1.bf16.msra.mxu0 0
        %4208 = vmatprep.subr.bf16.mxu0 0
        %4209 = vmatpush1.bf16.msra.mxu0 0
        %4210 = vmatprep.subr.bf16.mxu0 0
        %4211 = vmatpush1.bf16.msra.mxu0 0
        %4212 = vmatprep.subr.bf16.mxu0 0
        %4213 = vmatpush1.bf16.msra.mxu0 0
        %4214 = vmatprep.subr.bf16.mxu0 0
        %4215 = vmatpush1.bf16.msra.mxu0 0
        %4216 = vmatprep.subr.bf16.mxu0 0
        %4217 = vmatpush1.bf16.msra.mxu0 0
        %4218 = vmatprep.subr.bf16.mxu0 0
        %4219 = vmatpush1.bf16.msra.mxu0 0
        %4220 = vmatprep.subr.bf16.mxu0 0
        %4221 = vmatpush1.bf16.msra.mxu0 0
        %4222 = vmatprep.subr.bf16.mxu0 0
        %4223 = vmatpush1.bf16.msra.mxu0 0
        %4224 = vmatprep.subr.bf16.mxu0 0
        %4225 = vmatpush1.bf16.msra.mxu0 0
        %4226 = vmatprep.subr.bf16.mxu0 0
        %4227 = vmatpush1.bf16.msra.mxu0 0
        %4228 = vmatprep.mubr.bf16.mxu0 0
        %4229 = vmatmul.mubr.bf16.gmra.mrb[0].mxu0 %v3988
        %v4230 = vpop.f32.mrb[0].mxu0
        %v4231 = vadd.f32 %v4070, %v4230
        %v4232 = vpop.f32.mrb[0].mxu0
        %v4233 = vpop.f32.mrb[0].mxu0
        %v4234 = vadd.f32 %v4073, %v4233
        %v4235 = vpop.f32.mrb[0].mxu0
        %4236 = vmatprep.mubr.bf16.mxu0 0
        %4237 = vmatmul.mubr.bf16.gmra.mrb[0].mxu0 %v3991
        %v4238 = vpop.f32.mrb[0].mxu0
        %v4239 = vadd.f32 %v4078, %v4238
        %v4240 = vpop.f32.mrb[0].mxu0
        %v4241 = vpop.f32.mrb[0].mxu0
        %v4242 = vadd.f32 %v4081, %v4241
        %v4243 = vpop.f32.mrb[0].mxu0
        %4244 = vmatprep.mubr.bf16.mxu0 0
        %4245 = vmatmul.mubr.bf16.gmra.mrb[0].mxu0 %v3994
        %v4246 = vpop.f32.mrb[0].mxu0
        %v4247 = vadd.f32 %v4086, %v4246
        %v4248 = vpop.f32.mrb[0].mxu0
        %v4249 = vpop.f32.mrb[0].mxu0
        %v4250 = vadd.f32 %v4089, %v4249
        %v4251 = vpop.f32.mrb[0].mxu0
        %4252 = vmatprep.mubr.bf16.mxu0 0
        %4253 = vmatmul.mubr.bf16.gmra.mrb[0].mxu0 %v3997
        %v4254 = vpop.f32.mrb[0].mxu0
        %v4255 = vadd.f32 %v4094, %v4254
        %v4256 = vpop.f32.mrb[0].mxu0
        %v4257 = vpop.f32.mrb[0].mxu0
        %v4258 = vadd.f32 %v4097, %v4257
        %v4259 = vpop.f32.mrb[0].mxu0
        %4260 = vmatprep.mubr.bf16.mxu0 0
        %4261 = vmatmul.mubr.bf16.gmra.mrb[0].mxu0 %v4000
        %v4262 = vpop.f32.mrb[0].mxu0
        %v4263 = vadd.f32 %v4102, %v4262
        %v4264 = vpop.f32.mrb[0].mxu0
        %v4265 = vpop.f32.mrb[0].mxu0
        %v4266 = vadd.f32 %v4105, %v4265
        %v4267 = vpop.f32.mrb[0].mxu0
        %4268 = vmatprep.mubr.bf16.mxu0 0
        %4269 = vmatmul.mubr.bf16.gmra.mrb[0].mxu0 %v4003
        %v4270 = vpop.f32.mrb[0].mxu0
        %v4271 = vadd.f32 %v4110, %v4270
        %v4272 = vpop.f32.mrb[0].mxu0
        %v4273 = vpop.f32.mrb[0].mxu0
        %v4274 = vadd.f32 %v4113, %v4273
        %v4275 = vpop.f32.mrb[0].mxu0
        %4276 = vmatprep.mubr.bf16.mxu0 0
        %4277 = vmatmul.mubr.bf16.gmra.mrb[0].mxu0 %v4006
        %v4278 = vpop.f32.mrb[0].mxu0
        %v4279 = vadd.f32 %v4118, %v4278
        %v4280 = vpop.f32.mrb[0].mxu0
        %v4281 = vpop.f32.mrb[0].mxu0
        %v4282 = vadd.f32 %v4121, %v4281
        %v4283 = vpop.f32.mrb[0].mxu0
        %4284 = vmatprep.mubr.bf16.mxu0 0
        %4285 = vmatmul.mubr.bf16.gmra.mrb[0].mxu0 %v4009
        %v4286 = vpop.f32.mrb[0].mxu0
        %v4287 = vadd.f32 %v4126, %v4286
        %v4288 = vpop.f32.mrb[0].mxu0
        %v4289 = vpop.f32.mrb[0].mxu0
        %v4290 = vadd.f32 %v4129, %v4289
        %v4291 = vpop.f32.mrb[0].mxu0
        %4292 = vmatprep.mubr.bf16.mxu0 0
        %4293 = vmatmul.mubr.bf16.gmra.mrb[0].mxu0 %v4012
        %v4294 = vpop.f32.mrb[0].mxu0
        %v4295 = vadd.f32 %v4134, %v4294
        %v4296 = vpop.f32.mrb[0].mxu0
        %v4297 = vpop.f32.mrb[0].mxu0
        %v4298 = vadd.f32 %v4137, %v4297
        %v4299 = vpop.f32.mrb[0].mxu0
        %4300 = vmatprep.mubr.bf16.mxu0 0
        %4301 = vmatmul.mubr.bf16.gmra.mrb[0].mxu0 %v4015
        %v4302 = vpop.f32.mrb[0].mxu0
        %v4303 = vadd.f32 %v4142, %v4302
        %v4304 = vpop.f32.mrb[0].mxu0
        %v4305 = vpop.f32.mrb[0].mxu0
        %v4306 = vadd.f32 %v4145, %v4305
        %v4307 = vpop.f32.mrb[0].mxu0
        %4308 = vmatprep.mubr.bf16.mxu0 0
        %4309 = vmatmul.mubr.bf16.gmra.mrb[0].mxu0 %v4018
        %v4310 = vpop.f32.mrb[0].mxu0
        %v4311 = vadd.f32 %v4150, %v4310
        %v4312 = vpop.f32.mrb[0].mxu0
        %v4313 = vpop.f32.mrb[0].mxu0
        %v4314 = vadd.f32 %v4153, %v4313
        %v4315 = vpop.f32.mrb[0].mxu0
        %4316 = vmatprep.mubr.bf16.mxu0 0
        %4317 = vmatmul.mubr.bf16.gmra.mrb[0].mxu0 %v4021
        %v4318 = vpop.f32.mrb[0].mxu0
        %v4319 = vadd.f32 %v4158, %v4318
        %v4320 = vpop.f32.mrb[0].mxu0
        %v4321 = vpop.f32.mrb[0].mxu0
        %v4322 = vadd.f32 %v4161, %v4321
        %v4323 = vpop.f32.mrb[0].mxu0
        %4324 = vmatprep.mubr.bf16.mxu0 0
        %4325 = vmatmul.mubr.bf16.gmra.mrb[0].mxu0 %v4024
        %v4326 = vpop.f32.mrb[0].mxu0
        %v4327 = vadd.f32 %v4166, %v4326
        %v4328 = vpop.f32.mrb[0].mxu0
        %v4329 = vpop.f32.mrb[0].mxu0
        %v4330 = vadd.f32 %v4169, %v4329
        %v4331 = vpop.f32.mrb[0].mxu0
        %4332 = vmatprep.mubr.bf16.mxu0 0
        %4333 = vmatmul.mubr.bf16.gmra.mrb[0].mxu0 %v4027
        %v4334 = vpop.f32.mrb[0].mxu0
        %v4335 = vadd.f32 %v4174, %v4334
        %v4336 = vpop.f32.mrb[0].mxu0
        %v4337 = vpop.f32.mrb[0].mxu0
        %v4338 = vadd.f32 %v4177, %v4337
        %v4339 = vpop.f32.mrb[0].mxu0
        %4340 = vmatprep.mubr.bf16.mxu0 0
        %4341 = vmatmul.mubr.bf16.gmra.mrb[0].mxu0 %v4030
        %v4342 = vpop.f32.mrb[0].mxu0
        %v4343 = vadd.f32 %v4182, %v4342
        %v4344 = vpop.f32.mrb[0].mxu0
        %v4345 = vpop.f32.mrb[0].mxu0
        %v4346 = vadd.f32 %v4185, %v4345
        %v4347 = vpop.f32.mrb[0].mxu0
        %4348 = vmatprep.mubr.bf16.mxu0 0
        %4349 = vmatmul.mubr.bf16.gmra.mrb[0].mxu0 %v4033
        %v4350 = vpop.f32.mrb[0].mxu0
        %v4351 = vadd.f32 %v4190, %v4350
        %v4352 = vpop.f32.mrb[0].mxu0
        %v4353 = vpop.f32.mrb[0].mxu0
        %v4354 = vadd.f32 %v4193, %v4353
        %v4355 = vpop.f32.mrb[0].mxu0
        %4356 = vdwg.mxu0
        %v4357 = vmul.f32 %v4231, %v4231
        %v4358 = vmul.f32 %v4234, %v4234
        %v4359 = vmul.f32 %v4239, %v4239
        %v4360 = vmul.f32 %v4242, %v4242
        %v4361 = vmul.f32 %v4247, %v4247
        %v4362 = vmul.f32 %v4250, %v4250
        %v4363 = vmul.f32 %v4255, %v4255
        %v4364 = vmul.f32 %v4258, %v4258
        %v4365 = vmul.f32 %v4263, %v4263
        %v4366 = vmul.f32 %v4266, %v4266
        %v4367 = vmul.f32 %v4271, %v4271
        %v4368 = vmul.f32 %v4274, %v4274
        %v4369 = vmul.f32 %v4279, %v4279
        %v4370 = vmul.f32 %v4282, %v4282
        %v4371 = vmul.f32 %v4287, %v4287
        %v4372 = vmul.f32 %v4290, %v4290
        %v4373 = vmul.f32 %v4295, %v4295
        %v4374 = vmul.f32 %v4298, %v4298
        %v4375 = vmul.f32 %v4303, %v4303
        %v4376 = vmul.f32 %v4306, %v4306
        %v4377 = vmul.f32 %v4311, %v4311
        %v4378 = vmul.f32 %v4314, %v4314
        %v4379 = vmul.f32 %v4319, %v4319
        %v4380 = vmul.f32 %v4322, %v4322
        %v4381 = vmul.f32 %v4327, %v4327
        %v4382 = vmul.f32 %v4330, %v4330
        %v4383 = vmul.f32 %v4335, %v4335
        %v4384 = vmul.f32 %v4338, %v4338
        %v4385 = vmul.f32 %v4343, %v4343
        %v4386 = vmul.f32 %v4346, %v4346
        %v4387 = vmul.f32 %v4351, %v4351
        %v4388 = vmul.f32 %v4354, %v4354
        %4389 = vadd.xlane.f32.xlu0 %v4357
        %v4390 = vpop.xlane.xlu0 %4389
        %4391 = vadd.xlane.f32.xlu0 %v4358
        %v4392 = vpop.xlane.xlu0 %4391
        %4393 = vadd.xlane.f32.xlu0 %v4359
        %v4394 = vpop.xlane.xlu0 %4393
        %4395 = vadd.xlane.f32.xlu0 %v4360
        %v4396 = vpop.xlane.xlu0 %4395
        %4397 = vadd.xlane.f32.xlu0 %v4361
        %v4398 = vpop.xlane.xlu0 %4397
        %4399 = vadd.xlane.f32.xlu0 %v4362
        %v4400 = vpop.xlane.xlu0 %4399
        %4401 = vadd.xlane.f32.xlu0 %v4363
        %v4402 = vpop.xlane.xlu0 %4401
        %4403 = vadd.xlane.f32.xlu0 %v4364
        %v4404 = vpop.xlane.xlu0 %4403
        %4405 = vadd.xlane.f32.xlu0 %v4365
        %v4406 = vpop.xlane.xlu0 %4405
        %4407 = vadd.xlane.f32.xlu0 %v4366
        %v4408 = vpop.xlane.xlu0 %4407
        %4409 = vadd.xlane.f32.xlu0 %v4367
        %v4410 = vpop.xlane.xlu0 %4409
        %4411 = vadd.xlane.f32.xlu0 %v4368
        %v4412 = vpop.xlane.xlu0 %4411
        %4413 = vadd.xlane.f32.xlu0 %v4369
        %v4414 = vpop.xlane.xlu0 %4413
        %4415 = vadd.xlane.f32.xlu0 %v4370
        %v4416 = vpop.xlane.xlu0 %4415
        %4417 = vadd.xlane.f32.xlu0 %v4371
        %v4418 = vpop.xlane.xlu0 %4417
        %4419 = vadd.xlane.f32.xlu0 %v4372
        %v4420 = vpop.xlane.xlu0 %4419
        %4421 = vadd.xlane.f32.xlu0 %v4373
        %v4422 = vpop.xlane.xlu0 %4421
        %4423 = vadd.xlane.f32.xlu0 %v4374
        %v4424 = vpop.xlane.xlu0 %4423
        %4425 = vadd.xlane.f32.xlu0 %v4375
        %v4426 = vpop.xlane.xlu0 %4425
        %4427 = vadd.xlane.f32.xlu0 %v4376
        %v4428 = vpop.xlane.xlu0 %4427
        %4429 = vadd.xlane.f32.xlu0 %v4377
        %v4430 = vpop.xlane.xlu0 %4429
        %4431 = vadd.xlane.f32.xlu0 %v4378
        %v4432 = vpop.xlane.xlu0 %4431
        %4433 = vadd.xlane.f32.xlu0 %v4379
        %v4434 = vpop.xlane.xlu0 %4433
        %4435 = vadd.xlane.f32.xlu0 %v4380
        %v4436 = vpop.xlane.xlu0 %4435
        %4437 = vadd.xlane.f32.xlu0 %v4381
        %v4438 = vpop.xlane.xlu0 %4437
        %4439 = vadd.xlane.f32.xlu0 %v4382
        %v4440 = vpop.xlane.xlu0 %4439
        %4441 = vadd.xlane.f32.xlu0 %v4383
        %v4442 = vpop.xlane.xlu0 %4441
        %4443 = vadd.xlane.f32.xlu0 %v4384
        %v4444 = vpop.xlane.xlu0 %4443
        %4445 = vadd.xlane.f32.xlu0 %v4385
        %v4446 = vpop.xlane.xlu0 %4445
        %4447 = vadd.xlane.f32.xlu0 %v4386
        %v4448 = vpop.xlane.xlu0 %4447
        %4449 = vadd.xlane.f32.xlu0 %v4387
        %v4450 = vpop.xlane.xlu0 %4449
        %4451 = vadd.xlane.f32.xlu0 %v4388
        %v4452 = vpop.xlane.xlu0 %4451
        %v4453 = vmax.f32 %v4390, 1e-24
        %v4454 = vmax.f32 %v4392, 1e-24
        %v4455 = vmax.f32 %v4394, 1e-24
        %v4456 = vmax.f32 %v4396, 1e-24
        %v4457 = vmax.f32 %v4398, 1e-24
        %v4458 = vmax.f32 %v4400, 1e-24
        %v4459 = vmax.f32 %v4402, 1e-24
        %v4460 = vmax.f32 %v4404, 1e-24
        %v4461 = vmax.f32 %v4406, 1e-24
        %v4462 = vmax.f32 %v4408, 1e-24
        %v4463 = vmax.f32 %v4410, 1e-24
        %v4464 = vmax.f32 %v4412, 1e-24
        %v4465 = vmax.f32 %v4414, 1e-24
        %v4466 = vmax.f32 %v4416, 1e-24
        %v4467 = vmax.f32 %v4418, 1e-24
        %v4468 = vmax.f32 %v4420, 1e-24
        %v4469 = vmax.f32 %v4422, 1e-24
        %v4470 = vmax.f32 %v4424, 1e-24
        %v4471 = vmax.f32 %v4426, 1e-24
        %v4472 = vmax.f32 %v4428, 1e-24
        %v4473 = vmax.f32 %v4430, 1e-24
        %v4474 = vmax.f32 %v4432, 1e-24
        %v4475 = vmax.f32 %v4434, 1e-24
        %v4476 = vmax.f32 %v4436, 1e-24
        %v4477 = vmax.f32 %v4438, 1e-24
        %v4478 = vmax.f32 %v4440, 1e-24
        %v4479 = vmax.f32 %v4442, 1e-24
        %v4480 = vmax.f32 %v4444, 1e-24
        %v4481 = vmax.f32 %v4446, 1e-24
        %v4482 = vmax.f32 %v4448, 1e-24
        %v4483 = vmax.f32 %v4450, 1e-24
        %v4484 = vmax.f32 %v4452, 1e-24
        %v4485 = vrsqrt.pop %v4453
        %v4486 = vrsqrt.pop %v4454
        %v4487 = vrsqrt.pop %v4455
        %v4488 = vrsqrt.pop %v4456
        %v4489 = vrsqrt.pop %v4457
        %v4490 = vrsqrt.pop %v4458
        %v4491 = vrsqrt.pop %v4459
        %v4492 = vrsqrt.pop %v4460
        %v4493 = vrsqrt.pop %v4461
        %v4494 = vrsqrt.pop %v4462
        %v4495 = vrsqrt.pop %v4463
        %v4496 = vrsqrt.pop %v4464
        %v4497 = vrsqrt.pop %v4465
        %v4498 = vrsqrt.pop %v4466
        %v4499 = vrsqrt.pop %v4467
        %v4500 = vrsqrt.pop %v4468
        %v4501 = vrsqrt.pop %v4469
        %v4502 = vrsqrt.pop %v4470
        %v4503 = vrsqrt.pop %v4471
        %v4504 = vrsqrt.pop %v4472
        %v4505 = vrsqrt.pop %v4473
        %v4506 = vrsqrt.pop %v4474
        %v4507 = vrsqrt.pop %v4475
        %v4508 = vrsqrt.pop %v4476
        %v4509 = vrsqrt.pop %v4477
        %v4510 = vrsqrt.pop %v4478
        %v4511 = vrsqrt.pop %v4479
        %v4512 = vrsqrt.pop %v4480
        %v4513 = vrsqrt.pop %v4481
        %v4514 = vrsqrt.pop %v4482
        %v4515 = vrsqrt.pop %v4483
        %v4516 = vrsqrt.pop %v4484
        %v4517 = vmul.f32 %v4231, %v4485
        %v4518 = vmul.f32 %v4234, %v4486
        %v4519 = vmul.f32 %v4239, %v4487
        %v4520 = vmul.f32 %v4242, %v4488
        %v4521 = vmul.f32 %v4247, %v4489
        %v4522 = vmul.f32 %v4250, %v4490
        %v4523 = vmul.f32 %v4255, %v4491
        %v4524 = vmul.f32 %v4258, %v4492
        %v4525 = vmul.f32 %v4263, %v4493
        %v4526 = vmul.f32 %v4266, %v4494
        %v4527 = vmul.f32 %v4271, %v4495
        %v4528 = vmul.f32 %v4274, %v4496
        %v4529 = vmul.f32 %v4279, %v4497
        %v4530 = vmul.f32 %v4282, %v4498
        %v4531 = vmul.f32 %v4287, %v4499
        %v4532 = vmul.f32 %v4290, %v4500
        %v4533 = vmul.f32 %v4295, %v4501
        %v4534 = vmul.f32 %v4298, %v4502
        %v4535 = vmul.f32 %v4303, %v4503
        %v4536 = vmul.f32 %v4306, %v4504
        %v4537 = vmul.f32 %v4311, %v4505
        %v4538 = vmul.f32 %v4314, %v4506
        %v4539 = vmul.f32 %v4319, %v4507
        %v4540 = vmul.f32 %v4322, %v4508
        %v4541 = vmul.f32 %v4327, %v4509
        %v4542 = vmul.f32 %v4330, %v4510
        %v4543 = vmul.f32 %v4335, %v4511
        %v4544 = vmul.f32 %v4338, %v4512
        %v4545 = vmul.f32 %v4343, %v4513
        %v4546 = vmul.f32 %v4346, %v4514
        %v4547 = vmul.f32 %v4351, %v4515
        %v4548 = vmul.f32 %v4354, %v4516
        %v4549 = vpack.c.bf16 %v4518, %v4517
        %v4550 = vpack.c.bf16 %v4520, %v4519
        %v4551 = vpack.c.bf16 %v4522, %v4521
        %v4552 = vpack.c.bf16 %v4524, %v4523
        %v4553 = vpack.c.bf16 %v4526, %v4525
        %v4554 = vpack.c.bf16 %v4528, %v4527
        %v4555 = vpack.c.bf16 %v4530, %v4529
        %v4556 = vpack.c.bf16 %v4532, %v4531
        %v4557 = vpack.c.bf16 %v4534, %v4533
        %v4558 = vpack.c.bf16 %v4536, %v4535
        %v4559 = vpack.c.bf16 %v4538, %v4537
        %v4560 = vpack.c.bf16 %v4540, %v4539
        %v4561 = vpack.c.bf16 %v4542, %v4541
        %v4562 = vpack.c.bf16 %v4544, %v4543
        %v4563 = vpack.c.bf16 %v4546, %v4545
        %v4564 = vpack.c.bf16 %v4548, %v4547
        %v4565 = vld [vmem:[%s1 + $0x4] sm:$0xf]
        %v4566 = vld [vmem:[%s1 + $0x10] sm:$0xf]
        %v4567 = vld [vmem:[%s1 + $0x1c] sm:$0xf]
        %v4568 = vld [vmem:[%s1 + $0x28] sm:$0xf]
        %v4569 = vld [vmem:[%s1 + $0x34] sm:$0xf]
        %v4570 = vld [vmem:[%s1 + $0x40] sm:$0xf]
        %v4571 = vld [vmem:[%s1 + $0x4c] sm:$0xf]
        %v4572 = vld [vmem:[%s1 + $0x58] sm:$0xf]
        %v4573 = vld [vmem:[%s1 + $0x64] sm:$0xf]
        %v4574 = vld [vmem:[%s1 + $0x70] sm:$0xf]
        %v4575 = vld [vmem:[%s1 + $0x7c] sm:$0xf]
        %v4576 = vld [vmem:[%s1 + $0x88] sm:$0xf]
        %v4577 = vld [vmem:[%s1 + $0x94] sm:$0xf]
        %v4578 = vld [vmem:[%s1 + $0xa0] sm:$0xf]
        %v4579 = vld [vmem:[%s1 + $0xac] sm:$0xf]
        %v4580 = vld [vmem:[%s1 + $0xb8] sm:$0xf]
        %v4581 = vld [vmem:[%s1 + $0xc4] sm:$0xf]
        %v4582 = vld [vmem:[%s1 + $0xd0] sm:$0xf]
        %v4583 = vld [vmem:[%s1 + $0xdc] sm:$0xf]
        %v4584 = vld [vmem:[%s1 + $0xe8] sm:$0xf]
        %v4585 = vld [vmem:[%s1 + $0xf4] sm:$0xf]
        %v4586 = vld [vmem:[%s1 + $0x100] sm:$0xf]
        %v4587 = vld [vmem:[%s1 + $0x10c] sm:$0xf]
        %v4588 = vld [vmem:[%s1 + $0x118] sm:$0xf]
        %v4589 = vld [vmem:[%s1 + $0x124] sm:$0xf]
        %v4590 = vld [vmem:[%s1 + $0x130] sm:$0xf]
        %v4591 = vld [vmem:[%s1 + $0x13c] sm:$0xf]
        %v4592 = vld [vmem:[%s1 + $0x148] sm:$0xf]
        %v4593 = vld [vmem:[%s1 + $0x154] sm:$0xf]
        %v4594 = vld [vmem:[%s1 + $0x160] sm:$0xf]
        %v4595 = vld [vmem:[%s1 + $0x16c] sm:$0xf]
        %v4596 = vld [vmem:[%s1 + $0x178] sm:$0xf]
        %v4597 = vld [vmem:[%s1 + $0x184] sm:$0xf]
        %v4598 = vld [vmem:[%s1 + $0x190] sm:$0xf]
        %v4599 = vld [vmem:[%s1 + $0x19c] sm:$0xf]
        %v4600 = vld [vmem:[%s1 + $0x1a8] sm:$0xf]
        %v4601 = vld [vmem:[%s2 + $0x1] sm:$0x1]
        %v4603 = vlaneseq
        %v4604 = vshrl.u32 %v4603, 7
        %v4605 = vsub.s32 0, %v4604
        %v4606 = vrot.slane %v4601, %v4605
        %v4644 = vunpack.c.l.b16 %v4565
        %v4645 = vunpack.c.l.b16 %v4566
        %v4646 = vunpack.c.l.b16 %v4567
        %v4647 = vunpack.c.l.b16 %v4568
        %v4648 = vunpack.c.l.b16 %v4569
        %v4649 = vunpack.c.l.b16 %v4570
        %v4650 = vunpack.c.l.b16 %v4571
        %v4651 = vunpack.c.l.b16 %v4572
        %v4652 = vunpack.c.l.b16 %v4573
        %v4653 = vunpack.c.l.b16 %v4574
        %v4654 = vunpack.c.l.b16 %v4575
        %v4655 = vunpack.c.l.b16 %v4576
        %v4656 = vunpack.c.l.b16 %v4577
        %v4657 = vunpack.c.l.b16 %v4578
        %v4658 = vunpack.c.l.b16 %v4579
        %v4659 = vunpack.c.l.b16 %v4580
        %v4660 = vunpack.c.l.b16 %v4581
        %v4661 = vunpack.c.l.b16 %v4582
        %v4662 = vunpack.c.l.b16 %v4583
        %v4663 = vunpack.c.l.b16 %v4584
        %v4664 = vunpack.c.l.b16 %v4585
        %v4665 = vunpack.c.l.b16 %v4586
        %v4666 = vunpack.c.l.b16 %v4587
        %v4667 = vunpack.c.l.b16 %v4588
        %v4668 = vunpack.c.l.b16 %v4589
        %v4669 = vunpack.c.l.b16 %v4590
        %v4670 = vunpack.c.l.b16 %v4591
        %v4671 = vunpack.c.l.b16 %v4592
        %v4672 = vunpack.c.l.b16 %v4593
        %v4673 = vunpack.c.l.b16 %v4594
        %v4674 = vunpack.c.l.b16 %v4595
        %v4675 = vunpack.c.l.b16 %v4596
        %v4676 = vunpack.c.l.b16 %v4597
        %v4677 = vunpack.c.l.b16 %v4598
        %v4678 = vunpack.c.l.b16 %v4599
        %v4679 = vunpack.c.l.b16 %v4600
        %v4680 = vpack.c.b16 %v4645, %v4644
        %v4681 = vpack.c.b16 %v4647, %v4646
        %v4682 = vpack.c.b16 %v4649, %v4648
        %v4683 = vpack.c.b16 %v4651, %v4650
        %v4684 = vpack.c.b16 %v4653, %v4652
        %v4685 = vpack.c.b16 %v4655, %v4654
        %v4686 = vpack.c.b16 %v4657, %v4656
        %v4687 = vpack.c.b16 %v4659, %v4658
        %v4688 = vpack.c.b16 %v4661, %v4660
        %v4689 = vpack.c.b16 %v4663, %v4662
        %v4690 = vpack.c.b16 %v4665, %v4664
        %v4691 = vpack.c.b16 %v4667, %v4666
        %v4692 = vpack.c.b16 %v4669, %v4668
        %v4693 = vpack.c.b16 %v4671, %v4670
        %v4694 = vpack.c.b16 %v4673, %v4672
        %v4695 = vpack.c.b16 %v4675, %v4674
        %v4696 = vpack.c.b16 %v4677, %v4676
        %v4697 = vpack.c.b16 %v4679, %v4678
        %4716 = vmatprep.subr.bf16.mxu0 0
        %4717 = vmatpush1.bf16.msra.mxu0 %v4680
        %4718 = vmatprep.subr.bf16.mxu0 0
        %4719 = vmatpush1.bf16.msra.mxu0 %v4681
        %4720 = vmatprep.subr.bf16.mxu0 0
        %4721 = vmatpush1.bf16.msra.mxu0 %v4682
        %4722 = vmatprep.subr.bf16.mxu0 0
        %4723 = vmatpush1.bf16.msra.mxu0 %v4683
        %4724 = vmatprep.subr.bf16.mxu0 0
        %4725 = vmatpush1.bf16.msra.mxu0 %v4684
        %4726 = vmatprep.subr.bf16.mxu0 0
        %4727 = vmatpush1.bf16.msra.mxu0 %v4685
        %4728 = vmatprep.subr.bf16.mxu0 0
        %4729 = vmatpush1.bf16.msra.mxu0 %v4686
        %4730 = vmatprep.subr.bf16.mxu0 0
        %4731 = vmatpush1.bf16.msra.mxu0 %v4687
        %4732 = vmatprep.subr.bf16.mxu0 0
        %4733 = vmatpush1.bf16.msra.mxu0 %v4688
        %4734 = vmatprep.subr.bf16.mxu0 0
        %4735 = vmatpush1.bf16.msra.mxu0 %v4689
        %4736 = vmatprep.subr.bf16.mxu0 0
        %4737 = vmatpush1.bf16.msra.mxu0 %v4690
        %4738 = vmatprep.subr.bf16.mxu0 0
        %4739 = vmatpush1.bf16.msra.mxu0 %v4691
        %4740 = vmatprep.subr.bf16.mxu0 0
        %4741 = vmatpush1.bf16.msra.mxu0 %v4692
        %4742 = vmatprep.subr.bf16.mxu0 0
        %4743 = vmatpush1.bf16.msra.mxu0 %v4693
        %4744 = vmatprep.subr.bf16.mxu0 0
        %4745 = vmatpush1.bf16.msra.mxu0 %v4694
        %4746 = vmatprep.subr.bf16.mxu0 0
        %4747 = vmatpush1.bf16.msra.mxu0 %v4695
        %4748 = vmatprep.mubr.bf16.mxu0 %v3789
        %4749 = vmatmul.mubr.bf16.gmra.mrb[0].mxu0 %v3788
        %v4750 = vpop.f32.mrb[0].mxu0
        %v4751 = vadd.f32 %v4606, %v4750
        %v4752 = vpop.f32.mrb[0].mxu0
        %v4753 = vpop.f32.mrb[0].mxu0
        %v4754 = vadd.f32 %v4606, %v4753
        %v4755 = vpop.f32.mrb[0].mxu0
        %4756 = vmatprep.mubr.bf16.mxu0 %v3792
        %4757 = vmatmul.mubr.bf16.gmra.mrb[0].mxu0 %v3791
        %v4758 = vpop.f32.mrb[0].mxu0
        %v4759 = vadd.f32 %v4606, %v4758
        %v4760 = vpop.f32.mrb[0].mxu0
        %v4761 = vpop.f32.mrb[0].mxu0
        %v4762 = vadd.f32 %v4606, %v4761
        %v4763 = vpop.f32.mrb[0].mxu0
        %4764 = vmatprep.mubr.bf16.mxu0 %v3795
        %4765 = vmatmul.mubr.bf16.gmra.mrb[0].mxu0 %v3794
        %v4766 = vpop.f32.mrb[0].mxu0
        %v4767 = vadd.f32 %v4606, %v4766
        %v4768 = vpop.f32.mrb[0].mxu0
        %v4769 = vpop.f32.mrb[0].mxu0
        %v4770 = vadd.f32 %v4606, %v4769
        %v4771 = vpop.f32.mrb[0].mxu0
        %4772 = vmatprep.mubr.bf16.mxu0 %v3798
        %4773 = vmatmul.mubr.bf16.gmra.mrb[0].mxu0 %v3797
        %v4774 = vpop.f32.mrb[0].mxu0
        %v4775 = vadd.f32 %v4606, %v4774
        %v4776 = vpop.f32.mrb[0].mxu0
        %v4777 = vpop.f32.mrb[0].mxu0
        %v4778 = vadd.f32 %v4606, %v4777
        %v4779 = vpop.f32.mrb[0].mxu0
        %4780 = vmatprep.mubr.bf16.mxu0 %v3801
        %4781 = vmatmul.mubr.bf16.gmra.mrb[0].mxu0 %v3800
        %v4782 = vpop.f32.mrb[0].mxu0
        %v4783 = vadd.f32 %v4606, %v4782
        %v4784 = vpop.f32.mrb[0].mxu0
        %v4785 = vpop.f32.mrb[0].mxu0
        %v4786 = vadd.f32 %v4606, %v4785
        %v4787 = vpop.f32.mrb[0].mxu0
        %4788 = vmatprep.mubr.bf16.mxu0 %v3804
        %4789 = vmatmul.mubr.bf16.gmra.mrb[0].mxu0 %v3803
        %v4790 = vpop.f32.mrb[0].mxu0
        %v4791 = vadd.f32 %v4606, %v4790
        %v4792 = vpop.f32.mrb[0].mxu0
        %v4793 = vpop.f32.mrb[0].mxu0
        %v4794 = vadd.f32 %v4606, %v4793
        %v4795 = vpop.f32.mrb[0].mxu0
        %4796 = vmatprep.mubr.bf16.mxu0 %v3807
        %4797 = vmatmul.mubr.bf16.gmra.mrb[0].mxu0 %v3806
        %v4798 = vpop.f32.mrb[0].mxu0
        %v4799 = vadd.f32 %v4606, %v4798
        %v4800 = vpop.f32.mrb[0].mxu0
        %v4801 = vpop.f32.mrb[0].mxu0
        %v4802 = vadd.f32 %v4606, %v4801
        %v4803 = vpop.f32.mrb[0].mxu0
        %4804 = vmatprep.mubr.bf16.mxu0 %v3810
        %4805 = vmatmul.mubr.bf16.gmra.mrb[0].mxu0 %v3809
        %v4806 = vpop.f32.mrb[0].mxu0
        %v4807 = vadd.f32 %v4606, %v4806
        %v4808 = vpop.f32.mrb[0].mxu0
        %v4809 = vpop.f32.mrb[0].mxu0
        %v4810 = vadd.f32 %v4606, %v4809
        %v4811 = vpop.f32.mrb[0].mxu0
        %4812 = vmatprep.mubr.bf16.mxu0 %v3813
        %4813 = vmatmul.mubr.bf16.gmra.mrb[0].mxu0 %v3812
        %v4814 = vpop.f32.mrb[0].mxu0
        %v4815 = vadd.f32 %v4606, %v4814
        %v4816 = vpop.f32.mrb[0].mxu0
        %v4817 = vpop.f32.mrb[0].mxu0
        %v4818 = vadd.f32 %v4606, %v4817
        %v4819 = vpop.f32.mrb[0].mxu0
        %4820 = vmatprep.mubr.bf16.mxu0 %v3816
        %4821 = vmatmul.mubr.bf16.gmra.mrb[0].mxu0 %v3815
        %v4822 = vpop.f32.mrb[0].mxu0
        %v4823 = vadd.f32 %v4606, %v4822
        %v4824 = vpop.f32.mrb[0].mxu0
        %v4825 = vpop.f32.mrb[0].mxu0
        %v4826 = vadd.f32 %v4606, %v4825
        %v4827 = vpop.f32.mrb[0].mxu0
        %4828 = vmatprep.mubr.bf16.mxu0 %v3819
        %4829 = vmatmul.mubr.bf16.gmra.mrb[0].mxu0 %v3818
        %v4830 = vpop.f32.mrb[0].mxu0
        %v4831 = vadd.f32 %v4606, %v4830
        %v4832 = vpop.f32.mrb[0].mxu0
        %v4833 = vpop.f32.mrb[0].mxu0
        %v4834 = vadd.f32 %v4606, %v4833
        %v4835 = vpop.f32.mrb[0].mxu0
        %4836 = vmatprep.mubr.bf16.mxu0 %v3822
        %4837 = vmatmul.mubr.bf16.gmra.mrb[0].mxu0 %v3821
        %v4838 = vpop.f32.mrb[0].mxu0
        %v4839 = vadd.f32 %v4606, %v4838
        %v4840 = vpop.f32.mrb[0].mxu0
        %v4841 = vpop.f32.mrb[0].mxu0
        %v4842 = vadd.f32 %v4606, %v4841
        %v4843 = vpop.f32.mrb[0].mxu0
        %4844 = vmatprep.mubr.bf16.mxu0 %v3825
        %4845 = vmatmul.mubr.bf16.gmra.mrb[0].mxu0 %v3824
        %v4846 = vpop.f32.mrb[0].mxu0
        %v4847 = vadd.f32 %v4606, %v4846
        %v4848 = vpop.f32.mrb[0].mxu0
        %v4849 = vpop.f32.mrb[0].mxu0
        %v4850 = vadd.f32 %v4606, %v4849
        %v4851 = vpop.f32.mrb[0].mxu0
        %4852 = vmatprep.mubr.bf16.mxu0 %v3828
        %4853 = vmatmul.mubr.bf16.gmra.mrb[0].mxu0 %v3827
        %v4854 = vpop.f32.mrb[0].mxu0
        %v4855 = vadd.f32 %v4606, %v4854
        %v4856 = vpop.f32.mrb[0].mxu0
        %v4857 = vpop.f32.mrb[0].mxu0
        %v4858 = vadd.f32 %v4606, %v4857
        %v4859 = vpop.f32.mrb[0].mxu0
        %4860 = vmatprep.mubr.bf16.mxu0 %v3831
        %4861 = vmatmul.mubr.bf16.gmra.mrb[0].mxu0 %v3830
        %v4862 = vpop.f32.mrb[0].mxu0
        %v4863 = vadd.f32 %v4606, %v4862
        %v4864 = vpop.f32.mrb[0].mxu0
        %v4865 = vpop.f32.mrb[0].mxu0
        %v4866 = vadd.f32 %v4606, %v4865
        %v4867 = vpop.f32.mrb[0].mxu0
        %4868 = vmatprep.mubr.bf16.mxu0 %v3834
        %4869 = vmatmul.mubr.bf16.gmra.mrb[0].mxu0 %v3833
        %v4870 = vpop.f32.mrb[0].mxu0
        %v4871 = vadd.f32 %v4606, %v4870
        %v4872 = vpop.f32.mrb[0].mxu0
        %v4873 = vpop.f32.mrb[0].mxu0
        %v4874 = vadd.f32 %v4606, %v4873
        %v4875 = vpop.f32.mrb[0].mxu0
        %4876 = vdwg.mxu0
        %4877 = vmatprep.subr.bf16.mxu0 0
        %4878 = vmatpush1.bf16.msra.mxu0 %v4696
        %4879 = vmatprep.subr.bf16.mxu0 0
        %4880 = vmatpush1.bf16.msra.mxu0 %v4697
        %4881 = vmatprep.subr.bf16.mxu0 0
        %4882 = vmatpush1.bf16.msra.mxu0 0
        %4883 = vmatprep.subr.bf16.mxu0 0
        %4884 = vmatpush1.bf16.msra.mxu0 0
        %4885 = vmatprep.subr.bf16.mxu0 0
        %4886 = vmatpush1.bf16.msra.mxu0 0
        %4887 = vmatprep.subr.bf16.mxu0 0
        %4888 = vmatpush1.bf16.msra.mxu0 0
        %4889 = vmatprep.subr.bf16.mxu0 0
        %4890 = vmatpush1.bf16.msra.mxu0 0
        %4891 = vmatprep.subr.bf16.mxu0 0
        %4892 = vmatpush1.bf16.msra.mxu0 0
        %4893 = vmatprep.subr.bf16.mxu0 0
        %4894 = vmatpush1.bf16.msra.mxu0 0
        %4895 = vmatprep.subr.bf16.mxu0 0
        %4896 = vmatpush1.bf16.msra.mxu0 0
        %4897 = vmatprep.subr.bf16.mxu0 0
        %4898 = vmatpush1.bf16.msra.mxu0 0
        %4899 = vmatprep.subr.bf16.mxu0 0
        %4900 = vmatpush1.bf16.msra.mxu0 0
        %4901 = vmatprep.subr.bf16.mxu0 0
        %4902 = vmatpush1.bf16.msra.mxu0 0
        %4903 = vmatprep.subr.bf16.mxu0 0
        %4904 = vmatpush1.bf16.msra.mxu0 0
        %4905 = vmatprep.subr.bf16.mxu0 0
        %4906 = vmatpush1.bf16.msra.mxu0 0
        %4907 = vmatprep.subr.bf16.mxu0 0
        %4908 = vmatpush1.bf16.msra.mxu0 0
        %4909 = vmatprep.mubr.bf16.mxu0 0
        %4910 = vmatmul.mubr.bf16.gmra.mrb[0].mxu0 %v3988
        %v4911 = vpop.f32.mrb[0].mxu0
        %v4912 = vadd.f32 %v4751, %v4911
        %v4913 = vpop.f32.mrb[0].mxu0
        %v4914 = vpop.f32.mrb[0].mxu0
        %v4915 = vadd.f32 %v4754, %v4914
        %v4916 = vpop.f32.mrb[0].mxu0
        %4917 = vmatprep.mubr.bf16.mxu0 0
        %4918 = vmatmul.mubr.bf16.gmra.mrb[0].mxu0 %v3991
        %v4919 = vpop.f32.mrb[0].mxu0
        %v4920 = vadd.f32 %v4759, %v4919
        %v4921 = vpop.f32.mrb[0].mxu0
        %v4922 = vpop.f32.mrb[0].mxu0
        %v4923 = vadd.f32 %v4762, %v4922
        %v4924 = vpop.f32.mrb[0].mxu0
        %4925 = vmatprep.mubr.bf16.mxu0 0
        %4926 = vmatmul.mubr.bf16.gmra.mrb[0].mxu0 %v3994
        %v4927 = vpop.f32.mrb[0].mxu0
        %v4928 = vadd.f32 %v4767, %v4927
        %v4929 = vpop.f32.mrb[0].mxu0
        %v4930 = vpop.f32.mrb[0].mxu0
        %v4931 = vadd.f32 %v4770, %v4930
        %v4932 = vpop.f32.mrb[0].mxu0
        %4933 = vmatprep.mubr.bf16.mxu0 0
        %4934 = vmatmul.mubr.bf16.gmra.mrb[0].mxu0 %v3997
        %v4935 = vpop.f32.mrb[0].mxu0
        %v4936 = vadd.f32 %v4775, %v4935
        %v4937 = vpop.f32.mrb[0].mxu0
        %v4938 = vpop.f32.mrb[0].mxu0
        %v4939 = vadd.f32 %v4778, %v4938
        %v4940 = vpop.f32.mrb[0].mxu0
        %4941 = vmatprep.mubr.bf16.mxu0 0
        %4942 = vmatmul.mubr.bf16.gmra.mrb[0].mxu0 %v4000
        %v4943 = vpop.f32.mrb[0].mxu0
        %v4944 = vadd.f32 %v4783, %v4943
        %v4945 = vpop.f32.mrb[0].mxu0
        %v4946 = vpop.f32.mrb[0].mxu0
        %v4947 = vadd.f32 %v4786, %v4946
        %v4948 = vpop.f32.mrb[0].mxu0
        %4949 = vmatprep.mubr.bf16.mxu0 0
        %4950 = vmatmul.mubr.bf16.gmra.mrb[0].mxu0 %v4003
        %v4951 = vpop.f32.mrb[0].mxu0
        %v4952 = vadd.f32 %v4791, %v4951
        %v4953 = vpop.f32.mrb[0].mxu0
        %v4954 = vpop.f32.mrb[0].mxu0
        %v4955 = vadd.f32 %v4794, %v4954
        %v4956 = vpop.f32.mrb[0].mxu0
        %4957 = vmatprep.mubr.bf16.mxu0 0
        %4958 = vmatmul.mubr.bf16.gmra.mrb[0].mxu0 %v4006
        %v4959 = vpop.f32.mrb[0].mxu0
        %v4960 = vadd.f32 %v4799, %v4959
        %v4961 = vpop.f32.mrb[0].mxu0
        %v4962 = vpop.f32.mrb[0].mxu0
        %v4963 = vadd.f32 %v4802, %v4962
        %v4964 = vpop.f32.mrb[0].mxu0
        %4965 = vmatprep.mubr.bf16.mxu0 0
        %4966 = vmatmul.mubr.bf16.gmra.mrb[0].mxu0 %v4009
        %v4967 = vpop.f32.mrb[0].mxu0
        %v4968 = vadd.f32 %v4807, %v4967
        %v4969 = vpop.f32.mrb[0].mxu0
        %v4970 = vpop.f32.mrb[0].mxu0
        %v4971 = vadd.f32 %v4810, %v4970
        %v4972 = vpop.f32.mrb[0].mxu0
        %4973 = vmatprep.mubr.bf16.mxu0 0
        %4974 = vmatmul.mubr.bf16.gmra.mrb[0].mxu0 %v4012
        %v4975 = vpop.f32.mrb[0].mxu0
        %v4976 = vadd.f32 %v4815, %v4975
        %v4977 = vpop.f32.mrb[0].mxu0
        %v4978 = vpop.f32.mrb[0].mxu0
        %v4979 = vadd.f32 %v4818, %v4978
        %v4980 = vpop.f32.mrb[0].mxu0
        %4981 = vmatprep.mubr.bf16.mxu0 0
        %4982 = vmatmul.mubr.bf16.gmra.mrb[0].mxu0 %v4015
        %v4983 = vpop.f32.mrb[0].mxu0
        %v4984 = vadd.f32 %v4823, %v4983
        %v4985 = vpop.f32.mrb[0].mxu0
        %v4986 = vpop.f32.mrb[0].mxu0
        %v4987 = vadd.f32 %v4826, %v4986
        %v4988 = vpop.f32.mrb[0].mxu0
        %4989 = vmatprep.mubr.bf16.mxu0 0
        %4990 = vmatmul.mubr.bf16.gmra.mrb[0].mxu0 %v4018
        %v4991 = vpop.f32.mrb[0].mxu0
        %v4992 = vadd.f32 %v4831, %v4991
        %v4993 = vpop.f32.mrb[0].mxu0
        %v4994 = vpop.f32.mrb[0].mxu0
        %v4995 = vadd.f32 %v4834, %v4994
        %v4996 = vpop.f32.mrb[0].mxu0
        %4997 = vmatprep.mubr.bf16.mxu0 0
        %4998 = vmatmul.mubr.bf16.gmra.mrb[0].mxu0 %v4021
        %v4999 = vpop.f32.mrb[0].mxu0
        %v5000 = vadd.f32 %v4839, %v4999
        %v5001 = vpop.f32.mrb[0].mxu0
        %v5002 = vpop.f32.mrb[0].mxu0
        %v5003 = vadd.f32 %v4842, %v5002
        %v5004 = vpop.f32.mrb[0].mxu0
        %5005 = vmatprep.mubr.bf16.mxu0 0
        %5006 = vmatmul.mubr.bf16.gmra.mrb[0].mxu0 %v4024
        %v5007 = vpop.f32.mrb[0].mxu0
        %v5008 = vadd.f32 %v4847, %v5007
        %v5009 = vpop.f32.mrb[0].mxu0
        %v5010 = vpop.f32.mrb[0].mxu0
        %v5011 = vadd.f32 %v4850, %v5010
        %v5012 = vpop.f32.mrb[0].mxu0
        %5013 = vmatprep.mubr.bf16.mxu0 0
        %5014 = vmatmul.mubr.bf16.gmra.mrb[0].mxu0 %v4027
        %v5015 = vpop.f32.mrb[0].mxu0
        %v5016 = vadd.f32 %v4855, %v5015
        %v5017 = vpop.f32.mrb[0].mxu0
        %v5018 = vpop.f32.mrb[0].mxu0
        %v5019 = vadd.f32 %v4858, %v5018
        %v5020 = vpop.f32.mrb[0].mxu0
        %5021 = vmatprep.mubr.bf16.mxu0 0
        %5022 = vmatmul.mubr.bf16.gmra.mrb[0].mxu0 %v4030
        %v5023 = vpop.f32.mrb[0].mxu0
        %v5024 = vadd.f32 %v4863, %v5023
        %v5025 = vpop.f32.mrb[0].mxu0
        %v5026 = vpop.f32.mrb[0].mxu0
        %v5027 = vadd.f32 %v4866, %v5026
        %v5028 = vpop.f32.mrb[0].mxu0
        %5029 = vmatprep.mubr.bf16.mxu0 0
        %5030 = vmatmul.mubr.bf16.gmra.mrb[0].mxu0 %v4033
        %v5031 = vpop.f32.mrb[0].mxu0
        %v5032 = vadd.f32 %v4871, %v5031
        %v5033 = vpop.f32.mrb[0].mxu0
        %v5034 = vpop.f32.mrb[0].mxu0
        %v5035 = vadd.f32 %v4874, %v5034
        %v5036 = vpop.f32.mrb[0].mxu0
        %5037 = vdwg.mxu0
        %v5038 = vmul.f32 %v4912, %v4912
        %v5039 = vmul.f32 %v4915, %v4915
        %v5040 = vmul.f32 %v4920, %v4920
        %v5041 = vmul.f32 %v4923, %v4923
        %v5042 = vmul.f32 %v4928, %v4928
        %v5043 = vmul.f32 %v4931, %v4931
        %v5044 = vmul.f32 %v4936, %v4936
        %v5045 = vmul.f32 %v4939, %v4939
        %v5046 = vmul.f32 %v4944, %v4944
        %v5047 = vmul.f32 %v4947, %v4947
        %v5048 = vmul.f32 %v4952, %v4952
        %v5049 = vmul.f32 %v4955, %v4955
        %v5050 = vmul.f32 %v4960, %v4960
        %v5051 = vmul.f32 %v4963, %v4963
        %v5052 = vmul.f32 %v4968, %v4968
        %v5053 = vmul.f32 %v4971, %v4971
        %v5054 = vmul.f32 %v4976, %v4976
        %v5055 = vmul.f32 %v4979, %v4979
        %v5056 = vmul.f32 %v4984, %v4984
        %v5057 = vmul.f32 %v4987, %v4987
        %v5058 = vmul.f32 %v4992, %v4992
        %v5059 = vmul.f32 %v4995, %v4995
        %v5060 = vmul.f32 %v5000, %v5000
        %v5061 = vmul.f32 %v5003, %v5003
        %v5062 = vmul.f32 %v5008, %v5008
        %v5063 = vmul.f32 %v5011, %v5011
        %v5064 = vmul.f32 %v5016, %v5016
        %v5065 = vmul.f32 %v5019, %v5019
        %v5066 = vmul.f32 %v5024, %v5024
        %v5067 = vmul.f32 %v5027, %v5027
        %v5068 = vmul.f32 %v5032, %v5032
        %v5069 = vmul.f32 %v5035, %v5035
        %5070 = vadd.xlane.f32.xlu0 %v5038
        %v5071 = vpop.xlane.xlu0 %5070
        %5072 = vadd.xlane.f32.xlu0 %v5039
        %v5073 = vpop.xlane.xlu0 %5072
        %5074 = vadd.xlane.f32.xlu0 %v5040
        %v5075 = vpop.xlane.xlu0 %5074
        %5076 = vadd.xlane.f32.xlu0 %v5041
        %v5077 = vpop.xlane.xlu0 %5076
        %5078 = vadd.xlane.f32.xlu0 %v5042
        %v5079 = vpop.xlane.xlu0 %5078
        %5080 = vadd.xlane.f32.xlu0 %v5043
        %v5081 = vpop.xlane.xlu0 %5080
        %5082 = vadd.xlane.f32.xlu0 %v5044
        %v5083 = vpop.xlane.xlu0 %5082
        %5084 = vadd.xlane.f32.xlu0 %v5045
        %v5085 = vpop.xlane.xlu0 %5084
        %5086 = vadd.xlane.f32.xlu0 %v5046
        %v5087 = vpop.xlane.xlu0 %5086
        %5088 = vadd.xlane.f32.xlu0 %v5047
        %v5089 = vpop.xlane.xlu0 %5088
        %5090 = vadd.xlane.f32.xlu0 %v5048
        %v5091 = vpop.xlane.xlu0 %5090
        %5092 = vadd.xlane.f32.xlu0 %v5049
        %v5093 = vpop.xlane.xlu0 %5092
        %5094 = vadd.xlane.f32.xlu0 %v5050
        %v5095 = vpop.xlane.xlu0 %5094
        %5096 = vadd.xlane.f32.xlu0 %v5051
        %v5097 = vpop.xlane.xlu0 %5096
        %5098 = vadd.xlane.f32.xlu0 %v5052
        %v5099 = vpop.xlane.xlu0 %5098
        %5100 = vadd.xlane.f32.xlu0 %v5053
        %v5101 = vpop.xlane.xlu0 %5100
        %5102 = vadd.xlane.f32.xlu0 %v5054
        %v5103 = vpop.xlane.xlu0 %5102
        %5104 = vadd.xlane.f32.xlu0 %v5055
        %v5105 = vpop.xlane.xlu0 %5104
        %5106 = vadd.xlane.f32.xlu0 %v5056
        %v5107 = vpop.xlane.xlu0 %5106
        %5108 = vadd.xlane.f32.xlu0 %v5057
        %v5109 = vpop.xlane.xlu0 %5108
        %5110 = vadd.xlane.f32.xlu0 %v5058
        %v5111 = vpop.xlane.xlu0 %5110
        %5112 = vadd.xlane.f32.xlu0 %v5059
        %v5113 = vpop.xlane.xlu0 %5112
        %5114 = vadd.xlane.f32.xlu0 %v5060
        %v5115 = vpop.xlane.xlu0 %5114
        %5116 = vadd.xlane.f32.xlu0 %v5061
        %v5117 = vpop.xlane.xlu0 %5116
        %5118 = vadd.xlane.f32.xlu0 %v5062
        %v5119 = vpop.xlane.xlu0 %5118
        %5120 = vadd.xlane.f32.xlu0 %v5063
        %v5121 = vpop.xlane.xlu0 %5120
        %5122 = vadd.xlane.f32.xlu0 %v5064
        %v5123 = vpop.xlane.xlu0 %5122
        %5124 = vadd.xlane.f32.xlu0 %v5065
        %v5125 = vpop.xlane.xlu0 %5124
        %5126 = vadd.xlane.f32.xlu0 %v5066
        %v5127 = vpop.xlane.xlu0 %5126
        %5128 = vadd.xlane.f32.xlu0 %v5067
        %v5129 = vpop.xlane.xlu0 %5128
        %5130 = vadd.xlane.f32.xlu0 %v5068
        %v5131 = vpop.xlane.xlu0 %5130
        %5132 = vadd.xlane.f32.xlu0 %v5069
        %v5133 = vpop.xlane.xlu0 %5132
        %v5134 = vmax.f32 %v5071, 1e-24
        %v5135 = vmax.f32 %v5073, 1e-24
        %v5136 = vmax.f32 %v5075, 1e-24
        %v5137 = vmax.f32 %v5077, 1e-24
        %v5138 = vmax.f32 %v5079, 1e-24
        %v5139 = vmax.f32 %v5081, 1e-24
        %v5140 = vmax.f32 %v5083, 1e-24
        %v5141 = vmax.f32 %v5085, 1e-24
        %v5142 = vmax.f32 %v5087, 1e-24
        %v5143 = vmax.f32 %v5089, 1e-24
        %v5144 = vmax.f32 %v5091, 1e-24
        %v5145 = vmax.f32 %v5093, 1e-24
        %v5146 = vmax.f32 %v5095, 1e-24
        %v5147 = vmax.f32 %v5097, 1e-24
        %v5148 = vmax.f32 %v5099, 1e-24
        %v5149 = vmax.f32 %v5101, 1e-24
        %v5150 = vmax.f32 %v5103, 1e-24
        %v5151 = vmax.f32 %v5105, 1e-24
        %v5152 = vmax.f32 %v5107, 1e-24
        %v5153 = vmax.f32 %v5109, 1e-24
        %v5154 = vmax.f32 %v5111, 1e-24
        %v5155 = vmax.f32 %v5113, 1e-24
        %v5156 = vmax.f32 %v5115, 1e-24
        %v5157 = vmax.f32 %v5117, 1e-24
        %v5158 = vmax.f32 %v5119, 1e-24
        %v5159 = vmax.f32 %v5121, 1e-24
        %v5160 = vmax.f32 %v5123, 1e-24
        %v5161 = vmax.f32 %v5125, 1e-24
        %v5162 = vmax.f32 %v5127, 1e-24
        %v5163 = vmax.f32 %v5129, 1e-24
        %v5164 = vmax.f32 %v5131, 1e-24
        %v5165 = vmax.f32 %v5133, 1e-24
        %v5166 = vrsqrt.pop %v5134
        %v5167 = vrsqrt.pop %v5135
        %v5168 = vrsqrt.pop %v5136
        %v5169 = vrsqrt.pop %v5137
        %v5170 = vrsqrt.pop %v5138
        %v5171 = vrsqrt.pop %v5139
        %v5172 = vrsqrt.pop %v5140
        %v5173 = vrsqrt.pop %v5141
        %v5174 = vrsqrt.pop %v5142
        %v5175 = vrsqrt.pop %v5143
        %v5176 = vrsqrt.pop %v5144
        %v5177 = vrsqrt.pop %v5145
        %v5178 = vrsqrt.pop %v5146
        %v5179 = vrsqrt.pop %v5147
        %v5180 = vrsqrt.pop %v5148
        %v5181 = vrsqrt.pop %v5149
        %v5182 = vrsqrt.pop %v5150
        %v5183 = vrsqrt.pop %v5151
        %v5184 = vrsqrt.pop %v5152
        %v5185 = vrsqrt.pop %v5153
        %v5186 = vrsqrt.pop %v5154
        %v5187 = vrsqrt.pop %v5155
        %v5188 = vrsqrt.pop %v5156
        %v5189 = vrsqrt.pop %v5157
        %v5190 = vrsqrt.pop %v5158
        %v5191 = vrsqrt.pop %v5159
        %v5192 = vrsqrt.pop %v5160
        %v5193 = vrsqrt.pop %v5161
        %v5194 = vrsqrt.pop %v5162
        %v5195 = vrsqrt.pop %v5163
        %v5196 = vrsqrt.pop %v5164
        %v5197 = vrsqrt.pop %v5165
        %v5198 = vmul.f32 %v4912, %v5166
        %v5199 = vmul.f32 %v4915, %v5167
        %v5200 = vmul.f32 %v4920, %v5168
        %v5201 = vmul.f32 %v4923, %v5169
        %v5202 = vmul.f32 %v4928, %v5170
        %v5203 = vmul.f32 %v4931, %v5171
        %v5204 = vmul.f32 %v4936, %v5172
        %v5205 = vmul.f32 %v4939, %v5173
        %v5206 = vmul.f32 %v4944, %v5174
        %v5207 = vmul.f32 %v4947, %v5175
        %v5208 = vmul.f32 %v4952, %v5176
        %v5209 = vmul.f32 %v4955, %v5177
        %v5210 = vmul.f32 %v4960, %v5178
        %v5211 = vmul.f32 %v4963, %v5179
        %v5212 = vmul.f32 %v4968, %v5180
        %v5213 = vmul.f32 %v4971, %v5181
        %v5214 = vmul.f32 %v4976, %v5182
        %v5215 = vmul.f32 %v4979, %v5183
        %v5216 = vmul.f32 %v4984, %v5184
        %v5217 = vmul.f32 %v4987, %v5185
        %v5218 = vmul.f32 %v4992, %v5186
        %v5219 = vmul.f32 %v4995, %v5187
        %v5220 = vmul.f32 %v5000, %v5188
        %v5221 = vmul.f32 %v5003, %v5189
        %v5222 = vmul.f32 %v5008, %v5190
        %v5223 = vmul.f32 %v5011, %v5191
        %v5224 = vmul.f32 %v5016, %v5192
        %v5225 = vmul.f32 %v5019, %v5193
        %v5226 = vmul.f32 %v5024, %v5194
        %v5227 = vmul.f32 %v5027, %v5195
        %v5228 = vmul.f32 %v5032, %v5196
        %v5229 = vmul.f32 %v5035, %v5197
        %v5230 = vpack.c.bf16 %v5199, %v5198
        %v5231 = vpack.c.bf16 %v5201, %v5200
        %v5232 = vpack.c.bf16 %v5203, %v5202
        %v5233 = vpack.c.bf16 %v5205, %v5204
        %v5234 = vpack.c.bf16 %v5207, %v5206
        %v5235 = vpack.c.bf16 %v5209, %v5208
        %v5236 = vpack.c.bf16 %v5211, %v5210
        %v5237 = vpack.c.bf16 %v5213, %v5212
        %v5238 = vpack.c.bf16 %v5215, %v5214
        %v5239 = vpack.c.bf16 %v5217, %v5216
        %v5240 = vpack.c.bf16 %v5219, %v5218
        %v5241 = vpack.c.bf16 %v5221, %v5220
        %v5242 = vpack.c.bf16 %v5223, %v5222
        %v5243 = vpack.c.bf16 %v5225, %v5224
        %v5244 = vpack.c.bf16 %v5227, %v5226
        %v5245 = vpack.c.bf16 %v5229, %v5228
        %v5246 = vld [vmem:[%s1 + $0x8] sm:$0xf]
        %v5247 = vld [vmem:[%s1 + $0x14] sm:$0xf]
        %v5248 = vld [vmem:[%s1 + $0x20] sm:$0xf]
        %v5249 = vld [vmem:[%s1 + $0x2c] sm:$0xf]
        %v5250 = vld [vmem:[%s1 + $0x38] sm:$0xf]
        %v5251 = vld [vmem:[%s1 + $0x44] sm:$0xf]
        %v5252 = vld [vmem:[%s1 + $0x50] sm:$0xf]
        %v5253 = vld [vmem:[%s1 + $0x5c] sm:$0xf]
        %v5254 = vld [vmem:[%s1 + $0x68] sm:$0xf]
        %v5255 = vld [vmem:[%s1 + $0x74] sm:$0xf]
        %v5256 = vld [vmem:[%s1 + $0x80] sm:$0xf]
        %v5257 = vld [vmem:[%s1 + $0x8c] sm:$0xf]
        %v5258 = vld [vmem:[%s1 + $0x98] sm:$0xf]
        %v5259 = vld [vmem:[%s1 + $0xa4] sm:$0xf]
        %v5260 = vld [vmem:[%s1 + $0xb0] sm:$0xf]
        %v5261 = vld [vmem:[%s1 + $0xbc] sm:$0xf]
        %v5262 = vld [vmem:[%s1 + $0xc8] sm:$0xf]
        %v5263 = vld [vmem:[%s1 + $0xd4] sm:$0xf]
        %v5264 = vld [vmem:[%s1 + $0xe0] sm:$0xf]
        %v5265 = vld [vmem:[%s1 + $0xec] sm:$0xf]
        %v5266 = vld [vmem:[%s1 + $0xf8] sm:$0xf]
        %v5267 = vld [vmem:[%s1 + $0x104] sm:$0xf]
        %v5268 = vld [vmem:[%s1 + $0x110] sm:$0xf]
        %v5269 = vld [vmem:[%s1 + $0x11c] sm:$0xf]
        %v5270 = vld [vmem:[%s1 + $0x128] sm:$0xf]
        %v5271 = vld [vmem:[%s1 + $0x134] sm:$0xf]
        %v5272 = vld [vmem:[%s1 + $0x140] sm:$0xf]
        %v5273 = vld [vmem:[%s1 + $0x14c] sm:$0xf]
        %v5274 = vld [vmem:[%s1 + $0x158] sm:$0xf]
        %v5275 = vld [vmem:[%s1 + $0x164] sm:$0xf]
        %v5276 = vld [vmem:[%s1 + $0x170] sm:$0xf]
        %v5277 = vld [vmem:[%s1 + $0x17c] sm:$0xf]
        %v5278 = vld [vmem:[%s1 + $0x188] sm:$0xf]
        %v5279 = vld [vmem:[%s1 + $0x194] sm:$0xf]
        %v5280 = vld [vmem:[%s1 + $0x1a0] sm:$0xf]
        %v5281 = vld [vmem:[%s1 + $0x1ac] sm:$0xf]
        %v5282 = vld [vmem:[%s2 + $0x2] sm:$0x1]
        %v5284 = vlaneseq
        %v5285 = vshrl.u32 %v5284, 7
        %v5286 = vsub.s32 0, %v5285
        %v5287 = vrot.slane %v5282, %v5286
        %v5325 = vunpack.c.l.b16 %v5246
        %v5326 = vunpack.c.l.b16 %v5247
        %v5327 = vunpack.c.l.b16 %v5248
        %v5328 = vunpack.c.l.b16 %v5249
        %v5329 = vunpack.c.l.b16 %v5250
        %v5330 = vunpack.c.l.b16 %v5251
        %v5331 = vunpack.c.l.b16 %v5252
        %v5332 = vunpack.c.l.b16 %v5253
        %v5333 = vunpack.c.l.b16 %v5254
        %v5334 = vunpack.c.l.b16 %v5255
        %v5335 = vunpack.c.l.b16 %v5256
        %v5336 = vunpack.c.l.b16 %v5257
        %v5337 = vunpack.c.l.b16 %v5258
        %v5338 = vunpack.c.l.b16 %v5259
        %v5339 = vunpack.c.l.b16 %v5260
        %v5340 = vunpack.c.l.b16 %v5261
        %v5341 = vunpack.c.l.b16 %v5262
        %v5342 = vunpack.c.l.b16 %v5263
        %v5343 = vunpack.c.l.b16 %v5264
        %v5344 = vunpack.c.l.b16 %v5265
        %v5345 = vunpack.c.l.b16 %v5266
        %v5346 = vunpack.c.l.b16 %v5267
        %v5347 = vunpack.c.l.b16 %v5268
        %v5348 = vunpack.c.l.b16 %v5269
        %v5349 = vunpack.c.l.b16 %v5270
        %v5350 = vunpack.c.l.b16 %v5271
        %v5351 = vunpack.c.l.b16 %v5272
        %v5352 = vunpack.c.l.b16 %v5273
        %v5353 = vunpack.c.l.b16 %v5274
        %v5354 = vunpack.c.l.b16 %v5275
        %v5355 = vunpack.c.l.b16 %v5276
        %v5356 = vunpack.c.l.b16 %v5277
        %v5357 = vunpack.c.l.b16 %v5278
        %v5358 = vunpack.c.l.b16 %v5279
        %v5359 = vunpack.c.l.b16 %v5280
        %v5360 = vunpack.c.l.b16 %v5281
        %v5361 = vpack.c.b16 %v5326, %v5325
        %v5362 = vpack.c.b16 %v5328, %v5327
        %v5363 = vpack.c.b16 %v5330, %v5329
        %v5364 = vpack.c.b16 %v5332, %v5331
        %v5365 = vpack.c.b16 %v5334, %v5333
        %v5366 = vpack.c.b16 %v5336, %v5335
        %v5367 = vpack.c.b16 %v5338, %v5337
        %v5368 = vpack.c.b16 %v5340, %v5339
        %v5369 = vpack.c.b16 %v5342, %v5341
        %v5370 = vpack.c.b16 %v5344, %v5343
        %v5371 = vpack.c.b16 %v5346, %v5345
        %v5372 = vpack.c.b16 %v5348, %v5347
        %v5373 = vpack.c.b16 %v5350, %v5349
        %v5374 = vpack.c.b16 %v5352, %v5351
        %v5375 = vpack.c.b16 %v5354, %v5353
        %v5376 = vpack.c.b16 %v5356, %v5355
        %v5377 = vpack.c.b16 %v5358, %v5357
        %v5378 = vpack.c.b16 %v5360, %v5359
        %5397 = vmatprep.subr.bf16.mxu0 0
        %5398 = vmatpush1.bf16.msra.mxu0 %v5361
        %5399 = vmatprep.subr.bf16.mxu0 0
        %5400 = vmatpush1.bf16.msra.mxu0 %v5362
        %5401 = vmatprep.subr.bf16.mxu0 0
        %5402 = vmatpush1.bf16.msra.mxu0 %v5363
        %5403 = vmatprep.subr.bf16.mxu0 0
        %5404 = vmatpush1.bf16.msra.mxu0 %v5364
        %5405 = vmatprep.subr.bf16.mxu0 0
        %5406 = vmatpush1.bf16.msra.mxu0 %v5365
        %5407 = vmatprep.subr.bf16.mxu0 0
        %5408 = vmatpush1.bf16.msra.mxu0 %v5366
        %5409 = vmatprep.subr.bf16.mxu0 0
        %5410 = vmatpush1.bf16.msra.mxu0 %v5367
        %5411 = vmatprep.subr.bf16.mxu0 0
        %5412 = vmatpush1.bf16.msra.mxu0 %v5368
        %5413 = vmatprep.subr.bf16.mxu0 0
        %5414 = vmatpush1.bf16.msra.mxu0 %v5369
        %5415 = vmatprep.subr.bf16.mxu0 0
        %5416 = vmatpush1.bf16.msra.mxu0 %v5370
        %5417 = vmatprep.subr.bf16.mxu0 0
        %5418 = vmatpush1.bf16.msra.mxu0 %v5371
        %5419 = vmatprep.subr.bf16.mxu0 0
        %5420 = vmatpush1.bf16.msra.mxu0 %v5372
        %5421 = vmatprep.subr.bf16.mxu0 0
        %5422 = vmatpush1.bf16.msra.mxu0 %v5373
        %5423 = vmatprep.subr.bf16.mxu0 0
        %5424 = vmatpush1.bf16.msra.mxu0 %v5374
        %5425 = vmatprep.subr.bf16.mxu0 0
        %5426 = vmatpush1.bf16.msra.mxu0 %v5375
        %5427 = vmatprep.subr.bf16.mxu0 0
        %5428 = vmatpush1.bf16.msra.mxu0 %v5376
        %5429 = vmatprep.mubr.bf16.mxu0 %v3789
        %5430 = vmatmul.mubr.bf16.gmra.mrb[0].mxu0 %v3788
        %v5431 = vpop.f32.mrb[0].mxu0
        %v5432 = vadd.f32 %v5287, %v5431
        %v5433 = vpop.f32.mrb[0].mxu0
        %v5434 = vpop.f32.mrb[0].mxu0
        %v5435 = vadd.f32 %v5287, %v5434
        %v5436 = vpop.f32.mrb[0].mxu0
        %5437 = vmatprep.mubr.bf16.mxu0 %v3792
        %5438 = vmatmul.mubr.bf16.gmra.mrb[0].mxu0 %v3791
        %v5439 = vpop.f32.mrb[0].mxu0
        %v5440 = vadd.f32 %v5287, %v5439
        %v5441 = vpop.f32.mrb[0].mxu0
        %v5442 = vpop.f32.mrb[0].mxu0
        %v5443 = vadd.f32 %v5287, %v5442
        %v5444 = vpop.f32.mrb[0].mxu0
        %5445 = vmatprep.mubr.bf16.mxu0 %v3795
        %5446 = vmatmul.mubr.bf16.gmra.mrb[0].mxu0 %v3794
        %v5447 = vpop.f32.mrb[0].mxu0
        %v5448 = vadd.f32 %v5287, %v5447
        %v5449 = vpop.f32.mrb[0].mxu0
        %v5450 = vpop.f32.mrb[0].mxu0
        %v5451 = vadd.f32 %v5287, %v5450
        %v5452 = vpop.f32.mrb[0].mxu0
        %5453 = vmatprep.mubr.bf16.mxu0 %v3798
        %5454 = vmatmul.mubr.bf16.gmra.mrb[0].mxu0 %v3797
        %v5455 = vpop.f32.mrb[0].mxu0
        %v5456 = vadd.f32 %v5287, %v5455
        %v5457 = vpop.f32.mrb[0].mxu0
        %v5458 = vpop.f32.mrb[0].mxu0
        %v5459 = vadd.f32 %v5287, %v5458
        %v5460 = vpop.f32.mrb[0].mxu0
        %5461 = vmatprep.mubr.bf16.mxu0 %v3801
        %5462 = vmatmul.mubr.bf16.gmra.mrb[0].mxu0 %v3800
        %v5463 = vpop.f32.mrb[0].mxu0
        %v5464 = vadd.f32 %v5287, %v5463
        %v5465 = vpop.f32.mrb[0].mxu0
        %v5466 = vpop.f32.mrb[0].mxu0
        %v5467 = vadd.f32 %v5287, %v5466
        %v5468 = vpop.f32.mrb[0].mxu0
        %5469 = vmatprep.mubr.bf16.mxu0 %v3804
        %5470 = vmatmul.mubr.bf16.gmra.mrb[0].mxu0 %v3803
        %v5471 = vpop.f32.mrb[0].mxu0
        %v5472 = vadd.f32 %v5287, %v5471
        %v5473 = vpop.f32.mrb[0].mxu0
        %v5474 = vpop.f32.mrb[0].mxu0
        %v5475 = vadd.f32 %v5287, %v5474
        %v5476 = vpop.f32.mrb[0].mxu0
        %5477 = vmatprep.mubr.bf16.mxu0 %v3807
        %5478 = vmatmul.mubr.bf16.gmra.mrb[0].mxu0 %v3806
        %v5479 = vpop.f32.mrb[0].mxu0
        %v5480 = vadd.f32 %v5287, %v5479
        %v5481 = vpop.f32.mrb[0].mxu0
        %v5482 = vpop.f32.mrb[0].mxu0
        %v5483 = vadd.f32 %v5287, %v5482
        %v5484 = vpop.f32.mrb[0].mxu0
        %5485 = vmatprep.mubr.bf16.mxu0 %v3810
        %5486 = vmatmul.mubr.bf16.gmra.mrb[0].mxu0 %v3809
        %v5487 = vpop.f32.mrb[0].mxu0
        %v5488 = vadd.f32 %v5287, %v5487
        %v5489 = vpop.f32.mrb[0].mxu0
        %v5490 = vpop.f32.mrb[0].mxu0
        %v5491 = vadd.f32 %v5287, %v5490
        %v5492 = vpop.f32.mrb[0].mxu0
        %5493 = vmatprep.mubr.bf16.mxu0 %v3813
        %5494 = vmatmul.mubr.bf16.gmra.mrb[0].mxu0 %v3812
        %v5495 = vpop.f32.mrb[0].mxu0
        %v5496 = vadd.f32 %v5287, %v5495
        %v5497 = vpop.f32.mrb[0].mxu0
        %v5498 = vpop.f32.mrb[0].mxu0
        %v5499 = vadd.f32 %v5287, %v5498
        %v5500 = vpop.f32.mrb[0].mxu0
        %5501 = vmatprep.mubr.bf16.mxu0 %v3816
        %5502 = vmatmul.mubr.bf16.gmra.mrb[0].mxu0 %v3815
        %v5503 = vpop.f32.mrb[0].mxu0
        %v5504 = vadd.f32 %v5287, %v5503
        %v5505 = vpop.f32.mrb[0].mxu0
        %v5506 = vpop.f32.mrb[0].mxu0
        %v5507 = vadd.f32 %v5287, %v5506
        %v5508 = vpop.f32.mrb[0].mxu0
        %5509 = vmatprep.mubr.bf16.mxu0 %v3819
        %5510 = vmatmul.mubr.bf16.gmra.mrb[0].mxu0 %v3818
        %v5511 = vpop.f32.mrb[0].mxu0
        %v5512 = vadd.f32 %v5287, %v5511
        %v5513 = vpop.f32.mrb[0].mxu0
        %v5514 = vpop.f32.mrb[0].mxu0
        %v5515 = vadd.f32 %v5287, %v5514
        %v5516 = vpop.f32.mrb[0].mxu0
        %5517 = vmatprep.mubr.bf16.mxu0 %v3822
        %5518 = vmatmul.mubr.bf16.gmra.mrb[0].mxu0 %v3821
        %v5519 = vpop.f32.mrb[0].mxu0
        %v5520 = vadd.f32 %v5287, %v5519
        %v5521 = vpop.f32.mrb[0].mxu0
        %v5522 = vpop.f32.mrb[0].mxu0
        %v5523 = vadd.f32 %v5287, %v5522
        %v5524 = vpop.f32.mrb[0].mxu0
        %5525 = vmatprep.mubr.bf16.mxu0 %v3825
        %5526 = vmatmul.mubr.bf16.gmra.mrb[0].mxu0 %v3824
        %v5527 = vpop.f32.mrb[0].mxu0
        %v5528 = vadd.f32 %v5287, %v5527
        %v5529 = vpop.f32.mrb[0].mxu0
        %v5530 = vpop.f32.mrb[0].mxu0
        %v5531 = vadd.f32 %v5287, %v5530
        %v5532 = vpop.f32.mrb[0].mxu0
        %5533 = vmatprep.mubr.bf16.mxu0 %v3828
        %5534 = vmatmul.mubr.bf16.gmra.mrb[0].mxu0 %v3827
        %v5535 = vpop.f32.mrb[0].mxu0
        %v5536 = vadd.f32 %v5287, %v5535
        %v5537 = vpop.f32.mrb[0].mxu0
        %v5538 = vpop.f32.mrb[0].mxu0
        %v5539 = vadd.f32 %v5287, %v5538
        %v5540 = vpop.f32.mrb[0].mxu0
        %5541 = vmatprep.mubr.bf16.mxu0 %v3831
        %5542 = vmatmul.mubr.bf16.gmra.mrb[0].mxu0 %v3830
        %v5543 = vpop.f32.mrb[0].mxu0
        %v5544 = vadd.f32 %v5287, %v5543
        %v5545 = vpop.f32.mrb[0].mxu0
        %v5546 = vpop.f32.mrb[0].mxu0
        %v5547 = vadd.f32 %v5287, %v5546
        %v5548 = vpop.f32.mrb[0].mxu0
        %5549 = vmatprep.mubr.bf16.mxu0 %v3834
        %5550 = vmatmul.mubr.bf16.gmra.mrb[0].mxu0 %v3833
        %v5551 = vpop.f32.mrb[0].mxu0
        %v5552 = vadd.f32 %v5287, %v5551
        %v5553 = vpop.f32.mrb[0].mxu0
        %v5554 = vpop.f32.mrb[0].mxu0
        %v5555 = vadd.f32 %v5287, %v5554
        %v5556 = vpop.f32.mrb[0].mxu0
        %5557 = vdwg.mxu0
        %5558 = vmatprep.subr.bf16.mxu0 0
        %5559 = vmatpush1.bf16.msra.mxu0 %v5377
        %5560 = vmatprep.subr.bf16.mxu0 0
        %5561 = vmatpush1.bf16.msra.mxu0 %v5378
        %5562 = vmatprep.subr.bf16.mxu0 0
        %5563 = vmatpush1.bf16.msra.mxu0 0
        %5564 = vmatprep.subr.bf16.mxu0 0
        %5565 = vmatpush1.bf16.msra.mxu0 0
        %5566 = vmatprep.subr.bf16.mxu0 0
        %5567 = vmatpush1.bf16.msra.mxu0 0
        %5568 = vmatprep.subr.bf16.mxu0 0
        %5569 = vmatpush1.bf16.msra.mxu0 0
        %5570 = vmatprep.subr.bf16.mxu0 0
        %5571 = vmatpush1.bf16.msra.mxu0 0
        %5572 = vmatprep.subr.bf16.mxu0 0
        %5573 = vmatpush1.bf16.msra.mxu0 0
        %5574 = vmatprep.subr.bf16.mxu0 0
        %5575 = vmatpush1.bf16.msra.mxu0 0
        %5576 = vmatprep.subr.bf16.mxu0 0
        %5577 = vmatpush1.bf16.msra.mxu0 0
        %5578 = vmatprep.subr.bf16.mxu0 0
        %5579 = vmatpush1.bf16.msra.mxu0 0
        %5580 = vmatprep.subr.bf16.mxu0 0
        %5581 = vmatpush1.bf16.msra.mxu0 0
        %5582 = vmatprep.subr.bf16.mxu0 0
        %5583 = vmatpush1.bf16.msra.mxu0 0
        %5584 = vmatprep.subr.bf16.mxu0 0
        %5585 = vmatpush1.bf16.msra.mxu0 0
        %5586 = vmatprep.subr.bf16.mxu0 0
        %5587 = vmatpush1.bf16.msra.mxu0 0
        %5588 = vmatprep.subr.bf16.mxu0 0
        %5589 = vmatpush1.bf16.msra.mxu0 0
        %5590 = vmatprep.mubr.bf16.mxu0 0
        %5591 = vmatmul.mubr.bf16.gmra.mrb[0].mxu0 %v3988
        %v5592 = vpop.f32.mrb[0].mxu0
        %v5593 = vadd.f32 %v5432, %v5592
        %v5594 = vpop.f32.mrb[0].mxu0
        %v5595 = vpop.f32.mrb[0].mxu0
        %v5596 = vadd.f32 %v5435, %v5595
        %v5597 = vpop.f32.mrb[0].mxu0
        %5598 = vmatprep.mubr.bf16.mxu0 0
        %5599 = vmatmul.mubr.bf16.gmra.mrb[0].mxu0 %v3991
        %v5600 = vpop.f32.mrb[0].mxu0
        %v5601 = vadd.f32 %v5440, %v5600
        %v5602 = vpop.f32.mrb[0].mxu0
        %v5603 = vpop.f32.mrb[0].mxu0
        %v5604 = vadd.f32 %v5443, %v5603
        %v5605 = vpop.f32.mrb[0].mxu0
        %5606 = vmatprep.mubr.bf16.mxu0 0
        %5607 = vmatmul.mubr.bf16.gmra.mrb[0].mxu0 %v3994
        %v5608 = vpop.f32.mrb[0].mxu0
        %v5609 = vadd.f32 %v5448, %v5608
        %v5610 = vpop.f32.mrb[0].mxu0
        %v5611 = vpop.f32.mrb[0].mxu0
        %v5612 = vadd.f32 %v5451, %v5611
        %v5613 = vpop.f32.mrb[0].mxu0
        %5614 = vmatprep.mubr.bf16.mxu0 0
        %5615 = vmatmul.mubr.bf16.gmra.mrb[0].mxu0 %v3997
        %v5616 = vpop.f32.mrb[0].mxu0
        %v5617 = vadd.f32 %v5456, %v5616
        %v5618 = vpop.f32.mrb[0].mxu0
        %v5619 = vpop.f32.mrb[0].mxu0
        %v5620 = vadd.f32 %v5459, %v5619
        %v5621 = vpop.f32.mrb[0].mxu0
        %5622 = vmatprep.mubr.bf16.mxu0 0
        %5623 = vmatmul.mubr.bf16.gmra.mrb[0].mxu0 %v4000
        %v5624 = vpop.f32.mrb[0].mxu0
        %v5625 = vadd.f32 %v5464, %v5624
        %v5626 = vpop.f32.mrb[0].mxu0
        %v5627 = vpop.f32.mrb[0].mxu0
        %v5628 = vadd.f32 %v5467, %v5627
        %v5629 = vpop.f32.mrb[0].mxu0
        %5630 = vmatprep.mubr.bf16.mxu0 0
        %5631 = vmatmul.mubr.bf16.gmra.mrb[0].mxu0 %v4003
        %v5632 = vpop.f32.mrb[0].mxu0
        %v5633 = vadd.f32 %v5472, %v5632
        %v5634 = vpop.f32.mrb[0].mxu0
        %v5635 = vpop.f32.mrb[0].mxu0
        %v5636 = vadd.f32 %v5475, %v5635
        %v5637 = vpop.f32.mrb[0].mxu0
        %5638 = vmatprep.mubr.bf16.mxu0 0
        %5639 = vmatmul.mubr.bf16.gmra.mrb[0].mxu0 %v4006
        %v5640 = vpop.f32.mrb[0].mxu0
        %v5641 = vadd.f32 %v5480, %v5640
        %v5642 = vpop.f32.mrb[0].mxu0
        %v5643 = vpop.f32.mrb[0].mxu0
        %v5644 = vadd.f32 %v5483, %v5643
        %v5645 = vpop.f32.mrb[0].mxu0
        %5646 = vmatprep.mubr.bf16.mxu0 0
        %5647 = vmatmul.mubr.bf16.gmra.mrb[0].mxu0 %v4009
        %v5648 = vpop.f32.mrb[0].mxu0
        %v5649 = vadd.f32 %v5488, %v5648
        %v5650 = vpop.f32.mrb[0].mxu0
        %v5651 = vpop.f32.mrb[0].mxu0
        %v5652 = vadd.f32 %v5491, %v5651
        %v5653 = vpop.f32.mrb[0].mxu0
        %5654 = vmatprep.mubr.bf16.mxu0 0
        %5655 = vmatmul.mubr.bf16.gmra.mrb[0].mxu0 %v4012
        %v5656 = vpop.f32.mrb[0].mxu0
        %v5657 = vadd.f32 %v5496, %v5656
        %v5658 = vpop.f32.mrb[0].mxu0
        %v5659 = vpop.f32.mrb[0].mxu0
        %v5660 = vadd.f32 %v5499, %v5659
        %v5661 = vpop.f32.mrb[0].mxu0
        %5662 = vmatprep.mubr.bf16.mxu0 0
        %5663 = vmatmul.mubr.bf16.gmra.mrb[0].mxu0 %v4015
        %v5664 = vpop.f32.mrb[0].mxu0
        %v5665 = vadd.f32 %v5504, %v5664
        %v5666 = vpop.f32.mrb[0].mxu0
        %v5667 = vpop.f32.mrb[0].mxu0
        %v5668 = vadd.f32 %v5507, %v5667
        %v5669 = vpop.f32.mrb[0].mxu0
        %5670 = vmatprep.mubr.bf16.mxu0 0
        %5671 = vmatmul.mubr.bf16.gmra.mrb[0].mxu0 %v4018
        %v5672 = vpop.f32.mrb[0].mxu0
        %v5673 = vadd.f32 %v5512, %v5672
        %v5674 = vpop.f32.mrb[0].mxu0
        %v5675 = vpop.f32.mrb[0].mxu0
        %v5676 = vadd.f32 %v5515, %v5675
        %v5677 = vpop.f32.mrb[0].mxu0
        %5678 = vmatprep.mubr.bf16.mxu0 0
        %5679 = vmatmul.mubr.bf16.gmra.mrb[0].mxu0 %v4021
        %v5680 = vpop.f32.mrb[0].mxu0
        %v5681 = vadd.f32 %v5520, %v5680
        %v5682 = vpop.f32.mrb[0].mxu0
        %v5683 = vpop.f32.mrb[0].mxu0
        %v5684 = vadd.f32 %v5523, %v5683
        %v5685 = vpop.f32.mrb[0].mxu0
        %5686 = vmatprep.mubr.bf16.mxu0 0
        %5687 = vmatmul.mubr.bf16.gmra.mrb[0].mxu0 %v4024
        %v5688 = vpop.f32.mrb[0].mxu0
        %v5689 = vadd.f32 %v5528, %v5688
        %v5690 = vpop.f32.mrb[0].mxu0
        %v5691 = vpop.f32.mrb[0].mxu0
        %v5692 = vadd.f32 %v5531, %v5691
        %v5693 = vpop.f32.mrb[0].mxu0
        %5694 = vmatprep.mubr.bf16.mxu0 0
        %5695 = vmatmul.mubr.bf16.gmra.mrb[0].mxu0 %v4027
        %v5696 = vpop.f32.mrb[0].mxu0
        %v5697 = vadd.f32 %v5536, %v5696
        %v5698 = vpop.f32.mrb[0].mxu0
        %v5699 = vpop.f32.mrb[0].mxu0
        %v5700 = vadd.f32 %v5539, %v5699
        %v5701 = vpop.f32.mrb[0].mxu0
        %5702 = vmatprep.mubr.bf16.mxu0 0
        %5703 = vmatmul.mubr.bf16.gmra.mrb[0].mxu0 %v4030
        %v5704 = vpop.f32.mrb[0].mxu0
        %v5705 = vadd.f32 %v5544, %v5704
        %v5706 = vpop.f32.mrb[0].mxu0
        %v5707 = vpop.f32.mrb[0].mxu0
        %v5708 = vadd.f32 %v5547, %v5707
        %v5709 = vpop.f32.mrb[0].mxu0
        %5710 = vmatprep.mubr.bf16.mxu0 0
        %5711 = vmatmul.mubr.bf16.gmra.mrb[0].mxu0 %v4033
        %v5712 = vpop.f32.mrb[0].mxu0
        %v5713 = vadd.f32 %v5552, %v5712
        %v5714 = vpop.f32.mrb[0].mxu0
        %v5715 = vpop.f32.mrb[0].mxu0
        %v5716 = vadd.f32 %v5555, %v5715
        %v5717 = vpop.f32.mrb[0].mxu0
        %5718 = vdwg.mxu0
        %v5719 = vpack.c.bf16 %v5596, %v5593
        %v5720 = vpack.c.bf16 %v5604, %v5601
        %v5721 = vpack.c.bf16 %v5612, %v5609
        %v5722 = vpack.c.bf16 %v5620, %v5617
        %v5723 = vpack.c.bf16 %v5628, %v5625
        %v5724 = vpack.c.bf16 %v5636, %v5633
        %v5725 = vpack.c.bf16 %v5644, %v5641
        %v5726 = vpack.c.bf16 %v5652, %v5649
        %v5727 = vpack.c.bf16 %v5660, %v5657
        %v5728 = vpack.c.bf16 %v5668, %v5665
        %v5729 = vpack.c.bf16 %v5676, %v5673
        %v5730 = vpack.c.bf16 %v5684, %v5681
        %v5731 = vpack.c.bf16 %v5692, %v5689
        %v5732 = vpack.c.bf16 %v5700, %v5697
        %v5733 = vpack.c.bf16 %v5708, %v5705
        %v5734 = vpack.c.bf16 %v5716, %v5713
        %5735 = vxpose.xlu0.c.b16.start [1/8] %v5230, 128
        %5736 = vxpose.xlu0.c.b16.cont [2/8] %v5231, 128
        %5737 = vxpose.xlu0.c.b16.cont [3/8] %v5232, 128
        %5738 = vxpose.xlu0.c.b16.cont [4/8] %v5233, 128
        %5739 = vxpose.xlu0.c.b16.cont [5/8] %v5234, 128
        %5740 = vxpose.xlu0.c.b16.cont [6/8] %v5235, 128
        %5741 = vxpose.xlu0.c.b16.cont [7/8] %v5236, 128
        %5742 = vxpose.xlu0.c.b16.end [8/8] %v5237, 128
        %v5743 = vpop.trf.xlu0
        %v5744 = vpop.trf.xlu0
        %v5745 = vpop.trf.xlu0
        %v5746 = vpop.trf.xlu0
        %v5747 = vpop.trf.xlu0
        %v5748 = vpop.trf.xlu0
        %v5749 = vpop.trf.xlu0
        %v5750 = vpop.trf.xlu0
        %5751 = vxpose.xlu0.c.b16.start [1/8] %v5238, 128
        %5752 = vxpose.xlu0.c.b16.cont [2/8] %v5239, 128
        %5753 = vxpose.xlu0.c.b16.cont [3/8] %v5240, 128
        %5754 = vxpose.xlu0.c.b16.cont [4/8] %v5241, 128
        %5755 = vxpose.xlu0.c.b16.cont [5/8] %v5242, 128
        %5756 = vxpose.xlu0.c.b16.cont [6/8] %v5243, 128
        %5757 = vxpose.xlu0.c.b16.cont [7/8] %v5244, 128
        %5758 = vxpose.xlu0.c.b16.end [8/8] %v5245, 128
        %v5759 = vpop.trf.xlu0
        %v5760 = vpop.trf.xlu0
        %v5761 = vpop.trf.xlu0
        %v5762 = vpop.trf.xlu0
        %v5763 = vpop.trf.xlu0
        %v5764 = vpop.trf.xlu0
        %v5765 = vpop.trf.xlu0
        %v5766 = vpop.trf.xlu0
        %5767 = vmatprep.subr.bf16.mxu0 0
        %5768 = vmatpush1.bf16.msra.mxu0 %v4549
        %5769 = vmatprep.subr.bf16.mxu0 0
        %5770 = vmatpush1.bf16.msra.mxu0 %v4550
        %5771 = vmatprep.subr.bf16.mxu0 0
        %5772 = vmatpush1.bf16.msra.mxu0 %v4551
        %5773 = vmatprep.subr.bf16.mxu0 0
        %5774 = vmatpush1.bf16.msra.mxu0 %v4552
        %5775 = vmatprep.subr.bf16.mxu0 0
        %5776 = vmatpush1.bf16.msra.mxu0 %v4553
        %5777 = vmatprep.subr.bf16.mxu0 0
        %5778 = vmatpush1.bf16.msra.mxu0 %v4554
        %5779 = vmatprep.subr.bf16.mxu0 0
        %5780 = vmatpush1.bf16.msra.mxu0 %v4555
        %5781 = vmatprep.subr.bf16.mxu0 0
        %5782 = vmatpush1.bf16.msra.mxu0 %v4556
        %5783 = vmatprep.subr.bf16.mxu0 0
        %5784 = vmatpush1.bf16.msra.mxu0 %v4557
        %5785 = vmatprep.subr.bf16.mxu0 0
        %5786 = vmatpush1.bf16.msra.mxu0 %v4558
        %5787 = vmatprep.subr.bf16.mxu0 0
        %5788 = vmatpush1.bf16.msra.mxu0 %v4559
        %5789 = vmatprep.subr.bf16.mxu0 0
        %5790 = vmatpush1.bf16.msra.mxu0 %v4560
        %5791 = vmatprep.subr.bf16.mxu0 0
        %5792 = vmatpush1.bf16.msra.mxu0 %v4561
        %5793 = vmatprep.subr.bf16.mxu0 0
        %5794 = vmatpush1.bf16.msra.mxu0 %v4562
        %5795 = vmatprep.subr.bf16.mxu0 0
        %5796 = vmatpush1.bf16.msra.mxu0 %v4563
        %5797 = vmatprep.subr.bf16.mxu0 0
        %5798 = vmatpush1.bf16.msra.mxu0 %v4564
        %5799 = vmatprep.mubr.bf16.mxu0 %v5759
        %5800 = vmatmul.mubr.bf16.gmra.mrb[0].mxu0 %v5743
        %v5801 = vpop.f32.mrb[0].mxu0
        %v5802 = vadd.f32 0.0, %v5801
        %v5803 = vpop.f32.mrb[0].mxu0
        %v5804 = vpop.f32.mrb[0].mxu0
        %v5805 = vadd.f32 0.0, %v5804
        %v5806 = vpop.f32.mrb[0].mxu0
        %5807 = vmatprep.mubr.bf16.mxu0 %v5760
        %5808 = vmatmul.mubr.bf16.gmra.mrb[0].mxu0 %v5744
        %v5809 = vpop.f32.mrb[0].mxu0
        %v5810 = vadd.f32 0.0, %v5809
        %v5811 = vpop.f32.mrb[0].mxu0
        %v5812 = vpop.f32.mrb[0].mxu0
        %v5813 = vadd.f32 0.0, %v5812
        %v5814 = vpop.f32.mrb[0].mxu0
        %5815 = vmatprep.mubr.bf16.mxu0 %v5761
        %5816 = vmatmul.mubr.bf16.gmra.mrb[0].mxu0 %v5745
        %v5817 = vpop.f32.mrb[0].mxu0
        %v5818 = vadd.f32 0.0, %v5817
        %v5819 = vpop.f32.mrb[0].mxu0
        %v5820 = vpop.f32.mrb[0].mxu0
        %v5821 = vadd.f32 0.0, %v5820
        %v5822 = vpop.f32.mrb[0].mxu0
        %5823 = vmatprep.mubr.bf16.mxu0 %v5762
        %5824 = vmatmul.mubr.bf16.gmra.mrb[0].mxu0 %v5746
        %v5825 = vpop.f32.mrb[0].mxu0
        %v5826 = vadd.f32 0.0, %v5825
        %v5827 = vpop.f32.mrb[0].mxu0
        %v5828 = vpop.f32.mrb[0].mxu0
        %v5829 = vadd.f32 0.0, %v5828
        %v5830 = vpop.f32.mrb[0].mxu0
        %5831 = vmatprep.mubr.bf16.mxu0 %v5763
        %5832 = vmatmul.mubr.bf16.gmra.mrb[0].mxu0 %v5747
        %v5833 = vpop.f32.mrb[0].mxu0
        %v5834 = vadd.f32 0.0, %v5833
        %v5835 = vpop.f32.mrb[0].mxu0
        %v5836 = vpop.f32.mrb[0].mxu0
        %v5837 = vadd.f32 0.0, %v5836
        %v5838 = vpop.f32.mrb[0].mxu0
        %5839 = vmatprep.mubr.bf16.mxu0 %v5764
        %5840 = vmatmul.mubr.bf16.gmra.mrb[0].mxu0 %v5748
        %v5841 = vpop.f32.mrb[0].mxu0
        %v5842 = vadd.f32 0.0, %v5841
        %v5843 = vpop.f32.mrb[0].mxu0
        %v5844 = vpop.f32.mrb[0].mxu0
        %v5845 = vadd.f32 0.0, %v5844
        %v5846 = vpop.f32.mrb[0].mxu0
        %5847 = vmatprep.mubr.bf16.mxu0 %v5765
        %5848 = vmatmul.mubr.bf16.gmra.mrb[0].mxu0 %v5749
        %v5849 = vpop.f32.mrb[0].mxu0
        %v5850 = vadd.f32 0.0, %v5849
        %v5851 = vpop.f32.mrb[0].mxu0
        %v5852 = vpop.f32.mrb[0].mxu0
        %v5853 = vadd.f32 0.0, %v5852
        %v5854 = vpop.f32.mrb[0].mxu0
        %5855 = vmatprep.mubr.bf16.mxu0 %v5766
        %5856 = vmatmul.mubr.bf16.gmra.mrb[0].mxu0 %v5750
        %v5857 = vpop.f32.mrb[0].mxu0
        %v5858 = vadd.f32 0.0, %v5857
        %v5859 = vpop.f32.mrb[0].mxu0
        %v5860 = vpop.f32.mrb[0].mxu0
        %v5861 = vadd.f32 0.0, %v5860
        %v5862 = vpop.f32.mrb[0].mxu0
        %5863 = vdwg.mxu0
        %v5864 = vmul.f32 %v5802, 0.00390625
        %v5865 = vmul.f32 %v5805, 0.00390625
        %v5866 = vmul.f32 %v5810, 0.00390625
        %v5867 = vmul.f32 %v5813, 0.00390625
        %v5868 = vmul.f32 %v5818, 0.00390625
        %v5869 = vmul.f32 %v5821, 0.00390625
        %v5870 = vmul.f32 %v5826, 0.00390625
        %v5871 = vmul.f32 %v5829, 0.00390625
        %v5872 = vmul.f32 %v5834, 0.00390625
        %v5873 = vmul.f32 %v5837, 0.00390625
        %v5874 = vmul.f32 %v5842, 0.00390625
        %v5875 = vmul.f32 %v5845, 0.00390625
        %v5876 = vmul.f32 %v5850, 0.00390625
        %v5877 = vmul.f32 %v5853, 0.00390625
        %v5878 = vmul.f32 %v5858, 0.00390625
        %v5879 = vmul.f32 %v5861, 0.00390625
        %v5880 = vpack.c.bf16 %v5865, %v5864
        %v5881 = vpack.c.bf16 %v5867, %v5866
        %v5882 = vpack.c.bf16 %v5869, %v5868
        %v5883 = vpack.c.bf16 %v5871, %v5870
        %v5884 = vpack.c.bf16 %v5873, %v5872
        %v5885 = vpack.c.bf16 %v5875, %v5874
        %v5886 = vpack.c.bf16 %v5877, %v5876
        %v5887 = vpack.c.bf16 %v5879, %v5878
        %5888 = vmatprep.subr.bf16.mxu0 0
        %5889 = vmatpush1.bf16.msra.mxu0 %v5880
        %5890 = vmatprep.subr.bf16.mxu0 0
        %5891 = vmatpush1.bf16.msra.mxu0 %v5881
        %5892 = vmatprep.subr.bf16.mxu0 0
        %5893 = vmatpush1.bf16.msra.mxu0 %v5882
        %5894 = vmatprep.subr.bf16.mxu0 0
        %5895 = vmatpush1.bf16.msra.mxu0 %v5883
        %5896 = vmatprep.subr.bf16.mxu0 0
        %5897 = vmatpush1.bf16.msra.mxu0 %v5884
        %5898 = vmatprep.subr.bf16.mxu0 0
        %5899 = vmatpush1.bf16.msra.mxu0 %v5885
        %5900 = vmatprep.subr.bf16.mxu0 0
        %5901 = vmatpush1.bf16.msra.mxu0 %v5886
        %5902 = vmatprep.subr.bf16.mxu0 0
        %5903 = vmatpush1.bf16.msra.mxu0 %v5887
        %5904 = vmatprep.subr.bf16.mxu0 0
        %5905 = vmatpush1.bf16.msra.mxu0 0
        %5906 = vmatprep.subr.bf16.mxu0 0
        %5907 = vmatpush1.bf16.msra.mxu0 0
        %5908 = vmatprep.subr.bf16.mxu0 0
        %5909 = vmatpush1.bf16.msra.mxu0 0
        %5910 = vmatprep.subr.bf16.mxu0 0
        %5911 = vmatpush1.bf16.msra.mxu0 0
        %5912 = vmatprep.subr.bf16.mxu0 0
        %5913 = vmatpush1.bf16.msra.mxu0 0
        %5914 = vmatprep.subr.bf16.mxu0 0
        %5915 = vmatpush1.bf16.msra.mxu0 0
        %5916 = vmatprep.subr.bf16.mxu0 0
        %5917 = vmatpush1.bf16.msra.mxu0 0
        %5918 = vmatprep.subr.bf16.mxu0 0
        %5919 = vmatpush1.bf16.msra.mxu0 0
        %5920 = vmatprep.mubr.bf16.mxu0 0
        %5921 = vmatmul.mubr.bf16.gmra.mrb[0].mxu0 %v5719
        %v5922 = vpop.f32.mrb[0].mxu0
        %v5923 = vadd.f32 0.0, %v5922
        %v5924 = vpop.f32.mrb[0].mxu0
        %v5925 = vpop.f32.mrb[0].mxu0
        %v5926 = vadd.f32 0.0, %v5925
        %v5927 = vpop.f32.mrb[0].mxu0
        %5928 = vmatprep.mubr.bf16.mxu0 0
        %5929 = vmatmul.mubr.bf16.gmra.mrb[0].mxu0 %v5720
        %v5930 = vpop.f32.mrb[0].mxu0
        %v5931 = vadd.f32 0.0, %v5930
        %v5932 = vpop.f32.mrb[0].mxu0
        %v5933 = vpop.f32.mrb[0].mxu0
        %v5934 = vadd.f32 0.0, %v5933
        %v5935 = vpop.f32.mrb[0].mxu0
        %5936 = vmatprep.mubr.bf16.mxu0 0
        %5937 = vmatmul.mubr.bf16.gmra.mrb[0].mxu0 %v5721
        %v5938 = vpop.f32.mrb[0].mxu0
        %v5939 = vadd.f32 0.0, %v5938
        %v5940 = vpop.f32.mrb[0].mxu0
        %v5941 = vpop.f32.mrb[0].mxu0
        %v5942 = vadd.f32 0.0, %v5941
        %v5943 = vpop.f32.mrb[0].mxu0
        %5944 = vmatprep.mubr.bf16.mxu0 0
        %5945 = vmatmul.mubr.bf16.gmra.mrb[0].mxu0 %v5722
        %v5946 = vpop.f32.mrb[0].mxu0
        %v5947 = vadd.f32 0.0, %v5946
        %v5948 = vpop.f32.mrb[0].mxu0
        %v5949 = vpop.f32.mrb[0].mxu0
        %v5950 = vadd.f32 0.0, %v5949
        %v5951 = vpop.f32.mrb[0].mxu0
        %5952 = vmatprep.mubr.bf16.mxu0 0
        %5953 = vmatmul.mubr.bf16.gmra.mrb[0].mxu0 %v5723
        %v5954 = vpop.f32.mrb[0].mxu0
        %v5955 = vadd.f32 0.0, %v5954
        %v5956 = vpop.f32.mrb[0].mxu0
        %v5957 = vpop.f32.mrb[0].mxu0
        %v5958 = vadd.f32 0.0, %v5957
        %v5959 = vpop.f32.mrb[0].mxu0
        %5960 = vmatprep.mubr.bf16.mxu0 0
        %5961 = vmatmul.mubr.bf16.gmra.mrb[0].mxu0 %v5724
        %v5962 = vpop.f32.mrb[0].mxu0
        %v5963 = vadd.f32 0.0, %v5962
        %v5964 = vpop.f32.mrb[0].mxu0
        %v5965 = vpop.f32.mrb[0].mxu0
        %v5966 = vadd.f32 0.0, %v5965
        %v5967 = vpop.f32.mrb[0].mxu0
        %5968 = vmatprep.mubr.bf16.mxu0 0
        %5969 = vmatmul.mubr.bf16.gmra.mrb[0].mxu0 %v5725
        %v5970 = vpop.f32.mrb[0].mxu0
        %v5971 = vadd.f32 0.0, %v5970
        %v5972 = vpop.f32.mrb[0].mxu0
        %v5973 = vpop.f32.mrb[0].mxu0
        %v5974 = vadd.f32 0.0, %v5973
        %v5975 = vpop.f32.mrb[0].mxu0
        %5976 = vmatprep.mubr.bf16.mxu0 0
        %5977 = vmatmul.mubr.bf16.gmra.mrb[0].mxu0 %v5726
        %v5978 = vpop.f32.mrb[0].mxu0
        %v5979 = vadd.f32 0.0, %v5978
        %v5980 = vpop.f32.mrb[0].mxu0
        %v5981 = vpop.f32.mrb[0].mxu0
        %v5982 = vadd.f32 0.0, %v5981
        %v5983 = vpop.f32.mrb[0].mxu0
        %5984 = vmatprep.mubr.bf16.mxu0 0
        %5985 = vmatmul.mubr.bf16.gmra.mrb[0].mxu0 %v5727
        %v5986 = vpop.f32.mrb[0].mxu0
        %v5987 = vadd.f32 0.0, %v5986
        %v5988 = vpop.f32.mrb[0].mxu0
        %v5989 = vpop.f32.mrb[0].mxu0
        %v5990 = vadd.f32 0.0, %v5989
        %v5991 = vpop.f32.mrb[0].mxu0
        %5992 = vmatprep.mubr.bf16.mxu0 0
        %5993 = vmatmul.mubr.bf16.gmra.mrb[0].mxu0 %v5728
        %v5994 = vpop.f32.mrb[0].mxu0
        %v5995 = vadd.f32 0.0, %v5994
        %v5996 = vpop.f32.mrb[0].mxu0
        %v5997 = vpop.f32.mrb[0].mxu0
        %v5998 = vadd.f32 0.0, %v5997
        %v5999 = vpop.f32.mrb[0].mxu0
        %6000 = vmatprep.mubr.bf16.mxu0 0
        %6001 = vmatmul.mubr.bf16.gmra.mrb[0].mxu0 %v5729
        %v6002 = vpop.f32.mrb[0].mxu0
        %v6003 = vadd.f32 0.0, %v6002
        %v6004 = vpop.f32.mrb[0].mxu0
        %v6005 = vpop.f32.mrb[0].mxu0
        %v6006 = vadd.f32 0.0, %v6005
        %v6007 = vpop.f32.mrb[0].mxu0
        %6008 = vmatprep.mubr.bf16.mxu0 0
        %6009 = vmatmul.mubr.bf16.gmra.mrb[0].mxu0 %v5730
        %v6010 = vpop.f32.mrb[0].mxu0
        %v6011 = vadd.f32 0.0, %v6010
        %v6012 = vpop.f32.mrb[0].mxu0
        %v6013 = vpop.f32.mrb[0].mxu0
        %v6014 = vadd.f32 0.0, %v6013
        %v6015 = vpop.f32.mrb[0].mxu0
        %6016 = vmatprep.mubr.bf16.mxu0 0
        %6017 = vmatmul.mubr.bf16.gmra.mrb[0].mxu0 %v5731
        %v6018 = vpop.f32.mrb[0].mxu0
        %v6019 = vadd.f32 0.0, %v6018
        %v6020 = vpop.f32.mrb[0].mxu0
        %v6021 = vpop.f32.mrb[0].mxu0
        %v6022 = vadd.f32 0.0, %v6021
        %v6023 = vpop.f32.mrb[0].mxu0
        %6024 = vmatprep.mubr.bf16.mxu0 0
        %6025 = vmatmul.mubr.bf16.gmra.mrb[0].mxu0 %v5732
        %v6026 = vpop.f32.mrb[0].mxu0
        %v6027 = vadd.f32 0.0, %v6026
        %v6028 = vpop.f32.mrb[0].mxu0
        %v6029 = vpop.f32.mrb[0].mxu0
        %v6030 = vadd.f32 0.0, %v6029
        %v6031 = vpop.f32.mrb[0].mxu0
        %6032 = vmatprep.mubr.bf16.mxu0 0
        %6033 = vmatmul.mubr.bf16.gmra.mrb[0].mxu0 %v5733
        %v6034 = vpop.f32.mrb[0].mxu0
        %v6035 = vadd.f32 0.0, %v6034
        %v6036 = vpop.f32.mrb[0].mxu0
        %v6037 = vpop.f32.mrb[0].mxu0
        %v6038 = vadd.f32 0.0, %v6037
        %v6039 = vpop.f32.mrb[0].mxu0
        %6040 = vmatprep.mubr.bf16.mxu0 0
        %6041 = vmatmul.mubr.bf16.gmra.mrb[0].mxu0 %v5734
        %v6042 = vpop.f32.mrb[0].mxu0
        %v6043 = vadd.f32 0.0, %v6042
        %v6044 = vpop.f32.mrb[0].mxu0
        %v6045 = vpop.f32.mrb[0].mxu0
        %v6046 = vadd.f32 0.0, %v6045
        %v6047 = vpop.f32.mrb[0].mxu0
        %6048 = vdwg.mxu0
        %6049 = vst [vmem:[#allocation4] sm:$0xf] 0
        %6050 = vst [vmem:[#allocation4 + $0x4] sm:$0xf] 0
        %6051 = vst [vmem:[#allocation4 + $0x8] sm:$0x1] 0
        %6052 = vst [vmem:[#allocation4 + $0xc] sm:$0xf] 0
        %6053 = vst [vmem:[#allocation4 + $0x10] sm:$0xf] 0
        %6054 = vst [vmem:[#allocation4 + $0x14] sm:$0x1] 0
        %6055 = vst [vmem:[#allocation4 + $0x18] sm:$0xf] 0
        %6056 = vst [vmem:[#allocation4 + $0x1c] sm:$0xf] 0
        %6057 = vst [vmem:[#allocation4 + $0x20] sm:$0x1] 0
        %6058 = vst [vmem:[#allocation4 + $0x24] sm:$0xf] 0
        %6059 = vst [vmem:[#allocation4 + $0x28] sm:$0xf] 0
        %6060 = vst [vmem:[#allocation4 + $0x2c] sm:$0x1] 0
        %6061 = vst [vmem:[#allocation4 + $0x30] sm:$0xf] 0
        %6062 = vst [vmem:[#allocation4 + $0x34] sm:$0xf] 0
        %6063 = vst [vmem:[#allocation4 + $0x38] sm:$0x1] 0
        %6064 = vst [vmem:[#allocation4 + $0x3c] sm:$0xf] 0
        %6065 = vst [vmem:[#allocation4 + $0x40] sm:$0xf] 0
        %6066 = vst [vmem:[#allocation4 + $0x44] sm:$0x1] 0
        %6067 = vst [vmem:[#allocation4 + $0x48] sm:$0xf] 0
        %6068 = vst [vmem:[#allocation4 + $0x4c] sm:$0xf] 0
        %6069 = vst [vmem:[#allocation4 + $0x50] sm:$0x1] 0
        %6070 = vst [vmem:[#allocation4 + $0x54] sm:$0xf] 0
        %6071 = vst [vmem:[#allocation4 + $0x58] sm:$0xf] 0
        %6072 = vst [vmem:[#allocation4 + $0x5c] sm:$0x1] 0
        %6073 = vst [vmem:[#allocation4 + $0x60] sm:$0xf] 0
        %6074 = vst [vmem:[#allocation4 + $0x64] sm:$0xf] 0
        %6075 = vst [vmem:[#allocation4 + $0x68] sm:$0x1] 0
        %6076 = vst [vmem:[#allocation4 + $0x6c] sm:$0xf] 0
        %6077 = vst [vmem:[#allocation4 + $0x70] sm:$0xf] 0
        %6078 = vst [vmem:[#allocation4 + $0x74] sm:$0x1] 0
        %6079 = vst [vmem:[#allocation4 + $0x78] sm:$0xf] 0
        %6080 = vst [vmem:[#allocation4 + $0x7c] sm:$0xf] 0
        %6081 = vst [vmem:[#allocation4 + $0x80] sm:$0x1] 0
        %6082 = vst [vmem:[#allocation4 + $0x84] sm:$0xf] 0
        %6083 = vst [vmem:[#allocation4 + $0x88] sm:$0xf] 0
        %6084 = vst [vmem:[#allocation4 + $0x8c] sm:$0x1] 0
        %6085 = vst [vmem:[#allocation4 + $0x90] sm:$0xf] 0
        %6086 = vst [vmem:[#allocation4 + $0x94] sm:$0xf] 0
        %6087 = vst [vmem:[#allocation4 + $0x98] sm:$0x1] 0
        %6088 = vst [vmem:[#allocation4 + $0x9c] sm:$0xf] 0
        %6089 = vst [vmem:[#allocation4 + $0xa0] sm:$0xf] 0
        %6090 = vst [vmem:[#allocation4 + $0xa4] sm:$0x1] 0
        %6091 = vst [vmem:[#allocation4 + $0xa8] sm:$0xf] 0
        %6092 = vst [vmem:[#allocation4 + $0xac] sm:$0xf] 0
        %6093 = vst [vmem:[#allocation4 + $0xb0] sm:$0x1] 0
        %6094 = vst [vmem:[#allocation4 + $0xb4] sm:$0xf] 0
        %6095 = vst [vmem:[#allocation4 + $0xb8] sm:$0xf] 0
        %6096 = vst [vmem:[#allocation4 + $0xbc] sm:$0x1] 0
        %6097 = vst [vmem:[#allocation4 + $0xc0] sm:$0xf] 0
        %6098 = vst [vmem:[#allocation4 + $0xc4] sm:$0xf] 0
        %6099 = vst [vmem:[#allocation4 + $0xc8] sm:$0x1] 0
        %6100 = vst [vmem:[#allocation4 + $0xcc] sm:$0xf] 0
        %6101 = vst [vmem:[#allocation4 + $0xd0] sm:$0xf] 0
        %6102 = vst [vmem:[#allocation4 + $0xd4] sm:$0x1] 0
        %v6103 = vpack.c.bf16 %v5926, %v5923
        %v6104 = vpack.c.bf16 %v5934, %v5931
        %v6105 = vpack.c.bf16 %v5942, %v5939
        %v6106 = vpack.c.bf16 %v5950, %v5947
        %v6107 = vpack.c.bf16 %v5958, %v5955
        %v6108 = vpack.c.bf16 %v5966, %v5963
        %v6109 = vpack.c.bf16 %v5974, %v5971
        %v6110 = vpack.c.bf16 %v5982, %v5979
        %v6111 = vpack.c.bf16 %v5990, %v5987
        %v6112 = vpack.c.bf16 %v5998, %v5995
        %v6113 = vpack.c.bf16 %v6006, %v6003
        %v6114 = vpack.c.bf16 %v6014, %v6011
        %v6115 = vpack.c.bf16 %v6022, %v6019
        %v6116 = vpack.c.bf16 %v6030, %v6027
        %v6117 = vpack.c.bf16 %v6038, %v6035
        %v6118 = vpack.c.bf16 %v6046, %v6043
        %v6135 = vunpack.c.l.b16 %v6103
        %v6136 = vunpack.c.h.b16 %v6103
        %v6137 = vunpack.c.l.b16 %v6104
        %v6138 = vunpack.c.h.b16 %v6104
        %v6139 = vunpack.c.l.b16 %v6105
        %v6140 = vunpack.c.h.b16 %v6105
        %v6141 = vunpack.c.l.b16 %v6106
        %v6142 = vunpack.c.h.b16 %v6106
        %v6143 = vunpack.c.l.b16 %v6107
        %v6144 = vunpack.c.h.b16 %v6107
        %v6145 = vunpack.c.l.b16 %v6108
        %v6146 = vunpack.c.h.b16 %v6108
        %v6147 = vunpack.c.l.b16 %v6109
        %v6148 = vunpack.c.h.b16 %v6109
        %v6149 = vunpack.c.l.b16 %v6110
        %v6150 = vunpack.c.h.b16 %v6110
        %v6151 = vunpack.c.l.b16 %v6111
        %v6152 = vunpack.c.h.b16 %v6111
        %v6153 = vunpack.c.l.b16 %v6112
        %v6154 = vunpack.c.h.b16 %v6112
        %v6155 = vunpack.c.l.b16 %v6113
        %v6156 = vunpack.c.h.b16 %v6113
        %v6157 = vunpack.c.l.b16 %v6114
        %v6158 = vunpack.c.h.b16 %v6114
        %v6159 = vunpack.c.l.b16 %v6115
        %v6160 = vunpack.c.h.b16 %v6115
        %v6161 = vunpack.c.l.b16 %v6116
        %v6162 = vunpack.c.h.b16 %v6116
        %v6163 = vunpack.c.l.b16 %v6117
        %v6164 = vunpack.c.h.b16 %v6117
        %v6165 = vunpack.c.l.b16 %v6118
        %v6166 = vunpack.c.h.b16 %v6118
        %v6167 = vpack.c.b16 %v6135, %v6135
        %v6168 = vpack.c.b16 %v6136, %v6136
        %v6169 = vpack.c.b16 %v6137, %v6137
        %v6170 = vpack.c.b16 %v6138, %v6138
        %v6171 = vpack.c.b16 %v6139, %v6139
        %v6172 = vpack.c.b16 %v6140, %v6140
        %v6173 = vpack.c.b16 %v6141, %v6141
        %v6174 = vpack.c.b16 %v6142, %v6142
        %v6175 = vpack.c.b16 %v6143, %v6143
        %v6176 = vpack.c.b16 %v6144, %v6144
        %v6177 = vpack.c.b16 %v6145, %v6145
        %v6178 = vpack.c.b16 %v6146, %v6146
        %v6179 = vpack.c.b16 %v6147, %v6147
        %v6180 = vpack.c.b16 %v6148, %v6148
        %v6181 = vpack.c.b16 %v6149, %v6149
        %v6182 = vpack.c.b16 %v6150, %v6150
        %v6183 = vpack.c.b16 %v6151, %v6151
        %v6184 = vpack.c.b16 %v6152, %v6152
        %v6185 = vpack.c.b16 %v6153, %v6153
        %v6186 = vpack.c.b16 %v6154, %v6154
        %v6187 = vpack.c.b16 %v6155, %v6155
        %v6188 = vpack.c.b16 %v6156, %v6156
        %v6189 = vpack.c.b16 %v6157, %v6157
        %v6190 = vpack.c.b16 %v6158, %v6158
        %v6191 = vpack.c.b16 %v6159, %v6159
        %v6192 = vpack.c.b16 %v6160, %v6160
        %v6193 = vpack.c.b16 %v6161, %v6161
        %v6194 = vpack.c.b16 %v6162, %v6162
        %v6195 = vpack.c.b16 %v6163, %v6163
        %v6196 = vpack.c.b16 %v6164, %v6164
        %v6197 = vpack.c.b16 %v6165, %v6165
        %v6198 = vpack.c.b16 %v6166, %v6166
        %v6200 = vshrl.u32 %v6167, 16
        %v6202 = vrot.slane %v6200, 7
        %v6203 = vshll.u32 %v6167, 16
        %v6205 = vor.u32 %v6202, %v6203
        %v6206 = vrot.slane %v6202, 4
        %v6208 = vshrl.u32 %v6168, 16
        %v6210 = vrot.slane %v6208, 7
        %v6211 = vshll.u32 %v6168, 16
        %v6213 = vor.u32 %v6210, %v6211
        %v6214 = vsel %vm314, %v6206, %v6213
        %v6215 = vrot.slane %v6210, 4
        %v6217 = vshrl.u32 %v6169, 16
        %v6219 = vrot.slane %v6217, 7
        %v6220 = vshll.u32 %v6169, 16
        %v6222 = vor.u32 %v6219, %v6220
        %v6223 = vrot.slane %v6219, 4
        %v6225 = vshrl.u32 %v6170, 16
        %v6227 = vrot.slane %v6225, 7
        %v6228 = vshll.u32 %v6170, 16
        %v6230 = vor.u32 %v6227, %v6228
        %v6231 = vsel %vm314, %v6223, %v6230
        %v6232 = vrot.slane %v6227, 4
        %v6234 = vshrl.u32 %v6171, 16
        %v6236 = vrot.slane %v6234, 7
        %v6237 = vshll.u32 %v6171, 16
        %v6239 = vor.u32 %v6236, %v6237
        %v6240 = vrot.slane %v6236, 4
        %v6242 = vshrl.u32 %v6172, 16
        %v6244 = vrot.slane %v6242, 7
        %v6245 = vshll.u32 %v6172, 16
        %v6247 = vor.u32 %v6244, %v6245
        %v6248 = vsel %vm314, %v6240, %v6247
        %v6249 = vrot.slane %v6244, 4
        %v6251 = vshrl.u32 %v6173, 16
        %v6253 = vrot.slane %v6251, 7
        %v6254 = vshll.u32 %v6173, 16
        %v6256 = vor.u32 %v6253, %v6254
        %v6257 = vrot.slane %v6253, 4
        %v6259 = vshrl.u32 %v6174, 16
        %v6261 = vrot.slane %v6259, 7
        %v6262 = vshll.u32 %v6174, 16
        %v6264 = vor.u32 %v6261, %v6262
        %v6265 = vsel %vm314, %v6257, %v6264
        %v6266 = vrot.slane %v6261, 4
        %v6268 = vshrl.u32 %v6175, 16
        %v6270 = vrot.slane %v6268, 7
        %v6271 = vshll.u32 %v6175, 16
        %v6273 = vor.u32 %v6270, %v6271
        %v6274 = vrot.slane %v6270, 4
        %v6276 = vshrl.u32 %v6176, 16
        %v6278 = vrot.slane %v6276, 7
        %v6279 = vshll.u32 %v6176, 16
        %v6281 = vor.u32 %v6278, %v6279
        %v6282 = vsel %vm314, %v6274, %v6281
        %v6283 = vrot.slane %v6278, 4
        %v6285 = vshrl.u32 %v6177, 16
        %v6287 = vrot.slane %v6285, 7
        %v6288 = vshll.u32 %v6177, 16
        %v6290 = vor.u32 %v6287, %v6288
        %v6291 = vrot.slane %v6287, 4
        %v6293 = vshrl.u32 %v6178, 16
        %v6295 = vrot.slane %v6293, 7
        %v6296 = vshll.u32 %v6178, 16
        %v6298 = vor.u32 %v6295, %v6296
        %v6299 = vsel %vm314, %v6291, %v6298
        %v6300 = vrot.slane %v6295, 4
        %v6302 = vshrl.u32 %v6179, 16
        %v6304 = vrot.slane %v6302, 7
        %v6305 = vshll.u32 %v6179, 16
        %v6307 = vor.u32 %v6304, %v6305
        %v6308 = vrot.slane %v6304, 4
        %v6310 = vshrl.u32 %v6180, 16
        %v6312 = vrot.slane %v6310, 7
        %v6313 = vshll.u32 %v6180, 16
        %v6315 = vor.u32 %v6312, %v6313
        %v6316 = vsel %vm314, %v6308, %v6315
        %v6317 = vrot.slane %v6312, 4
        %v6319 = vshrl.u32 %v6181, 16
        %v6321 = vrot.slane %v6319, 7
        %v6322 = vshll.u32 %v6181, 16
        %v6324 = vor.u32 %v6321, %v6322
        %v6325 = vrot.slane %v6321, 4
        %v6327 = vshrl.u32 %v6182, 16
        %v6329 = vrot.slane %v6327, 7
        %v6330 = vshll.u32 %v6182, 16
        %v6332 = vor.u32 %v6329, %v6330
        %v6333 = vsel %vm314, %v6325, %v6332
        %v6334 = vrot.slane %v6329, 4
        %v6336 = vshrl.u32 %v6183, 16
        %v6338 = vrot.slane %v6336, 7
        %v6339 = vshll.u32 %v6183, 16
        %v6341 = vor.u32 %v6338, %v6339
        %v6342 = vrot.slane %v6338, 4
        %v6344 = vshrl.u32 %v6184, 16
        %v6346 = vrot.slane %v6344, 7
        %v6347 = vshll.u32 %v6184, 16
        %v6349 = vor.u32 %v6346, %v6347
        %v6350 = vsel %vm314, %v6342, %v6349
        %v6351 = vrot.slane %v6346, 4
        %v6353 = vshrl.u32 %v6185, 16
        %v6355 = vrot.slane %v6353, 7
        %v6356 = vshll.u32 %v6185, 16
        %v6358 = vor.u32 %v6355, %v6356
        %v6359 = vrot.slane %v6355, 4
        %v6361 = vshrl.u32 %v6186, 16
        %v6363 = vrot.slane %v6361, 7
        %v6364 = vshll.u32 %v6186, 16
        %v6366 = vor.u32 %v6363, %v6364
        %v6367 = vsel %vm314, %v6359, %v6366
        %v6368 = vrot.slane %v6363, 4
        %v6370 = vshrl.u32 %v6187, 16
        %v6372 = vrot.slane %v6370, 7
        %v6373 = vshll.u32 %v6187, 16
        %v6375 = vor.u32 %v6372, %v6373
        %v6376 = vrot.slane %v6372, 4
        %v6378 = vshrl.u32 %v6188, 16
        %v6380 = vrot.slane %v6378, 7
        %v6381 = vshll.u32 %v6188, 16
        %v6383 = vor.u32 %v6380, %v6381
        %v6384 = vsel %vm314, %v6376, %v6383
        %v6385 = vrot.slane %v6380, 4
        %v6387 = vshrl.u32 %v6189, 16
        %v6389 = vrot.slane %v6387, 7
        %v6390 = vshll.u32 %v6189, 16
        %v6392 = vor.u32 %v6389, %v6390
        %v6393 = vrot.slane %v6389, 4
        %v6395 = vshrl.u32 %v6190, 16
        %v6397 = vrot.slane %v6395, 7
        %v6398 = vshll.u32 %v6190, 16
        %v6400 = vor.u32 %v6397, %v6398
        %v6401 = vsel %vm314, %v6393, %v6400
        %v6402 = vrot.slane %v6397, 4
        %v6404 = vshrl.u32 %v6191, 16
        %v6406 = vrot.slane %v6404, 7
        %v6407 = vshll.u32 %v6191, 16
        %v6409 = vor.u32 %v6406, %v6407
        %v6410 = vrot.slane %v6406, 4
        %v6412 = vshrl.u32 %v6192, 16
        %v6414 = vrot.slane %v6412, 7
        %v6415 = vshll.u32 %v6192, 16
        %v6417 = vor.u32 %v6414, %v6415
        %v6418 = vsel %vm314, %v6410, %v6417
        %v6419 = vrot.slane %v6414, 4
        %v6421 = vshrl.u32 %v6193, 16
        %v6423 = vrot.slane %v6421, 7
        %v6424 = vshll.u32 %v6193, 16
        %v6426 = vor.u32 %v6423, %v6424
        %v6427 = vrot.slane %v6423, 4
        %v6429 = vshrl.u32 %v6194, 16
        %v6431 = vrot.slane %v6429, 7
        %v6432 = vshll.u32 %v6194, 16
        %v6434 = vor.u32 %v6431, %v6432
        %v6435 = vsel %vm314, %v6427, %v6434
        %v6436 = vrot.slane %v6431, 4
        %v6438 = vshrl.u32 %v6195, 16
        %v6440 = vrot.slane %v6438, 7
        %v6441 = vshll.u32 %v6195, 16
        %v6443 = vor.u32 %v6440, %v6441
        %v6444 = vrot.slane %v6440, 4
        %v6446 = vshrl.u32 %v6196, 16
        %v6448 = vrot.slane %v6446, 7
        %v6449 = vshll.u32 %v6196, 16
        %v6451 = vor.u32 %v6448, %v6449
        %v6452 = vsel %vm314, %v6444, %v6451
        %v6453 = vrot.slane %v6448, 4
        %v6455 = vshrl.u32 %v6197, 16
        %v6457 = vrot.slane %v6455, 7
        %v6458 = vshll.u32 %v6197, 16
        %v6460 = vor.u32 %v6457, %v6458
        %v6461 = vrot.slane %v6457, 4
        %v6463 = vshrl.u32 %v6198, 16
        %v6465 = vrot.slane %v6463, 7
        %v6466 = vshll.u32 %v6198, 16
        %v6468 = vor.u32 %v6465, %v6466
        %v6469 = vsel %vm314, %v6461, %v6468
        %v6470 = vrot.slane %v6465, 4
        %s6519 = scalar_lea.vmem [#allocation4], 12
        %vm6520 = vcmask 1043456
        %vm6521 = vmand %vm6520, %vm637
        %v6522 = vld [vmem:[%s6519] sm:$0xf]
        %v6523 = vsel %vm6521, %v6205, %v6522
        %6524 = vst [vmem:[%s6519] sm:$0xf] %v6523
        %6525 = vst [vmem:[%s6519 + $0x4] sm:$0xf] %v6214
        %vm6526 = vcmask 1040384
        %vm6527 = vmand %vm6526, %vm312
        %v6528 = vld [vmem:[%s6519 + $0x8] sm:$0x1]
        %v6529 = vsel %vm6527, %v6215, %v6528
        %6530 = vst [vmem:[%s6519 + $0x8] sm:$0x1] %v6529
        %v6531 = vld [vmem:[%s6519 + $0xc] sm:$0xf]
        %v6532 = vsel %vm6521, %v6222, %v6531
        %6533 = vst [vmem:[%s6519 + $0xc] sm:$0xf] %v6532
        %6534 = vst [vmem:[%s6519 + $0x10] sm:$0xf] %v6231
        %v6535 = vld [vmem:[%s6519 + $0x14] sm:$0x1]
        %v6536 = vsel %vm6527, %v6232, %v6535
        %6537 = vst [vmem:[%s6519 + $0x14] sm:$0x1] %v6536
        %v6538 = vld [vmem:[%s6519 + $0x18] sm:$0xf]
        %v6539 = vsel %vm6521, %v6239, %v6538
        %6540 = vst [vmem:[%s6519 + $0x18] sm:$0xf] %v6539
        %6541 = vst [vmem:[%s6519 + $0x1c] sm:$0xf] %v6248
        %v6542 = vld [vmem:[%s6519 + $0x20] sm:$0x1]
        %v6543 = vsel %vm6527, %v6249, %v6542
        %6544 = vst [vmem:[%s6519 + $0x20] sm:$0x1] %v6543
        %v6545 = vld [vmem:[%s6519 + $0x24] sm:$0xf]
        %v6546 = vsel %vm6521, %v6256, %v6545
        %6547 = vst [vmem:[%s6519 + $0x24] sm:$0xf] %v6546
        %6548 = vst [vmem:[%s6519 + $0x28] sm:$0xf] %v6265
        %v6549 = vld [vmem:[%s6519 + $0x2c] sm:$0x1]
        %v6550 = vsel %vm6527, %v6266, %v6549
        %6551 = vst [vmem:[%s6519 + $0x2c] sm:$0x1] %v6550
        %v6552 = vld [vmem:[%s6519 + $0x30] sm:$0xf]
        %v6553 = vsel %vm6521, %v6273, %v6552
        %6554 = vst [vmem:[%s6519 + $0x30] sm:$0xf] %v6553
        %6555 = vst [vmem:[%s6519 + $0x34] sm:$0xf] %v6282
        %v6556 = vld [vmem:[%s6519 + $0x38] sm:$0x1]
        %v6557 = vsel %vm6527, %v6283, %v6556
        %6558 = vst [vmem:[%s6519 + $0x38] sm:$0x1] %v6557
        %v6559 = vld [vmem:[%s6519 + $0x3c] sm:$0xf]
        %v6560 = vsel %vm6521, %v6290, %v6559
        %6561 = vst [vmem:[%s6519 + $0x3c] sm:$0xf] %v6560
        %6562 = vst [vmem:[%s6519 + $0x40] sm:$0xf] %v6299
        %v6563 = vld [vmem:[%s6519 + $0x44] sm:$0x1]
        %v6564 = vsel %vm6527, %v6300, %v6563
        %6565 = vst [vmem:[%s6519 + $0x44] sm:$0x1] %v6564
        %v6566 = vld [vmem:[%s6519 + $0x48] sm:$0xf]
        %v6567 = vsel %vm6521, %v6307, %v6566
        %6568 = vst [vmem:[%s6519 + $0x48] sm:$0xf] %v6567
        %6569 = vst [vmem:[%s6519 + $0x4c] sm:$0xf] %v6316
        %v6570 = vld [vmem:[%s6519 + $0x50] sm:$0x1]
        %v6571 = vsel %vm6527, %v6317, %v6570
        %6572 = vst [vmem:[%s6519 + $0x50] sm:$0x1] %v6571
        %v6573 = vld [vmem:[%s6519 + $0x54] sm:$0xf]
        %v6574 = vsel %vm6521, %v6324, %v6573
        %6575 = vst [vmem:[%s6519 + $0x54] sm:$0xf] %v6574
        %6576 = vst [vmem:[%s6519 + $0x58] sm:$0xf] %v6333
        %v6577 = vld [vmem:[%s6519 + $0x5c] sm:$0x1]
        %v6578 = vsel %vm6527, %v6334, %v6577
        %6579 = vst [vmem:[%s6519 + $0x5c] sm:$0x1] %v6578
        %v6580 = vld [vmem:[%s6519 + $0x60] sm:$0xf]
        %v6581 = vsel %vm6521, %v6341, %v6580
        %6582 = vst [vmem:[%s6519 + $0x60] sm:$0xf] %v6581
        %6583 = vst [vmem:[%s6519 + $0x64] sm:$0xf] %v6350
        %v6584 = vld [vmem:[%s6519 + $0x68] sm:$0x1]
        %v6585 = vsel %vm6527, %v6351, %v6584
        %6586 = vst [vmem:[%s6519 + $0x68] sm:$0x1] %v6585
        %v6587 = vld [vmem:[%s6519 + $0x6c] sm:$0xf]
        %v6588 = vsel %vm6521, %v6358, %v6587
        %6589 = vst [vmem:[%s6519 + $0x6c] sm:$0xf] %v6588
        %6590 = vst [vmem:[%s6519 + $0x70] sm:$0xf] %v6367
        %v6591 = vld [vmem:[%s6519 + $0x74] sm:$0x1]
        %v6592 = vsel %vm6527, %v6368, %v6591
        %6593 = vst [vmem:[%s6519 + $0x74] sm:$0x1] %v6592
        %v6594 = vld [vmem:[%s6519 + $0x78] sm:$0xf]
        %v6595 = vsel %vm6521, %v6375, %v6594
        %6596 = vst [vmem:[%s6519 + $0x78] sm:$0xf] %v6595
        %6597 = vst [vmem:[%s6519 + $0x7c] sm:$0xf] %v6384
        %v6598 = vld [vmem:[%s6519 + $0x80] sm:$0x1]
        %v6599 = vsel %vm6527, %v6385, %v6598
        %6600 = vst [vmem:[%s6519 + $0x80] sm:$0x1] %v6599
        %v6601 = vld [vmem:[%s6519 + $0x84] sm:$0xf]
        %v6602 = vsel %vm6521, %v6392, %v6601
        %6603 = vst [vmem:[%s6519 + $0x84] sm:$0xf] %v6602
        %6604 = vst [vmem:[%s6519 + $0x88] sm:$0xf] %v6401
        %v6605 = vld [vmem:[%s6519 + $0x8c] sm:$0x1]
        %v6606 = vsel %vm6527, %v6402, %v6605
        %6607 = vst [vmem:[%s6519 + $0x8c] sm:$0x1] %v6606
        %v6608 = vld [vmem:[%s6519 + $0x90] sm:$0xf]
        %v6609 = vsel %vm6521, %v6409, %v6608
        %6610 = vst [vmem:[%s6519 + $0x90] sm:$0xf] %v6609
        %6611 = vst [vmem:[%s6519 + $0x94] sm:$0xf] %v6418
        %v6612 = vld [vmem:[%s6519 + $0x98] sm:$0x1]
        %v6613 = vsel %vm6527, %v6419, %v6612
        %6614 = vst [vmem:[%s6519 + $0x98] sm:$0x1] %v6613
        %v6615 = vld [vmem:[%s6519 + $0x9c] sm:$0xf]
        %v6616 = vsel %vm6521, %v6426, %v6615
        %6617 = vst [vmem:[%s6519 + $0x9c] sm:$0xf] %v6616
        %6618 = vst [vmem:[%s6519 + $0xa0] sm:$0xf] %v6435
        %v6619 = vld [vmem:[%s6519 + $0xa4] sm:$0x1]
        %v6620 = vsel %vm6527, %v6436, %v6619
        %6621 = vst [vmem:[%s6519 + $0xa4] sm:$0x1] %v6620
        %v6622 = vld [vmem:[%s6519 + $0xa8] sm:$0xf]
        %v6623 = vsel %vm6521, %v6443, %v6622
        %6624 = vst [vmem:[%s6519 + $0xa8] sm:$0xf] %v6623
        %6625 = vst [vmem:[%s6519 + $0xac] sm:$0xf] %v6452
        %v6626 = vld [vmem:[%s6519 + $0xb0] sm:$0x1]
        %v6627 = vsel %vm6527, %v6453, %v6626
        %6628 = vst [vmem:[%s6519 + $0xb0] sm:$0x1] %v6627
        %v6629 = vld [vmem:[%s6519 + $0xb4] sm:$0xf]
        %v6630 = vsel %vm6521, %v6460, %v6629
        %6631 = vst [vmem:[%s6519 + $0xb4] sm:$0xf] %v6630
        %6632 = vst [vmem:[%s6519 + $0xb8] sm:$0xf] %v6469
        %v6633 = vld [vmem:[%s6519 + $0xbc] sm:$0x1]
        %v6634 = vsel %vm6527, %v6470, %v6633
        %6635 = vst [vmem:[%s6519 + $0xbc] sm:$0x1] %v6634
        %v6636 = vld [vmem:[#allocation4] sm:$0xf]
        %v6637 = vld [vmem:[#allocation4 + $0x4] sm:$0xf]
        %v6638 = vld [vmem:[#allocation4 + $0xc] sm:$0xf]
        %v6639 = vld [vmem:[#allocation4 + $0x10] sm:$0xf]
        %v6640 = vld [vmem:[#allocation4 + $0x18] sm:$0xf]
        %v6641 = vld [vmem:[#allocation4 + $0x1c] sm:$0xf]
        %v6642 = vld [vmem:[#allocation4 + $0x24] sm:$0xf]
        %v6643 = vld [vmem:[#allocation4 + $0x28] sm:$0xf]
        %v6644 = vld [vmem:[#allocation4 + $0x30] sm:$0xf]
        %v6645 = vld [vmem:[#allocation4 + $0x34] sm:$0xf]
        %v6646 = vld [vmem:[#allocation4 + $0x3c] sm:$0xf]
        %v6647 = vld [vmem:[#allocation4 + $0x40] sm:$0xf]
        %v6648 = vld [vmem:[#allocation4 + $0x48] sm:$0xf]
        %v6649 = vld [vmem:[#allocation4 + $0x4c] sm:$0xf]
        %v6650 = vld [vmem:[#allocation4 + $0x54] sm:$0xf]
        %v6651 = vld [vmem:[#allocation4 + $0x58] sm:$0xf]
        %v6652 = vld [vmem:[#allocation4 + $0x60] sm:$0xf]
        %v6653 = vld [vmem:[#allocation4 + $0x64] sm:$0xf]
        %v6654 = vld [vmem:[#allocation4 + $0x6c] sm:$0xf]
        %v6655 = vld [vmem:[#allocation4 + $0x70] sm:$0xf]
        %v6656 = vld [vmem:[#allocation4 + $0x78] sm:$0xf]
        %v6657 = vld [vmem:[#allocation4 + $0x7c] sm:$0xf]
        %v6658 = vld [vmem:[#allocation4 + $0x84] sm:$0xf]
        %v6659 = vld [vmem:[#allocation4 + $0x88] sm:$0xf]
        %v6660 = vld [vmem:[#allocation4 + $0x90] sm:$0xf]
        %v6661 = vld [vmem:[#allocation4 + $0x94] sm:$0xf]
        %v6662 = vld [vmem:[#allocation4 + $0x9c] sm:$0xf]
        %v6663 = vld [vmem:[#allocation4 + $0xa0] sm:$0xf]
        %v6664 = vld [vmem:[#allocation4 + $0xa8] sm:$0xf]
        %v6665 = vld [vmem:[#allocation4 + $0xac] sm:$0xf]
        %v6666 = vld [vmem:[#allocation4 + $0xb4] sm:$0xf]
        %v6667 = vld [vmem:[#allocation4 + $0xb8] sm:$0xf]
        %v6668 = vld [vmem:[%s3] sm:$0xf]
        %v6669 = vld [vmem:[%s3 + $0x4] sm:$0xf]
        %v6670 = vld [vmem:[%s3 + $0x8] sm:$0xf]
        %v6671 = vld [vmem:[%s3 + $0xc] sm:$0xf]
        %v6672 = vld [vmem:[%s3 + $0x10] sm:$0xf]
        %v6673 = vld [vmem:[%s3 + $0x14] sm:$0xf]
        %v6674 = vld [vmem:[%s3 + $0x18] sm:$0xf]
        %v6675 = vld [vmem:[%s3 + $0x1c] sm:$0xf]
        %v6676 = vld [vmem:[%s3 + $0x20] sm:$0xf]
        %v6677 = vld [vmem:[%s3 + $0x24] sm:$0xf]
        %v6678 = vld [vmem:[%s3 + $0x28] sm:$0xf]
        %v6679 = vld [vmem:[%s3 + $0x2c] sm:$0xf]
        %v6680 = vld [vmem:[%s3 + $0x30] sm:$0xf]
        %v6681 = vld [vmem:[%s3 + $0x34] sm:$0xf]
        %v6682 = vld [vmem:[%s3 + $0x38] sm:$0xf]
        %v6683 = vld [vmem:[%s3 + $0x3c] sm:$0xf]
        %v6684 = vld [vmem:[#allocation4 + $0x8] sm:$0x1]
        %v6685 = vld [vmem:[#allocation4 + $0x14] sm:$0x1]
        %v6686 = vld [vmem:[#allocation4 + $0x20] sm:$0x1]
        %v6687 = vld [vmem:[#allocation4 + $0x2c] sm:$0x1]
        %v6688 = vld [vmem:[#allocation4 + $0x38] sm:$0x1]
        %v6689 = vld [vmem:[#allocation4 + $0x44] sm:$0x1]
        %v6690 = vld [vmem:[#allocation4 + $0x50] sm:$0x1]
        %v6691 = vld [vmem:[#allocation4 + $0x5c] sm:$0x1]
        %v6692 = vld [vmem:[#allocation4 + $0x68] sm:$0x1]
        %v6693 = vld [vmem:[#allocation4 + $0x74] sm:$0x1]
        %v6694 = vld [vmem:[#allocation4 + $0x80] sm:$0x1]
        %v6695 = vld [vmem:[#allocation4 + $0x8c] sm:$0x1]
        %v6696 = vld [vmem:[#allocation4 + $0x98] sm:$0x1]
        %v6697 = vld [vmem:[#allocation4 + $0xa4] sm:$0x1]
        %v6698 = vld [vmem:[#allocation4 + $0xb0] sm:$0x1]
        %v6699 = vld [vmem:[#allocation4 + $0xbc] sm:$0x1]
        %v6701 = vshrl.u32 %v6636, 16
        %v6703 = vrot.slane %v6701, 4
        %v6704 = vshll.u32 %v6636, 16
        %v6706 = vrot.slane %v6704, 5
        %v6707 = vor.u32 %v6703, %v6706
        %v6708 = vrot.slane %v6707, 4
        %v6710 = vshll.u32 %v6637, 16
        %v6712 = vrot.slane %v6710, 5
        %v6713 = vsel %vm948, %v6708, %v6712
        %v6714 = vshrl.u32 %v6637, 16
        %v6716 = vrot.slane %v6714, 4
        %v6717 = vor.u32 %v6716, %v6712
        %v6718 = vrot.slane %v6717, 4
        %v6720 = vshll.u32 %v6684, 16
        %v6722 = vrot.slane %v6720, 5
        %v6723 = vsel %vm948, %v6718, %v6722
        %v6725 = vshrl.u32 %v6638, 16
        %v6727 = vrot.slane %v6725, 4
        %v6728 = vshll.u32 %v6638, 16
        %v6730 = vrot.slane %v6728, 5
        %v6731 = vor.u32 %v6727, %v6730
        %v6732 = vrot.slane %v6731, 4
        %v6734 = vshll.u32 %v6639, 16
        %v6736 = vrot.slane %v6734, 5
        %v6737 = vsel %vm948, %v6732, %v6736
        %v6738 = vshrl.u32 %v6639, 16
        %v6740 = vrot.slane %v6738, 4
        %v6741 = vor.u32 %v6740, %v6736
        %v6742 = vrot.slane %v6741, 4
        %v6744 = vshll.u32 %v6685, 16
        %v6746 = vrot.slane %v6744, 5
        %v6747 = vsel %vm948, %v6742, %v6746
        %v6749 = vshrl.u32 %v6640, 16
        %v6751 = vrot.slane %v6749, 4
        %v6752 = vshll.u32 %v6640, 16
        %v6754 = vrot.slane %v6752, 5
        %v6755 = vor.u32 %v6751, %v6754
        %v6756 = vrot.slane %v6755, 4
        %v6758 = vshll.u32 %v6641, 16
        %v6760 = vrot.slane %v6758, 5
        %v6761 = vsel %vm948, %v6756, %v6760
        %v6762 = vshrl.u32 %v6641, 16
        %v6764 = vrot.slane %v6762, 4
        %v6765 = vor.u32 %v6764, %v6760
        %v6766 = vrot.slane %v6765, 4
        %v6768 = vshll.u32 %v6686, 16
        %v6770 = vrot.slane %v6768, 5
        %v6771 = vsel %vm948, %v6766, %v6770
        %v6773 = vshrl.u32 %v6642, 16
        %v6775 = vrot.slane %v6773, 4
        %v6776 = vshll.u32 %v6642, 16
        %v6778 = vrot.slane %v6776, 5
        %v6779 = vor.u32 %v6775, %v6778
        %v6780 = vrot.slane %v6779, 4
        %v6782 = vshll.u32 %v6643, 16
        %v6784 = vrot.slane %v6782, 5
        %v6785 = vsel %vm948, %v6780, %v6784
        %v6786 = vshrl.u32 %v6643, 16
        %v6788 = vrot.slane %v6786, 4
        %v6789 = vor.u32 %v6788, %v6784
        %v6790 = vrot.slane %v6789, 4
        %v6792 = vshll.u32 %v6687, 16
        %v6794 = vrot.slane %v6792, 5
        %v6795 = vsel %vm948, %v6790, %v6794
        %v6797 = vshrl.u32 %v6644, 16
        %v6799 = vrot.slane %v6797, 4
        %v6800 = vshll.u32 %v6644, 16
        %v6802 = vrot.slane %v6800, 5
        %v6803 = vor.u32 %v6799, %v6802
        %v6804 = vrot.slane %v6803, 4
        %v6806 = vshll.u32 %v6645, 16
        %v6808 = vrot.slane %v6806, 5
        %v6809 = vsel %vm948, %v6804, %v6808
        %v6810 = vshrl.u32 %v6645, 16
        %v6812 = vrot.slane %v6810, 4
        %v6813 = vor.u32 %v6812, %v6808
        %v6814 = vrot.slane %v6813, 4
        %v6816 = vshll.u32 %v6688, 16
        %v6818 = vrot.slane %v6816, 5
        %v6819 = vsel %vm948, %v6814, %v6818
        %v6821 = vshrl.u32 %v6646, 16
        %v6823 = vrot.slane %v6821, 4
        %v6824 = vshll.u32 %v6646, 16
        %v6826 = vrot.slane %v6824, 5
        %v6827 = vor.u32 %v6823, %v6826
        %v6828 = vrot.slane %v6827, 4
        %v6830 = vshll.u32 %v6647, 16
        %v6832 = vrot.slane %v6830, 5
        %v6833 = vsel %vm948, %v6828, %v6832
        %v6834 = vshrl.u32 %v6647, 16
        %v6836 = vrot.slane %v6834, 4
        %v6837 = vor.u32 %v6836, %v6832
        %v6838 = vrot.slane %v6837, 4
        %v6840 = vshll.u32 %v6689, 16
        %v6842 = vrot.slane %v6840, 5
        %v6843 = vsel %vm948, %v6838, %v6842
        %v6845 = vshrl.u32 %v6648, 16
        %v6847 = vrot.slane %v6845, 4
        %v6848 = vshll.u32 %v6648, 16
        %v6850 = vrot.slane %v6848, 5
        %v6851 = vor.u32 %v6847, %v6850
        %v6852 = vrot.slane %v6851, 4
        %v6854 = vshll.u32 %v6649, 16
        %v6856 = vrot.slane %v6854, 5
        %v6857 = vsel %vm948, %v6852, %v6856
        %v6858 = vshrl.u32 %v6649, 16
        %v6860 = vrot.slane %v6858, 4
        %v6861 = vor.u32 %v6860, %v6856
        %v6862 = vrot.slane %v6861, 4
        %v6864 = vshll.u32 %v6690, 16
        %v6866 = vrot.slane %v6864, 5
        %v6867 = vsel %vm948, %v6862, %v6866
        %v6869 = vshrl.u32 %v6650, 16
        %v6871 = vrot.slane %v6869, 4
        %v6872 = vshll.u32 %v6650, 16
        %v6874 = vrot.slane %v6872, 5
        %v6875 = vor.u32 %v6871, %v6874
        %v6876 = vrot.slane %v6875, 4
        %v6878 = vshll.u32 %v6651, 16
        %v6880 = vrot.slane %v6878, 5
        %v6881 = vsel %vm948, %v6876, %v6880
        %v6882 = vshrl.u32 %v6651, 16
        %v6884 = vrot.slane %v6882, 4
        %v6885 = vor.u32 %v6884, %v6880
        %v6886 = vrot.slane %v6885, 4
        %v6888 = vshll.u32 %v6691, 16
        %v6890 = vrot.slane %v6888, 5
        %v6891 = vsel %vm948, %v6886, %v6890
        %v6893 = vshrl.u32 %v6652, 16
        %v6895 = vrot.slane %v6893, 4
        %v6896 = vshll.u32 %v6652, 16
        %v6898 = vrot.slane %v6896, 5
        %v6899 = vor.u32 %v6895, %v6898
        %v6900 = vrot.slane %v6899, 4
        %v6902 = vshll.u32 %v6653, 16
        %v6904 = vrot.slane %v6902, 5
        %v6905 = vsel %vm948, %v6900, %v6904
        %v6906 = vshrl.u32 %v6653, 16
        %v6908 = vrot.slane %v6906, 4
        %v6909 = vor.u32 %v6908, %v6904
        %v6910 = vrot.slane %v6909, 4
        %v6912 = vshll.u32 %v6692, 16
        %v6914 = vrot.slane %v6912, 5
        %v6915 = vsel %vm948, %v6910, %v6914
        %v6917 = vshrl.u32 %v6654, 16
        %v6919 = vrot.slane %v6917, 4
        %v6920 = vshll.u32 %v6654, 16
        %v6922 = vrot.slane %v6920, 5
        %v6923 = vor.u32 %v6919, %v6922
        %v6924 = vrot.slane %v6923, 4
        %v6926 = vshll.u32 %v6655, 16
        %v6928 = vrot.slane %v6926, 5
        %v6929 = vsel %vm948, %v6924, %v6928
        %v6930 = vshrl.u32 %v6655, 16
        %v6932 = vrot.slane %v6930, 4
        %v6933 = vor.u32 %v6932, %v6928
        %v6934 = vrot.slane %v6933, 4
        %v6936 = vshll.u32 %v6693, 16
        %v6938 = vrot.slane %v6936, 5
        %v6939 = vsel %vm948, %v6934, %v6938
        %v6941 = vshrl.u32 %v6656, 16
        %v6943 = vrot.slane %v6941, 4
        %v6944 = vshll.u32 %v6656, 16
        %v6946 = vrot.slane %v6944, 5
        %v6947 = vor.u32 %v6943, %v6946
        %v6948 = vrot.slane %v6947, 4
        %v6950 = vshll.u32 %v6657, 16
        %v6952 = vrot.slane %v6950, 5
        %v6953 = vsel %vm948, %v6948, %v6952
        %v6954 = vshrl.u32 %v6657, 16
        %v6956 = vrot.slane %v6954, 4
        %v6957 = vor.u32 %v6956, %v6952
        %v6958 = vrot.slane %v6957, 4
        %v6960 = vshll.u32 %v6694, 16
        %v6962 = vrot.slane %v6960, 5
        %v6963 = vsel %vm948, %v6958, %v6962
        %v6965 = vshrl.u32 %v6658, 16
        %v6967 = vrot.slane %v6965, 4
        %v6968 = vshll.u32 %v6658, 16
        %v6970 = vrot.slane %v6968, 5
        %v6971 = vor.u32 %v6967, %v6970
        %v6972 = vrot.slane %v6971, 4
        %v6974 = vshll.u32 %v6659, 16
        %v6976 = vrot.slane %v6974, 5
        %v6977 = vsel %vm948, %v6972, %v6976
        %v6978 = vshrl.u32 %v6659, 16
        %v6980 = vrot.slane %v6978, 4
        %v6981 = vor.u32 %v6980, %v6976
        %v6982 = vrot.slane %v6981, 4
        %v6984 = vshll.u32 %v6695, 16
        %v6986 = vrot.slane %v6984, 5
        %v6987 = vsel %vm948, %v6982, %v6986
        %v6989 = vshrl.u32 %v6660, 16
        %v6991 = vrot.slane %v6989, 4
        %v6992 = vshll.u32 %v6660, 16
        %v6994 = vrot.slane %v6992, 5
        %v6995 = vor.u32 %v6991, %v6994
        %v6996 = vrot.slane %v6995, 4
        %v6998 = vshll.u32 %v6661, 16
        %v7000 = vrot.slane %v6998, 5
        %v7001 = vsel %vm948, %v6996, %v7000
        %v7002 = vshrl.u32 %v6661, 16
        %v7004 = vrot.slane %v7002, 4
        %v7005 = vor.u32 %v7004, %v7000
        %v7006 = vrot.slane %v7005, 4
        %v7008 = vshll.u32 %v6696, 16
        %v7010 = vrot.slane %v7008, 5
        %v7011 = vsel %vm948, %v7006, %v7010
        %v7013 = vshrl.u32 %v6662, 16
        %v7015 = vrot.slane %v7013, 4
        %v7016 = vshll.u32 %v6662, 16
        %v7018 = vrot.slane %v7016, 5
        %v7019 = vor.u32 %v7015, %v7018
        %v7020 = vrot.slane %v7019, 4
        %v7022 = vshll.u32 %v6663, 16
        %v7024 = vrot.slane %v7022, 5
        %v7025 = vsel %vm948, %v7020, %v7024
        %v7026 = vshrl.u32 %v6663, 16
        %v7028 = vrot.slane %v7026, 4
        %v7029 = vor.u32 %v7028, %v7024
        %v7030 = vrot.slane %v7029, 4
        %v7032 = vshll.u32 %v6697, 16
        %v7034 = vrot.slane %v7032, 5
        %v7035 = vsel %vm948, %v7030, %v7034
        %v7037 = vshrl.u32 %v6664, 16
        %v7039 = vrot.slane %v7037, 4
        %v7040 = vshll.u32 %v6664, 16
        %v7042 = vrot.slane %v7040, 5
        %v7043 = vor.u32 %v7039, %v7042
        %v7044 = vrot.slane %v7043, 4
        %v7046 = vshll.u32 %v6665, 16
        %v7048 = vrot.slane %v7046, 5
        %v7049 = vsel %vm948, %v7044, %v7048
        %v7050 = vshrl.u32 %v6665, 16
        %v7052 = vrot.slane %v7050, 4
        %v7053 = vor.u32 %v7052, %v7048
        %v7054 = vrot.slane %v7053, 4
        %v7056 = vshll.u32 %v6698, 16
        %v7058 = vrot.slane %v7056, 5
        %v7059 = vsel %vm948, %v7054, %v7058
        %v7061 = vshrl.u32 %v6666, 16
        %v7063 = vrot.slane %v7061, 4
        %v7064 = vshll.u32 %v6666, 16
        %v7066 = vrot.slane %v7064, 5
        %v7067 = vor.u32 %v7063, %v7066
        %v7068 = vrot.slane %v7067, 4
        %v7070 = vshll.u32 %v6667, 16
        %v7072 = vrot.slane %v7070, 5
        %v7073 = vsel %vm948, %v7068, %v7072
        %v7074 = vshrl.u32 %v6667, 16
        %v7076 = vrot.slane %v7074, 4
        %v7077 = vor.u32 %v7076, %v7072
        %v7078 = vrot.slane %v7077, 4
        %v7080 = vshll.u32 %v6699, 16
        %v7082 = vrot.slane %v7080, 5
        %v7083 = vsel %vm948, %v7078, %v7082
        %s7084 = scalar_lea.vmem %s3, 64
        %v7085 = vld [vmem:[%s7084] sm:$0xf]
        %v7086 = vld [vmem:[%s7084 + $0x4] sm:$0xf]
        %v7087 = vld [vmem:[%s7084 + $0x8] sm:$0xf]
        %v7088 = vld [vmem:[%s7084 + $0xc] sm:$0xf]
        %v7089 = vld [vmem:[%s7084 + $0x10] sm:$0xf]
        %v7090 = vld [vmem:[%s7084 + $0x14] sm:$0xf]
        %v7091 = vld [vmem:[%s7084 + $0x18] sm:$0xf]
        %v7092 = vld [vmem:[%s7084 + $0x1c] sm:$0xf]
        %v7093 = vld [vmem:[%s7084 + $0x20] sm:$0xf]
        %v7094 = vld [vmem:[%s7084 + $0x24] sm:$0xf]
        %v7095 = vld [vmem:[%s7084 + $0x28] sm:$0xf]
        %v7096 = vld [vmem:[%s7084 + $0x2c] sm:$0xf]
        %v7097 = vld [vmem:[%s7084 + $0x30] sm:$0xf]
        %v7098 = vld [vmem:[%s7084 + $0x34] sm:$0xf]
        %v7099 = vld [vmem:[%s7084 + $0x38] sm:$0xf]
        %v7100 = vld [vmem:[%s7084 + $0x3c] sm:$0xf]
        %v7101 = vunpack.c.l.b16 %v6713
        %v7102 = vunpack.c.l.b16 %v6723
        %v7103 = vunpack.c.l.b16 %v6737
        %v7104 = vunpack.c.l.b16 %v6747
        %v7105 = vunpack.c.l.b16 %v6761
        %v7106 = vunpack.c.l.b16 %v6771
        %v7107 = vunpack.c.l.b16 %v6785
        %v7108 = vunpack.c.l.b16 %v6795
        %v7109 = vunpack.c.l.b16 %v6809
        %v7110 = vunpack.c.l.b16 %v6819
        %v7111 = vunpack.c.l.b16 %v6833
        %v7112 = vunpack.c.l.b16 %v6843
        %v7113 = vunpack.c.l.b16 %v6857
        %v7114 = vunpack.c.l.b16 %v6867
        %v7115 = vunpack.c.l.b16 %v6881
        %v7116 = vunpack.c.l.b16 %v6891
        %v7117 = vunpack.c.l.b16 %v6905
        %v7118 = vunpack.c.l.b16 %v6915
        %v7119 = vunpack.c.l.b16 %v6929
        %v7120 = vunpack.c.l.b16 %v6939
        %v7121 = vunpack.c.l.b16 %v6953
        %v7122 = vunpack.c.l.b16 %v6963
        %v7123 = vunpack.c.l.b16 %v6977
        %v7124 = vunpack.c.l.b16 %v6987
        %v7125 = vunpack.c.l.b16 %v7001
        %v7126 = vunpack.c.l.b16 %v7011
        %v7127 = vunpack.c.l.b16 %v7025
        %v7128 = vunpack.c.l.b16 %v7035
        %v7129 = vunpack.c.l.b16 %v7049
        %v7130 = vunpack.c.l.b16 %v7059
        %v7131 = vunpack.c.l.b16 %v7073
        %v7132 = vunpack.c.l.b16 %v7083
        %v7133 = vpack.c.b16 %v7102, %v7101
        %v7134 = vpack.c.b16 %v7104, %v7103
        %v7135 = vpack.c.b16 %v7106, %v7105
        %v7136 = vpack.c.b16 %v7108, %v7107
        %v7137 = vpack.c.b16 %v7110, %v7109
        %v7138 = vpack.c.b16 %v7112, %v7111
        %v7139 = vpack.c.b16 %v7114, %v7113
        %v7140 = vpack.c.b16 %v7116, %v7115
        %v7141 = vpack.c.b16 %v7118, %v7117
        %v7142 = vpack.c.b16 %v7120, %v7119
        %v7143 = vpack.c.b16 %v7122, %v7121
        %v7144 = vpack.c.b16 %v7124, %v7123
        %v7145 = vpack.c.b16 %v7126, %v7125
        %v7146 = vpack.c.b16 %v7128, %v7127
        %v7147 = vpack.c.b16 %v7130, %v7129
        %v7148 = vpack.c.b16 %v7132, %v7131
        %v7181 = vunpack.c.l.b16 %v7085
        %v7182 = vunpack.c.l.b16 %v7086
        %v7183 = vunpack.c.l.b16 %v7087
        %v7184 = vunpack.c.l.b16 %v7088
        %v7185 = vunpack.c.l.b16 %v7089
        %v7186 = vunpack.c.l.b16 %v7090
        %v7187 = vunpack.c.l.b16 %v7091
        %v7188 = vunpack.c.l.b16 %v7092
        %v7189 = vunpack.c.l.b16 %v7093
        %v7190 = vunpack.c.l.b16 %v7094
        %v7191 = vunpack.c.l.b16 %v7095
        %v7192 = vunpack.c.l.b16 %v7096
        %v7193 = vunpack.c.l.b16 %v7097
        %v7194 = vunpack.c.l.b16 %v7098
        %v7195 = vunpack.c.l.b16 %v7099
        %v7196 = vunpack.c.l.b16 %v7100
        %v7197 = vpack.c.b16 %v7182, %v7181
        %v7198 = vpack.c.b16 %v7184, %v7183
        %v7199 = vpack.c.b16 %v7186, %v7185
        %v7200 = vpack.c.b16 %v7188, %v7187
        %v7201 = vpack.c.b16 %v7190, %v7189
        %v7202 = vpack.c.b16 %v7192, %v7191
        %v7203 = vpack.c.b16 %v7194, %v7193
        %v7204 = vpack.c.b16 %v7196, %v7195
        %7213 = vmatprep.subr.bf16.mxu0 0
        %7214 = vmatpush1.bf16.msra.mxu0 %v7197
        %7215 = vmatprep.subr.bf16.mxu0 0
        %7216 = vmatpush1.bf16.msra.mxu0 %v7198
        %7217 = vmatprep.subr.bf16.mxu0 0
        %7218 = vmatpush1.bf16.msra.mxu0 %v7199
        %7219 = vmatprep.subr.bf16.mxu0 0
        %7220 = vmatpush1.bf16.msra.mxu0 %v7200
        %7221 = vmatprep.subr.bf16.mxu0 0
        %7222 = vmatpush1.bf16.msra.mxu0 %v7201
        %7223 = vmatprep.subr.bf16.mxu0 0
        %7224 = vmatpush1.bf16.msra.mxu0 %v7202
        %7225 = vmatprep.subr.bf16.mxu0 0
        %7226 = vmatpush1.bf16.msra.mxu0 %v7203
        %7227 = vmatprep.subr.bf16.mxu0 0
        %7228 = vmatpush1.bf16.msra.mxu0 %v7204
        %7229 = vmatprep.subr.bf16.mxu0 0
        %7230 = vmatpush1.bf16.msra.mxu0 0
        %7231 = vmatprep.subr.bf16.mxu0 0
        %7232 = vmatpush1.bf16.msra.mxu0 0
        %7233 = vmatprep.subr.bf16.mxu0 0
        %7234 = vmatpush1.bf16.msra.mxu0 0
        %7235 = vmatprep.subr.bf16.mxu0 0
        %7236 = vmatpush1.bf16.msra.mxu0 0
        %7237 = vmatprep.subr.bf16.mxu0 0
        %7238 = vmatpush1.bf16.msra.mxu0 0
        %7239 = vmatprep.subr.bf16.mxu0 0
        %7240 = vmatpush1.bf16.msra.mxu0 0
        %7241 = vmatprep.subr.bf16.mxu0 0
        %7242 = vmatpush1.bf16.msra.mxu0 0
        %7243 = vmatprep.subr.bf16.mxu0 0
        %7244 = vmatpush1.bf16.msra.mxu0 0
        %7245 = vmatprep.mubr.bf16.mxu0 0
        %7246 = vmatmul.mubr.bf16.gmra.mrb[0].mxu0 %v7133
        %v7247 = vpop.f32.mrb[0].mxu0
        %v7248 = vadd.f32 0.0, %v7247
        %v7249 = vpop.f32.mrb[0].mxu0
        %v7250 = vpop.f32.mrb[0].mxu0
        %v7251 = vadd.f32 0.0, %v7250
        %v7252 = vpop.f32.mrb[0].mxu0
        %7253 = vmatprep.mubr.bf16.mxu0 0
        %7254 = vmatmul.mubr.bf16.gmra.mrb[0].mxu0 %v7134
        %v7255 = vpop.f32.mrb[0].mxu0
        %v7256 = vadd.f32 0.0, %v7255
        %v7257 = vpop.f32.mrb[0].mxu0
        %v7258 = vpop.f32.mrb[0].mxu0
        %v7259 = vadd.f32 0.0, %v7258
        %v7260 = vpop.f32.mrb[0].mxu0
        %7261 = vmatprep.mubr.bf16.mxu0 0
        %7262 = vmatmul.mubr.bf16.gmra.mrb[0].mxu0 %v7135
        %v7263 = vpop.f32.mrb[0].mxu0
        %v7264 = vadd.f32 0.0, %v7263
        %v7265 = vpop.f32.mrb[0].mxu0
        %v7266 = vpop.f32.mrb[0].mxu0
        %v7267 = vadd.f32 0.0, %v7266
        %v7268 = vpop.f32.mrb[0].mxu0
        %7269 = vmatprep.mubr.bf16.mxu0 0
        %7270 = vmatmul.mubr.bf16.gmra.mrb[0].mxu0 %v7136
        %v7271 = vpop.f32.mrb[0].mxu0
        %v7272 = vadd.f32 0.0, %v7271
        %v7273 = vpop.f32.mrb[0].mxu0
        %v7274 = vpop.f32.mrb[0].mxu0
        %v7275 = vadd.f32 0.0, %v7274
        %v7276 = vpop.f32.mrb[0].mxu0
        %7277 = vmatprep.mubr.bf16.mxu0 0
        %7278 = vmatmul.mubr.bf16.gmra.mrb[0].mxu0 %v7137
        %v7279 = vpop.f32.mrb[0].mxu0
        %v7280 = vadd.f32 0.0, %v7279
        %v7281 = vpop.f32.mrb[0].mxu0
        %v7282 = vpop.f32.mrb[0].mxu0
        %v7283 = vadd.f32 0.0, %v7282
        %v7284 = vpop.f32.mrb[0].mxu0
        %7285 = vmatprep.mubr.bf16.mxu0 0
        %7286 = vmatmul.mubr.bf16.gmra.mrb[0].mxu0 %v7138
        %v7287 = vpop.f32.mrb[0].mxu0
        %v7288 = vadd.f32 0.0, %v7287
        %v7289 = vpop.f32.mrb[0].mxu0
        %v7290 = vpop.f32.mrb[0].mxu0
        %v7291 = vadd.f32 0.0, %v7290
        %v7292 = vpop.f32.mrb[0].mxu0
        %7293 = vmatprep.mubr.bf16.mxu0 0
        %7294 = vmatmul.mubr.bf16.gmra.mrb[0].mxu0 %v7139
        %v7295 = vpop.f32.mrb[0].mxu0
        %v7296 = vadd.f32 0.0, %v7295
        %v7297 = vpop.f32.mrb[0].mxu0
        %v7298 = vpop.f32.mrb[0].mxu0
        %v7299 = vadd.f32 0.0, %v7298
        %v7300 = vpop.f32.mrb[0].mxu0
        %7301 = vmatprep.mubr.bf16.mxu0 0
        %7302 = vmatmul.mubr.bf16.gmra.mrb[0].mxu0 %v7140
        %v7303 = vpop.f32.mrb[0].mxu0
        %v7304 = vadd.f32 0.0, %v7303
        %v7305 = vpop.f32.mrb[0].mxu0
        %v7306 = vpop.f32.mrb[0].mxu0
        %v7307 = vadd.f32 0.0, %v7306
        %v7308 = vpop.f32.mrb[0].mxu0
        %7309 = vmatprep.mubr.bf16.mxu0 0
        %7310 = vmatmul.mubr.bf16.gmra.mrb[0].mxu0 %v7141
        %v7311 = vpop.f32.mrb[0].mxu0
        %v7312 = vadd.f32 0.0, %v7311
        %v7313 = vpop.f32.mrb[0].mxu0
        %v7314 = vpop.f32.mrb[0].mxu0
        %v7315 = vadd.f32 0.0, %v7314
        %v7316 = vpop.f32.mrb[0].mxu0
        %7317 = vmatprep.mubr.bf16.mxu0 0
        %7318 = vmatmul.mubr.bf16.gmra.mrb[0].mxu0 %v7142
        %v7319 = vpop.f32.mrb[0].mxu0
        %v7320 = vadd.f32 0.0, %v7319
        %v7321 = vpop.f32.mrb[0].mxu0
        %v7322 = vpop.f32.mrb[0].mxu0
        %v7323 = vadd.f32 0.0, %v7322
        %v7324 = vpop.f32.mrb[0].mxu0
        %7325 = vmatprep.mubr.bf16.mxu0 0
        %7326 = vmatmul.mubr.bf16.gmra.mrb[0].mxu0 %v7143
        %v7327 = vpop.f32.mrb[0].mxu0
        %v7328 = vadd.f32 0.0, %v7327
        %v7329 = vpop.f32.mrb[0].mxu0
        %v7330 = vpop.f32.mrb[0].mxu0
        %v7331 = vadd.f32 0.0, %v7330
        %v7332 = vpop.f32.mrb[0].mxu0
        %7333 = vmatprep.mubr.bf16.mxu0 0
        %7334 = vmatmul.mubr.bf16.gmra.mrb[0].mxu0 %v7144
        %v7335 = vpop.f32.mrb[0].mxu0
        %v7336 = vadd.f32 0.0, %v7335
        %v7337 = vpop.f32.mrb[0].mxu0
        %v7338 = vpop.f32.mrb[0].mxu0
        %v7339 = vadd.f32 0.0, %v7338
        %v7340 = vpop.f32.mrb[0].mxu0
        %7341 = vmatprep.mubr.bf16.mxu0 0
        %7342 = vmatmul.mubr.bf16.gmra.mrb[0].mxu0 %v7145
        %v7343 = vpop.f32.mrb[0].mxu0
        %v7344 = vadd.f32 0.0, %v7343
        %v7345 = vpop.f32.mrb[0].mxu0
        %v7346 = vpop.f32.mrb[0].mxu0
        %v7347 = vadd.f32 0.0, %v7346
        %v7348 = vpop.f32.mrb[0].mxu0
        %7349 = vmatprep.mubr.bf16.mxu0 0
        %7350 = vmatmul.mubr.bf16.gmra.mrb[0].mxu0 %v7146
        %v7351 = vpop.f32.mrb[0].mxu0
        %v7352 = vadd.f32 0.0, %v7351
        %v7353 = vpop.f32.mrb[0].mxu0
        %v7354 = vpop.f32.mrb[0].mxu0
        %v7355 = vadd.f32 0.0, %v7354
        %v7356 = vpop.f32.mrb[0].mxu0
        %7357 = vmatprep.mubr.bf16.mxu0 0
        %7358 = vmatmul.mubr.bf16.gmra.mrb[0].mxu0 %v7147
        %v7359 = vpop.f32.mrb[0].mxu0
        %v7360 = vadd.f32 0.0, %v7359
        %v7361 = vpop.f32.mrb[0].mxu0
        %v7362 = vpop.f32.mrb[0].mxu0
        %v7363 = vadd.f32 0.0, %v7362
        %v7364 = vpop.f32.mrb[0].mxu0
        %7365 = vmatprep.mubr.bf16.mxu0 0
        %7366 = vmatmul.mubr.bf16.gmra.mrb[0].mxu0 %v7148
        %v7367 = vpop.f32.mrb[0].mxu0
        %v7368 = vadd.f32 0.0, %v7367
        %v7369 = vpop.f32.mrb[0].mxu0
        %v7370 = vpop.f32.mrb[0].mxu0
        %v7371 = vadd.f32 0.0, %v7370
        %v7372 = vpop.f32.mrb[0].mxu0
        %7373 = vdwg.mxu0
        %v7406 = vunpack.c.l.b16 %v6636
        %v7407 = vunpack.c.l.b16 %v6637
        %v7408 = vunpack.c.l.b16 %v6638
        %v7409 = vunpack.c.l.b16 %v6639
        %v7410 = vunpack.c.l.b16 %v6640
        %v7411 = vunpack.c.l.b16 %v6641
        %v7412 = vunpack.c.l.b16 %v6642
        %v7413 = vunpack.c.l.b16 %v6643
        %v7414 = vunpack.c.l.b16 %v6644
        %v7415 = vunpack.c.l.b16 %v6645
        %v7416 = vunpack.c.l.b16 %v6646
        %v7417 = vunpack.c.l.b16 %v6647
        %v7418 = vunpack.c.l.b16 %v6648
        %v7419 = vunpack.c.l.b16 %v6649
        %v7420 = vunpack.c.l.b16 %v6650
        %v7421 = vunpack.c.l.b16 %v6651
        %v7422 = vunpack.c.l.b16 %v6652
        %v7423 = vunpack.c.l.b16 %v6653
        %v7424 = vunpack.c.l.b16 %v6654
        %v7425 = vunpack.c.l.b16 %v6655
        %v7426 = vunpack.c.l.b16 %v6656
        %v7427 = vunpack.c.l.b16 %v6657
        %v7428 = vunpack.c.l.b16 %v6658
        %v7429 = vunpack.c.l.b16 %v6659
        %v7430 = vunpack.c.l.b16 %v6660
        %v7431 = vunpack.c.l.b16 %v6661
        %v7432 = vunpack.c.l.b16 %v6662
        %v7433 = vunpack.c.l.b16 %v6663
        %v7434 = vunpack.c.l.b16 %v6664
        %v7435 = vunpack.c.l.b16 %v6665
        %v7436 = vunpack.c.l.b16 %v6666
        %v7437 = vunpack.c.l.b16 %v6667
        %v7438 = vpack.c.b16 %v7407, %v7406
        %v7439 = vpack.c.b16 %v7409, %v7408
        %v7440 = vpack.c.b16 %v7411, %v7410
        %v7441 = vpack.c.b16 %v7413, %v7412
        %v7442 = vpack.c.b16 %v7415, %v7414
        %v7443 = vpack.c.b16 %v7417, %v7416
        %v7444 = vpack.c.b16 %v7419, %v7418
        %v7445 = vpack.c.b16 %v7421, %v7420
        %v7446 = vpack.c.b16 %v7423, %v7422
        %v7447 = vpack.c.b16 %v7425, %v7424
        %v7448 = vpack.c.b16 %v7427, %v7426
        %v7449 = vpack.c.b16 %v7429, %v7428
        %v7450 = vpack.c.b16 %v7431, %v7430
        %v7451 = vpack.c.b16 %v7433, %v7432
        %v7452 = vpack.c.b16 %v7435, %v7434
        %v7453 = vpack.c.b16 %v7437, %v7436
        %v7486 = vunpack.c.l.b16 %v6668
        %v7487 = vunpack.c.l.b16 %v6669
        %v7488 = vunpack.c.l.b16 %v6670
        %v7489 = vunpack.c.l.b16 %v6671
        %v7490 = vunpack.c.l.b16 %v6672
        %v7491 = vunpack.c.l.b16 %v6673
        %v7492 = vunpack.c.l.b16 %v6674
        %v7493 = vunpack.c.l.b16 %v6675
        %v7494 = vunpack.c.l.b16 %v6676
        %v7495 = vunpack.c.l.b16 %v6677
        %v7496 = vunpack.c.l.b16 %v6678
        %v7497 = vunpack.c.l.b16 %v6679
        %v7498 = vunpack.c.l.b16 %v6680
        %v7499 = vunpack.c.l.b16 %v6681
        %v7500 = vunpack.c.l.b16 %v6682
        %v7501 = vunpack.c.l.b16 %v6683
        %v7502 = vpack.c.b16 %v7487, %v7486
        %v7503 = vpack.c.b16 %v7489, %v7488
        %v7504 = vpack.c.b16 %v7491, %v7490
        %v7505 = vpack.c.b16 %v7493, %v7492
        %v7506 = vpack.c.b16 %v7495, %v7494
        %v7507 = vpack.c.b16 %v7497, %v7496
        %v7508 = vpack.c.b16 %v7499, %v7498
        %v7509 = vpack.c.b16 %v7501, %v7500
        %7518 = vmatprep.subr.bf16.mxu0 0
        %7519 = vmatpush1.bf16.msra.mxu0 %v7502
        %7520 = vmatprep.subr.bf16.mxu0 0
        %7521 = vmatpush1.bf16.msra.mxu0 %v7503
        %7522 = vmatprep.subr.bf16.mxu0 0
        %7523 = vmatpush1.bf16.msra.mxu0 %v7504
        %7524 = vmatprep.subr.bf16.mxu0 0
        %7525 = vmatpush1.bf16.msra.mxu0 %v7505
        %7526 = vmatprep.subr.bf16.mxu0 0
        %7527 = vmatpush1.bf16.msra.mxu0 %v7506
        %7528 = vmatprep.subr.bf16.mxu0 0
        %7529 = vmatpush1.bf16.msra.mxu0 %v7507
        %7530 = vmatprep.subr.bf16.mxu0 0
        %7531 = vmatpush1.bf16.msra.mxu0 %v7508
        %7532 = vmatprep.subr.bf16.mxu0 0
        %7533 = vmatpush1.bf16.msra.mxu0 %v7509
        %7534 = vmatprep.subr.bf16.mxu0 0
        %7535 = vmatpush1.bf16.msra.mxu0 0
        %7536 = vmatprep.subr.bf16.mxu0 0
        %7537 = vmatpush1.bf16.msra.mxu0 0
        %7538 = vmatprep.subr.bf16.mxu0 0
        %7539 = vmatpush1.bf16.msra.mxu0 0
        %7540 = vmatprep.subr.bf16.mxu0 0
        %7541 = vmatpush1.bf16.msra.mxu0 0
        %7542 = vmatprep.subr.bf16.mxu0 0
        %7543 = vmatpush1.bf16.msra.mxu0 0
        %7544 = vmatprep.subr.bf16.mxu0 0
        %7545 = vmatpush1.bf16.msra.mxu0 0
        %7546 = vmatprep.subr.bf16.mxu0 0
        %7547 = vmatpush1.bf16.msra.mxu0 0
        %7548 = vmatprep.subr.bf16.mxu0 0
        %7549 = vmatpush1.bf16.msra.mxu0 0
        %7550 = vmatprep.mubr.bf16.mxu0 0
        %7551 = vmatmul.mubr.bf16.gmra.mrb[0].mxu0 %v7438
        %v7552 = vpop.f32.mrb[0].mxu0
        %v7553 = vadd.f32 %v7248, %v7552
        %v7554 = vpop.f32.mrb[0].mxu0
        %v7555 = vpop.f32.mrb[0].mxu0
        %v7556 = vadd.f32 %v7251, %v7555
        %v7557 = vpop.f32.mrb[0].mxu0
        %7558 = vmatprep.mubr.bf16.mxu0 0
        %7559 = vmatmul.mubr.bf16.gmra.mrb[0].mxu0 %v7439
        %v7560 = vpop.f32.mrb[0].mxu0
        %v7561 = vadd.f32 %v7256, %v7560
        %v7562 = vpop.f32.mrb[0].mxu0
        %v7563 = vpop.f32.mrb[0].mxu0
        %v7564 = vadd.f32 %v7259, %v7563
        %v7565 = vpop.f32.mrb[0].mxu0
        %7566 = vmatprep.mubr.bf16.mxu0 0
        %7567 = vmatmul.mubr.bf16.gmra.mrb[0].mxu0 %v7440
        %v7568 = vpop.f32.mrb[0].mxu0
        %v7569 = vadd.f32 %v7264, %v7568
        %v7570 = vpop.f32.mrb[0].mxu0
        %v7571 = vpop.f32.mrb[0].mxu0
        %v7572 = vadd.f32 %v7267, %v7571
        %v7573 = vpop.f32.mrb[0].mxu0
        %7574 = vmatprep.mubr.bf16.mxu0 0
        %7575 = vmatmul.mubr.bf16.gmra.mrb[0].mxu0 %v7441
        %v7576 = vpop.f32.mrb[0].mxu0
        %v7577 = vadd.f32 %v7272, %v7576
        %v7578 = vpop.f32.mrb[0].mxu0
        %v7579 = vpop.f32.mrb[0].mxu0
        %v7580 = vadd.f32 %v7275, %v7579
        %v7581 = vpop.f32.mrb[0].mxu0
        %7582 = vmatprep.mubr.bf16.mxu0 0
        %7583 = vmatmul.mubr.bf16.gmra.mrb[0].mxu0 %v7442
        %v7584 = vpop.f32.mrb[0].mxu0
        %v7585 = vadd.f32 %v7280, %v7584
        %v7586 = vpop.f32.mrb[0].mxu0
        %v7587 = vpop.f32.mrb[0].mxu0
        %v7588 = vadd.f32 %v7283, %v7587
        %v7589 = vpop.f32.mrb[0].mxu0
        %7590 = vmatprep.mubr.bf16.mxu0 0
        %7591 = vmatmul.mubr.bf16.gmra.mrb[0].mxu0 %v7443
        %v7592 = vpop.f32.mrb[0].mxu0
        %v7593 = vadd.f32 %v7288, %v7592
        %v7594 = vpop.f32.mrb[0].mxu0
        %v7595 = vpop.f32.mrb[0].mxu0
        %v7596 = vadd.f32 %v7291, %v7595
        %v7597 = vpop.f32.mrb[0].mxu0
        %7598 = vmatprep.mubr.bf16.mxu0 0
        %7599 = vmatmul.mubr.bf16.gmra.mrb[0].mxu0 %v7444
        %v7600 = vpop.f32.mrb[0].mxu0
        %v7601 = vadd.f32 %v7296, %v7600
        %v7602 = vpop.f32.mrb[0].mxu0
        %v7603 = vpop.f32.mrb[0].mxu0
        %v7604 = vadd.f32 %v7299, %v7603
        %v7605 = vpop.f32.mrb[0].mxu0
        %7606 = vmatprep.mubr.bf16.mxu0 0
        %7607 = vmatmul.mubr.bf16.gmra.mrb[0].mxu0 %v7445
        %v7608 = vpop.f32.mrb[0].mxu0
        %v7609 = vadd.f32 %v7304, %v7608
        %v7610 = vpop.f32.mrb[0].mxu0
        %v7611 = vpop.f32.mrb[0].mxu0
        %v7612 = vadd.f32 %v7307, %v7611
        %v7613 = vpop.f32.mrb[0].mxu0
        %7614 = vmatprep.mubr.bf16.mxu0 0
        %7615 = vmatmul.mubr.bf16.gmra.mrb[0].mxu0 %v7446
        %v7616 = vpop.f32.mrb[0].mxu0
        %v7617 = vadd.f32 %v7312, %v7616
        %v7618 = vpop.f32.mrb[0].mxu0
        %v7619 = vpop.f32.mrb[0].mxu0
        %v7620 = vadd.f32 %v7315, %v7619
        %v7621 = vpop.f32.mrb[0].mxu0
        %7622 = vmatprep.mubr.bf16.mxu0 0
        %7623 = vmatmul.mubr.bf16.gmra.mrb[0].mxu0 %v7447
        %v7624 = vpop.f32.mrb[0].mxu0
        %v7625 = vadd.f32 %v7320, %v7624
        %v7626 = vpop.f32.mrb[0].mxu0
        %v7627 = vpop.f32.mrb[0].mxu0
        %v7628 = vadd.f32 %v7323, %v7627
        %v7629 = vpop.f32.mrb[0].mxu0
        %7630 = vmatprep.mubr.bf16.mxu0 0
        %7631 = vmatmul.mubr.bf16.gmra.mrb[0].mxu0 %v7448
        %v7632 = vpop.f32.mrb[0].mxu0
        %v7633 = vadd.f32 %v7328, %v7632
        %v7634 = vpop.f32.mrb[0].mxu0
        %v7635 = vpop.f32.mrb[0].mxu0
        %v7636 = vadd.f32 %v7331, %v7635
        %v7637 = vpop.f32.mrb[0].mxu0
        %7638 = vmatprep.mubr.bf16.mxu0 0
        %7639 = vmatmul.mubr.bf16.gmra.mrb[0].mxu0 %v7449
        %v7640 = vpop.f32.mrb[0].mxu0
        %v7641 = vadd.f32 %v7336, %v7640
        %v7642 = vpop.f32.mrb[0].mxu0
        %v7643 = vpop.f32.mrb[0].mxu0
        %v7644 = vadd.f32 %v7339, %v7643
        %v7645 = vpop.f32.mrb[0].mxu0
        %7646 = vmatprep.mubr.bf16.mxu0 0
        %7647 = vmatmul.mubr.bf16.gmra.mrb[0].mxu0 %v7450
        %v7648 = vpop.f32.mrb[0].mxu0
        %v7649 = vadd.f32 %v7344, %v7648
        %v7650 = vpop.f32.mrb[0].mxu0
        %v7651 = vpop.f32.mrb[0].mxu0
        %v7652 = vadd.f32 %v7347, %v7651
        %v7653 = vpop.f32.mrb[0].mxu0
        %7654 = vmatprep.mubr.bf16.mxu0 0
        %7655 = vmatmul.mubr.bf16.gmra.mrb[0].mxu0 %v7451
        %v7656 = vpop.f32.mrb[0].mxu0
        %v7657 = vadd.f32 %v7352, %v7656
        %v7658 = vpop.f32.mrb[0].mxu0
        %v7659 = vpop.f32.mrb[0].mxu0
        %v7660 = vadd.f32 %v7355, %v7659
        %v7661 = vpop.f32.mrb[0].mxu0
        %7662 = vmatprep.mubr.bf16.mxu0 0
        %7663 = vmatmul.mubr.bf16.gmra.mrb[0].mxu0 %v7452
        %v7664 = vpop.f32.mrb[0].mxu0
        %v7665 = vadd.f32 %v7360, %v7664
        %v7666 = vpop.f32.mrb[0].mxu0
        %v7667 = vpop.f32.mrb[0].mxu0
        %v7668 = vadd.f32 %v7363, %v7667
        %v7669 = vpop.f32.mrb[0].mxu0
        %7670 = vmatprep.mubr.bf16.mxu0 0
        %7671 = vmatmul.mubr.bf16.gmra.mrb[0].mxu0 %v7453
        %v7672 = vpop.f32.mrb[0].mxu0
        %v7673 = vadd.f32 %v7368, %v7672
        %v7674 = vpop.f32.mrb[0].mxu0
        %v7675 = vpop.f32.mrb[0].mxu0
        %v7676 = vadd.f32 %v7371, %v7675
        %v7677 = vpop.f32.mrb[0].mxu0
        %7678 = vdwg.mxu0
        %v7679 = vld [vmem:[#allocation4] sm:$0xe]
        %v7680 = vld [vmem:[#allocation4 + $0xc] sm:$0xe]
        %v7681 = vld [vmem:[#allocation4 + $0x18] sm:$0xe]
        %v7682 = vld [vmem:[#allocation4 + $0x24] sm:$0xe]
        %v7683 = vld [vmem:[#allocation4 + $0x30] sm:$0xe]
        %v7684 = vld [vmem:[#allocation4 + $0x3c] sm:$0xe]
        %v7685 = vld [vmem:[#allocation4 + $0x48] sm:$0xe]
        %v7686 = vld [vmem:[#allocation4 + $0x54] sm:$0xe]
        %v7687 = vld [vmem:[#allocation4 + $0x60] sm:$0xe]
        %v7688 = vld [vmem:[#allocation4 + $0x6c] sm:$0xe]
        %v7689 = vld [vmem:[#allocation4 + $0x78] sm:$0xe]
        %v7690 = vld [vmem:[#allocation4 + $0x84] sm:$0xe]
        %v7691 = vld [vmem:[#allocation4 + $0x90] sm:$0xe]
        %v7692 = vld [vmem:[#allocation4 + $0x9c] sm:$0xe]
        %v7693 = vld [vmem:[#allocation4 + $0xa8] sm:$0xe]
        %v7694 = vld [vmem:[#allocation4 + $0xb4] sm:$0xe]
        %v7727 = vrot.slane %v7679, 5
        %v7728 = vrot.slane %v7727, 4
        %v7729 = vrot.slane %v6637, 5
        %v7730 = vsel %vm1544, %v7728, %v7729
        %v7731 = vrot.slane %v7729, 4
        %v7732 = vrot.slane %v6684, 5
        %v7733 = vsel %vm1544, %v7731, %v7732
        %v7734 = vrot.slane %v7680, 5
        %v7735 = vrot.slane %v7734, 4
        %v7736 = vrot.slane %v6639, 5
        %v7737 = vsel %vm1544, %v7735, %v7736
        %v7738 = vrot.slane %v7736, 4
        %v7739 = vrot.slane %v6685, 5
        %v7740 = vsel %vm1544, %v7738, %v7739
        %v7741 = vrot.slane %v7681, 5
        %v7742 = vrot.slane %v7741, 4
        %v7743 = vrot.slane %v6641, 5
        %v7744 = vsel %vm1544, %v7742, %v7743
        %v7745 = vrot.slane %v7743, 4
        %v7746 = vrot.slane %v6686, 5
        %v7747 = vsel %vm1544, %v7745, %v7746
        %v7748 = vrot.slane %v7682, 5
        %v7749 = vrot.slane %v7748, 4
        %v7750 = vrot.slane %v6643, 5
        %v7751 = vsel %vm1544, %v7749, %v7750
        %v7752 = vrot.slane %v7750, 4
        %v7753 = vrot.slane %v6687, 5
        %v7754 = vsel %vm1544, %v7752, %v7753
        %v7755 = vrot.slane %v7683, 5
        %v7756 = vrot.slane %v7755, 4
        %v7757 = vrot.slane %v6645, 5
        %v7758 = vsel %vm1544, %v7756, %v7757
        %v7759 = vrot.slane %v7757, 4
        %v7760 = vrot.slane %v6688, 5
        %v7761 = vsel %vm1544, %v7759, %v7760
        %v7762 = vrot.slane %v7684, 5
        %v7763 = vrot.slane %v7762, 4
        %v7764 = vrot.slane %v6647, 5
        %v7765 = vsel %vm1544, %v7763, %v7764
        %v7766 = vrot.slane %v7764, 4
        %v7767 = vrot.slane %v6689, 5
        %v7768 = vsel %vm1544, %v7766, %v7767
        %v7769 = vrot.slane %v7685, 5
        %v7770 = vrot.slane %v7769, 4
        %v7771 = vrot.slane %v6649, 5
        %v7772 = vsel %vm1544, %v7770, %v7771
        %v7773 = vrot.slane %v7771, 4
        %v7774 = vrot.slane %v6690, 5
        %v7775 = vsel %vm1544, %v7773, %v7774
        %v7776 = vrot.slane %v7686, 5
        %v7777 = vrot.slane %v7776, 4
        %v7778 = vrot.slane %v6651, 5
        %v7779 = vsel %vm1544, %v7777, %v7778
        %v7780 = vrot.slane %v7778, 4
        %v7781 = vrot.slane %v6691, 5
        %v7782 = vsel %vm1544, %v7780, %v7781
        %v7783 = vrot.slane %v7687, 5
        %v7784 = vrot.slane %v7783, 4
        %v7785 = vrot.slane %v6653, 5
        %v7786 = vsel %vm1544, %v7784, %v7785
        %v7787 = vrot.slane %v7785, 4
        %v7788 = vrot.slane %v6692, 5
        %v7789 = vsel %vm1544, %v7787, %v7788
        %v7790 = vrot.slane %v7688, 5
        %v7791 = vrot.slane %v7790, 4
        %v7792 = vrot.slane %v6655, 5
        %v7793 = vsel %vm1544, %v7791, %v7792
        %v7794 = vrot.slane %v7792, 4
        %v7795 = vrot.slane %v6693, 5
        %v7796 = vsel %vm1544, %v7794, %v7795
        %v7797 = vrot.slane %v7689, 5
        %v7798 = vrot.slane %v7797, 4
        %v7799 = vrot.slane %v6657, 5
        %v7800 = vsel %vm1544, %v7798, %v7799
        %v7801 = vrot.slane %v7799, 4
        %v7802 = vrot.slane %v6694, 5
        %v7803 = vsel %vm1544, %v7801, %v7802
        %v7804 = vrot.slane %v7690, 5
        %v7805 = vrot.slane %v7804, 4
        %v7806 = vrot.slane %v6659, 5
        %v7807 = vsel %vm1544, %v7805, %v7806
        %v7808 = vrot.slane %v7806, 4
        %v7809 = vrot.slane %v6695, 5
        %v7810 = vsel %vm1544, %v7808, %v7809
        %v7811 = vrot.slane %v7691, 5
        %v7812 = vrot.slane %v7811, 4
        %v7813 = vrot.slane %v6661, 5
        %v7814 = vsel %vm1544, %v7812, %v7813
        %v7815 = vrot.slane %v7813, 4
        %v7816 = vrot.slane %v6696, 5
        %v7817 = vsel %vm1544, %v7815, %v7816
        %v7818 = vrot.slane %v7692, 5
        %v7819 = vrot.slane %v7818, 4
        %v7820 = vrot.slane %v6663, 5
        %v7821 = vsel %vm1544, %v7819, %v7820
        %v7822 = vrot.slane %v7820, 4
        %v7823 = vrot.slane %v6697, 5
        %v7824 = vsel %vm1544, %v7822, %v7823
        %v7825 = vrot.slane %v7693, 5
        %v7826 = vrot.slane %v7825, 4
        %v7827 = vrot.slane %v6665, 5
        %v7828 = vsel %vm1544, %v7826, %v7827
        %v7829 = vrot.slane %v7827, 4
        %v7830 = vrot.slane %v6698, 5
        %v7831 = vsel %vm1544, %v7829, %v7830
        %v7832 = vrot.slane %v7694, 5
        %v7833 = vrot.slane %v7832, 4
        %v7834 = vrot.slane %v6667, 5
        %v7835 = vsel %vm1544, %v7833, %v7834
        %v7836 = vrot.slane %v7834, 4
        %v7837 = vrot.slane %v6699, 5
        %v7838 = vsel %vm1544, %v7836, %v7837
        %s7839 = scalar_lea.vmem %s3, 128
        %v7840 = vld [vmem:[%s7839] sm:$0xf]
        %v7841 = vld [vmem:[%s7839 + $0x4] sm:$0xf]
        %v7842 = vld [vmem:[%s7839 + $0x8] sm:$0xf]
        %v7843 = vld [vmem:[%s7839 + $0xc] sm:$0xf]
        %v7844 = vld [vmem:[%s7839 + $0x10] sm:$0xf]
        %v7845 = vld [vmem:[%s7839 + $0x14] sm:$0xf]
        %v7846 = vld [vmem:[%s7839 + $0x18] sm:$0xf]
        %v7847 = vld [vmem:[%s7839 + $0x1c] sm:$0xf]
        %v7848 = vld [vmem:[%s7839 + $0x20] sm:$0xf]
        %v7849 = vld [vmem:[%s7839 + $0x24] sm:$0xf]
        %v7850 = vld [vmem:[%s7839 + $0x28] sm:$0xf]
        %v7851 = vld [vmem:[%s7839 + $0x2c] sm:$0xf]
        %v7852 = vld [vmem:[%s7839 + $0x30] sm:$0xf]
        %v7853 = vld [vmem:[%s7839 + $0x34] sm:$0xf]
        %v7854 = vld [vmem:[%s7839 + $0x38] sm:$0xf]
        %v7855 = vld [vmem:[%s7839 + $0x3c] sm:$0xf]
        %v7856 = vunpack.c.l.b16 %v7730
        %v7857 = vunpack.c.l.b16 %v7733
        %v7858 = vunpack.c.l.b16 %v7737
        %v7859 = vunpack.c.l.b16 %v7740
        %v7860 = vunpack.c.l.b16 %v7744
        %v7861 = vunpack.c.l.b16 %v7747
        %v7862 = vunpack.c.l.b16 %v7751
        %v7863 = vunpack.c.l.b16 %v7754
        %v7864 = vunpack.c.l.b16 %v7758
        %v7865 = vunpack.c.l.b16 %v7761
        %v7866 = vunpack.c.l.b16 %v7765
        %v7867 = vunpack.c.l.b16 %v7768
        %v7868 = vunpack.c.l.b16 %v7772
        %v7869 = vunpack.c.l.b16 %v7775
        %v7870 = vunpack.c.l.b16 %v7779
        %v7871 = vunpack.c.l.b16 %v7782
        %v7872 = vunpack.c.l.b16 %v7786
        %v7873 = vunpack.c.l.b16 %v7789
        %v7874 = vunpack.c.l.b16 %v7793
        %v7875 = vunpack.c.l.b16 %v7796
        %v7876 = vunpack.c.l.b16 %v7800
        %v7877 = vunpack.c.l.b16 %v7803
        %v7878 = vunpack.c.l.b16 %v7807
        %v7879 = vunpack.c.l.b16 %v7810
        %v7880 = vunpack.c.l.b16 %v7814
        %v7881 = vunpack.c.l.b16 %v7817
        %v7882 = vunpack.c.l.b16 %v7821
        %v7883 = vunpack.c.l.b16 %v7824
        %v7884 = vunpack.c.l.b16 %v7828
        %v7885 = vunpack.c.l.b16 %v7831
        %v7886 = vunpack.c.l.b16 %v7835
        %v7887 = vunpack.c.l.b16 %v7838
        %v7888 = vpack.c.b16 %v7857, %v7856
        %v7889 = vpack.c.b16 %v7859, %v7858
        %v7890 = vpack.c.b16 %v7861, %v7860
        %v7891 = vpack.c.b16 %v7863, %v7862
        %v7892 = vpack.c.b16 %v7865, %v7864
        %v7893 = vpack.c.b16 %v7867, %v7866
        %v7894 = vpack.c.b16 %v7869, %v7868
        %v7895 = vpack.c.b16 %v7871, %v7870
        %v7896 = vpack.c.b16 %v7873, %v7872
        %v7897 = vpack.c.b16 %v7875, %v7874
        %v7898 = vpack.c.b16 %v7877, %v7876
        %v7899 = vpack.c.b16 %v7879, %v7878
        %v7900 = vpack.c.b16 %v7881, %v7880
        %v7901 = vpack.c.b16 %v7883, %v7882
        %v7902 = vpack.c.b16 %v7885, %v7884
        %v7903 = vpack.c.b16 %v7887, %v7886
        %v7936 = vunpack.c.l.b16 %v7840
        %v7937 = vunpack.c.l.b16 %v7841
        %v7938 = vunpack.c.l.b16 %v7842
        %v7939 = vunpack.c.l.b16 %v7843
        %v7940 = vunpack.c.l.b16 %v7844
        %v7941 = vunpack.c.l.b16 %v7845
        %v7942 = vunpack.c.l.b16 %v7846
        %v7943 = vunpack.c.l.b16 %v7847
        %v7944 = vunpack.c.l.b16 %v7848
        %v7945 = vunpack.c.l.b16 %v7849
        %v7946 = vunpack.c.l.b16 %v7850
        %v7947 = vunpack.c.l.b16 %v7851
        %v7948 = vunpack.c.l.b16 %v7852
        %v7949 = vunpack.c.l.b16 %v7853
        %v7950 = vunpack.c.l.b16 %v7854
        %v7951 = vunpack.c.l.b16 %v7855
        %v7952 = vpack.c.b16 %v7937, %v7936
        %v7953 = vpack.c.b16 %v7939, %v7938
        %v7954 = vpack.c.b16 %v7941, %v7940
        %v7955 = vpack.c.b16 %v7943, %v7942
        %v7956 = vpack.c.b16 %v7945, %v7944
        %v7957 = vpack.c.b16 %v7947, %v7946
        %v7958 = vpack.c.b16 %v7949, %v7948
        %v7959 = vpack.c.b16 %v7951, %v7950
        %7968 = vmatprep.subr.bf16.mxu0 0
        %7969 = vmatpush1.bf16.msra.mxu0 %v7952
        %7970 = vmatprep.subr.bf16.mxu0 0
        %7971 = vmatpush1.bf16.msra.mxu0 %v7953
        %7972 = vmatprep.subr.bf16.mxu0 0
        %7973 = vmatpush1.bf16.msra.mxu0 %v7954
        %7974 = vmatprep.subr.bf16.mxu0 0
        %7975 = vmatpush1.bf16.msra.mxu0 %v7955
        %7976 = vmatprep.subr.bf16.mxu0 0
        %7977 = vmatpush1.bf16.msra.mxu0 %v7956
        %7978 = vmatprep.subr.bf16.mxu0 0
        %7979 = vmatpush1.bf16.msra.mxu0 %v7957
        %7980 = vmatprep.subr.bf16.mxu0 0
        %7981 = vmatpush1.bf16.msra.mxu0 %v7958
        %7982 = vmatprep.subr.bf16.mxu0 0
        %7983 = vmatpush1.bf16.msra.mxu0 %v7959
        %7984 = vmatprep.subr.bf16.mxu0 0
        %7985 = vmatpush1.bf16.msra.mxu0 0
        %7986 = vmatprep.subr.bf16.mxu0 0
        %7987 = vmatpush1.bf16.msra.mxu0 0
        %7988 = vmatprep.subr.bf16.mxu0 0
        %7989 = vmatpush1.bf16.msra.mxu0 0
        %7990 = vmatprep.subr.bf16.mxu0 0
        %7991 = vmatpush1.bf16.msra.mxu0 0
        %7992 = vmatprep.subr.bf16.mxu0 0
        %7993 = vmatpush1.bf16.msra.mxu0 0
        %7994 = vmatprep.subr.bf16.mxu0 0
        %7995 = vmatpush1.bf16.msra.mxu0 0
        %7996 = vmatprep.subr.bf16.mxu0 0
        %7997 = vmatpush1.bf16.msra.mxu0 0
        %7998 = vmatprep.subr.bf16.mxu0 0
        %7999 = vmatpush1.bf16.msra.mxu0 0
        %8000 = vmatprep.mubr.bf16.mxu0 0
        %8001 = vmatmul.mubr.bf16.gmra.mrb[0].mxu0 %v7888
        %v8002 = vpop.f32.mrb[0].mxu0
        %v8003 = vadd.f32 0.0, %v8002
        %v8004 = vpop.f32.mrb[0].mxu0
        %v8005 = vpop.f32.mrb[0].mxu0
        %v8006 = vadd.f32 0.0, %v8005
        %v8007 = vpop.f32.mrb[0].mxu0
        %8008 = vmatprep.mubr.bf16.mxu0 0
        %8009 = vmatmul.mubr.bf16.gmra.mrb[0].mxu0 %v7889
        %v8010 = vpop.f32.mrb[0].mxu0
        %v8011 = vadd.f32 0.0, %v8010
        %v8012 = vpop.f32.mrb[0].mxu0
        %v8013 = vpop.f32.mrb[0].mxu0
        %v8014 = vadd.f32 0.0, %v8013
        %v8015 = vpop.f32.mrb[0].mxu0
        %8016 = vmatprep.mubr.bf16.mxu0 0
        %8017 = vmatmul.mubr.bf16.gmra.mrb[0].mxu0 %v7890
        %v8018 = vpop.f32.mrb[0].mxu0
        %v8019 = vadd.f32 0.0, %v8018
        %v8020 = vpop.f32.mrb[0].mxu0
        %v8021 = vpop.f32.mrb[0].mxu0
        %v8022 = vadd.f32 0.0, %v8021
        %v8023 = vpop.f32.mrb[0].mxu0
        %8024 = vmatprep.mubr.bf16.mxu0 0
        %8025 = vmatmul.mubr.bf16.gmra.mrb[0].mxu0 %v7891
        %v8026 = vpop.f32.mrb[0].mxu0
        %v8027 = vadd.f32 0.0, %v8026
        %v8028 = vpop.f32.mrb[0].mxu0
        %v8029 = vpop.f32.mrb[0].mxu0
        %v8030 = vadd.f32 0.0, %v8029
        %v8031 = vpop.f32.mrb[0].mxu0
        %8032 = vmatprep.mubr.bf16.mxu0 0
        %8033 = vmatmul.mubr.bf16.gmra.mrb[0].mxu0 %v7892
        %v8034 = vpop.f32.mrb[0].mxu0
        %v8035 = vadd.f32 0.0, %v8034
        %v8036 = vpop.f32.mrb[0].mxu0
        %v8037 = vpop.f32.mrb[0].mxu0
        %v8038 = vadd.f32 0.0, %v8037
        %v8039 = vpop.f32.mrb[0].mxu0
        %8040 = vmatprep.mubr.bf16.mxu0 0
        %8041 = vmatmul.mubr.bf16.gmra.mrb[0].mxu0 %v7893
        %v8042 = vpop.f32.mrb[0].mxu0
        %v8043 = vadd.f32 0.0, %v8042
        %v8044 = vpop.f32.mrb[0].mxu0
        %v8045 = vpop.f32.mrb[0].mxu0
        %v8046 = vadd.f32 0.0, %v8045
        %v8047 = vpop.f32.mrb[0].mxu0
        %8048 = vmatprep.mubr.bf16.mxu0 0
        %8049 = vmatmul.mubr.bf16.gmra.mrb[0].mxu0 %v7894
        %v8050 = vpop.f32.mrb[0].mxu0
        %v8051 = vadd.f32 0.0, %v8050
        %v8052 = vpop.f32.mrb[0].mxu0
        %v8053 = vpop.f32.mrb[0].mxu0
        %v8054 = vadd.f32 0.0, %v8053
        %v8055 = vpop.f32.mrb[0].mxu0
        %8056 = vmatprep.mubr.bf16.mxu0 0
        %8057 = vmatmul.mubr.bf16.gmra.mrb[0].mxu0 %v7895
        %v8058 = vpop.f32.mrb[0].mxu0
        %v8059 = vadd.f32 0.0, %v8058
        %v8060 = vpop.f32.mrb[0].mxu0
        %v8061 = vpop.f32.mrb[0].mxu0
        %v8062 = vadd.f32 0.0, %v8061
        %v8063 = vpop.f32.mrb[0].mxu0
        %8064 = vmatprep.mubr.bf16.mxu0 0
        %8065 = vmatmul.mubr.bf16.gmra.mrb[0].mxu0 %v7896
        %v8066 = vpop.f32.mrb[0].mxu0
        %v8067 = vadd.f32 0.0, %v8066
        %v8068 = vpop.f32.mrb[0].mxu0
        %v8069 = vpop.f32.mrb[0].mxu0
        %v8070 = vadd.f32 0.0, %v8069
        %v8071 = vpop.f32.mrb[0].mxu0
        %8072 = vmatprep.mubr.bf16.mxu0 0
        %8073 = vmatmul.mubr.bf16.gmra.mrb[0].mxu0 %v7897
        %v8074 = vpop.f32.mrb[0].mxu0
        %v8075 = vadd.f32 0.0, %v8074
        %v8076 = vpop.f32.mrb[0].mxu0
        %v8077 = vpop.f32.mrb[0].mxu0
        %v8078 = vadd.f32 0.0, %v8077
        %v8079 = vpop.f32.mrb[0].mxu0
        %8080 = vmatprep.mubr.bf16.mxu0 0
        %8081 = vmatmul.mubr.bf16.gmra.mrb[0].mxu0 %v7898
        %v8082 = vpop.f32.mrb[0].mxu0
        %v8083 = vadd.f32 0.0, %v8082
        %v8084 = vpop.f32.mrb[0].mxu0
        %v8085 = vpop.f32.mrb[0].mxu0
        %v8086 = vadd.f32 0.0, %v8085
        %v8087 = vpop.f32.mrb[0].mxu0
        %8088 = vmatprep.mubr.bf16.mxu0 0
        %8089 = vmatmul.mubr.bf16.gmra.mrb[0].mxu0 %v7899
        %v8090 = vpop.f32.mrb[0].mxu0
        %v8091 = vadd.f32 0.0, %v8090
        %v8092 = vpop.f32.mrb[0].mxu0
        %v8093 = vpop.f32.mrb[0].mxu0
        %v8094 = vadd.f32 0.0, %v8093
        %v8095 = vpop.f32.mrb[0].mxu0
        %8096 = vmatprep.mubr.bf16.mxu0 0
        %8097 = vmatmul.mubr.bf16.gmra.mrb[0].mxu0 %v7900
        %v8098 = vpop.f32.mrb[0].mxu0
        %v8099 = vadd.f32 0.0, %v8098
        %v8100 = vpop.f32.mrb[0].mxu0
        %v8101 = vpop.f32.mrb[0].mxu0
        %v8102 = vadd.f32 0.0, %v8101
        %v8103 = vpop.f32.mrb[0].mxu0
        %8104 = vmatprep.mubr.bf16.mxu0 0
        %8105 = vmatmul.mubr.bf16.gmra.mrb[0].mxu0 %v7901
        %v8106 = vpop.f32.mrb[0].mxu0
        %v8107 = vadd.f32 0.0, %v8106
        %v8108 = vpop.f32.mrb[0].mxu0
        %v8109 = vpop.f32.mrb[0].mxu0
        %v8110 = vadd.f32 0.0, %v8109
        %v8111 = vpop.f32.mrb[0].mxu0
        %8112 = vmatprep.mubr.bf16.mxu0 0
        %8113 = vmatmul.mubr.bf16.gmra.mrb[0].mxu0 %v7902
        %v8114 = vpop.f32.mrb[0].mxu0
        %v8115 = vadd.f32 0.0, %v8114
        %v8116 = vpop.f32.mrb[0].mxu0
        %v8117 = vpop.f32.mrb[0].mxu0
        %v8118 = vadd.f32 0.0, %v8117
        %v8119 = vpop.f32.mrb[0].mxu0
        %8120 = vmatprep.mubr.bf16.mxu0 0
        %8121 = vmatmul.mubr.bf16.gmra.mrb[0].mxu0 %v7903
        %v8122 = vpop.f32.mrb[0].mxu0
        %v8123 = vadd.f32 0.0, %v8122
        %v8124 = vpop.f32.mrb[0].mxu0
        %v8125 = vpop.f32.mrb[0].mxu0
        %v8126 = vadd.f32 0.0, %v8125
        %v8127 = vpop.f32.mrb[0].mxu0
        %8128 = vdwg.mxu0
        %v8129 = vadd.f32 %v7553, %v8003
        %v8130 = vadd.f32 %v7556, %v8006
        %v8131 = vadd.f32 %v7561, %v8011
        %v8132 = vadd.f32 %v7564, %v8014
        %v8133 = vadd.f32 %v7569, %v8019
        %v8134 = vadd.f32 %v7572, %v8022
        %v8135 = vadd.f32 %v7577, %v8027
        %v8136 = vadd.f32 %v7580, %v8030
        %v8137 = vadd.f32 %v7585, %v8035
        %v8138 = vadd.f32 %v7588, %v8038
        %v8139 = vadd.f32 %v7593, %v8043
        %v8140 = vadd.f32 %v7596, %v8046
        %v8141 = vadd.f32 %v7601, %v8051
        %v8142 = vadd.f32 %v7604, %v8054
        %v8143 = vadd.f32 %v7609, %v8059
        %v8144 = vadd.f32 %v7612, %v8062
        %v8145 = vadd.f32 %v7617, %v8067
        %v8146 = vadd.f32 %v7620, %v8070
        %v8147 = vadd.f32 %v7625, %v8075
        %v8148 = vadd.f32 %v7628, %v8078
        %v8149 = vadd.f32 %v7633, %v8083
        %v8150 = vadd.f32 %v7636, %v8086
        %v8151 = vadd.f32 %v7641, %v8091
        %v8152 = vadd.f32 %v7644, %v8094
        %v8153 = vadd.f32 %v7649, %v8099
        %v8154 = vadd.f32 %v7652, %v8102
        %v8155 = vadd.f32 %v7657, %v8107
        %v8156 = vadd.f32 %v7660, %v8110
        %v8157 = vadd.f32 %v7665, %v8115
        %v8158 = vadd.f32 %v7668, %v8118
        %v8159 = vadd.f32 %v7673, %v8123
        %v8160 = vadd.f32 %v7676, %v8126
        %v8161 = vld [vmem:[%s6519] sm:$0xf]
        %v8162 = vld [vmem:[%s6519 + $0x4] sm:$0xf]
        %v8163 = vld [vmem:[%s6519 + $0xc] sm:$0xf]
        %v8164 = vld [vmem:[%s6519 + $0x10] sm:$0xf]
        %v8165 = vld [vmem:[%s6519 + $0x18] sm:$0xf]
        %v8166 = vld [vmem:[%s6519 + $0x1c] sm:$0xf]
        %v8167 = vld [vmem:[%s6519 + $0x24] sm:$0xf]
        %v8168 = vld [vmem:[%s6519 + $0x28] sm:$0xf]
        %v8169 = vld [vmem:[%s6519 + $0x30] sm:$0xf]
        %v8170 = vld [vmem:[%s6519 + $0x34] sm:$0xf]
        %v8171 = vld [vmem:[%s6519 + $0x3c] sm:$0xf]
        %v8172 = vld [vmem:[%s6519 + $0x40] sm:$0xf]
        %v8173 = vld [vmem:[%s6519 + $0x48] sm:$0xf]
        %v8174 = vld [vmem:[%s6519 + $0x4c] sm:$0xf]
        %v8175 = vld [vmem:[%s6519 + $0x54] sm:$0xf]
        %v8176 = vld [vmem:[%s6519 + $0x58] sm:$0xf]
        %v8177 = vld [vmem:[%s6519 + $0x60] sm:$0xf]
        %v8178 = vld [vmem:[%s6519 + $0x64] sm:$0xf]
        %v8179 = vld [vmem:[%s6519 + $0x6c] sm:$0xf]
        %v8180 = vld [vmem:[%s6519 + $0x70] sm:$0xf]
        %v8181 = vld [vmem:[%s6519 + $0x78] sm:$0xf]
        %v8182 = vld [vmem:[%s6519 + $0x7c] sm:$0xf]
        %v8183 = vld [vmem:[%s6519 + $0x84] sm:$0xf]
        %v8184 = vld [vmem:[%s6519 + $0x88] sm:$0xf]
        %v8185 = vld [vmem:[%s6519 + $0x90] sm:$0xf]
        %v8186 = vld [vmem:[%s6519 + $0x94] sm:$0xf]
        %v8187 = vld [vmem:[%s6519 + $0x9c] sm:$0xf]
        %v8188 = vld [vmem:[%s6519 + $0xa0] sm:$0xf]
        %v8189 = vld [vmem:[%s6519 + $0xa8] sm:$0xf]
        %v8190 = vld [vmem:[%s6519 + $0xac] sm:$0xf]
        %v8191 = vld [vmem:[%s6519 + $0xb4] sm:$0xf]
        %v8192 = vld [vmem:[%s6519 + $0xb8] sm:$0xf]
        %s8193 = scalar_lea.vmem %s3, 192
        %v8194 = vld [vmem:[%s8193] sm:$0xf]
        %v8195 = vld [vmem:[%s8193 + $0x4] sm:$0xf]
        %v8196 = vld [vmem:[%s8193 + $0x8] sm:$0xf]
        %v8197 = vld [vmem:[%s8193 + $0xc] sm:$0xf]
        %v8198 = vld [vmem:[%s8193 + $0x10] sm:$0xf]
        %v8199 = vld [vmem:[%s8193 + $0x14] sm:$0xf]
        %v8200 = vld [vmem:[%s8193 + $0x18] sm:$0xf]
        %v8201 = vld [vmem:[%s8193 + $0x1c] sm:$0xf]
        %v8202 = vld [vmem:[%s8193 + $0x20] sm:$0xf]
        %v8203 = vld [vmem:[%s8193 + $0x24] sm:$0xf]
        %v8204 = vld [vmem:[%s8193 + $0x28] sm:$0xf]
        %v8205 = vld [vmem:[%s8193 + $0x2c] sm:$0xf]
        %v8206 = vld [vmem:[%s8193 + $0x30] sm:$0xf]
        %v8207 = vld [vmem:[%s8193 + $0x34] sm:$0xf]
        %v8208 = vld [vmem:[%s8193 + $0x38] sm:$0xf]
        %v8209 = vld [vmem:[%s8193 + $0x3c] sm:$0xf]
        %v8242 = vunpack.c.l.b16 %v8161
        %v8243 = vunpack.c.l.b16 %v8162
        %v8244 = vunpack.c.l.b16 %v8163
        %v8245 = vunpack.c.l.b16 %v8164
        %v8246 = vunpack.c.l.b16 %v8165
        %v8247 = vunpack.c.l.b16 %v8166
        %v8248 = vunpack.c.l.b16 %v8167
        %v8249 = vunpack.c.l.b16 %v8168
        %v8250 = vunpack.c.l.b16 %v8169
        %v8251 = vunpack.c.l.b16 %v8170
        %v8252 = vunpack.c.l.b16 %v8171
        %v8253 = vunpack.c.l.b16 %v8172
        %v8254 = vunpack.c.l.b16 %v8173
        %v8255 = vunpack.c.l.b16 %v8174
        %v8256 = vunpack.c.l.b16 %v8175
        %v8257 = vunpack.c.l.b16 %v8176
        %v8258 = vunpack.c.l.b16 %v8177
        %v8259 = vunpack.c.l.b16 %v8178
        %v8260 = vunpack.c.l.b16 %v8179
        %v8261 = vunpack.c.l.b16 %v8180
        %v8262 = vunpack.c.l.b16 %v8181
        %v8263 = vunpack.c.l.b16 %v8182
        %v8264 = vunpack.c.l.b16 %v8183
        %v8265 = vunpack.c.l.b16 %v8184
        %v8266 = vunpack.c.l.b16 %v8185
        %v8267 = vunpack.c.l.b16 %v8186
        %v8268 = vunpack.c.l.b16 %v8187
        %v8269 = vunpack.c.l.b16 %v8188
        %v8270 = vunpack.c.l.b16 %v8189
        %v8271 = vunpack.c.l.b16 %v8190
        %v8272 = vunpack.c.l.b16 %v8191
        %v8273 = vunpack.c.l.b16 %v8192
        %v8274 = vpack.c.b16 %v8243, %v8242
        %v8275 = vpack.c.b16 %v8245, %v8244
        %v8276 = vpack.c.b16 %v8247, %v8246
        %v8277 = vpack.c.b16 %v8249, %v8248
        %v8278 = vpack.c.b16 %v8251, %v8250
        %v8279 = vpack.c.b16 %v8253, %v8252
        %v8280 = vpack.c.b16 %v8255, %v8254
        %v8281 = vpack.c.b16 %v8257, %v8256
        %v8282 = vpack.c.b16 %v8259, %v8258
        %v8283 = vpack.c.b16 %v8261, %v8260
        %v8284 = vpack.c.b16 %v8263, %v8262
        %v8285 = vpack.c.b16 %v8265, %v8264
        %v8286 = vpack.c.b16 %v8267, %v8266
        %v8287 = vpack.c.b16 %v8269, %v8268
        %v8288 = vpack.c.b16 %v8271, %v8270
        %v8289 = vpack.c.b16 %v8273, %v8272
        %v8322 = vunpack.c.l.b16 %v8194
        %v8323 = vunpack.c.l.b16 %v8195
        %v8324 = vunpack.c.l.b16 %v8196
        %v8325 = vunpack.c.l.b16 %v8197
        %v8326 = vunpack.c.l.b16 %v8198
        %v8327 = vunpack.c.l.b16 %v8199
        %v8328 = vunpack.c.l.b16 %v8200
        %v8329 = vunpack.c.l.b16 %v8201
        %v8330 = vunpack.c.l.b16 %v8202
        %v8331 = vunpack.c.l.b16 %v8203
        %v8332 = vunpack.c.l.b16 %v8204
        %v8333 = vunpack.c.l.b16 %v8205
        %v8334 = vunpack.c.l.b16 %v8206
        %v8335 = vunpack.c.l.b16 %v8207
        %v8336 = vunpack.c.l.b16 %v8208
        %v8337 = vunpack.c.l.b16 %v8209
        %v8338 = vpack.c.b16 %v8323, %v8322
        %v8339 = vpack.c.b16 %v8325, %v8324
        %v8340 = vpack.c.b16 %v8327, %v8326
        %v8341 = vpack.c.b16 %v8329, %v8328
        %v8342 = vpack.c.b16 %v8331, %v8330
        %v8343 = vpack.c.b16 %v8333, %v8332
        %v8344 = vpack.c.b16 %v8335, %v8334
        %v8345 = vpack.c.b16 %v8337, %v8336
        %8354 = vmatprep.subr.bf16.mxu0 0
        %8355 = vmatpush1.bf16.msra.mxu0 %v8338
        %8356 = vmatprep.subr.bf16.mxu0 0
        %8357 = vmatpush1.bf16.msra.mxu0 %v8339
        %8358 = vmatprep.subr.bf16.mxu0 0
        %8359 = vmatpush1.bf16.msra.mxu0 %v8340
        %8360 = vmatprep.subr.bf16.mxu0 0
        %8361 = vmatpush1.bf16.msra.mxu0 %v8341
        %8362 = vmatprep.subr.bf16.mxu0 0
        %8363 = vmatpush1.bf16.msra.mxu0 %v8342
        %8364 = vmatprep.subr.bf16.mxu0 0
        %8365 = vmatpush1.bf16.msra.mxu0 %v8343
        %8366 = vmatprep.subr.bf16.mxu0 0
        %8367 = vmatpush1.bf16.msra.mxu0 %v8344
        %8368 = vmatprep.subr.bf16.mxu0 0
        %8369 = vmatpush1.bf16.msra.mxu0 %v8345
        %8370 = vmatprep.subr.bf16.mxu0 0
        %8371 = vmatpush1.bf16.msra.mxu0 0
        %8372 = vmatprep.subr.bf16.mxu0 0
        %8373 = vmatpush1.bf16.msra.mxu0 0
        %8374 = vmatprep.subr.bf16.mxu0 0
        %8375 = vmatpush1.bf16.msra.mxu0 0
        %8376 = vmatprep.subr.bf16.mxu0 0
        %8377 = vmatpush1.bf16.msra.mxu0 0
        %8378 = vmatprep.subr.bf16.mxu0 0
        %8379 = vmatpush1.bf16.msra.mxu0 0
        %8380 = vmatprep.subr.bf16.mxu0 0
        %8381 = vmatpush1.bf16.msra.mxu0 0
        %8382 = vmatprep.subr.bf16.mxu0 0
        %8383 = vmatpush1.bf16.msra.mxu0 0
        %8384 = vmatprep.subr.bf16.mxu0 0
        %8385 = vmatpush1.bf16.msra.mxu0 0
        %8386 = vmatprep.mubr.bf16.mxu0 0
        %8387 = vmatmul.mubr.bf16.gmra.mrb[0].mxu0 %v8274
        %v8388 = vpop.f32.mrb[0].mxu0
        %v8389 = vadd.f32 0.0, %v8388
        %v8390 = vpop.f32.mrb[0].mxu0
        %v8391 = vpop.f32.mrb[0].mxu0
        %v8392 = vadd.f32 0.0, %v8391
        %v8393 = vpop.f32.mrb[0].mxu0
        %8394 = vmatprep.mubr.bf16.mxu0 0
        %8395 = vmatmul.mubr.bf16.gmra.mrb[0].mxu0 %v8275
        %v8396 = vpop.f32.mrb[0].mxu0
        %v8397 = vadd.f32 0.0, %v8396
        %v8398 = vpop.f32.mrb[0].mxu0
        %v8399 = vpop.f32.mrb[0].mxu0
        %v8400 = vadd.f32 0.0, %v8399
        %v8401 = vpop.f32.mrb[0].mxu0
        %8402 = vmatprep.mubr.bf16.mxu0 0
        %8403 = vmatmul.mubr.bf16.gmra.mrb[0].mxu0 %v8276
        %v8404 = vpop.f32.mrb[0].mxu0
        %v8405 = vadd.f32 0.0, %v8404
        %v8406 = vpop.f32.mrb[0].mxu0
        %v8407 = vpop.f32.mrb[0].mxu0
        %v8408 = vadd.f32 0.0, %v8407
        %v8409 = vpop.f32.mrb[0].mxu0
        %8410 = vmatprep.mubr.bf16.mxu0 0
        %8411 = vmatmul.mubr.bf16.gmra.mrb[0].mxu0 %v8277
        %v8412 = vpop.f32.mrb[0].mxu0
        %v8413 = vadd.f32 0.0, %v8412
        %v8414 = vpop.f32.mrb[0].mxu0
        %v8415 = vpop.f32.mrb[0].mxu0
        %v8416 = vadd.f32 0.0, %v8415
        %v8417 = vpop.f32.mrb[0].mxu0
        %8418 = vmatprep.mubr.bf16.mxu0 0
        %8419 = vmatmul.mubr.bf16.gmra.mrb[0].mxu0 %v8278
        %v8420 = vpop.f32.mrb[0].mxu0
        %v8421 = vadd.f32 0.0, %v8420
        %v8422 = vpop.f32.mrb[0].mxu0
        %v8423 = vpop.f32.mrb[0].mxu0
        %v8424 = vadd.f32 0.0, %v8423
        %v8425 = vpop.f32.mrb[0].mxu0
        %8426 = vmatprep.mubr.bf16.mxu0 0
        %8427 = vmatmul.mubr.bf16.gmra.mrb[0].mxu0 %v8279
        %v8428 = vpop.f32.mrb[0].mxu0
        %v8429 = vadd.f32 0.0, %v8428
        %v8430 = vpop.f32.mrb[0].mxu0
        %v8431 = vpop.f32.mrb[0].mxu0
        %v8432 = vadd.f32 0.0, %v8431
        %v8433 = vpop.f32.mrb[0].mxu0
        %8434 = vmatprep.mubr.bf16.mxu0 0
        %8435 = vmatmul.mubr.bf16.gmra.mrb[0].mxu0 %v8280
        %v8436 = vpop.f32.mrb[0].mxu0
        %v8437 = vadd.f32 0.0, %v8436
        %v8438 = vpop.f32.mrb[0].mxu0
        %v8439 = vpop.f32.mrb[0].mxu0
        %v8440 = vadd.f32 0.0, %v8439
        %v8441 = vpop.f32.mrb[0].mxu0
        %8442 = vmatprep.mubr.bf16.mxu0 0
        %8443 = vmatmul.mubr.bf16.gmra.mrb[0].mxu0 %v8281
        %v8444 = vpop.f32.mrb[0].mxu0
        %v8445 = vadd.f32 0.0, %v8444
        %v8446 = vpop.f32.mrb[0].mxu0
        %v8447 = vpop.f32.mrb[0].mxu0
        %v8448 = vadd.f32 0.0, %v8447
        %v8449 = vpop.f32.mrb[0].mxu0
        %8450 = vmatprep.mubr.bf16.mxu0 0
        %8451 = vmatmul.mubr.bf16.gmra.mrb[0].mxu0 %v8282
        %v8452 = vpop.f32.mrb[0].mxu0
        %v8453 = vadd.f32 0.0, %v8452
        %v8454 = vpop.f32.mrb[0].mxu0
        %v8455 = vpop.f32.mrb[0].mxu0
        %v8456 = vadd.f32 0.0, %v8455
        %v8457 = vpop.f32.mrb[0].mxu0
        %8458 = vmatprep.mubr.bf16.mxu0 0
        %8459 = vmatmul.mubr.bf16.gmra.mrb[0].mxu0 %v8283
        %v8460 = vpop.f32.mrb[0].mxu0
        %v8461 = vadd.f32 0.0, %v8460
        %v8462 = vpop.f32.mrb[0].mxu0
        %v8463 = vpop.f32.mrb[0].mxu0
        %v8464 = vadd.f32 0.0, %v8463
        %v8465 = vpop.f32.mrb[0].mxu0
        %8466 = vmatprep.mubr.bf16.mxu0 0
        %8467 = vmatmul.mubr.bf16.gmra.mrb[0].mxu0 %v8284
        %v8468 = vpop.f32.mrb[0].mxu0
        %v8469 = vadd.f32 0.0, %v8468
        %v8470 = vpop.f32.mrb[0].mxu0
        %v8471 = vpop.f32.mrb[0].mxu0
        %v8472 = vadd.f32 0.0, %v8471
        %v8473 = vpop.f32.mrb[0].mxu0
        %8474 = vmatprep.mubr.bf16.mxu0 0
        %8475 = vmatmul.mubr.bf16.gmra.mrb[0].mxu0 %v8285
        %v8476 = vpop.f32.mrb[0].mxu0
        %v8477 = vadd.f32 0.0, %v8476
        %v8478 = vpop.f32.mrb[0].mxu0
        %v8479 = vpop.f32.mrb[0].mxu0
        %v8480 = vadd.f32 0.0, %v8479
        %v8481 = vpop.f32.mrb[0].mxu0
        %8482 = vmatprep.mubr.bf16.mxu0 0
        %8483 = vmatmul.mubr.bf16.gmra.mrb[0].mxu0 %v8286
        %v8484 = vpop.f32.mrb[0].mxu0
        %v8485 = vadd.f32 0.0, %v8484
        %v8486 = vpop.f32.mrb[0].mxu0
        %v8487 = vpop.f32.mrb[0].mxu0
        %v8488 = vadd.f32 0.0, %v8487
        %v8489 = vpop.f32.mrb[0].mxu0
        %8490 = vmatprep.mubr.bf16.mxu0 0
        %8491 = vmatmul.mubr.bf16.gmra.mrb[0].mxu0 %v8287
        %v8492 = vpop.f32.mrb[0].mxu0
        %v8493 = vadd.f32 0.0, %v8492
        %v8494 = vpop.f32.mrb[0].mxu0
        %v8495 = vpop.f32.mrb[0].mxu0
        %v8496 = vadd.f32 0.0, %v8495
        %v8497 = vpop.f32.mrb[0].mxu0
        %8498 = vmatprep.mubr.bf16.mxu0 0
        %8499 = vmatmul.mubr.bf16.gmra.mrb[0].mxu0 %v8288
        %v8500 = vpop.f32.mrb[0].mxu0
        %v8501 = vadd.f32 0.0, %v8500
        %v8502 = vpop.f32.mrb[0].mxu0
        %v8503 = vpop.f32.mrb[0].mxu0
        %v8504 = vadd.f32 0.0, %v8503
        %v8505 = vpop.f32.mrb[0].mxu0
        %8506 = vmatprep.mubr.bf16.mxu0 0
        %8507 = vmatmul.mubr.bf16.gmra.mrb[0].mxu0 %v8289
        %v8508 = vpop.f32.mrb[0].mxu0
        %v8509 = vadd.f32 0.0, %v8508
        %v8510 = vpop.f32.mrb[0].mxu0
        %v8511 = vpop.f32.mrb[0].mxu0
        %v8512 = vadd.f32 0.0, %v8511
        %v8513 = vpop.f32.mrb[0].mxu0
        %8514 = vdwg.mxu0
        %v8515 = vadd.f32 %v8129, %v8389
        %v8516 = vadd.f32 %v8130, %v8392
        %v8517 = vadd.f32 %v8131, %v8397
        %v8518 = vadd.f32 %v8132, %v8400
        %v8519 = vadd.f32 %v8133, %v8405
        %v8520 = vadd.f32 %v8134, %v8408
        %v8521 = vadd.f32 %v8135, %v8413
        %v8522 = vadd.f32 %v8136, %v8416
        %v8523 = vadd.f32 %v8137, %v8421
        %v8524 = vadd.f32 %v8138, %v8424
        %v8525 = vadd.f32 %v8139, %v8429
        %v8526 = vadd.f32 %v8140, %v8432
        %v8527 = vadd.f32 %v8141, %v8437
        %v8528 = vadd.f32 %v8142, %v8440
        %v8529 = vadd.f32 %v8143, %v8445
        %v8530 = vadd.f32 %v8144, %v8448
        %v8531 = vadd.f32 %v8145, %v8453
        %v8532 = vadd.f32 %v8146, %v8456
        %v8533 = vadd.f32 %v8147, %v8461
        %v8534 = vadd.f32 %v8148, %v8464
        %v8535 = vadd.f32 %v8149, %v8469
        %v8536 = vadd.f32 %v8150, %v8472
        %v8537 = vadd.f32 %v8151, %v8477
        %v8538 = vadd.f32 %v8152, %v8480
        %v8539 = vadd.f32 %v8153, %v8485
        %v8540 = vadd.f32 %v8154, %v8488
        %v8541 = vadd.f32 %v8155, %v8493
        %v8542 = vadd.f32 %v8156, %v8496
        %v8543 = vadd.f32 %v8157, %v8501
        %v8544 = vadd.f32 %v8158, %v8504
        %v8545 = vadd.f32 %v8159, %v8509
        %v8546 = vadd.f32 %v8160, %v8512
        %v8547 = vld [vmem:[%s6519] sm:$0xf]
        %v8548 = vld [vmem:[%s6519 + $0x4] sm:$0xf]
        %v8549 = vld [vmem:[%s6519 + $0x8] sm:$0x1]
        %v8550 = vld [vmem:[%s6519 + $0xc] sm:$0xf]
        %v8551 = vld [vmem:[%s6519 + $0x10] sm:$0xf]
        %v8552 = vld [vmem:[%s6519 + $0x14] sm:$0x1]
        %v8553 = vld [vmem:[%s6519 + $0x18] sm:$0xf]
        %v8554 = vld [vmem:[%s6519 + $0x1c] sm:$0xf]
        %v8555 = vld [vmem:[%s6519 + $0x20] sm:$0x1]
        %v8556 = vld [vmem:[%s6519 + $0x24] sm:$0xf]
        %v8557 = vld [vmem:[%s6519 + $0x28] sm:$0xf]
        %v8558 = vld [vmem:[%s6519 + $0x2c] sm:$0x1]
        %v8559 = vld [vmem:[%s6519 + $0x30] sm:$0xf]
        %v8560 = vld [vmem:[%s6519 + $0x34] sm:$0xf]
        %v8561 = vld [vmem:[%s6519 + $0x38] sm:$0x1]
        %v8562 = vld [vmem:[%s6519 + $0x3c] sm:$0xf]
        %v8563 = vld [vmem:[%s6519 + $0x40] sm:$0xf]
        %v8564 = vld [vmem:[%s6519 + $0x44] sm:$0x1]
        %v8565 = vld [vmem:[%s6519 + $0x48] sm:$0xf]
        %v8566 = vld [vmem:[%s6519 + $0x4c] sm:$0xf]
        %v8567 = vld [vmem:[%s6519 + $0x50] sm:$0x1]
        %v8568 = vld [vmem:[%s6519 + $0x54] sm:$0xf]
        %v8569 = vld [vmem:[%s6519 + $0x58] sm:$0xf]
        %v8570 = vld [vmem:[%s6519 + $0x5c] sm:$0x1]
        %v8571 = vld [vmem:[%s6519 + $0x60] sm:$0xf]
        %v8572 = vld [vmem:[%s6519 + $0x64] sm:$0xf]
        %v8573 = vld [vmem:[%s6519 + $0x68] sm:$0x1]
        %v8574 = vld [vmem:[%s6519 + $0x6c] sm:$0xf]
        %v8575 = vld [vmem:[%s6519 + $0x70] sm:$0xf]
        %v8576 = vld [vmem:[%s6519 + $0x74] sm:$0x1]
        %v8577 = vld [vmem:[%s6519 + $0x78] sm:$0xf]
        %v8578 = vld [vmem:[%s6519 + $0x7c] sm:$0xf]
        %v8579 = vld [vmem:[%s6519 + $0x80] sm:$0x1]
        %v8580 = vld [vmem:[%s6519 + $0x84] sm:$0xf]
        %v8581 = vld [vmem:[%s6519 + $0x88] sm:$0xf]
        %v8582 = vld [vmem:[%s6519 + $0x8c] sm:$0x1]
        %v8583 = vld [vmem:[%s6519 + $0x90] sm:$0xf]
        %v8584 = vld [vmem:[%s6519 + $0x94] sm:$0xf]
        %v8585 = vld [vmem:[%s6519 + $0x98] sm:$0x1]
        %v8586 = vld [vmem:[%s6519 + $0x9c] sm:$0xf]
        %v8587 = vld [vmem:[%s6519 + $0xa0] sm:$0xf]
        %v8588 = vld [vmem:[%s6519 + $0xa4] sm:$0x1]
        %v8589 = vld [vmem:[%s6519 + $0xa8] sm:$0xf]
        %v8590 = vld [vmem:[%s6519 + $0xac] sm:$0xf]
        %v8591 = vld [vmem:[%s6519 + $0xb0] sm:$0x1]
        %v8592 = vld [vmem:[%s6519 + $0xb4] sm:$0xf]
        %v8593 = vld [vmem:[%s6519 + $0xb8] sm:$0xf]
        %v8594 = vld [vmem:[%s6519 + $0xbc] sm:$0x1]
        %v8596 = vshrl.u32 %v8547, 16
        %v8598 = vrot.slane %v8596, 4
        %v8599 = vshll.u32 %v8547, 16
        %v8601 = vrot.slane %v8599, 5
        %v8602 = vor.u32 %v8598, %v8601
        %v8603 = vrot.slane %v8602, 4
        %v8605 = vshll.u32 %v8548, 16
        %v8607 = vrot.slane %v8605, 5
        %v8608 = vsel %vm948, %v8603, %v8607
        %v8609 = vshrl.u32 %v8548, 16
        %v8611 = vrot.slane %v8609, 4
        %v8612 = vor.u32 %v8611, %v8607
        %v8613 = vrot.slane %v8612, 4
        %v8615 = vshll.u32 %v8549, 16
        %v8617 = vrot.slane %v8615, 5
        %v8618 = vsel %vm948, %v8613, %v8617
        %v8620 = vshrl.u32 %v8550, 16
        %v8622 = vrot.slane %v8620, 4
        %v8623 = vshll.u32 %v8550, 16
        %v8625 = vrot.slane %v8623, 5
        %v8626 = vor.u32 %v8622, %v8625
        %v8627 = vrot.slane %v8626, 4
        %v8629 = vshll.u32 %v8551, 16
        %v8631 = vrot.slane %v8629, 5
        %v8632 = vsel %vm948, %v8627, %v8631
        %v8633 = vshrl.u32 %v8551, 16
        %v8635 = vrot.slane %v8633, 4
        %v8636 = vor.u32 %v8635, %v8631
        %v8637 = vrot.slane %v8636, 4
        %v8639 = vshll.u32 %v8552, 16
        %v8641 = vrot.slane %v8639, 5
        %v8642 = vsel %vm948, %v8637, %v8641
        %v8644 = vshrl.u32 %v8553, 16
        %v8646 = vrot.slane %v8644, 4
        %v8647 = vshll.u32 %v8553, 16
        %v8649 = vrot.slane %v8647, 5
        %v8650 = vor.u32 %v8646, %v8649
        %v8651 = vrot.slane %v8650, 4
        %v8653 = vshll.u32 %v8554, 16
        %v8655 = vrot.slane %v8653, 5
        %v8656 = vsel %vm948, %v8651, %v8655
        %v8657 = vshrl.u32 %v8554, 16
        %v8659 = vrot.slane %v8657, 4
        %v8660 = vor.u32 %v8659, %v8655
        %v8661 = vrot.slane %v8660, 4
        %v8663 = vshll.u32 %v8555, 16
        %v8665 = vrot.slane %v8663, 5
        %v8666 = vsel %vm948, %v8661, %v8665
        %v8668 = vshrl.u32 %v8556, 16
        %v8670 = vrot.slane %v8668, 4
        %v8671 = vshll.u32 %v8556, 16
        %v8673 = vrot.slane %v8671, 5
        %v8674 = vor.u32 %v8670, %v8673
        %v8675 = vrot.slane %v8674, 4
        %v8677 = vshll.u32 %v8557, 16
        %v8679 = vrot.slane %v8677, 5
        %v8680 = vsel %vm948, %v8675, %v8679
        %v8681 = vshrl.u32 %v8557, 16
        %v8683 = vrot.slane %v8681, 4
        %v8684 = vor.u32 %v8683, %v8679
        %v8685 = vrot.slane %v8684, 4
        %v8687 = vshll.u32 %v8558, 16
        %v8689 = vrot.slane %v8687, 5
        %v8690 = vsel %vm948, %v8685, %v8689
        %v8692 = vshrl.u32 %v8559, 16
        %v8694 = vrot.slane %v8692, 4
        %v8695 = vshll.u32 %v8559, 16
        %v8697 = vrot.slane %v8695, 5
        %v8698 = vor.u32 %v8694, %v8697
        %v8699 = vrot.slane %v8698, 4
        %v8701 = vshll.u32 %v8560, 16
        %v8703 = vrot.slane %v8701, 5
        %v8704 = vsel %vm948, %v8699, %v8703
        %v8705 = vshrl.u32 %v8560, 16
        %v8707 = vrot.slane %v8705, 4
        %v8708 = vor.u32 %v8707, %v8703
        %v8709 = vrot.slane %v8708, 4
        %v8711 = vshll.u32 %v8561, 16
        %v8713 = vrot.slane %v8711, 5
        %v8714 = vsel %vm948, %v8709, %v8713
        %v8716 = vshrl.u32 %v8562, 16
        %v8718 = vrot.slane %v8716, 4
        %v8719 = vshll.u32 %v8562, 16
        %v8721 = vrot.slane %v8719, 5
        %v8722 = vor.u32 %v8718, %v8721
        %v8723 = vrot.slane %v8722, 4
        %v8725 = vshll.u32 %v8563, 16
        %v8727 = vrot.slane %v8725, 5
        %v8728 = vsel %vm948, %v8723, %v8727
        %v8729 = vshrl.u32 %v8563, 16
        %v8731 = vrot.slane %v8729, 4
        %v8732 = vor.u32 %v8731, %v8727
        %v8733 = vrot.slane %v8732, 4
        %v8735 = vshll.u32 %v8564, 16
        %v8737 = vrot.slane %v8735, 5
        %v8738 = vsel %vm948, %v8733, %v8737
        %v8740 = vshrl.u32 %v8565, 16
        %v8742 = vrot.slane %v8740, 4
        %v8743 = vshll.u32 %v8565, 16
        %v8745 = vrot.slane %v8743, 5
        %v8746 = vor.u32 %v8742, %v8745
        %v8747 = vrot.slane %v8746, 4
        %v8749 = vshll.u32 %v8566, 16
        %v8751 = vrot.slane %v8749, 5
        %v8752 = vsel %vm948, %v8747, %v8751
        %v8753 = vshrl.u32 %v8566, 16
        %v8755 = vrot.slane %v8753, 4
        %v8756 = vor.u32 %v8755, %v8751
        %v8757 = vrot.slane %v8756, 4
        %v8759 = vshll.u32 %v8567, 16
        %v8761 = vrot.slane %v8759, 5
        %v8762 = vsel %vm948, %v8757, %v8761
        %v8764 = vshrl.u32 %v8568, 16
        %v8766 = vrot.slane %v8764, 4
        %v8767 = vshll.u32 %v8568, 16
        %v8769 = vrot.slane %v8767, 5
        %v8770 = vor.u32 %v8766, %v8769
        %v8771 = vrot.slane %v8770, 4
        %v8773 = vshll.u32 %v8569, 16
        %v8775 = vrot.slane %v8773, 5
        %v8776 = vsel %vm948, %v8771, %v8775
        %v8777 = vshrl.u32 %v8569, 16
        %v8779 = vrot.slane %v8777, 4
        %v8780 = vor.u32 %v8779, %v8775
        %v8781 = vrot.slane %v8780, 4
        %v8783 = vshll.u32 %v8570, 16
        %v8785 = vrot.slane %v8783, 5
        %v8786 = vsel %vm948, %v8781, %v8785
        %v8788 = vshrl.u32 %v8571, 16
        %v8790 = vrot.slane %v8788, 4
        %v8791 = vshll.u32 %v8571, 16
        %v8793 = vrot.slane %v8791, 5
        %v8794 = vor.u32 %v8790, %v8793
        %v8795 = vrot.slane %v8794, 4
        %v8797 = vshll.u32 %v8572, 16
        %v8799 = vrot.slane %v8797, 5
        %v8800 = vsel %vm948, %v8795, %v8799
        %v8801 = vshrl.u32 %v8572, 16
        %v8803 = vrot.slane %v8801, 4
        %v8804 = vor.u32 %v8803, %v8799
        %v8805 = vrot.slane %v8804, 4
        %v8807 = vshll.u32 %v8573, 16
        %v8809 = vrot.slane %v8807, 5
        %v8810 = vsel %vm948, %v8805, %v8809
        %v8812 = vshrl.u32 %v8574, 16
        %v8814 = vrot.slane %v8812, 4
        %v8815 = vshll.u32 %v8574, 16
        %v8817 = vrot.slane %v8815, 5
        %v8818 = vor.u32 %v8814, %v8817
        %v8819 = vrot.slane %v8818, 4
        %v8821 = vshll.u32 %v8575, 16
        %v8823 = vrot.slane %v8821, 5
        %v8824 = vsel %vm948, %v8819, %v8823
        %v8825 = vshrl.u32 %v8575, 16
        %v8827 = vrot.slane %v8825, 4
        %v8828 = vor.u32 %v8827, %v8823
        %v8829 = vrot.slane %v8828, 4
        %v8831 = vshll.u32 %v8576, 16
        %v8833 = vrot.slane %v8831, 5
        %v8834 = vsel %vm948, %v8829, %v8833
        %v8836 = vshrl.u32 %v8577, 16
        %v8838 = vrot.slane %v8836, 4
        %v8839 = vshll.u32 %v8577, 16
        %v8841 = vrot.slane %v8839, 5
        %v8842 = vor.u32 %v8838, %v8841
        %v8843 = vrot.slane %v8842, 4
        %v8845 = vshll.u32 %v8578, 16
        %v8847 = vrot.slane %v8845, 5
        %v8848 = vsel %vm948, %v8843, %v8847
        %v8849 = vshrl.u32 %v8578, 16
        %v8851 = vrot.slane %v8849, 4
        %v8852 = vor.u32 %v8851, %v8847
        %v8853 = vrot.slane %v8852, 4
        %v8855 = vshll.u32 %v8579, 16
        %v8857 = vrot.slane %v8855, 5
        %v8858 = vsel %vm948, %v8853, %v8857
        %v8860 = vshrl.u32 %v8580, 16
        %v8862 = vrot.slane %v8860, 4
        %v8863 = vshll.u32 %v8580, 16
        %v8865 = vrot.slane %v8863, 5
        %v8866 = vor.u32 %v8862, %v8865
        %v8867 = vrot.slane %v8866, 4
        %v8869 = vshll.u32 %v8581, 16
        %v8871 = vrot.slane %v8869, 5
        %v8872 = vsel %vm948, %v8867, %v8871
        %v8873 = vshrl.u32 %v8581, 16
        %v8875 = vrot.slane %v8873, 4
        %v8876 = vor.u32 %v8875, %v8871
        %v8877 = vrot.slane %v8876, 4
        %v8879 = vshll.u32 %v8582, 16
        %v8881 = vrot.slane %v8879, 5
        %v8882 = vsel %vm948, %v8877, %v8881
        %v8884 = vshrl.u32 %v8583, 16
        %v8886 = vrot.slane %v8884, 4
        %v8887 = vshll.u32 %v8583, 16
        %v8889 = vrot.slane %v8887, 5
        %v8890 = vor.u32 %v8886, %v8889
        %v8891 = vrot.slane %v8890, 4
        %v8893 = vshll.u32 %v8584, 16
        %v8895 = vrot.slane %v8893, 5
        %v8896 = vsel %vm948, %v8891, %v8895
        %v8897 = vshrl.u32 %v8584, 16
        %v8899 = vrot.slane %v8897, 4
        %v8900 = vor.u32 %v8899, %v8895
        %v8901 = vrot.slane %v8900, 4
        %v8903 = vshll.u32 %v8585, 16
        %v8905 = vrot.slane %v8903, 5
        %v8906 = vsel %vm948, %v8901, %v8905
        %v8908 = vshrl.u32 %v8586, 16
        %v8910 = vrot.slane %v8908, 4
        %v8911 = vshll.u32 %v8586, 16
        %v8913 = vrot.slane %v8911, 5
        %v8914 = vor.u32 %v8910, %v8913
        %v8915 = vrot.slane %v8914, 4
        %v8917 = vshll.u32 %v8587, 16
        %v8919 = vrot.slane %v8917, 5
        %v8920 = vsel %vm948, %v8915, %v8919
        %v8921 = vshrl.u32 %v8587, 16
        %v8923 = vrot.slane %v8921, 4
        %v8924 = vor.u32 %v8923, %v8919
        %v8925 = vrot.slane %v8924, 4
        %v8927 = vshll.u32 %v8588, 16
        %v8929 = vrot.slane %v8927, 5
        %v8930 = vsel %vm948, %v8925, %v8929
        %v8932 = vshrl.u32 %v8589, 16
        %v8934 = vrot.slane %v8932, 4
        %v8935 = vshll.u32 %v8589, 16
        %v8937 = vrot.slane %v8935, 5
        %v8938 = vor.u32 %v8934, %v8937
        %v8939 = vrot.slane %v8938, 4
        %v8941 = vshll.u32 %v8590, 16
        %v8943 = vrot.slane %v8941, 5
        %v8944 = vsel %vm948, %v8939, %v8943
        %v8945 = vshrl.u32 %v8590, 16
        %v8947 = vrot.slane %v8945, 4
        %v8948 = vor.u32 %v8947, %v8943
        %v8949 = vrot.slane %v8948, 4
        %v8951 = vshll.u32 %v8591, 16
        %v8953 = vrot.slane %v8951, 5
        %v8954 = vsel %vm948, %v8949, %v8953
        %v8956 = vshrl.u32 %v8592, 16
        %v8958 = vrot.slane %v8956, 4
        %v8959 = vshll.u32 %v8592, 16
        %v8961 = vrot.slane %v8959, 5
        %v8962 = vor.u32 %v8958, %v8961
        %v8963 = vrot.slane %v8962, 4
        %v8965 = vshll.u32 %v8593, 16
        %v8967 = vrot.slane %v8965, 5
        %v8968 = vsel %vm948, %v8963, %v8967
        %v8969 = vshrl.u32 %v8593, 16
        %v8971 = vrot.slane %v8969, 4
        %v8972 = vor.u32 %v8971, %v8967
        %v8973 = vrot.slane %v8972, 4
        %v8975 = vshll.u32 %v8594, 16
        %v8977 = vrot.slane %v8975, 5
        %v8978 = vsel %vm948, %v8973, %v8977
        %s8979 = scalar_lea.vmem %s3, 256
        %v8980 = vld [vmem:[%s8979] sm:$0xf]
        %v8981 = vld [vmem:[%s8979 + $0x4] sm:$0xf]
        %v8982 = vld [vmem:[%s8979 + $0x8] sm:$0xf]
        %v8983 = vld [vmem:[%s8979 + $0xc] sm:$0xf]
        %v8984 = vld [vmem:[%s8979 + $0x10] sm:$0xf]
        %v8985 = vld [vmem:[%s8979 + $0x14] sm:$0xf]
        %v8986 = vld [vmem:[%s8979 + $0x18] sm:$0xf]
        %v8987 = vld [vmem:[%s8979 + $0x1c] sm:$0xf]
        %v8988 = vld [vmem:[%s8979 + $0x20] sm:$0xf]
        %v8989 = vld [vmem:[%s8979 + $0x24] sm:$0xf]
        %v8990 = vld [vmem:[%s8979 + $0x28] sm:$0xf]
        %v8991 = vld [vmem:[%s8979 + $0x2c] sm:$0xf]
        %v8992 = vld [vmem:[%s8979 + $0x30] sm:$0xf]
        %v8993 = vld [vmem:[%s8979 + $0x34] sm:$0xf]
        %v8994 = vld [vmem:[%s8979 + $0x38] sm:$0xf]
        %v8995 = vld [vmem:[%s8979 + $0x3c] sm:$0xf]
        %v8996 = vunpack.c.l.b16 %v8608
        %v8997 = vunpack.c.l.b16 %v8618
        %v8998 = vunpack.c.l.b16 %v8632
        %v8999 = vunpack.c.l.b16 %v8642
        %v9000 = vunpack.c.l.b16 %v8656
        %v9001 = vunpack.c.l.b16 %v8666
        %v9002 = vunpack.c.l.b16 %v8680
        %v9003 = vunpack.c.l.b16 %v8690
        %v9004 = vunpack.c.l.b16 %v8704
        %v9005 = vunpack.c.l.b16 %v8714
        %v9006 = vunpack.c.l.b16 %v8728
        %v9007 = vunpack.c.l.b16 %v8738
        %v9008 = vunpack.c.l.b16 %v8752
        %v9009 = vunpack.c.l.b16 %v8762
        %v9010 = vunpack.c.l.b16 %v8776
        %v9011 = vunpack.c.l.b16 %v8786
        %v9012 = vunpack.c.l.b16 %v8800
        %v9013 = vunpack.c.l.b16 %v8810
        %v9014 = vunpack.c.l.b16 %v8824
        %v9015 = vunpack.c.l.b16 %v8834
        %v9016 = vunpack.c.l.b16 %v8848
        %v9017 = vunpack.c.l.b16 %v8858
        %v9018 = vunpack.c.l.b16 %v8872
        %v9019 = vunpack.c.l.b16 %v8882
        %v9020 = vunpack.c.l.b16 %v8896
        %v9021 = vunpack.c.l.b16 %v8906
        %v9022 = vunpack.c.l.b16 %v8920
        %v9023 = vunpack.c.l.b16 %v8930
        %v9024 = vunpack.c.l.b16 %v8944
        %v9025 = vunpack.c.l.b16 %v8954
        %v9026 = vunpack.c.l.b16 %v8968
        %v9027 = vunpack.c.l.b16 %v8978
        %v9028 = vpack.c.b16 %v8997, %v8996
        %v9029 = vpack.c.b16 %v8999, %v8998
        %v9030 = vpack.c.b16 %v9001, %v9000
        %v9031 = vpack.c.b16 %v9003, %v9002
        %v9032 = vpack.c.b16 %v9005, %v9004
        %v9033 = vpack.c.b16 %v9007, %v9006
        %v9034 = vpack.c.b16 %v9009, %v9008
        %v9035 = vpack.c.b16 %v9011, %v9010
        %v9036 = vpack.c.b16 %v9013, %v9012
        %v9037 = vpack.c.b16 %v9015, %v9014
        %v9038 = vpack.c.b16 %v9017, %v9016
        %v9039 = vpack.c.b16 %v9019, %v9018
        %v9040 = vpack.c.b16 %v9021, %v9020
        %v9041 = vpack.c.b16 %v9023, %v9022
        %v9042 = vpack.c.b16 %v9025, %v9024
        %v9043 = vpack.c.b16 %v9027, %v9026
        %v9076 = vunpack.c.l.b16 %v8980
        %v9077 = vunpack.c.l.b16 %v8981
        %v9078 = vunpack.c.l.b16 %v8982
        %v9079 = vunpack.c.l.b16 %v8983
        %v9080 = vunpack.c.l.b16 %v8984
        %v9081 = vunpack.c.l.b16 %v8985
        %v9082 = vunpack.c.l.b16 %v8986
        %v9083 = vunpack.c.l.b16 %v8987
        %v9084 = vunpack.c.l.b16 %v8988
        %v9085 = vunpack.c.l.b16 %v8989
        %v9086 = vunpack.c.l.b16 %v8990
        %v9087 = vunpack.c.l.b16 %v8991
        %v9088 = vunpack.c.l.b16 %v8992
        %v9089 = vunpack.c.l.b16 %v8993
        %v9090 = vunpack.c.l.b16 %v8994
        %v9091 = vunpack.c.l.b16 %v8995
        %v9092 = vpack.c.b16 %v9077, %v9076
        %v9093 = vpack.c.b16 %v9079, %v9078
        %v9094 = vpack.c.b16 %v9081, %v9080
        %v9095 = vpack.c.b16 %v9083, %v9082
        %v9096 = vpack.c.b16 %v9085, %v9084
        %v9097 = vpack.c.b16 %v9087, %v9086
        %v9098 = vpack.c.b16 %v9089, %v9088
        %v9099 = vpack.c.b16 %v9091, %v9090
        %9108 = vmatprep.subr.bf16.mxu0 0
        %9109 = vmatpush1.bf16.msra.mxu0 %v9092
        %9110 = vmatprep.subr.bf16.mxu0 0
        %9111 = vmatpush1.bf16.msra.mxu0 %v9093
        %9112 = vmatprep.subr.bf16.mxu0 0
        %9113 = vmatpush1.bf16.msra.mxu0 %v9094
        %9114 = vmatprep.subr.bf16.mxu0 0
        %9115 = vmatpush1.bf16.msra.mxu0 %v9095
        %9116 = vmatprep.subr.bf16.mxu0 0
        %9117 = vmatpush1.bf16.msra.mxu0 %v9096
        %9118 = vmatprep.subr.bf16.mxu0 0
        %9119 = vmatpush1.bf16.msra.mxu0 %v9097
        %9120 = vmatprep.subr.bf16.mxu0 0
        %9121 = vmatpush1.bf16.msra.mxu0 %v9098
        %9122 = vmatprep.subr.bf16.mxu0 0
        %9123 = vmatpush1.bf16.msra.mxu0 %v9099
        %9124 = vmatprep.subr.bf16.mxu0 0
        %9125 = vmatpush1.bf16.msra.mxu0 0
        %9126 = vmatprep.subr.bf16.mxu0 0
        %9127 = vmatpush1.bf16.msra.mxu0 0
        %9128 = vmatprep.subr.bf16.mxu0 0
        %9129 = vmatpush1.bf16.msra.mxu0 0
        %9130 = vmatprep.subr.bf16.mxu0 0
        %9131 = vmatpush1.bf16.msra.mxu0 0
        %9132 = vmatprep.subr.bf16.mxu0 0
        %9133 = vmatpush1.bf16.msra.mxu0 0
        %9134 = vmatprep.subr.bf16.mxu0 0
        %9135 = vmatpush1.bf16.msra.mxu0 0
        %9136 = vmatprep.subr.bf16.mxu0 0
        %9137 = vmatpush1.bf16.msra.mxu0 0
        %9138 = vmatprep.subr.bf16.mxu0 0
        %9139 = vmatpush1.bf16.msra.mxu0 0
        %9140 = vmatprep.mubr.bf16.mxu0 0
        %9141 = vmatmul.mubr.bf16.gmra.mrb[0].mxu0 %v9028
        %v9142 = vpop.f32.mrb[0].mxu0
        %v9143 = vadd.f32 0.0, %v9142
        %v9144 = vpop.f32.mrb[0].mxu0
        %v9145 = vpop.f32.mrb[0].mxu0
        %v9146 = vadd.f32 0.0, %v9145
        %v9147 = vpop.f32.mrb[0].mxu0
        %9148 = vmatprep.mubr.bf16.mxu0 0
        %9149 = vmatmul.mubr.bf16.gmra.mrb[0].mxu0 %v9029
        %v9150 = vpop.f32.mrb[0].mxu0
        %v9151 = vadd.f32 0.0, %v9150
        %v9152 = vpop.f32.mrb[0].mxu0
        %v9153 = vpop.f32.mrb[0].mxu0
        %v9154 = vadd.f32 0.0, %v9153
        %v9155 = vpop.f32.mrb[0].mxu0
        %9156 = vmatprep.mubr.bf16.mxu0 0
        %9157 = vmatmul.mubr.bf16.gmra.mrb[0].mxu0 %v9030
        %v9158 = vpop.f32.mrb[0].mxu0
        %v9159 = vadd.f32 0.0, %v9158
        %v9160 = vpop.f32.mrb[0].mxu0
        %v9161 = vpop.f32.mrb[0].mxu0
        %v9162 = vadd.f32 0.0, %v9161
        %v9163 = vpop.f32.mrb[0].mxu0
        %9164 = vmatprep.mubr.bf16.mxu0 0
        %9165 = vmatmul.mubr.bf16.gmra.mrb[0].mxu0 %v9031
        %v9166 = vpop.f32.mrb[0].mxu0
        %v9167 = vadd.f32 0.0, %v9166
        %v9168 = vpop.f32.mrb[0].mxu0
        %v9169 = vpop.f32.mrb[0].mxu0
        %v9170 = vadd.f32 0.0, %v9169
        %v9171 = vpop.f32.mrb[0].mxu0
        %9172 = vmatprep.mubr.bf16.mxu0 0
        %9173 = vmatmul.mubr.bf16.gmra.mrb[0].mxu0 %v9032
        %v9174 = vpop.f32.mrb[0].mxu0
        %v9175 = vadd.f32 0.0, %v9174
        %v9176 = vpop.f32.mrb[0].mxu0
        %v9177 = vpop.f32.mrb[0].mxu0
        %v9178 = vadd.f32 0.0, %v9177
        %v9179 = vpop.f32.mrb[0].mxu0
        %9180 = vmatprep.mubr.bf16.mxu0 0
        %9181 = vmatmul.mubr.bf16.gmra.mrb[0].mxu0 %v9033
        %v9182 = vpop.f32.mrb[0].mxu0
        %v9183 = vadd.f32 0.0, %v9182
        %v9184 = vpop.f32.mrb[0].mxu0
        %v9185 = vpop.f32.mrb[0].mxu0
        %v9186 = vadd.f32 0.0, %v9185
        %v9187 = vpop.f32.mrb[0].mxu0
        %9188 = vmatprep.mubr.bf16.mxu0 0
        %9189 = vmatmul.mubr.bf16.gmra.mrb[0].mxu0 %v9034
        %v9190 = vpop.f32.mrb[0].mxu0
        %v9191 = vadd.f32 0.0, %v9190
        %v9192 = vpop.f32.mrb[0].mxu0
        %v9193 = vpop.f32.mrb[0].mxu0
        %v9194 = vadd.f32 0.0, %v9193
        %v9195 = vpop.f32.mrb[0].mxu0
        %9196 = vmatprep.mubr.bf16.mxu0 0
        %9197 = vmatmul.mubr.bf16.gmra.mrb[0].mxu0 %v9035
        %v9198 = vpop.f32.mrb[0].mxu0
        %v9199 = vadd.f32 0.0, %v9198
        %v9200 = vpop.f32.mrb[0].mxu0
        %v9201 = vpop.f32.mrb[0].mxu0
        %v9202 = vadd.f32 0.0, %v9201
        %v9203 = vpop.f32.mrb[0].mxu0
        %9204 = vmatprep.mubr.bf16.mxu0 0
        %9205 = vmatmul.mubr.bf16.gmra.mrb[0].mxu0 %v9036
        %v9206 = vpop.f32.mrb[0].mxu0
        %v9207 = vadd.f32 0.0, %v9206
        %v9208 = vpop.f32.mrb[0].mxu0
        %v9209 = vpop.f32.mrb[0].mxu0
        %v9210 = vadd.f32 0.0, %v9209
        %v9211 = vpop.f32.mrb[0].mxu0
        %9212 = vmatprep.mubr.bf16.mxu0 0
        %9213 = vmatmul.mubr.bf16.gmra.mrb[0].mxu0 %v9037
        %v9214 = vpop.f32.mrb[0].mxu0
        %v9215 = vadd.f32 0.0, %v9214
        %v9216 = vpop.f32.mrb[0].mxu0
        %v9217 = vpop.f32.mrb[0].mxu0
        %v9218 = vadd.f32 0.0, %v9217
        %v9219 = vpop.f32.mrb[0].mxu0
        %9220 = vmatprep.mubr.bf16.mxu0 0
        %9221 = vmatmul.mubr.bf16.gmra.mrb[0].mxu0 %v9038
        %v9222 = vpop.f32.mrb[0].mxu0
        %v9223 = vadd.f32 0.0, %v9222
        %v9224 = vpop.f32.mrb[0].mxu0
        %v9225 = vpop.f32.mrb[0].mxu0
        %v9226 = vadd.f32 0.0, %v9225
        %v9227 = vpop.f32.mrb[0].mxu0
        %9228 = vmatprep.mubr.bf16.mxu0 0
        %9229 = vmatmul.mubr.bf16.gmra.mrb[0].mxu0 %v9039
        %v9230 = vpop.f32.mrb[0].mxu0
        %v9231 = vadd.f32 0.0, %v9230
        %v9232 = vpop.f32.mrb[0].mxu0
        %v9233 = vpop.f32.mrb[0].mxu0
        %v9234 = vadd.f32 0.0, %v9233
        %v9235 = vpop.f32.mrb[0].mxu0
        %9236 = vmatprep.mubr.bf16.mxu0 0
        %9237 = vmatmul.mubr.bf16.gmra.mrb[0].mxu0 %v9040
        %v9238 = vpop.f32.mrb[0].mxu0
        %v9239 = vadd.f32 0.0, %v9238
        %v9240 = vpop.f32.mrb[0].mxu0
        %v9241 = vpop.f32.mrb[0].mxu0
        %v9242 = vadd.f32 0.0, %v9241
        %v9243 = vpop.f32.mrb[0].mxu0
        %9244 = vmatprep.mubr.bf16.mxu0 0
        %9245 = vmatmul.mubr.bf16.gmra.mrb[0].mxu0 %v9041
        %v9246 = vpop.f32.mrb[0].mxu0
        %v9247 = vadd.f32 0.0, %v9246
        %v9248 = vpop.f32.mrb[0].mxu0
        %v9249 = vpop.f32.mrb[0].mxu0
        %v9250 = vadd.f32 0.0, %v9249
        %v9251 = vpop.f32.mrb[0].mxu0
        %9252 = vmatprep.mubr.bf16.mxu0 0
        %9253 = vmatmul.mubr.bf16.gmra.mrb[0].mxu0 %v9042
        %v9254 = vpop.f32.mrb[0].mxu0
        %v9255 = vadd.f32 0.0, %v9254
        %v9256 = vpop.f32.mrb[0].mxu0
        %v9257 = vpop.f32.mrb[0].mxu0
        %v9258 = vadd.f32 0.0, %v9257
        %v9259 = vpop.f32.mrb[0].mxu0
        %9260 = vmatprep.mubr.bf16.mxu0 0
        %9261 = vmatmul.mubr.bf16.gmra.mrb[0].mxu0 %v9043
        %v9262 = vpop.f32.mrb[0].mxu0
        %v9263 = vadd.f32 0.0, %v9262
        %v9264 = vpop.f32.mrb[0].mxu0
        %v9265 = vpop.f32.mrb[0].mxu0
        %v9266 = vadd.f32 0.0, %v9265
        %v9267 = vpop.f32.mrb[0].mxu0
        %9268 = vdwg.mxu0
        %v9269 = vadd.f32 %v8515, %v9143
        %v9270 = vadd.f32 %v8516, %v9146
        %v9271 = vadd.f32 %v8517, %v9151
        %v9272 = vadd.f32 %v8518, %v9154
        %v9273 = vadd.f32 %v8519, %v9159
        %v9274 = vadd.f32 %v8520, %v9162
        %v9275 = vadd.f32 %v8521, %v9167
        %v9276 = vadd.f32 %v8522, %v9170
        %v9277 = vadd.f32 %v8523, %v9175
        %v9278 = vadd.f32 %v8524, %v9178
        %v9279 = vadd.f32 %v8525, %v9183
        %v9280 = vadd.f32 %v8526, %v9186
        %v9281 = vadd.f32 %v8527, %v9191
        %v9282 = vadd.f32 %v8528, %v9194
        %v9283 = vadd.f32 %v8529, %v9199
        %v9284 = vadd.f32 %v8530, %v9202
        %v9285 = vadd.f32 %v8531, %v9207
        %v9286 = vadd.f32 %v8532, %v9210
        %v9287 = vadd.f32 %v8533, %v9215
        %v9288 = vadd.f32 %v8534, %v9218
        %v9289 = vadd.f32 %v8535, %v9223
        %v9290 = vadd.f32 %v8536, %v9226
        %v9291 = vadd.f32 %v8537, %v9231
        %v9292 = vadd.f32 %v8538, %v9234
        %v9293 = vadd.f32 %v8539, %v9239
        %v9294 = vadd.f32 %v8540, %v9242
        %v9295 = vadd.f32 %v8541, %v9247
        %v9296 = vadd.f32 %v8542, %v9250
        %v9297 = vadd.f32 %v8543, %v9255
        %v9298 = vadd.f32 %v8544, %v9258
        %v9299 = vadd.f32 %v8545, %v9263
        %v9300 = vadd.f32 %v8546, %v9266
        %v9301 = vld [vmem:[%s6519] sm:$0xe]
        %v9302 = vld [vmem:[%s6519 + $0xc] sm:$0xe]
        %v9303 = vld [vmem:[%s6519 + $0x18] sm:$0xe]
        %v9304 = vld [vmem:[%s6519 + $0x24] sm:$0xe]
        %v9305 = vld [vmem:[%s6519 + $0x30] sm:$0xe]
        %v9306 = vld [vmem:[%s6519 + $0x3c] sm:$0xe]
        %v9307 = vld [vmem:[%s6519 + $0x48] sm:$0xe]
        %v9308 = vld [vmem:[%s6519 + $0x54] sm:$0xe]
        %v9309 = vld [vmem:[%s6519 + $0x60] sm:$0xe]
        %v9310 = vld [vmem:[%s6519 + $0x6c] sm:$0xe]
        %v9311 = vld [vmem:[%s6519 + $0x78] sm:$0xe]
        %v9312 = vld [vmem:[%s6519 + $0x84] sm:$0xe]
        %v9313 = vld [vmem:[%s6519 + $0x90] sm:$0xe]
        %v9314 = vld [vmem:[%s6519 + $0x9c] sm:$0xe]
        %v9315 = vld [vmem:[%s6519 + $0xa8] sm:$0xe]
        %v9316 = vld [vmem:[%s6519 + $0xb4] sm:$0xe]
        %v9365 = vrot.slane %v9301, 5
        %v9366 = vrot.slane %v9365, 4
        %v9367 = vrot.slane %v8548, 5
        %v9368 = vsel %vm1544, %v9366, %v9367
        %v9369 = vrot.slane %v9367, 4
        %v9370 = vrot.slane %v8549, 5
        %v9371 = vsel %vm1544, %v9369, %v9370
        %v9372 = vrot.slane %v9302, 5
        %v9373 = vrot.slane %v9372, 4
        %v9374 = vrot.slane %v8551, 5
        %v9375 = vsel %vm1544, %v9373, %v9374
        %v9376 = vrot.slane %v9374, 4
        %v9377 = vrot.slane %v8552, 5
        %v9378 = vsel %vm1544, %v9376, %v9377
        %v9379 = vrot.slane %v9303, 5
        %v9380 = vrot.slane %v9379, 4
        %v9381 = vrot.slane %v8554, 5
        %v9382 = vsel %vm1544, %v9380, %v9381
        %v9383 = vrot.slane %v9381, 4
        %v9384 = vrot.slane %v8555, 5
        %v9385 = vsel %vm1544, %v9383, %v9384
        %v9386 = vrot.slane %v9304, 5
        %v9387 = vrot.slane %v9386, 4
        %v9388 = vrot.slane %v8557, 5
        %v9389 = vsel %vm1544, %v9387, %v9388
        %v9390 = vrot.slane %v9388, 4
        %v9391 = vrot.slane %v8558, 5
        %v9392 = vsel %vm1544, %v9390, %v9391
        %v9393 = vrot.slane %v9305, 5
        %v9394 = vrot.slane %v9393, 4
        %v9395 = vrot.slane %v8560, 5
        %v9396 = vsel %vm1544, %v9394, %v9395
        %v9397 = vrot.slane %v9395, 4
        %v9398 = vrot.slane %v8561, 5
        %v9399 = vsel %vm1544, %v9397, %v9398
        %v9400 = vrot.slane %v9306, 5
        %v9401 = vrot.slane %v9400, 4
        %v9402 = vrot.slane %v8563, 5
        %v9403 = vsel %vm1544, %v9401, %v9402
        %v9404 = vrot.slane %v9402, 4
        %v9405 = vrot.slane %v8564, 5
        %v9406 = vsel %vm1544, %v9404, %v9405
        %v9407 = vrot.slane %v9307, 5
        %v9408 = vrot.slane %v9407, 4
        %v9409 = vrot.slane %v8566, 5
        %v9410 = vsel %vm1544, %v9408, %v9409
        %v9411 = vrot.slane %v9409, 4
        %v9412 = vrot.slane %v8567, 5
        %v9413 = vsel %vm1544, %v9411, %v9412
        %v9414 = vrot.slane %v9308, 5
        %v9415 = vrot.slane %v9414, 4
        %v9416 = vrot.slane %v8569, 5
        %v9417 = vsel %vm1544, %v9415, %v9416
        %v9418 = vrot.slane %v9416, 4
        %v9419 = vrot.slane %v8570, 5
        %v9420 = vsel %vm1544, %v9418, %v9419
        %v9421 = vrot.slane %v9309, 5
        %v9422 = vrot.slane %v9421, 4
        %v9423 = vrot.slane %v8572, 5
        %v9424 = vsel %vm1544, %v9422, %v9423
        %v9425 = vrot.slane %v9423, 4
        %v9426 = vrot.slane %v8573, 5
        %v9427 = vsel %vm1544, %v9425, %v9426
        %v9428 = vrot.slane %v9310, 5
        %v9429 = vrot.slane %v9428, 4
        %v9430 = vrot.slane %v8575, 5
        %v9431 = vsel %vm1544, %v9429, %v9430
        %v9432 = vrot.slane %v9430, 4
        %v9433 = vrot.slane %v8576, 5
        %v9434 = vsel %vm1544, %v9432, %v9433
        %v9435 = vrot.slane %v9311, 5
        %v9436 = vrot.slane %v9435, 4
        %v9437 = vrot.slane %v8578, 5
        %v9438 = vsel %vm1544, %v9436, %v9437
        %v9439 = vrot.slane %v9437, 4
        %v9440 = vrot.slane %v8579, 5
        %v9441 = vsel %vm1544, %v9439, %v9440
        %v9442 = vrot.slane %v9312, 5
        %v9443 = vrot.slane %v9442, 4
        %v9444 = vrot.slane %v8581, 5
        %v9445 = vsel %vm1544, %v9443, %v9444
        %v9446 = vrot.slane %v9444, 4
        %v9447 = vrot.slane %v8582, 5
        %v9448 = vsel %vm1544, %v9446, %v9447
        %v9449 = vrot.slane %v9313, 5
        %v9450 = vrot.slane %v9449, 4
        %v9451 = vrot.slane %v8584, 5
        %v9452 = vsel %vm1544, %v9450, %v9451
        %v9453 = vrot.slane %v9451, 4
        %v9454 = vrot.slane %v8585, 5
        %v9455 = vsel %vm1544, %v9453, %v9454
        %v9456 = vrot.slane %v9314, 5
        %v9457 = vrot.slane %v9456, 4
        %v9458 = vrot.slane %v8587, 5
        %v9459 = vsel %vm1544, %v9457, %v9458
        %v9460 = vrot.slane %v9458, 4
        %v9461 = vrot.slane %v8588, 5
        %v9462 = vsel %vm1544, %v9460, %v9461
        %v9463 = vrot.slane %v9315, 5
        %v9464 = vrot.slane %v9463, 4
        %v9465 = vrot.slane %v8590, 5
        %v9466 = vsel %vm1544, %v9464, %v9465
        %v9467 = vrot.slane %v9465, 4
        %v9468 = vrot.slane %v8591, 5
        %v9469 = vsel %vm1544, %v9467, %v9468
        %v9470 = vrot.slane %v9316, 5
        %v9471 = vrot.slane %v9470, 4
        %v9472 = vrot.slane %v8593, 5
        %v9473 = vsel %vm1544, %v9471, %v9472
        %v9474 = vrot.slane %v9472, 4
        %v9475 = vrot.slane %v8594, 5
        %v9476 = vsel %vm1544, %v9474, %v9475
        %s9477 = scalar_lea.vmem %s3, 320
        %v9478 = vld [vmem:[%s9477] sm:$0xf]
        %v9479 = vld [vmem:[%s9477 + $0x4] sm:$0xf]
        %v9480 = vld [vmem:[%s9477 + $0x8] sm:$0xf]
        %v9481 = vld [vmem:[%s9477 + $0xc] sm:$0xf]
        %v9482 = vld [vmem:[%s9477 + $0x10] sm:$0xf]
        %v9483 = vld [vmem:[%s9477 + $0x14] sm:$0xf]
        %v9484 = vld [vmem:[%s9477 + $0x18] sm:$0xf]
        %v9485 = vld [vmem:[%s9477 + $0x1c] sm:$0xf]
        %v9486 = vld [vmem:[%s9477 + $0x20] sm:$0xf]
        %v9487 = vld [vmem:[%s9477 + $0x24] sm:$0xf]
        %v9488 = vld [vmem:[%s9477 + $0x28] sm:$0xf]
        %v9489 = vld [vmem:[%s9477 + $0x2c] sm:$0xf]
        %v9490 = vld [vmem:[%s9477 + $0x30] sm:$0xf]
        %v9491 = vld [vmem:[%s9477 + $0x34] sm:$0xf]
        %v9492 = vld [vmem:[%s9477 + $0x38] sm:$0xf]
        %v9493 = vld [vmem:[%s9477 + $0x3c] sm:$0xf]
        %v9494 = vunpack.c.l.b16 %v9368
        %v9495 = vunpack.c.l.b16 %v9371
        %v9496 = vunpack.c.l.b16 %v9375
        %v9497 = vunpack.c.l.b16 %v9378
        %v9498 = vunpack.c.l.b16 %v9382
        %v9499 = vunpack.c.l.b16 %v9385
        %v9500 = vunpack.c.l.b16 %v9389
        %v9501 = vunpack.c.l.b16 %v9392
        %v9502 = vunpack.c.l.b16 %v9396
        %v9503 = vunpack.c.l.b16 %v9399
        %v9504 = vunpack.c.l.b16 %v9403
        %v9505 = vunpack.c.l.b16 %v9406
        %v9506 = vunpack.c.l.b16 %v9410
        %v9507 = vunpack.c.l.b16 %v9413
        %v9508 = vunpack.c.l.b16 %v9417
        %v9509 = vunpack.c.l.b16 %v9420
        %v9510 = vunpack.c.l.b16 %v9424
        %v9511 = vunpack.c.l.b16 %v9427
        %v9512 = vunpack.c.l.b16 %v9431
        %v9513 = vunpack.c.l.b16 %v9434
        %v9514 = vunpack.c.l.b16 %v9438
        %v9515 = vunpack.c.l.b16 %v9441
        %v9516 = vunpack.c.l.b16 %v9445
        %v9517 = vunpack.c.l.b16 %v9448
        %v9518 = vunpack.c.l.b16 %v9452
        %v9519 = vunpack.c.l.b16 %v9455
        %v9520 = vunpack.c.l.b16 %v9459
        %v9521 = vunpack.c.l.b16 %v9462
        %v9522 = vunpack.c.l.b16 %v9466
        %v9523 = vunpack.c.l.b16 %v9469
        %v9524 = vunpack.c.l.b16 %v9473
        %v9525 = vunpack.c.l.b16 %v9476
        %v9526 = vpack.c.b16 %v9495, %v9494
        %v9527 = vpack.c.b16 %v9497, %v9496
        %v9528 = vpack.c.b16 %v9499, %v9498
        %v9529 = vpack.c.b16 %v9501, %v9500
        %v9530 = vpack.c.b16 %v9503, %v9502
        %v9531 = vpack.c.b16 %v9505, %v9504
        %v9532 = vpack.c.b16 %v9507, %v9506
        %v9533 = vpack.c.b16 %v9509, %v9508
        %v9534 = vpack.c.b16 %v9511, %v9510
        %v9535 = vpack.c.b16 %v9513, %v9512
        %v9536 = vpack.c.b16 %v9515, %v9514
        %v9537 = vpack.c.b16 %v9517, %v9516
        %v9538 = vpack.c.b16 %v9519, %v9518
        %v9539 = vpack.c.b16 %v9521, %v9520
        %v9540 = vpack.c.b16 %v9523, %v9522
        %v9541 = vpack.c.b16 %v9525, %v9524
        %v9574 = vunpack.c.l.b16 %v9478
        %v9575 = vunpack.c.l.b16 %v9479
        %v9576 = vunpack.c.l.b16 %v9480
        %v9577 = vunpack.c.l.b16 %v9481
        %v9578 = vunpack.c.l.b16 %v9482
        %v9579 = vunpack.c.l.b16 %v9483
        %v9580 = vunpack.c.l.b16 %v9484
        %v9581 = vunpack.c.l.b16 %v9485
        %v9582 = vunpack.c.l.b16 %v9486
        %v9583 = vunpack.c.l.b16 %v9487
        %v9584 = vunpack.c.l.b16 %v9488
        %v9585 = vunpack.c.l.b16 %v9489
        %v9586 = vunpack.c.l.b16 %v9490
        %v9587 = vunpack.c.l.b16 %v9491
        %v9588 = vunpack.c.l.b16 %v9492
        %v9589 = vunpack.c.l.b16 %v9493
        %v9590 = vpack.c.b16 %v9575, %v9574
        %v9591 = vpack.c.b16 %v9577, %v9576
        %v9592 = vpack.c.b16 %v9579, %v9578
        %v9593 = vpack.c.b16 %v9581, %v9580
        %v9594 = vpack.c.b16 %v9583, %v9582
        %v9595 = vpack.c.b16 %v9585, %v9584
        %v9596 = vpack.c.b16 %v9587, %v9586
        %v9597 = vpack.c.b16 %v9589, %v9588
        %9606 = vmatprep.subr.bf16.mxu0 0
        %9607 = vmatpush1.bf16.msra.mxu0 %v9590
        %9608 = vmatprep.subr.bf16.mxu0 0
        %9609 = vmatpush1.bf16.msra.mxu0 %v9591
        %9610 = vmatprep.subr.bf16.mxu0 0
        %9611 = vmatpush1.bf16.msra.mxu0 %v9592
        %9612 = vmatprep.subr.bf16.mxu0 0
        %9613 = vmatpush1.bf16.msra.mxu0 %v9593
        %9614 = vmatprep.subr.bf16.mxu0 0
        %9615 = vmatpush1.bf16.msra.mxu0 %v9594
        %9616 = vmatprep.subr.bf16.mxu0 0
        %9617 = vmatpush1.bf16.msra.mxu0 %v9595
        %9618 = vmatprep.subr.bf16.mxu0 0
        %9619 = vmatpush1.bf16.msra.mxu0 %v9596
        %9620 = vmatprep.subr.bf16.mxu0 0
        %9621 = vmatpush1.bf16.msra.mxu0 %v9597
        %9622 = vmatprep.subr.bf16.mxu0 0
        %9623 = vmatpush1.bf16.msra.mxu0 0
        %9624 = vmatprep.subr.bf16.mxu0 0
        %9625 = vmatpush1.bf16.msra.mxu0 0
        %9626 = vmatprep.subr.bf16.mxu0 0
        %9627 = vmatpush1.bf16.msra.mxu0 0
        %9628 = vmatprep.subr.bf16.mxu0 0
        %9629 = vmatpush1.bf16.msra.mxu0 0
        %9630 = vmatprep.subr.bf16.mxu0 0
        %9631 = vmatpush1.bf16.msra.mxu0 0
        %9632 = vmatprep.subr.bf16.mxu0 0
        %9633 = vmatpush1.bf16.msra.mxu0 0
        %9634 = vmatprep.subr.bf16.mxu0 0
        %9635 = vmatpush1.bf16.msra.mxu0 0
        %9636 = vmatprep.subr.bf16.mxu0 0
        %9637 = vmatpush1.bf16.msra.mxu0 0
        %9638 = vmatprep.mubr.bf16.mxu0 0
        %9639 = vmatmul.mubr.bf16.gmra.mrb[0].mxu0 %v9526
        %v9640 = vpop.f32.mrb[0].mxu0
        %v9641 = vadd.f32 0.0, %v9640
        %v9642 = vpop.f32.mrb[0].mxu0
        %v9643 = vpop.f32.mrb[0].mxu0
        %v9644 = vadd.f32 0.0, %v9643
        %v9645 = vpop.f32.mrb[0].mxu0
        %9646 = vmatprep.mubr.bf16.mxu0 0
        %9647 = vmatmul.mubr.bf16.gmra.mrb[0].mxu0 %v9527
        %v9648 = vpop.f32.mrb[0].mxu0
        %v9649 = vadd.f32 0.0, %v9648
        %v9650 = vpop.f32.mrb[0].mxu0
        %v9651 = vpop.f32.mrb[0].mxu0
        %v9652 = vadd.f32 0.0, %v9651
        %v9653 = vpop.f32.mrb[0].mxu0
        %9654 = vmatprep.mubr.bf16.mxu0 0
        %9655 = vmatmul.mubr.bf16.gmra.mrb[0].mxu0 %v9528
        %v9656 = vpop.f32.mrb[0].mxu0
        %v9657 = vadd.f32 0.0, %v9656
        %v9658 = vpop.f32.mrb[0].mxu0
        %v9659 = vpop.f32.mrb[0].mxu0
        %v9660 = vadd.f32 0.0, %v9659
        %v9661 = vpop.f32.mrb[0].mxu0
        %9662 = vmatprep.mubr.bf16.mxu0 0
        %9663 = vmatmul.mubr.bf16.gmra.mrb[0].mxu0 %v9529
        %v9664 = vpop.f32.mrb[0].mxu0
        %v9665 = vadd.f32 0.0, %v9664
        %v9666 = vpop.f32.mrb[0].mxu0
        %v9667 = vpop.f32.mrb[0].mxu0
        %v9668 = vadd.f32 0.0, %v9667
        %v9669 = vpop.f32.mrb[0].mxu0
        %9670 = vmatprep.mubr.bf16.mxu0 0
        %9671 = vmatmul.mubr.bf16.gmra.mrb[0].mxu0 %v9530
        %v9672 = vpop.f32.mrb[0].mxu0
        %v9673 = vadd.f32 0.0, %v9672
        %v9674 = vpop.f32.mrb[0].mxu0
        %v9675 = vpop.f32.mrb[0].mxu0
        %v9676 = vadd.f32 0.0, %v9675
        %v9677 = vpop.f32.mrb[0].mxu0
        %9678 = vmatprep.mubr.bf16.mxu0 0
        %9679 = vmatmul.mubr.bf16.gmra.mrb[0].mxu0 %v9531
        %v9680 = vpop.f32.mrb[0].mxu0
        %v9681 = vadd.f32 0.0, %v9680
        %v9682 = vpop.f32.mrb[0].mxu0
        %v9683 = vpop.f32.mrb[0].mxu0
        %v9684 = vadd.f32 0.0, %v9683
        %v9685 = vpop.f32.mrb[0].mxu0
        %9686 = vmatprep.mubr.bf16.mxu0 0
        %9687 = vmatmul.mubr.bf16.gmra.mrb[0].mxu0 %v9532
        %v9688 = vpop.f32.mrb[0].mxu0
        %v9689 = vadd.f32 0.0, %v9688
        %v9690 = vpop.f32.mrb[0].mxu0
        %v9691 = vpop.f32.mrb[0].mxu0
        %v9692 = vadd.f32 0.0, %v9691
        %v9693 = vpop.f32.mrb[0].mxu0
        %9694 = vmatprep.mubr.bf16.mxu0 0
        %9695 = vmatmul.mubr.bf16.gmra.mrb[0].mxu0 %v9533
        %v9696 = vpop.f32.mrb[0].mxu0
        %v9697 = vadd.f32 0.0, %v9696
        %v9698 = vpop.f32.mrb[0].mxu0
        %v9699 = vpop.f32.mrb[0].mxu0
        %v9700 = vadd.f32 0.0, %v9699
        %v9701 = vpop.f32.mrb[0].mxu0
        %9702 = vmatprep.mubr.bf16.mxu0 0
        %9703 = vmatmul.mubr.bf16.gmra.mrb[0].mxu0 %v9534
        %v9704 = vpop.f32.mrb[0].mxu0
        %v9705 = vadd.f32 0.0, %v9704
        %v9706 = vpop.f32.mrb[0].mxu0
        %v9707 = vpop.f32.mrb[0].mxu0
        %v9708 = vadd.f32 0.0, %v9707
        %v9709 = vpop.f32.mrb[0].mxu0
        %9710 = vmatprep.mubr.bf16.mxu0 0
        %9711 = vmatmul.mubr.bf16.gmra.mrb[0].mxu0 %v9535
        %v9712 = vpop.f32.mrb[0].mxu0
        %v9713 = vadd.f32 0.0, %v9712
        %v9714 = vpop.f32.mrb[0].mxu0
        %v9715 = vpop.f32.mrb[0].mxu0
        %v9716 = vadd.f32 0.0, %v9715
        %v9717 = vpop.f32.mrb[0].mxu0
        %9718 = vmatprep.mubr.bf16.mxu0 0
        %9719 = vmatmul.mubr.bf16.gmra.mrb[0].mxu0 %v9536
        %v9720 = vpop.f32.mrb[0].mxu0
        %v9721 = vadd.f32 0.0, %v9720
        %v9722 = vpop.f32.mrb[0].mxu0
        %v9723 = vpop.f32.mrb[0].mxu0
        %v9724 = vadd.f32 0.0, %v9723
        %v9725 = vpop.f32.mrb[0].mxu0
        %9726 = vmatprep.mubr.bf16.mxu0 0
        %9727 = vmatmul.mubr.bf16.gmra.mrb[0].mxu0 %v9537
        %v9728 = vpop.f32.mrb[0].mxu0
        %v9729 = vadd.f32 0.0, %v9728
        %v9730 = vpop.f32.mrb[0].mxu0
        %v9731 = vpop.f32.mrb[0].mxu0
        %v9732 = vadd.f32 0.0, %v9731
        %v9733 = vpop.f32.mrb[0].mxu0
        %9734 = vmatprep.mubr.bf16.mxu0 0
        %9735 = vmatmul.mubr.bf16.gmra.mrb[0].mxu0 %v9538
        %v9736 = vpop.f32.mrb[0].mxu0
        %v9737 = vadd.f32 0.0, %v9736
        %v9738 = vpop.f32.mrb[0].mxu0
        %v9739 = vpop.f32.mrb[0].mxu0
        %v9740 = vadd.f32 0.0, %v9739
        %v9741 = vpop.f32.mrb[0].mxu0
        %9742 = vmatprep.mubr.bf16.mxu0 0
        %9743 = vmatmul.mubr.bf16.gmra.mrb[0].mxu0 %v9539
        %v9744 = vpop.f32.mrb[0].mxu0
        %v9745 = vadd.f32 0.0, %v9744
        %v9746 = vpop.f32.mrb[0].mxu0
        %v9747 = vpop.f32.mrb[0].mxu0
        %v9748 = vadd.f32 0.0, %v9747
        %v9749 = vpop.f32.mrb[0].mxu0
        %9750 = vmatprep.mubr.bf16.mxu0 0
        %9751 = vmatmul.mubr.bf16.gmra.mrb[0].mxu0 %v9540
        %v9752 = vpop.f32.mrb[0].mxu0
        %v9753 = vadd.f32 0.0, %v9752
        %v9754 = vpop.f32.mrb[0].mxu0
        %v9755 = vpop.f32.mrb[0].mxu0
        %v9756 = vadd.f32 0.0, %v9755
        %v9757 = vpop.f32.mrb[0].mxu0
        %9758 = vmatprep.mubr.bf16.mxu0 0
        %9759 = vmatmul.mubr.bf16.gmra.mrb[0].mxu0 %v9541
        %v9760 = vpop.f32.mrb[0].mxu0
        %v9761 = vadd.f32 0.0, %v9760
        %v9762 = vpop.f32.mrb[0].mxu0
        %v9763 = vpop.f32.mrb[0].mxu0
        %v9764 = vadd.f32 0.0, %v9763
        %v9765 = vpop.f32.mrb[0].mxu0
        %9766 = vdwg.mxu0
        %v9767 = vadd.f32 %v9269, %v9641
        %v9768 = vadd.f32 %v9270, %v9644
        %v9769 = vadd.f32 %v9271, %v9649
        %v9770 = vadd.f32 %v9272, %v9652
        %v9771 = vadd.f32 %v9273, %v9657
        %v9772 = vadd.f32 %v9274, %v9660
        %v9773 = vadd.f32 %v9275, %v9665
        %v9774 = vadd.f32 %v9276, %v9668
        %v9775 = vadd.f32 %v9277, %v9673
        %v9776 = vadd.f32 %v9278, %v9676
        %v9777 = vadd.f32 %v9279, %v9681
        %v9778 = vadd.f32 %v9280, %v9684
        %v9779 = vadd.f32 %v9281, %v9689
        %v9780 = vadd.f32 %v9282, %v9692
        %v9781 = vadd.f32 %v9283, %v9697
        %v9782 = vadd.f32 %v9284, %v9700
        %v9783 = vadd.f32 %v9285, %v9705
        %v9784 = vadd.f32 %v9286, %v9708
        %v9785 = vadd.f32 %v9287, %v9713
        %v9786 = vadd.f32 %v9288, %v9716
        %v9787 = vadd.f32 %v9289, %v9721
        %v9788 = vadd.f32 %v9290, %v9724
        %v9789 = vadd.f32 %v9291, %v9729
        %v9790 = vadd.f32 %v9292, %v9732
        %v9791 = vadd.f32 %v9293, %v9737
        %v9792 = vadd.f32 %v9294, %v9740
        %v9793 = vadd.f32 %v9295, %v9745
        %v9794 = vadd.f32 %v9296, %v9748
        %v9795 = vadd.f32 %v9297, %v9753
        %v9796 = vadd.f32 %v9298, %v9756
        %v9797 = vadd.f32 %v9299, %v9761
        %v9798 = vadd.f32 %v9300, %v9764
        %s9799 = scalar_lea.vmem [#allocation4], 24
        %v9800 = vld [vmem:[%s9799] sm:$0xf]
        %v9801 = vld [vmem:[%s9799 + $0x4] sm:$0xf]
        %v9802 = vld [vmem:[%s9799 + $0xc] sm:$0xf]
        %v9803 = vld [vmem:[%s9799 + $0x10] sm:$0xf]
        %v9804 = vld [vmem:[%s9799 + $0x18] sm:$0xf]
        %v9805 = vld [vmem:[%s9799 + $0x1c] sm:$0xf]
        %v9806 = vld [vmem:[%s9799 + $0x24] sm:$0xf]
        %v9807 = vld [vmem:[%s9799 + $0x28] sm:$0xf]
        %v9808 = vld [vmem:[%s9799 + $0x30] sm:$0xf]
        %v9809 = vld [vmem:[%s9799 + $0x34] sm:$0xf]
        %v9810 = vld [vmem:[%s9799 + $0x3c] sm:$0xf]
        %v9811 = vld [vmem:[%s9799 + $0x40] sm:$0xf]
        %v9812 = vld [vmem:[%s9799 + $0x48] sm:$0xf]
        %v9813 = vld [vmem:[%s9799 + $0x4c] sm:$0xf]
        %v9814 = vld [vmem:[%s9799 + $0x54] sm:$0xf]
        %v9815 = vld [vmem:[%s9799 + $0x58] sm:$0xf]
        %v9816 = vld [vmem:[%s9799 + $0x60] sm:$0xf]
        %v9817 = vld [vmem:[%s9799 + $0x64] sm:$0xf]
        %v9818 = vld [vmem:[%s9799 + $0x6c] sm:$0xf]
        %v9819 = vld [vmem:[%s9799 + $0x70] sm:$0xf]
        %v9820 = vld [vmem:[%s9799 + $0x78] sm:$0xf]
        %v9821 = vld [vmem:[%s9799 + $0x7c] sm:$0xf]
        %v9822 = vld [vmem:[%s9799 + $0x84] sm:$0xf]
        %v9823 = vld [vmem:[%s9799 + $0x88] sm:$0xf]
        %v9824 = vld [vmem:[%s9799 + $0x90] sm:$0xf]
        %v9825 = vld [vmem:[%s9799 + $0x94] sm:$0xf]
        %v9826 = vld [vmem:[%s9799 + $0x9c] sm:$0xf]
        %v9827 = vld [vmem:[%s9799 + $0xa0] sm:$0xf]
        %v9828 = vld [vmem:[%s9799 + $0xa8] sm:$0xf]
        %v9829 = vld [vmem:[%s9799 + $0xac] sm:$0xf]
        %v9830 = vld [vmem:[%s9799 + $0xb4] sm:$0xf]
        %v9831 = vld [vmem:[%s9799 + $0xb8] sm:$0xf]
        %s9832 = scalar_lea.vmem %s3, 384
        %v9833 = vld [vmem:[%s9832] sm:$0xf]
        %v9834 = vld [vmem:[%s9832 + $0x4] sm:$0xf]
        %v9835 = vld [vmem:[%s9832 + $0x8] sm:$0xf]
        %v9836 = vld [vmem:[%s9832 + $0xc] sm:$0xf]
        %v9837 = vld [vmem:[%s9832 + $0x10] sm:$0xf]
        %v9838 = vld [vmem:[%s9832 + $0x14] sm:$0xf]
        %v9839 = vld [vmem:[%s9832 + $0x18] sm:$0xf]
        %v9840 = vld [vmem:[%s9832 + $0x1c] sm:$0xf]
        %v9841 = vld [vmem:[%s9832 + $0x20] sm:$0xf]
        %v9842 = vld [vmem:[%s9832 + $0x24] sm:$0xf]
        %v9843 = vld [vmem:[%s9832 + $0x28] sm:$0xf]
        %v9844 = vld [vmem:[%s9832 + $0x2c] sm:$0xf]
        %v9845 = vld [vmem:[%s9832 + $0x30] sm:$0xf]
        %v9846 = vld [vmem:[%s9832 + $0x34] sm:$0xf]
        %v9847 = vld [vmem:[%s9832 + $0x38] sm:$0xf]
        %v9848 = vld [vmem:[%s9832 + $0x3c] sm:$0xf]
        %v9881 = vunpack.c.l.b16 %v9800
        %v9882 = vunpack.c.l.b16 %v9801
        %v9883 = vunpack.c.l.b16 %v9802
        %v9884 = vunpack.c.l.b16 %v9803
        %v9885 = vunpack.c.l.b16 %v9804
        %v9886 = vunpack.c.l.b16 %v9805
        %v9887 = vunpack.c.l.b16 %v9806
        %v9888 = vunpack.c.l.b16 %v9807
        %v9889 = vunpack.c.l.b16 %v9808
        %v9890 = vunpack.c.l.b16 %v9809
        %v9891 = vunpack.c.l.b16 %v9810
        %v9892 = vunpack.c.l.b16 %v9811
        %v9893 = vunpack.c.l.b16 %v9812
        %v9894 = vunpack.c.l.b16 %v9813
        %v9895 = vunpack.c.l.b16 %v9814
        %v9896 = vunpack.c.l.b16 %v9815
        %v9897 = vunpack.c.l.b16 %v9816
        %v9898 = vunpack.c.l.b16 %v9817
        %v9899 = vunpack.c.l.b16 %v9818
        %v9900 = vunpack.c.l.b16 %v9819
        %v9901 = vunpack.c.l.b16 %v9820
        %v9902 = vunpack.c.l.b16 %v9821
        %v9903 = vunpack.c.l.b16 %v9822
        %v9904 = vunpack.c.l.b16 %v9823
        %v9905 = vunpack.c.l.b16 %v9824
        %v9906 = vunpack.c.l.b16 %v9825
        %v9907 = vunpack.c.l.b16 %v9826
        %v9908 = vunpack.c.l.b16 %v9827
        %v9909 = vunpack.c.l.b16 %v9828
        %v9910 = vunpack.c.l.b16 %v9829
        %v9911 = vunpack.c.l.b16 %v9830
        %v9912 = vunpack.c.l.b16 %v9831
        %v9913 = vpack.c.b16 %v9882, %v9881
        %v9914 = vpack.c.b16 %v9884, %v9883
        %v9915 = vpack.c.b16 %v9886, %v9885
        %v9916 = vpack.c.b16 %v9888, %v9887
        %v9917 = vpack.c.b16 %v9890, %v9889
        %v9918 = vpack.c.b16 %v9892, %v9891
        %v9919 = vpack.c.b16 %v9894, %v9893
        %v9920 = vpack.c.b16 %v9896, %v9895
        %v9921 = vpack.c.b16 %v9898, %v9897
        %v9922 = vpack.c.b16 %v9900, %v9899
        %v9923 = vpack.c.b16 %v9902, %v9901
        %v9924 = vpack.c.b16 %v9904, %v9903
        %v9925 = vpack.c.b16 %v9906, %v9905
        %v9926 = vpack.c.b16 %v9908, %v9907
        %v9927 = vpack.c.b16 %v9910, %v9909
        %v9928 = vpack.c.b16 %v9912, %v9911
        %v9961 = vunpack.c.l.b16 %v9833
        %v9962 = vunpack.c.l.b16 %v9834
        %v9963 = vunpack.c.l.b16 %v9835
        %v9964 = vunpack.c.l.b16 %v9836
        %v9965 = vunpack.c.l.b16 %v9837
        %v9966 = vunpack.c.l.b16 %v9838
        %v9967 = vunpack.c.l.b16 %v9839
        %v9968 = vunpack.c.l.b16 %v9840
        %v9969 = vunpack.c.l.b16 %v9841
        %v9970 = vunpack.c.l.b16 %v9842
        %v9971 = vunpack.c.l.b16 %v9843
        %v9972 = vunpack.c.l.b16 %v9844
        %v9973 = vunpack.c.l.b16 %v9845
        %v9974 = vunpack.c.l.b16 %v9846
        %v9975 = vunpack.c.l.b16 %v9847
        %v9976 = vunpack.c.l.b16 %v9848
        %v9977 = vpack.c.b16 %v9962, %v9961
        %v9978 = vpack.c.b16 %v9964, %v9963
        %v9979 = vpack.c.b16 %v9966, %v9965
        %v9980 = vpack.c.b16 %v9968, %v9967
        %v9981 = vpack.c.b16 %v9970, %v9969
        %v9982 = vpack.c.b16 %v9972, %v9971
        %v9983 = vpack.c.b16 %v9974, %v9973
        %v9984 = vpack.c.b16 %v9976, %v9975
        %9993 = vmatprep.subr.bf16.mxu0 0
        %9994 = vmatpush1.bf16.msra.mxu0 %v9977
        %9995 = vmatprep.subr.bf16.mxu0 0
        %9996 = vmatpush1.bf16.msra.mxu0 %v9978
        %9997 = vmatprep.subr.bf16.mxu0 0
        %9998 = vmatpush1.bf16.msra.mxu0 %v9979
        %9999 = vmatprep.subr.bf16.mxu0 0
        %10000 = vmatpush1.bf16.msra.mxu0 %v9980
        %10001 = vmatprep.subr.bf16.mxu0 0
        %10002 = vmatpush1.bf16.msra.mxu0 %v9981
        %10003 = vmatprep.subr.bf16.mxu0 0
        %10004 = vmatpush1.bf16.msra.mxu0 %v9982
        %10005 = vmatprep.subr.bf16.mxu0 0
        %10006 = vmatpush1.bf16.msra.mxu0 %v9983
        %10007 = vmatprep.subr.bf16.mxu0 0
        %10008 = vmatpush1.bf16.msra.mxu0 %v9984
        %10009 = vmatprep.subr.bf16.mxu0 0
        %10010 = vmatpush1.bf16.msra.mxu0 0
        %10011 = vmatprep.subr.bf16.mxu0 0
        %10012 = vmatpush1.bf16.msra.mxu0 0
        %10013 = vmatprep.subr.bf16.mxu0 0
        %10014 = vmatpush1.bf16.msra.mxu0 0
        %10015 = vmatprep.subr.bf16.mxu0 0
        %10016 = vmatpush1.bf16.msra.mxu0 0
        %10017 = vmatprep.subr.bf16.mxu0 0
        %10018 = vmatpush1.bf16.msra.mxu0 0
        %10019 = vmatprep.subr.bf16.mxu0 0
        %10020 = vmatpush1.bf16.msra.mxu0 0
        %10021 = vmatprep.subr.bf16.mxu0 0
        %10022 = vmatpush1.bf16.msra.mxu0 0
        %10023 = vmatprep.subr.bf16.mxu0 0
        %10024 = vmatpush1.bf16.msra.mxu0 0
        %10025 = vmatprep.mubr.bf16.mxu0 0
        %10026 = vmatmul.mubr.bf16.gmra.mrb[0].mxu0 %v9913
        %v10027 = vpop.f32.mrb[0].mxu0
        %v10028 = vadd.f32 0.0, %v10027
        %v10029 = vpop.f32.mrb[0].mxu0
        %v10030 = vpop.f32.mrb[0].mxu0
        %v10031 = vadd.f32 0.0, %v10030
        %v10032 = vpop.f32.mrb[0].mxu0
        %10033 = vmatprep.mubr.bf16.mxu0 0
        %10034 = vmatmul.mubr.bf16.gmra.mrb[0].mxu0 %v9914
        %v10035 = vpop.f32.mrb[0].mxu0
        %v10036 = vadd.f32 0.0, %v10035
        %v10037 = vpop.f32.mrb[0].mxu0
        %v10038 = vpop.f32.mrb[0].mxu0
        %v10039 = vadd.f32 0.0, %v10038
        %v10040 = vpop.f32.mrb[0].mxu0
        %10041 = vmatprep.mubr.bf16.mxu0 0
        %10042 = vmatmul.mubr.bf16.gmra.mrb[0].mxu0 %v9915
        %v10043 = vpop.f32.mrb[0].mxu0
        %v10044 = vadd.f32 0.0, %v10043
        %v10045 = vpop.f32.mrb[0].mxu0
        %v10046 = vpop.f32.mrb[0].mxu0
        %v10047 = vadd.f32 0.0, %v10046
        %v10048 = vpop.f32.mrb[0].mxu0
        %10049 = vmatprep.mubr.bf16.mxu0 0
        %10050 = vmatmul.mubr.bf16.gmra.mrb[0].mxu0 %v9916
        %v10051 = vpop.f32.mrb[0].mxu0
        %v10052 = vadd.f32 0.0, %v10051
        %v10053 = vpop.f32.mrb[0].mxu0
        %v10054 = vpop.f32.mrb[0].mxu0
        %v10055 = vadd.f32 0.0, %v10054
        %v10056 = vpop.f32.mrb[0].mxu0
        %10057 = vmatprep.mubr.bf16.mxu0 0
        %10058 = vmatmul.mubr.bf16.gmra.mrb[0].mxu0 %v9917
        %v10059 = vpop.f32.mrb[0].mxu0
        %v10060 = vadd.f32 0.0, %v10059
        %v10061 = vpop.f32.mrb[0].mxu0
        %v10062 = vpop.f32.mrb[0].mxu0
        %v10063 = vadd.f32 0.0, %v10062
        %v10064 = vpop.f32.mrb[0].mxu0
        %10065 = vmatprep.mubr.bf16.mxu0 0
        %10066 = vmatmul.mubr.bf16.gmra.mrb[0].mxu0 %v9918
        %v10067 = vpop.f32.mrb[0].mxu0
        %v10068 = vadd.f32 0.0, %v10067
        %v10069 = vpop.f32.mrb[0].mxu0
        %v10070 = vpop.f32.mrb[0].mxu0
        %v10071 = vadd.f32 0.0, %v10070
        %v10072 = vpop.f32.mrb[0].mxu0
        %10073 = vmatprep.mubr.bf16.mxu0 0
        %10074 = vmatmul.mubr.bf16.gmra.mrb[0].mxu0 %v9919
        %v10075 = vpop.f32.mrb[0].mxu0
        %v10076 = vadd.f32 0.0, %v10075
        %v10077 = vpop.f32.mrb[0].mxu0
        %v10078 = vpop.f32.mrb[0].mxu0
        %v10079 = vadd.f32 0.0, %v10078
        %v10080 = vpop.f32.mrb[0].mxu0
        %10081 = vmatprep.mubr.bf16.mxu0 0
        %10082 = vmatmul.mubr.bf16.gmra.mrb[0].mxu0 %v9920
        %v10083 = vpop.f32.mrb[0].mxu0
        %v10084 = vadd.f32 0.0, %v10083
        %v10085 = vpop.f32.mrb[0].mxu0
        %v10086 = vpop.f32.mrb[0].mxu0
        %v10087 = vadd.f32 0.0, %v10086
        %v10088 = vpop.f32.mrb[0].mxu0
        %10089 = vmatprep.mubr.bf16.mxu0 0
        %10090 = vmatmul.mubr.bf16.gmra.mrb[0].mxu0 %v9921
        %v10091 = vpop.f32.mrb[0].mxu0
        %v10092 = vadd.f32 0.0, %v10091
        %v10093 = vpop.f32.mrb[0].mxu0
        %v10094 = vpop.f32.mrb[0].mxu0
        %v10095 = vadd.f32 0.0, %v10094
        %v10096 = vpop.f32.mrb[0].mxu0
        %10097 = vmatprep.mubr.bf16.mxu0 0
        %10098 = vmatmul.mubr.bf16.gmra.mrb[0].mxu0 %v9922
        %v10099 = vpop.f32.mrb[0].mxu0
        %v10100 = vadd.f32 0.0, %v10099
        %v10101 = vpop.f32.mrb[0].mxu0
        %v10102 = vpop.f32.mrb[0].mxu0
        %v10103 = vadd.f32 0.0, %v10102
        %v10104 = vpop.f32.mrb[0].mxu0
        %10105 = vmatprep.mubr.bf16.mxu0 0
        %10106 = vmatmul.mubr.bf16.gmra.mrb[0].mxu0 %v9923
        %v10107 = vpop.f32.mrb[0].mxu0
        %v10108 = vadd.f32 0.0, %v10107
        %v10109 = vpop.f32.mrb[0].mxu0
        %v10110 = vpop.f32.mrb[0].mxu0
        %v10111 = vadd.f32 0.0, %v10110
        %v10112 = vpop.f32.mrb[0].mxu0
        %10113 = vmatprep.mubr.bf16.mxu0 0
        %10114 = vmatmul.mubr.bf16.gmra.mrb[0].mxu0 %v9924
        %v10115 = vpop.f32.mrb[0].mxu0
        %v10116 = vadd.f32 0.0, %v10115
        %v10117 = vpop.f32.mrb[0].mxu0
        %v10118 = vpop.f32.mrb[0].mxu0
        %v10119 = vadd.f32 0.0, %v10118
        %v10120 = vpop.f32.mrb[0].mxu0
        %10121 = vmatprep.mubr.bf16.mxu0 0
        %10122 = vmatmul.mubr.bf16.gmra.mrb[0].mxu0 %v9925
        %v10123 = vpop.f32.mrb[0].mxu0
        %v10124 = vadd.f32 0.0, %v10123
        %v10125 = vpop.f32.mrb[0].mxu0
        %v10126 = vpop.f32.mrb[0].mxu0
        %v10127 = vadd.f32 0.0, %v10126
        %v10128 = vpop.f32.mrb[0].mxu0
        %10129 = vmatprep.mubr.bf16.mxu0 0
        %10130 = vmatmul.mubr.bf16.gmra.mrb[0].mxu0 %v9926
        %v10131 = vpop.f32.mrb[0].mxu0
        %v10132 = vadd.f32 0.0, %v10131
        %v10133 = vpop.f32.mrb[0].mxu0
        %v10134 = vpop.f32.mrb[0].mxu0
        %v10135 = vadd.f32 0.0, %v10134
        %v10136 = vpop.f32.mrb[0].mxu0
        %10137 = vmatprep.mubr.bf16.mxu0 0
        %10138 = vmatmul.mubr.bf16.gmra.mrb[0].mxu0 %v9927
        %v10139 = vpop.f32.mrb[0].mxu0
        %v10140 = vadd.f32 0.0, %v10139
        %v10141 = vpop.f32.mrb[0].mxu0
        %v10142 = vpop.f32.mrb[0].mxu0
        %v10143 = vadd.f32 0.0, %v10142
        %v10144 = vpop.f32.mrb[0].mxu0
        %10145 = vmatprep.mubr.bf16.mxu0 0
        %10146 = vmatmul.mubr.bf16.gmra.mrb[0].mxu0 %v9928
        %v10147 = vpop.f32.mrb[0].mxu0
        %v10148 = vadd.f32 0.0, %v10147
        %v10149 = vpop.f32.mrb[0].mxu0
        %v10150 = vpop.f32.mrb[0].mxu0
        %v10151 = vadd.f32 0.0, %v10150
        %v10152 = vpop.f32.mrb[0].mxu0
        %10153 = vdwg.mxu0
        %v10154 = vadd.f32 %v9767, %v10028
        %v10155 = vadd.f32 %v9768, %v10031
        %v10156 = vadd.f32 %v9769, %v10036
        %v10157 = vadd.f32 %v9770, %v10039
        %v10158 = vadd.f32 %v9771, %v10044
        %v10159 = vadd.f32 %v9772, %v10047
        %v10160 = vadd.f32 %v9773, %v10052
        %v10161 = vadd.f32 %v9774, %v10055
        %v10162 = vadd.f32 %v9775, %v10060
        %v10163 = vadd.f32 %v9776, %v10063
        %v10164 = vadd.f32 %v9777, %v10068
        %v10165 = vadd.f32 %v9778, %v10071
        %v10166 = vadd.f32 %v9779, %v10076
        %v10167 = vadd.f32 %v9780, %v10079
        %v10168 = vadd.f32 %v9781, %v10084
        %v10169 = vadd.f32 %v9782, %v10087
        %v10170 = vadd.f32 %v9783, %v10092
        %v10171 = vadd.f32 %v9784, %v10095
        %v10172 = vadd.f32 %v9785, %v10100
        %v10173 = vadd.f32 %v9786, %v10103
        %v10174 = vadd.f32 %v9787, %v10108
        %v10175 = vadd.f32 %v9788, %v10111
        %v10176 = vadd.f32 %v9789, %v10116
        %v10177 = vadd.f32 %v9790, %v10119
        %v10178 = vadd.f32 %v9791, %v10124
        %v10179 = vadd.f32 %v9792, %v10127
        %v10180 = vadd.f32 %v9793, %v10132
        %v10181 = vadd.f32 %v9794, %v10135
        %v10182 = vadd.f32 %v9795, %v10140
        %v10183 = vadd.f32 %v9796, %v10143
        %v10184 = vadd.f32 %v9797, %v10148
        %v10185 = vadd.f32 %v9798, %v10151
        %v10186 = vld [vmem:[%s9799] sm:$0xf]
        %v10187 = vld [vmem:[%s9799 + $0x4] sm:$0xf]
        %v10188 = vld [vmem:[%s9799 + $0x8] sm:$0x1]
        %v10189 = vld [vmem:[%s9799 + $0xc] sm:$0xf]
        %v10190 = vld [vmem:[%s9799 + $0x10] sm:$0xf]
        %v10191 = vld [vmem:[%s9799 + $0x14] sm:$0x1]
        %v10192 = vld [vmem:[%s9799 + $0x18] sm:$0xf]
        %v10193 = vld [vmem:[%s9799 + $0x1c] sm:$0xf]
        %v10194 = vld [vmem:[%s9799 + $0x20] sm:$0x1]
        %v10195 = vld [vmem:[%s9799 + $0x24] sm:$0xf]
        %v10196 = vld [vmem:[%s9799 + $0x28] sm:$0xf]
        %v10197 = vld [vmem:[%s9799 + $0x2c] sm:$0x1]
        %v10198 = vld [vmem:[%s9799 + $0x30] sm:$0xf]
        %v10199 = vld [vmem:[%s9799 + $0x34] sm:$0xf]
        %v10200 = vld [vmem:[%s9799 + $0x38] sm:$0x1]
        %v10201 = vld [vmem:[%s9799 + $0x3c] sm:$0xf]
        %v10202 = vld [vmem:[%s9799 + $0x40] sm:$0xf]
        %v10203 = vld [vmem:[%s9799 + $0x44] sm:$0x1]
        %v10204 = vld [vmem:[%s9799 + $0x48] sm:$0xf]
        %v10205 = vld [vmem:[%s9799 + $0x4c] sm:$0xf]
        %v10206 = vld [vmem:[%s9799 + $0x50] sm:$0x1]
        %v10207 = vld [vmem:[%s9799 + $0x54] sm:$0xf]
        %v10208 = vld [vmem:[%s9799 + $0x58] sm:$0xf]
        %v10209 = vld [vmem:[%s9799 + $0x5c] sm:$0x1]
        %v10210 = vld [vmem:[%s9799 + $0x60] sm:$0xf]
        %v10211 = vld [vmem:[%s9799 + $0x64] sm:$0xf]
        %v10212 = vld [vmem:[%s9799 + $0x68] sm:$0x1]
        %v10213 = vld [vmem:[%s9799 + $0x6c] sm:$0xf]
        %v10214 = vld [vmem:[%s9799 + $0x70] sm:$0xf]
        %v10215 = vld [vmem:[%s9799 + $0x74] sm:$0x1]
        %v10216 = vld [vmem:[%s9799 + $0x78] sm:$0xf]
        %v10217 = vld [vmem:[%s9799 + $0x7c] sm:$0xf]
        %v10218 = vld [vmem:[%s9799 + $0x80] sm:$0x1]
        %v10219 = vld [vmem:[%s9799 + $0x84] sm:$0xf]
        %v10220 = vld [vmem:[%s9799 + $0x88] sm:$0xf]
        %v10221 = vld [vmem:[%s9799 + $0x8c] sm:$0x1]
        %v10222 = vld [vmem:[%s9799 + $0x90] sm:$0xf]
        %v10223 = vld [vmem:[%s9799 + $0x94] sm:$0xf]
        %v10224 = vld [vmem:[%s9799 + $0x98] sm:$0x1]
        %v10225 = vld [vmem:[%s9799 + $0x9c] sm:$0xf]
        %v10226 = vld [vmem:[%s9799 + $0xa0] sm:$0xf]
        %v10227 = vld [vmem:[%s9799 + $0xa4] sm:$0x1]
        %v10228 = vld [vmem:[%s9799 + $0xa8] sm:$0xf]
        %v10229 = vld [vmem:[%s9799 + $0xac] sm:$0xf]
        %v10230 = vld [vmem:[%s9799 + $0xb0] sm:$0x1]
        %v10231 = vld [vmem:[%s9799 + $0xb4] sm:$0xf]
        %v10232 = vld [vmem:[%s9799 + $0xb8] sm:$0xf]
        %v10233 = vld [vmem:[%s9799 + $0xbc] sm:$0x1]
        %v10235 = vshrl.u32 %v10186, 16
        %v10237 = vrot.slane %v10235, 4
        %v10238 = vshll.u32 %v10186, 16
        %v10240 = vrot.slane %v10238, 5
        %v10241 = vor.u32 %v10237, %v10240
        %v10242 = vrot.slane %v10241, 4
        %v10244 = vshll.u32 %v10187, 16
        %v10246 = vrot.slane %v10244, 5
        %v10247 = vsel %vm948, %v10242, %v10246
        %v10248 = vshrl.u32 %v10187, 16
        %v10250 = vrot.slane %v10248, 4
        %v10251 = vor.u32 %v10250, %v10246
        %v10252 = vrot.slane %v10251, 4
        %v10254 = vshll.u32 %v10188, 16
        %v10256 = vrot.slane %v10254, 5
        %v10257 = vsel %vm948, %v10252, %v10256
        %v10259 = vshrl.u32 %v10189, 16
        %v10261 = vrot.slane %v10259, 4
        %v10262 = vshll.u32 %v10189, 16
        %v10264 = vrot.slane %v10262, 5
        %v10265 = vor.u32 %v10261, %v10264
        %v10266 = vrot.slane %v10265, 4
        %v10268 = vshll.u32 %v10190, 16
        %v10270 = vrot.slane %v10268, 5
        %v10271 = vsel %vm948, %v10266, %v10270
        %v10272 = vshrl.u32 %v10190, 16
        %v10274 = vrot.slane %v10272, 4
        %v10275 = vor.u32 %v10274, %v10270
        %v10276 = vrot.slane %v10275, 4
        %v10278 = vshll.u32 %v10191, 16
        %v10280 = vrot.slane %v10278, 5
        %v10281 = vsel %vm948, %v10276, %v10280
        %v10283 = vshrl.u32 %v10192, 16
        %v10285 = vrot.slane %v10283, 4
        %v10286 = vshll.u32 %v10192, 16
        %v10288 = vrot.slane %v10286, 5
        %v10289 = vor.u32 %v10285, %v10288
        %v10290 = vrot.slane %v10289, 4
        %v10292 = vshll.u32 %v10193, 16
        %v10294 = vrot.slane %v10292, 5
        %v10295 = vsel %vm948, %v10290, %v10294
        %v10296 = vshrl.u32 %v10193, 16
        %v10298 = vrot.slane %v10296, 4
        %v10299 = vor.u32 %v10298, %v10294
        %v10300 = vrot.slane %v10299, 4
        %v10302 = vshll.u32 %v10194, 16
        %v10304 = vrot.slane %v10302, 5
        %v10305 = vsel %vm948, %v10300, %v10304
        %v10307 = vshrl.u32 %v10195, 16
        %v10309 = vrot.slane %v10307, 4
        %v10310 = vshll.u32 %v10195, 16
        %v10312 = vrot.slane %v10310, 5
        %v10313 = vor.u32 %v10309, %v10312
        %v10314 = vrot.slane %v10313, 4
        %v10316 = vshll.u32 %v10196, 16
        %v10318 = vrot.slane %v10316, 5
        %v10319 = vsel %vm948, %v10314, %v10318
        %v10320 = vshrl.u32 %v10196, 16
        %v10322 = vrot.slane %v10320, 4
        %v10323 = vor.u32 %v10322, %v10318
        %v10324 = vrot.slane %v10323, 4
        %v10326 = vshll.u32 %v10197, 16
        %v10328 = vrot.slane %v10326, 5
        %v10329 = vsel %vm948, %v10324, %v10328
        %v10331 = vshrl.u32 %v10198, 16
        %v10333 = vrot.slane %v10331, 4
        %v10334 = vshll.u32 %v10198, 16
        %v10336 = vrot.slane %v10334, 5
        %v10337 = vor.u32 %v10333, %v10336
        %v10338 = vrot.slane %v10337, 4
        %v10340 = vshll.u32 %v10199, 16
        %v10342 = vrot.slane %v10340, 5
        %v10343 = vsel %vm948, %v10338, %v10342
        %v10344 = vshrl.u32 %v10199, 16
        %v10346 = vrot.slane %v10344, 4
        %v10347 = vor.u32 %v10346, %v10342
        %v10348 = vrot.slane %v10347, 4
        %v10350 = vshll.u32 %v10200, 16
        %v10352 = vrot.slane %v10350, 5
        %v10353 = vsel %vm948, %v10348, %v10352
        %v10355 = vshrl.u32 %v10201, 16
        %v10357 = vrot.slane %v10355, 4
        %v10358 = vshll.u32 %v10201, 16
        %v10360 = vrot.slane %v10358, 5
        %v10361 = vor.u32 %v10357, %v10360
        %v10362 = vrot.slane %v10361, 4
        %v10364 = vshll.u32 %v10202, 16
        %v10366 = vrot.slane %v10364, 5
        %v10367 = vsel %vm948, %v10362, %v10366
        %v10368 = vshrl.u32 %v10202, 16
        %v10370 = vrot.slane %v10368, 4
        %v10371 = vor.u32 %v10370, %v10366
        %v10372 = vrot.slane %v10371, 4
        %v10374 = vshll.u32 %v10203, 16
        %v10376 = vrot.slane %v10374, 5
        %v10377 = vsel %vm948, %v10372, %v10376
        %v10379 = vshrl.u32 %v10204, 16
        %v10381 = vrot.slane %v10379, 4
        %v10382 = vshll.u32 %v10204, 16
        %v10384 = vrot.slane %v10382, 5
        %v10385 = vor.u32 %v10381, %v10384
        %v10386 = vrot.slane %v10385, 4
        %v10388 = vshll.u32 %v10205, 16
        %v10390 = vrot.slane %v10388, 5
        %v10391 = vsel %vm948, %v10386, %v10390
        %v10392 = vshrl.u32 %v10205, 16
        %v10394 = vrot.slane %v10392, 4
        %v10395 = vor.u32 %v10394, %v10390
        %v10396 = vrot.slane %v10395, 4
        %v10398 = vshll.u32 %v10206, 16
        %v10400 = vrot.slane %v10398, 5
        %v10401 = vsel %vm948, %v10396, %v10400
        %v10403 = vshrl.u32 %v10207, 16
        %v10405 = vrot.slane %v10403, 4
        %v10406 = vshll.u32 %v10207, 16
        %v10408 = vrot.slane %v10406, 5
        %v10409 = vor.u32 %v10405, %v10408
        %v10410 = vrot.slane %v10409, 4
        %v10412 = vshll.u32 %v10208, 16
        %v10414 = vrot.slane %v10412, 5
        %v10415 = vsel %vm948, %v10410, %v10414
        %v10416 = vshrl.u32 %v10208, 16
        %v10418 = vrot.slane %v10416, 4
        %v10419 = vor.u32 %v10418, %v10414
        %v10420 = vrot.slane %v10419, 4
        %v10422 = vshll.u32 %v10209, 16
        %v10424 = vrot.slane %v10422, 5
        %v10425 = vsel %vm948, %v10420, %v10424
        %v10427 = vshrl.u32 %v10210, 16
        %v10429 = vrot.slane %v10427, 4
        %v10430 = vshll.u32 %v10210, 16
        %v10432 = vrot.slane %v10430, 5
        %v10433 = vor.u32 %v10429, %v10432
        %v10434 = vrot.slane %v10433, 4
        %v10436 = vshll.u32 %v10211, 16
        %v10438 = vrot.slane %v10436, 5
        %v10439 = vsel %vm948, %v10434, %v10438
        %v10440 = vshrl.u32 %v10211, 16
        %v10442 = vrot.slane %v10440, 4
        %v10443 = vor.u32 %v10442, %v10438
        %v10444 = vrot.slane %v10443, 4
        %v10446 = vshll.u32 %v10212, 16
        %v10448 = vrot.slane %v10446, 5
        %v10449 = vsel %vm948, %v10444, %v10448
        %v10451 = vshrl.u32 %v10213, 16
        %v10453 = vrot.slane %v10451, 4
        %v10454 = vshll.u32 %v10213, 16
        %v10456 = vrot.slane %v10454, 5
        %v10457 = vor.u32 %v10453, %v10456
        %v10458 = vrot.slane %v10457, 4
        %v10460 = vshll.u32 %v10214, 16
        %v10462 = vrot.slane %v10460, 5
        %v10463 = vsel %vm948, %v10458, %v10462
        %v10464 = vshrl.u32 %v10214, 16
        %v10466 = vrot.slane %v10464, 4
        %v10467 = vor.u32 %v10466, %v10462
        %v10468 = vrot.slane %v10467, 4
        %v10470 = vshll.u32 %v10215, 16
        %v10472 = vrot.slane %v10470, 5
        %v10473 = vsel %vm948, %v10468, %v10472
        %v10475 = vshrl.u32 %v10216, 16
        %v10477 = vrot.slane %v10475, 4
        %v10478 = vshll.u32 %v10216, 16
        %v10480 = vrot.slane %v10478, 5
        %v10481 = vor.u32 %v10477, %v10480
        %v10482 = vrot.slane %v10481, 4
        %v10484 = vshll.u32 %v10217, 16
        %v10486 = vrot.slane %v10484, 5
        %v10487 = vsel %vm948, %v10482, %v10486
        %v10488 = vshrl.u32 %v10217, 16
        %v10490 = vrot.slane %v10488, 4
        %v10491 = vor.u32 %v10490, %v10486
        %v10492 = vrot.slane %v10491, 4
        %v10494 = vshll.u32 %v10218, 16
        %v10496 = vrot.slane %v10494, 5
        %v10497 = vsel %vm948, %v10492, %v10496
        %v10499 = vshrl.u32 %v10219, 16
        %v10501 = vrot.slane %v10499, 4
        %v10502 = vshll.u32 %v10219, 16
        %v10504 = vrot.slane %v10502, 5
        %v10505 = vor.u32 %v10501, %v10504
        %v10506 = vrot.slane %v10505, 4
        %v10508 = vshll.u32 %v10220, 16
        %v10510 = vrot.slane %v10508, 5
        %v10511 = vsel %vm948, %v10506, %v10510
        %v10512 = vshrl.u32 %v10220, 16
        %v10514 = vrot.slane %v10512, 4
        %v10515 = vor.u32 %v10514, %v10510
        %v10516 = vrot.slane %v10515, 4
        %v10518 = vshll.u32 %v10221, 16
        %v10520 = vrot.slane %v10518, 5
        %v10521 = vsel %vm948, %v10516, %v10520
        %v10523 = vshrl.u32 %v10222, 16
        %v10525 = vrot.slane %v10523, 4
        %v10526 = vshll.u32 %v10222, 16
        %v10528 = vrot.slane %v10526, 5
        %v10529 = vor.u32 %v10525, %v10528
        %v10530 = vrot.slane %v10529, 4
        %v10532 = vshll.u32 %v10223, 16
        %v10534 = vrot.slane %v10532, 5
        %v10535 = vsel %vm948, %v10530, %v10534
        %v10536 = vshrl.u32 %v10223, 16
        %v10538 = vrot.slane %v10536, 4
        %v10539 = vor.u32 %v10538, %v10534
        %v10540 = vrot.slane %v10539, 4
        %v10542 = vshll.u32 %v10224, 16
        %v10544 = vrot.slane %v10542, 5
        %v10545 = vsel %vm948, %v10540, %v10544
        %v10547 = vshrl.u32 %v10225, 16
        %v10549 = vrot.slane %v10547, 4
        %v10550 = vshll.u32 %v10225, 16
        %v10552 = vrot.slane %v10550, 5
        %v10553 = vor.u32 %v10549, %v10552
        %v10554 = vrot.slane %v10553, 4
        %v10556 = vshll.u32 %v10226, 16
        %v10558 = vrot.slane %v10556, 5
        %v10559 = vsel %vm948, %v10554, %v10558
        %v10560 = vshrl.u32 %v10226, 16
        %v10562 = vrot.slane %v10560, 4
        %v10563 = vor.u32 %v10562, %v10558
        %v10564 = vrot.slane %v10563, 4
        %v10566 = vshll.u32 %v10227, 16
        %v10568 = vrot.slane %v10566, 5
        %v10569 = vsel %vm948, %v10564, %v10568
        %v10571 = vshrl.u32 %v10228, 16
        %v10573 = vrot.slane %v10571, 4
        %v10574 = vshll.u32 %v10228, 16
        %v10576 = vrot.slane %v10574, 5
        %v10577 = vor.u32 %v10573, %v10576
        %v10578 = vrot.slane %v10577, 4
        %v10580 = vshll.u32 %v10229, 16
        %v10582 = vrot.slane %v10580, 5
        %v10583 = vsel %vm948, %v10578, %v10582
        %v10584 = vshrl.u32 %v10229, 16
        %v10586 = vrot.slane %v10584, 4
        %v10587 = vor.u32 %v10586, %v10582
        %v10588 = vrot.slane %v10587, 4
        %v10590 = vshll.u32 %v10230, 16
        %v10592 = vrot.slane %v10590, 5
        %v10593 = vsel %vm948, %v10588, %v10592
        %v10595 = vshrl.u32 %v10231, 16
        %v10597 = vrot.slane %v10595, 4
        %v10598 = vshll.u32 %v10231, 16
        %v10600 = vrot.slane %v10598, 5
        %v10601 = vor.u32 %v10597, %v10600
        %v10602 = vrot.slane %v10601, 4
        %v10604 = vshll.u32 %v10232, 16
        %v10606 = vrot.slane %v10604, 5
        %v10607 = vsel %vm948, %v10602, %v10606
        %v10608 = vshrl.u32 %v10232, 16
        %v10610 = vrot.slane %v10608, 4
        %v10611 = vor.u32 %v10610, %v10606
        %v10612 = vrot.slane %v10611, 4
        %v10614 = vshll.u32 %v10233, 16
        %v10616 = vrot.slane %v10614, 5
        %v10617 = vsel %vm948, %v10612, %v10616
        %s10618 = scalar_lea.vmem %s3, 448
        %v10619 = vld [vmem:[%s10618] sm:$0xf]
        %v10620 = vld [vmem:[%s10618 + $0x4] sm:$0xf]
        %v10621 = vld [vmem:[%s10618 + $0x8] sm:$0xf]
        %v10622 = vld [vmem:[%s10618 + $0xc] sm:$0xf]
        %v10623 = vld [vmem:[%s10618 + $0x10] sm:$0xf]
        %v10624 = vld [vmem:[%s10618 + $0x14] sm:$0xf]
        %v10625 = vld [vmem:[%s10618 + $0x18] sm:$0xf]
        %v10626 = vld [vmem:[%s10618 + $0x1c] sm:$0xf]
        %v10627 = vld [vmem:[%s10618 + $0x20] sm:$0xf]
        %v10628 = vld [vmem:[%s10618 + $0x24] sm:$0xf]
        %v10629 = vld [vmem:[%s10618 + $0x28] sm:$0xf]
        %v10630 = vld [vmem:[%s10618 + $0x2c] sm:$0xf]
        %v10631 = vld [vmem:[%s10618 + $0x30] sm:$0xf]
        %v10632 = vld [vmem:[%s10618 + $0x34] sm:$0xf]
        %v10633 = vld [vmem:[%s10618 + $0x38] sm:$0xf]
        %v10634 = vld [vmem:[%s10618 + $0x3c] sm:$0xf]
        %v10635 = vunpack.c.l.b16 %v10247
        %v10636 = vunpack.c.l.b16 %v10257
        %v10637 = vunpack.c.l.b16 %v10271
        %v10638 = vunpack.c.l.b16 %v10281
        %v10639 = vunpack.c.l.b16 %v10295
        %v10640 = vunpack.c.l.b16 %v10305
        %v10641 = vunpack.c.l.b16 %v10319
        %v10642 = vunpack.c.l.b16 %v10329
        %v10643 = vunpack.c.l.b16 %v10343
        %v10644 = vunpack.c.l.b16 %v10353
        %v10645 = vunpack.c.l.b16 %v10367
        %v10646 = vunpack.c.l.b16 %v10377
        %v10647 = vunpack.c.l.b16 %v10391
        %v10648 = vunpack.c.l.b16 %v10401
        %v10649 = vunpack.c.l.b16 %v10415
        %v10650 = vunpack.c.l.b16 %v10425
        %v10651 = vunpack.c.l.b16 %v10439
        %v10652 = vunpack.c.l.b16 %v10449
        %v10653 = vunpack.c.l.b16 %v10463
        %v10654 = vunpack.c.l.b16 %v10473
        %v10655 = vunpack.c.l.b16 %v10487
        %v10656 = vunpack.c.l.b16 %v10497
        %v10657 = vunpack.c.l.b16 %v10511
        %v10658 = vunpack.c.l.b16 %v10521
        %v10659 = vunpack.c.l.b16 %v10535
        %v10660 = vunpack.c.l.b16 %v10545
        %v10661 = vunpack.c.l.b16 %v10559
        %v10662 = vunpack.c.l.b16 %v10569
        %v10663 = vunpack.c.l.b16 %v10583
        %v10664 = vunpack.c.l.b16 %v10593
        %v10665 = vunpack.c.l.b16 %v10607
        %v10666 = vunpack.c.l.b16 %v10617
        %v10667 = vpack.c.b16 %v10636, %v10635
        %v10668 = vpack.c.b16 %v10638, %v10637
        %v10669 = vpack.c.b16 %v10640, %v10639
        %v10670 = vpack.c.b16 %v10642, %v10641
        %v10671 = vpack.c.b16 %v10644, %v10643
        %v10672 = vpack.c.b16 %v10646, %v10645
        %v10673 = vpack.c.b16 %v10648, %v10647
        %v10674 = vpack.c.b16 %v10650, %v10649
        %v10675 = vpack.c.b16 %v10652, %v10651
        %v10676 = vpack.c.b16 %v10654, %v10653
        %v10677 = vpack.c.b16 %v10656, %v10655
        %v10678 = vpack.c.b16 %v10658, %v10657
        %v10679 = vpack.c.b16 %v10660, %v10659
        %v10680 = vpack.c.b16 %v10662, %v10661
        %v10681 = vpack.c.b16 %v10664, %v10663
        %v10682 = vpack.c.b16 %v10666, %v10665
        %v10715 = vunpack.c.l.b16 %v10619
        %v10716 = vunpack.c.l.b16 %v10620
        %v10717 = vunpack.c.l.b16 %v10621
        %v10718 = vunpack.c.l.b16 %v10622
        %v10719 = vunpack.c.l.b16 %v10623
        %v10720 = vunpack.c.l.b16 %v10624
        %v10721 = vunpack.c.l.b16 %v10625
        %v10722 = vunpack.c.l.b16 %v10626
        %v10723 = vunpack.c.l.b16 %v10627
        %v10724 = vunpack.c.l.b16 %v10628
        %v10725 = vunpack.c.l.b16 %v10629
        %v10726 = vunpack.c.l.b16 %v10630
        %v10727 = vunpack.c.l.b16 %v10631
        %v10728 = vunpack.c.l.b16 %v10632
        %v10729 = vunpack.c.l.b16 %v10633
        %v10730 = vunpack.c.l.b16 %v10634
        %v10731 = vpack.c.b16 %v10716, %v10715
        %v10732 = vpack.c.b16 %v10718, %v10717
        %v10733 = vpack.c.b16 %v10720, %v10719
        %v10734 = vpack.c.b16 %v10722, %v10721
        %v10735 = vpack.c.b16 %v10724, %v10723
        %v10736 = vpack.c.b16 %v10726, %v10725
        %v10737 = vpack.c.b16 %v10728, %v10727
        %v10738 = vpack.c.b16 %v10730, %v10729
        %10747 = vmatprep.subr.bf16.mxu0 0
        %10748 = vmatpush1.bf16.msra.mxu0 %v10731
        %10749 = vmatprep.subr.bf16.mxu0 0
        %10750 = vmatpush1.bf16.msra.mxu0 %v10732
        %10751 = vmatprep.subr.bf16.mxu0 0
        %10752 = vmatpush1.bf16.msra.mxu0 %v10733
        %10753 = vmatprep.subr.bf16.mxu0 0
        %10754 = vmatpush1.bf16.msra.mxu0 %v10734
        %10755 = vmatprep.subr.bf16.mxu0 0
        %10756 = vmatpush1.bf16.msra.mxu0 %v10735
        %10757 = vmatprep.subr.bf16.mxu0 0
        %10758 = vmatpush1.bf16.msra.mxu0 %v10736
        %10759 = vmatprep.subr.bf16.mxu0 0
        %10760 = vmatpush1.bf16.msra.mxu0 %v10737
        %10761 = vmatprep.subr.bf16.mxu0 0
        %10762 = vmatpush1.bf16.msra.mxu0 %v10738
        %10763 = vmatprep.subr.bf16.mxu0 0
        %10764 = vmatpush1.bf16.msra.mxu0 0
        %10765 = vmatprep.subr.bf16.mxu0 0
        %10766 = vmatpush1.bf16.msra.mxu0 0
        %10767 = vmatprep.subr.bf16.mxu0 0
        %10768 = vmatpush1.bf16.msra.mxu0 0
        %10769 = vmatprep.subr.bf16.mxu0 0
        %10770 = vmatpush1.bf16.msra.mxu0 0
        %10771 = vmatprep.subr.bf16.mxu0 0
        %10772 = vmatpush1.bf16.msra.mxu0 0
        %10773 = vmatprep.subr.bf16.mxu0 0
        %10774 = vmatpush1.bf16.msra.mxu0 0
        %10775 = vmatprep.subr.bf16.mxu0 0
        %10776 = vmatpush1.bf16.msra.mxu0 0
        %10777 = vmatprep.subr.bf16.mxu0 0
        %10778 = vmatpush1.bf16.msra.mxu0 0
        %10779 = vmatprep.mubr.bf16.mxu0 0
        %10780 = vmatmul.mubr.bf16.gmra.mrb[0].mxu0 %v10667
        %v10781 = vpop.f32.mrb[0].mxu0
        %v10782 = vadd.f32 0.0, %v10781
        %v10783 = vpop.f32.mrb[0].mxu0
        %v10784 = vpop.f32.mrb[0].mxu0
        %v10785 = vadd.f32 0.0, %v10784
        %v10786 = vpop.f32.mrb[0].mxu0
        %10787 = vmatprep.mubr.bf16.mxu0 0
        %10788 = vmatmul.mubr.bf16.gmra.mrb[0].mxu0 %v10668
        %v10789 = vpop.f32.mrb[0].mxu0
        %v10790 = vadd.f32 0.0, %v10789
        %v10791 = vpop.f32.mrb[0].mxu0
        %v10792 = vpop.f32.mrb[0].mxu0
        %v10793 = vadd.f32 0.0, %v10792
        %v10794 = vpop.f32.mrb[0].mxu0
        %10795 = vmatprep.mubr.bf16.mxu0 0
        %10796 = vmatmul.mubr.bf16.gmra.mrb[0].mxu0 %v10669
        %v10797 = vpop.f32.mrb[0].mxu0
        %v10798 = vadd.f32 0.0, %v10797
        %v10799 = vpop.f32.mrb[0].mxu0
        %v10800 = vpop.f32.mrb[0].mxu0
        %v10801 = vadd.f32 0.0, %v10800
        %v10802 = vpop.f32.mrb[0].mxu0
        %10803 = vmatprep.mubr.bf16.mxu0 0
        %10804 = vmatmul.mubr.bf16.gmra.mrb[0].mxu0 %v10670
        %v10805 = vpop.f32.mrb[0].mxu0
        %v10806 = vadd.f32 0.0, %v10805
        %v10807 = vpop.f32.mrb[0].mxu0
        %v10808 = vpop.f32.mrb[0].mxu0
        %v10809 = vadd.f32 0.0, %v10808
        %v10810 = vpop.f32.mrb[0].mxu0
        %10811 = vmatprep.mubr.bf16.mxu0 0
        %10812 = vmatmul.mubr.bf16.gmra.mrb[0].mxu0 %v10671
        %v10813 = vpop.f32.mrb[0].mxu0
        %v10814 = vadd.f32 0.0, %v10813
        %v10815 = vpop.f32.mrb[0].mxu0
        %v10816 = vpop.f32.mrb[0].mxu0
        %v10817 = vadd.f32 0.0, %v10816
        %v10818 = vpop.f32.mrb[0].mxu0
        %10819 = vmatprep.mubr.bf16.mxu0 0
        %10820 = vmatmul.mubr.bf16.gmra.mrb[0].mxu0 %v10672
        %v10821 = vpop.f32.mrb[0].mxu0
        %v10822 = vadd.f32 0.0, %v10821
        %v10823 = vpop.f32.mrb[0].mxu0
        %v10824 = vpop.f32.mrb[0].mxu0
        %v10825 = vadd.f32 0.0, %v10824
        %v10826 = vpop.f32.mrb[0].mxu0
        %10827 = vmatprep.mubr.bf16.mxu0 0
        %10828 = vmatmul.mubr.bf16.gmra.mrb[0].mxu0 %v10673
        %v10829 = vpop.f32.mrb[0].mxu0
        %v10830 = vadd.f32 0.0, %v10829
        %v10831 = vpop.f32.mrb[0].mxu0
        %v10832 = vpop.f32.mrb[0].mxu0
        %v10833 = vadd.f32 0.0, %v10832
        %v10834 = vpop.f32.mrb[0].mxu0
        %10835 = vmatprep.mubr.bf16.mxu0 0
        %10836 = vmatmul.mubr.bf16.gmra.mrb[0].mxu0 %v10674
        %v10837 = vpop.f32.mrb[0].mxu0
        %v10838 = vadd.f32 0.0, %v10837
        %v10839 = vpop.f32.mrb[0].mxu0
        %v10840 = vpop.f32.mrb[0].mxu0
        %v10841 = vadd.f32 0.0, %v10840
        %v10842 = vpop.f32.mrb[0].mxu0
        %10843 = vmatprep.mubr.bf16.mxu0 0
        %10844 = vmatmul.mubr.bf16.gmra.mrb[0].mxu0 %v10675
        %v10845 = vpop.f32.mrb[0].mxu0
        %v10846 = vadd.f32 0.0, %v10845
        %v10847 = vpop.f32.mrb[0].mxu0
        %v10848 = vpop.f32.mrb[0].mxu0
        %v10849 = vadd.f32 0.0, %v10848
        %v10850 = vpop.f32.mrb[0].mxu0
        %10851 = vmatprep.mubr.bf16.mxu0 0
        %10852 = vmatmul.mubr.bf16.gmra.mrb[0].mxu0 %v10676
        %v10853 = vpop.f32.mrb[0].mxu0
        %v10854 = vadd.f32 0.0, %v10853
        %v10855 = vpop.f32.mrb[0].mxu0
        %v10856 = vpop.f32.mrb[0].mxu0
        %v10857 = vadd.f32 0.0, %v10856
        %v10858 = vpop.f32.mrb[0].mxu0
        %10859 = vmatprep.mubr.bf16.mxu0 0
        %10860 = vmatmul.mubr.bf16.gmra.mrb[0].mxu0 %v10677
        %v10861 = vpop.f32.mrb[0].mxu0
        %v10862 = vadd.f32 0.0, %v10861
        %v10863 = vpop.f32.mrb[0].mxu0
        %v10864 = vpop.f32.mrb[0].mxu0
        %v10865 = vadd.f32 0.0, %v10864
        %v10866 = vpop.f32.mrb[0].mxu0
        %10867 = vmatprep.mubr.bf16.mxu0 0
        %10868 = vmatmul.mubr.bf16.gmra.mrb[0].mxu0 %v10678
        %v10869 = vpop.f32.mrb[0].mxu0
        %v10870 = vadd.f32 0.0, %v10869
        %v10871 = vpop.f32.mrb[0].mxu0
        %v10872 = vpop.f32.mrb[0].mxu0
        %v10873 = vadd.f32 0.0, %v10872
        %v10874 = vpop.f32.mrb[0].mxu0
        %10875 = vmatprep.mubr.bf16.mxu0 0
        %10876 = vmatmul.mubr.bf16.gmra.mrb[0].mxu0 %v10679
        %v10877 = vpop.f32.mrb[0].mxu0
        %v10878 = vadd.f32 0.0, %v10877
        %v10879 = vpop.f32.mrb[0].mxu0
        %v10880 = vpop.f32.mrb[0].mxu0
        %v10881 = vadd.f32 0.0, %v10880
        %v10882 = vpop.f32.mrb[0].mxu0
        %10883 = vmatprep.mubr.bf16.mxu0 0
        %10884 = vmatmul.mubr.bf16.gmra.mrb[0].mxu0 %v10680
        %v10885 = vpop.f32.mrb[0].mxu0
        %v10886 = vadd.f32 0.0, %v10885
        %v10887 = vpop.f32.mrb[0].mxu0
        %v10888 = vpop.f32.mrb[0].mxu0
        %v10889 = vadd.f32 0.0, %v10888
        %v10890 = vpop.f32.mrb[0].mxu0
        %10891 = vmatprep.mubr.bf16.mxu0 0
        %10892 = vmatmul.mubr.bf16.gmra.mrb[0].mxu0 %v10681
        %v10893 = vpop.f32.mrb[0].mxu0
        %v10894 = vadd.f32 0.0, %v10893
        %v10895 = vpop.f32.mrb[0].mxu0
        %v10896 = vpop.f32.mrb[0].mxu0
        %v10897 = vadd.f32 0.0, %v10896
        %v10898 = vpop.f32.mrb[0].mxu0
        %10899 = vmatprep.mubr.bf16.mxu0 0
        %10900 = vmatmul.mubr.bf16.gmra.mrb[0].mxu0 %v10682
        %v10901 = vpop.f32.mrb[0].mxu0
        %v10902 = vadd.f32 0.0, %v10901
        %v10903 = vpop.f32.mrb[0].mxu0
        %v10904 = vpop.f32.mrb[0].mxu0
        %v10905 = vadd.f32 0.0, %v10904
        %v10906 = vpop.f32.mrb[0].mxu0
        %10907 = vdwg.mxu0
        %v10908 = vadd.f32 %v10154, %v10782
        %v10909 = vadd.f32 %v10155, %v10785
        %v10910 = vadd.f32 %v10156, %v10790
        %v10911 = vadd.f32 %v10157, %v10793
        %v10912 = vadd.f32 %v10158, %v10798
        %v10913 = vadd.f32 %v10159, %v10801
        %v10914 = vadd.f32 %v10160, %v10806
        %v10915 = vadd.f32 %v10161, %v10809
        %v10916 = vadd.f32 %v10162, %v10814
        %v10917 = vadd.f32 %v10163, %v10817
        %v10918 = vadd.f32 %v10164, %v10822
        %v10919 = vadd.f32 %v10165, %v10825
        %v10920 = vadd.f32 %v10166, %v10830
        %v10921 = vadd.f32 %v10167, %v10833
        %v10922 = vadd.f32 %v10168, %v10838
        %v10923 = vadd.f32 %v10169, %v10841
        %v10924 = vadd.f32 %v10170, %v10846
        %v10925 = vadd.f32 %v10171, %v10849
        %v10926 = vadd.f32 %v10172, %v10854
        %v10927 = vadd.f32 %v10173, %v10857
        %v10928 = vadd.f32 %v10174, %v10862
        %v10929 = vadd.f32 %v10175, %v10865
        %v10930 = vadd.f32 %v10176, %v10870
        %v10931 = vadd.f32 %v10177, %v10873
        %v10932 = vadd.f32 %v10178, %v10878
        %v10933 = vadd.f32 %v10179, %v10881
        %v10934 = vadd.f32 %v10180, %v10886
        %v10935 = vadd.f32 %v10181, %v10889
        %v10936 = vadd.f32 %v10182, %v10894
        %v10937 = vadd.f32 %v10183, %v10897
        %v10938 = vadd.f32 %v10184, %v10902
        %v10939 = vadd.f32 %v10185, %v10905
        %v10940 = vld [vmem:[%s9799] sm:$0xe]
        %v10941 = vld [vmem:[%s9799 + $0xc] sm:$0xe]
        %v10942 = vld [vmem:[%s9799 + $0x18] sm:$0xe]
        %v10943 = vld [vmem:[%s9799 + $0x24] sm:$0xe]
        %v10944 = vld [vmem:[%s9799 + $0x30] sm:$0xe]
        %v10945 = vld [vmem:[%s9799 + $0x3c] sm:$0xe]
        %v10946 = vld [vmem:[%s9799 + $0x48] sm:$0xe]
        %v10947 = vld [vmem:[%s9799 + $0x54] sm:$0xe]
        %v10948 = vld [vmem:[%s9799 + $0x60] sm:$0xe]
        %v10949 = vld [vmem:[%s9799 + $0x6c] sm:$0xe]
        %v10950 = vld [vmem:[%s9799 + $0x78] sm:$0xe]
        %v10951 = vld [vmem:[%s9799 + $0x84] sm:$0xe]
        %v10952 = vld [vmem:[%s9799 + $0x90] sm:$0xe]
        %v10953 = vld [vmem:[%s9799 + $0x9c] sm:$0xe]
        %v10954 = vld [vmem:[%s9799 + $0xa8] sm:$0xe]
        %v10955 = vld [vmem:[%s9799 + $0xb4] sm:$0xe]
        %v11004 = vrot.slane %v10940, 5
        %v11005 = vrot.slane %v11004, 4
        %v11006 = vrot.slane %v10187, 5
        %v11007 = vsel %vm1544, %v11005, %v11006
        %v11008 = vrot.slane %v11006, 4
        %v11009 = vrot.slane %v10188, 5
        %v11010 = vsel %vm1544, %v11008, %v11009
        %v11011 = vrot.slane %v10941, 5
        %v11012 = vrot.slane %v11011, 4
        %v11013 = vrot.slane %v10190, 5
        %v11014 = vsel %vm1544, %v11012, %v11013
        %v11015 = vrot.slane %v11013, 4
        %v11016 = vrot.slane %v10191, 5
        %v11017 = vsel %vm1544, %v11015, %v11016
        %v11018 = vrot.slane %v10942, 5
        %v11019 = vrot.slane %v11018, 4
        %v11020 = vrot.slane %v10193, 5
        %v11021 = vsel %vm1544, %v11019, %v11020
        %v11022 = vrot.slane %v11020, 4
        %v11023 = vrot.slane %v10194, 5
        %v11024 = vsel %vm1544, %v11022, %v11023
        %v11025 = vrot.slane %v10943, 5
        %v11026 = vrot.slane %v11025, 4
        %v11027 = vrot.slane %v10196, 5
        %v11028 = vsel %vm1544, %v11026, %v11027
        %v11029 = vrot.slane %v11027, 4
        %v11030 = vrot.slane %v10197, 5
        %v11031 = vsel %vm1544, %v11029, %v11030
        %v11032 = vrot.slane %v10944, 5
        %v11033 = vrot.slane %v11032, 4
        %v11034 = vrot.slane %v10199, 5
        %v11035 = vsel %vm1544, %v11033, %v11034
        %v11036 = vrot.slane %v11034, 4
        %v11037 = vrot.slane %v10200, 5
        %v11038 = vsel %vm1544, %v11036, %v11037
        %v11039 = vrot.slane %v10945, 5
        %v11040 = vrot.slane %v11039, 4
        %v11041 = vrot.slane %v10202, 5
        %v11042 = vsel %vm1544, %v11040, %v11041
        %v11043 = vrot.slane %v11041, 4
        %v11044 = vrot.slane %v10203, 5
        %v11045 = vsel %vm1544, %v11043, %v11044
        %v11046 = vrot.slane %v10946, 5
        %v11047 = vrot.slane %v11046, 4
        %v11048 = vrot.slane %v10205, 5
        %v11049 = vsel %vm1544, %v11047, %v11048
        %v11050 = vrot.slane %v11048, 4
        %v11051 = vrot.slane %v10206, 5
        %v11052 = vsel %vm1544, %v11050, %v11051
        %v11053 = vrot.slane %v10947, 5
        %v11054 = vrot.slane %v11053, 4
        %v11055 = vrot.slane %v10208, 5
        %v11056 = vsel %vm1544, %v11054, %v11055
        %v11057 = vrot.slane %v11055, 4
        %v11058 = vrot.slane %v10209, 5
        %v11059 = vsel %vm1544, %v11057, %v11058
        %v11060 = vrot.slane %v10948, 5
        %v11061 = vrot.slane %v11060, 4
        %v11062 = vrot.slane %v10211, 5
        %v11063 = vsel %vm1544, %v11061, %v11062
        %v11064 = vrot.slane %v11062, 4
        %v11065 = vrot.slane %v10212, 5
        %v11066 = vsel %vm1544, %v11064, %v11065
        %v11067 = vrot.slane %v10949, 5
        %v11068 = vrot.slane %v11067, 4
        %v11069 = vrot.slane %v10214, 5
        %v11070 = vsel %vm1544, %v11068, %v11069
        %v11071 = vrot.slane %v11069, 4
        %v11072 = vrot.slane %v10215, 5
        %v11073 = vsel %vm1544, %v11071, %v11072
        %v11074 = vrot.slane %v10950, 5
        %v11075 = vrot.slane %v11074, 4
        %v11076 = vrot.slane %v10217, 5
        %v11077 = vsel %vm1544, %v11075, %v11076
        %v11078 = vrot.slane %v11076, 4
        %v11079 = vrot.slane %v10218, 5
        %v11080 = vsel %vm1544, %v11078, %v11079
        %v11081 = vrot.slane %v10951, 5
        %v11082 = vrot.slane %v11081, 4
        %v11083 = vrot.slane %v10220, 5
        %v11084 = vsel %vm1544, %v11082, %v11083
        %v11085 = vrot.slane %v11083, 4
        %v11086 = vrot.slane %v10221, 5
        %v11087 = vsel %vm1544, %v11085, %v11086
        %v11088 = vrot.slane %v10952, 5
        %v11089 = vrot.slane %v11088, 4
        %v11090 = vrot.slane %v10223, 5
        %v11091 = vsel %vm1544, %v11089, %v11090
        %v11092 = vrot.slane %v11090, 4
        %v11093 = vrot.slane %v10224, 5
        %v11094 = vsel %vm1544, %v11092, %v11093
        %v11095 = vrot.slane %v10953, 5
        %v11096 = vrot.slane %v11095, 4
        %v11097 = vrot.slane %v10226, 5
        %v11098 = vsel %vm1544, %v11096, %v11097
        %v11099 = vrot.slane %v11097, 4
        %v11100 = vrot.slane %v10227, 5
        %v11101 = vsel %vm1544, %v11099, %v11100
        %v11102 = vrot.slane %v10954, 5
        %v11103 = vrot.slane %v11102, 4
        %v11104 = vrot.slane %v10229, 5
        %v11105 = vsel %vm1544, %v11103, %v11104
        %v11106 = vrot.slane %v11104, 4
        %v11107 = vrot.slane %v10230, 5
        %v11108 = vsel %vm1544, %v11106, %v11107
        %v11109 = vrot.slane %v10955, 5
        %v11110 = vrot.slane %v11109, 4
        %v11111 = vrot.slane %v10232, 5
        %v11112 = vsel %vm1544, %v11110, %v11111
        %v11113 = vrot.slane %v11111, 4
        %v11114 = vrot.slane %v10233, 5
        %v11115 = vsel %vm1544, %v11113, %v11114
        %s11116 = scalar_lea.vmem %s3, 512
        %v11117 = vld [vmem:[%s11116] sm:$0xf]
        %v11118 = vld [vmem:[%s11116 + $0x4] sm:$0xf]
        %v11119 = vld [vmem:[%s11116 + $0x8] sm:$0xf]
        %v11120 = vld [vmem:[%s11116 + $0xc] sm:$0xf]
        %v11121 = vld [vmem:[%s11116 + $0x10] sm:$0xf]
        %v11122 = vld [vmem:[%s11116 + $0x14] sm:$0xf]
        %v11123 = vld [vmem:[%s11116 + $0x18] sm:$0xf]
        %v11124 = vld [vmem:[%s11116 + $0x1c] sm:$0xf]
        %v11125 = vld [vmem:[%s11116 + $0x20] sm:$0xf]
        %v11126 = vld [vmem:[%s11116 + $0x24] sm:$0xf]
        %v11127 = vld [vmem:[%s11116 + $0x28] sm:$0xf]
        %v11128 = vld [vmem:[%s11116 + $0x2c] sm:$0xf]
        %v11129 = vld [vmem:[%s11116 + $0x30] sm:$0xf]
        %v11130 = vld [vmem:[%s11116 + $0x34] sm:$0xf]
        %v11131 = vld [vmem:[%s11116 + $0x38] sm:$0xf]
        %v11132 = vld [vmem:[%s11116 + $0x3c] sm:$0xf]
        %v11133 = vunpack.c.l.b16 %v11007
        %v11134 = vunpack.c.l.b16 %v11010
        %v11135 = vunpack.c.l.b16 %v11014
        %v11136 = vunpack.c.l.b16 %v11017
        %v11137 = vunpack.c.l.b16 %v11021
        %v11138 = vunpack.c.l.b16 %v11024
        %v11139 = vunpack.c.l.b16 %v11028
        %v11140 = vunpack.c.l.b16 %v11031
        %v11141 = vunpack.c.l.b16 %v11035
        %v11142 = vunpack.c.l.b16 %v11038
        %v11143 = vunpack.c.l.b16 %v11042
        %v11144 = vunpack.c.l.b16 %v11045
        %v11145 = vunpack.c.l.b16 %v11049
        %v11146 = vunpack.c.l.b16 %v11052
        %v11147 = vunpack.c.l.b16 %v11056
        %v11148 = vunpack.c.l.b16 %v11059
        %v11149 = vunpack.c.l.b16 %v11063
        %v11150 = vunpack.c.l.b16 %v11066
        %v11151 = vunpack.c.l.b16 %v11070
        %v11152 = vunpack.c.l.b16 %v11073
        %v11153 = vunpack.c.l.b16 %v11077
        %v11154 = vunpack.c.l.b16 %v11080
        %v11155 = vunpack.c.l.b16 %v11084
        %v11156 = vunpack.c.l.b16 %v11087
        %v11157 = vunpack.c.l.b16 %v11091
        %v11158 = vunpack.c.l.b16 %v11094
        %v11159 = vunpack.c.l.b16 %v11098
        %v11160 = vunpack.c.l.b16 %v11101
        %v11161 = vunpack.c.l.b16 %v11105
        %v11162 = vunpack.c.l.b16 %v11108
        %v11163 = vunpack.c.l.b16 %v11112
        %v11164 = vunpack.c.l.b16 %v11115
        %v11165 = vpack.c.b16 %v11134, %v11133
        %v11166 = vpack.c.b16 %v11136, %v11135
        %v11167 = vpack.c.b16 %v11138, %v11137
        %v11168 = vpack.c.b16 %v11140, %v11139
        %v11169 = vpack.c.b16 %v11142, %v11141
        %v11170 = vpack.c.b16 %v11144, %v11143
        %v11171 = vpack.c.b16 %v11146, %v11145
        %v11172 = vpack.c.b16 %v11148, %v11147
        %v11173 = vpack.c.b16 %v11150, %v11149
        %v11174 = vpack.c.b16 %v11152, %v11151
        %v11175 = vpack.c.b16 %v11154, %v11153
        %v11176 = vpack.c.b16 %v11156, %v11155
        %v11177 = vpack.c.b16 %v11158, %v11157
        %v11178 = vpack.c.b16 %v11160, %v11159
        %v11179 = vpack.c.b16 %v11162, %v11161
        %v11180 = vpack.c.b16 %v11164, %v11163
        %v11213 = vunpack.c.l.b16 %v11117
        %v11214 = vunpack.c.l.b16 %v11118
        %v11215 = vunpack.c.l.b16 %v11119
        %v11216 = vunpack.c.l.b16 %v11120
        %v11217 = vunpack.c.l.b16 %v11121
        %v11218 = vunpack.c.l.b16 %v11122
        %v11219 = vunpack.c.l.b16 %v11123
        %v11220 = vunpack.c.l.b16 %v11124
        %v11221 = vunpack.c.l.b16 %v11125
        %v11222 = vunpack.c.l.b16 %v11126
        %v11223 = vunpack.c.l.b16 %v11127
        %v11224 = vunpack.c.l.b16 %v11128
        %v11225 = vunpack.c.l.b16 %v11129
        %v11226 = vunpack.c.l.b16 %v11130
        %v11227 = vunpack.c.l.b16 %v11131
        %v11228 = vunpack.c.l.b16 %v11132
        %v11229 = vpack.c.b16 %v11214, %v11213
        %v11230 = vpack.c.b16 %v11216, %v11215
        %v11231 = vpack.c.b16 %v11218, %v11217
        %v11232 = vpack.c.b16 %v11220, %v11219
        %v11233 = vpack.c.b16 %v11222, %v11221
        %v11234 = vpack.c.b16 %v11224, %v11223
        %v11235 = vpack.c.b16 %v11226, %v11225
        %v11236 = vpack.c.b16 %v11228, %v11227
        %11245 = vmatprep.subr.bf16.mxu0 0
        %11246 = vmatpush1.bf16.msra.mxu0 %v11229
        %11247 = vmatprep.subr.bf16.mxu0 0
        %11248 = vmatpush1.bf16.msra.mxu0 %v11230
        %11249 = vmatprep.subr.bf16.mxu0 0
        %11250 = vmatpush1.bf16.msra.mxu0 %v11231
        %11251 = vmatprep.subr.bf16.mxu0 0
        %11252 = vmatpush1.bf16.msra.mxu0 %v11232
        %11253 = vmatprep.subr.bf16.mxu0 0
        %11254 = vmatpush1.bf16.msra.mxu0 %v11233
        %11255 = vmatprep.subr.bf16.mxu0 0
        %11256 = vmatpush1.bf16.msra.mxu0 %v11234
        %11257 = vmatprep.subr.bf16.mxu0 0
        %11258 = vmatpush1.bf16.msra.mxu0 %v11235
        %11259 = vmatprep.subr.bf16.mxu0 0
        %11260 = vmatpush1.bf16.msra.mxu0 %v11236
        %11261 = vmatprep.subr.bf16.mxu0 0
        %11262 = vmatpush1.bf16.msra.mxu0 0
        %11263 = vmatprep.subr.bf16.mxu0 0
        %11264 = vmatpush1.bf16.msra.mxu0 0
        %11265 = vmatprep.subr.bf16.mxu0 0
        %11266 = vmatpush1.bf16.msra.mxu0 0
        %11267 = vmatprep.subr.bf16.mxu0 0
        %11268 = vmatpush1.bf16.msra.mxu0 0
        %11269 = vmatprep.subr.bf16.mxu0 0
        %11270 = vmatpush1.bf16.msra.mxu0 0
        %11271 = vmatprep.subr.bf16.mxu0 0
        %11272 = vmatpush1.bf16.msra.mxu0 0
        %11273 = vmatprep.subr.bf16.mxu0 0
        %11274 = vmatpush1.bf16.msra.mxu0 0
        %11275 = vmatprep.subr.bf16.mxu0 0
        %11276 = vmatpush1.bf16.msra.mxu0 0
        %11277 = vmatprep.mubr.bf16.mxu0 0
        %11278 = vmatmul.mubr.bf16.gmra.mrb[0].mxu0 %v11165
        %v11279 = vpop.f32.mrb[0].mxu0
        %v11280 = vadd.f32 0.0, %v11279
        %v11281 = vpop.f32.mrb[0].mxu0
        %v11282 = vpop.f32.mrb[0].mxu0
        %v11283 = vadd.f32 0.0, %v11282
        %v11284 = vpop.f32.mrb[0].mxu0
        %11285 = vmatprep.mubr.bf16.mxu0 0
        %11286 = vmatmul.mubr.bf16.gmra.mrb[0].mxu0 %v11166
        %v11287 = vpop.f32.mrb[0].mxu0
        %v11288 = vadd.f32 0.0, %v11287
        %v11289 = vpop.f32.mrb[0].mxu0
        %v11290 = vpop.f32.mrb[0].mxu0
        %v11291 = vadd.f32 0.0, %v11290
        %v11292 = vpop.f32.mrb[0].mxu0
        %11293 = vmatprep.mubr.bf16.mxu0 0
        %11294 = vmatmul.mubr.bf16.gmra.mrb[0].mxu0 %v11167
        %v11295 = vpop.f32.mrb[0].mxu0
        %v11296 = vadd.f32 0.0, %v11295
        %v11297 = vpop.f32.mrb[0].mxu0
        %v11298 = vpop.f32.mrb[0].mxu0
        %v11299 = vadd.f32 0.0, %v11298
        %v11300 = vpop.f32.mrb[0].mxu0
        %11301 = vmatprep.mubr.bf16.mxu0 0
        %11302 = vmatmul.mubr.bf16.gmra.mrb[0].mxu0 %v11168
        %v11303 = vpop.f32.mrb[0].mxu0
        %v11304 = vadd.f32 0.0, %v11303
        %v11305 = vpop.f32.mrb[0].mxu0
        %v11306 = vpop.f32.mrb[0].mxu0
        %v11307 = vadd.f32 0.0, %v11306
        %v11308 = vpop.f32.mrb[0].mxu0
        %11309 = vmatprep.mubr.bf16.mxu0 0
        %11310 = vmatmul.mubr.bf16.gmra.mrb[0].mxu0 %v11169
        %v11311 = vpop.f32.mrb[0].mxu0
        %v11312 = vadd.f32 0.0, %v11311
        %v11313 = vpop.f32.mrb[0].mxu0
        %v11314 = vpop.f32.mrb[0].mxu0
        %v11315 = vadd.f32 0.0, %v11314
        %v11316 = vpop.f32.mrb[0].mxu0
        %11317 = vmatprep.mubr.bf16.mxu0 0
        %11318 = vmatmul.mubr.bf16.gmra.mrb[0].mxu0 %v11170
        %v11319 = vpop.f32.mrb[0].mxu0
        %v11320 = vadd.f32 0.0, %v11319
        %v11321 = vpop.f32.mrb[0].mxu0
        %v11322 = vpop.f32.mrb[0].mxu0
        %v11323 = vadd.f32 0.0, %v11322
        %v11324 = vpop.f32.mrb[0].mxu0
        %11325 = vmatprep.mubr.bf16.mxu0 0
        %11326 = vmatmul.mubr.bf16.gmra.mrb[0].mxu0 %v11171
        %v11327 = vpop.f32.mrb[0].mxu0
        %v11328 = vadd.f32 0.0, %v11327
        %v11329 = vpop.f32.mrb[0].mxu0
        %v11330 = vpop.f32.mrb[0].mxu0
        %v11331 = vadd.f32 0.0, %v11330
        %v11332 = vpop.f32.mrb[0].mxu0
        %11333 = vmatprep.mubr.bf16.mxu0 0
        %11334 = vmatmul.mubr.bf16.gmra.mrb[0].mxu0 %v11172
        %v11335 = vpop.f32.mrb[0].mxu0
        %v11336 = vadd.f32 0.0, %v11335
        %v11337 = vpop.f32.mrb[0].mxu0
        %v11338 = vpop.f32.mrb[0].mxu0
        %v11339 = vadd.f32 0.0, %v11338
        %v11340 = vpop.f32.mrb[0].mxu0
        %11341 = vmatprep.mubr.bf16.mxu0 0
        %11342 = vmatmul.mubr.bf16.gmra.mrb[0].mxu0 %v11173
        %v11343 = vpop.f32.mrb[0].mxu0
        %v11344 = vadd.f32 0.0, %v11343
        %v11345 = vpop.f32.mrb[0].mxu0
        %v11346 = vpop.f32.mrb[0].mxu0
        %v11347 = vadd.f32 0.0, %v11346
        %v11348 = vpop.f32.mrb[0].mxu0
        %11349 = vmatprep.mubr.bf16.mxu0 0
        %11350 = vmatmul.mubr.bf16.gmra.mrb[0].mxu0 %v11174
        %v11351 = vpop.f32.mrb[0].mxu0
        %v11352 = vadd.f32 0.0, %v11351
        %v11353 = vpop.f32.mrb[0].mxu0
        %v11354 = vpop.f32.mrb[0].mxu0
        %v11355 = vadd.f32 0.0, %v11354
        %v11356 = vpop.f32.mrb[0].mxu0
        %11357 = vmatprep.mubr.bf16.mxu0 0
        %11358 = vmatmul.mubr.bf16.gmra.mrb[0].mxu0 %v11175
        %v11359 = vpop.f32.mrb[0].mxu0
        %v11360 = vadd.f32 0.0, %v11359
        %v11361 = vpop.f32.mrb[0].mxu0
        %v11362 = vpop.f32.mrb[0].mxu0
        %v11363 = vadd.f32 0.0, %v11362
        %v11364 = vpop.f32.mrb[0].mxu0
        %11365 = vmatprep.mubr.bf16.mxu0 0
        %11366 = vmatmul.mubr.bf16.gmra.mrb[0].mxu0 %v11176
        %v11367 = vpop.f32.mrb[0].mxu0
        %v11368 = vadd.f32 0.0, %v11367
        %v11369 = vpop.f32.mrb[0].mxu0
        %v11370 = vpop.f32.mrb[0].mxu0
        %v11371 = vadd.f32 0.0, %v11370
        %v11372 = vpop.f32.mrb[0].mxu0
        %11373 = vmatprep.mubr.bf16.mxu0 0
        %11374 = vmatmul.mubr.bf16.gmra.mrb[0].mxu0 %v11177
        %v11375 = vpop.f32.mrb[0].mxu0
        %v11376 = vadd.f32 0.0, %v11375
        %v11377 = vpop.f32.mrb[0].mxu0
        %v11378 = vpop.f32.mrb[0].mxu0
        %v11379 = vadd.f32 0.0, %v11378
        %v11380 = vpop.f32.mrb[0].mxu0
        %11381 = vmatprep.mubr.bf16.mxu0 0
        %11382 = vmatmul.mubr.bf16.gmra.mrb[0].mxu0 %v11178
        %v11383 = vpop.f32.mrb[0].mxu0
        %v11384 = vadd.f32 0.0, %v11383
        %v11385 = vpop.f32.mrb[0].mxu0
        %v11386 = vpop.f32.mrb[0].mxu0
        %v11387 = vadd.f32 0.0, %v11386
        %v11388 = vpop.f32.mrb[0].mxu0
        %11389 = vmatprep.mubr.bf16.mxu0 0
        %11390 = vmatmul.mubr.bf16.gmra.mrb[0].mxu0 %v11179
        %v11391 = vpop.f32.mrb[0].mxu0
        %v11392 = vadd.f32 0.0, %v11391
        %v11393 = vpop.f32.mrb[0].mxu0
        %v11394 = vpop.f32.mrb[0].mxu0
        %v11395 = vadd.f32 0.0, %v11394
        %v11396 = vpop.f32.mrb[0].mxu0
        %11397 = vmatprep.mubr.bf16.mxu0 0
        %11398 = vmatmul.mubr.bf16.gmra.mrb[0].mxu0 %v11180
        %v11399 = vpop.f32.mrb[0].mxu0
        %v11400 = vadd.f32 0.0, %v11399
        %v11401 = vpop.f32.mrb[0].mxu0
        %v11402 = vpop.f32.mrb[0].mxu0
        %v11403 = vadd.f32 0.0, %v11402
        %v11404 = vpop.f32.mrb[0].mxu0
        %11405 = vdwg.mxu0
        %v11406 = vadd.f32 %v10908, %v11280
        %v11407 = vadd.f32 %v10909, %v11283
        %v11408 = vadd.f32 %v10910, %v11288
        %v11409 = vadd.f32 %v10911, %v11291
        %v11410 = vadd.f32 %v10912, %v11296
        %v11411 = vadd.f32 %v10913, %v11299
        %v11412 = vadd.f32 %v10914, %v11304
        %v11413 = vadd.f32 %v10915, %v11307
        %v11414 = vadd.f32 %v10916, %v11312
        %v11415 = vadd.f32 %v10917, %v11315
        %v11416 = vadd.f32 %v10918, %v11320
        %v11417 = vadd.f32 %v10919, %v11323
        %v11418 = vadd.f32 %v10920, %v11328
        %v11419 = vadd.f32 %v10921, %v11331
        %v11420 = vadd.f32 %v10922, %v11336
        %v11421 = vadd.f32 %v10923, %v11339
        %v11422 = vadd.f32 %v10924, %v11344
        %v11423 = vadd.f32 %v10925, %v11347
        %v11424 = vadd.f32 %v10926, %v11352
        %v11425 = vadd.f32 %v10927, %v11355
        %v11426 = vadd.f32 %v10928, %v11360
        %v11427 = vadd.f32 %v10929, %v11363
        %v11428 = vadd.f32 %v10930, %v11368
        %v11429 = vadd.f32 %v10931, %v11371
        %v11430 = vadd.f32 %v10932, %v11376
        %v11431 = vadd.f32 %v10933, %v11379
        %v11432 = vadd.f32 %v10934, %v11384
        %v11433 = vadd.f32 %v10935, %v11387
        %v11434 = vadd.f32 %v10936, %v11392
        %v11435 = vadd.f32 %v10937, %v11395
        %v11436 = vadd.f32 %v10938, %v11400
        %v11437 = vadd.f32 %v10939, %v11403
        %v11438 = vld [vmem:[%s4] sm:$0x1]
        %v11440 = vlaneseq
        %v11441 = vshrl.u32 %v11440, 7
        %v11442 = vsub.s32 0, %v11441
        %v11443 = vrot.slane %v11438, %v11442
        %v11445 = vadd.f32 %v11406, %v11443
        %v11446 = vadd.f32 %v11407, %v11443
        %v11447 = vadd.f32 %v11408, %v11443
        %v11448 = vadd.f32 %v11409, %v11443
        %v11449 = vadd.f32 %v11410, %v11443
        %v11450 = vadd.f32 %v11411, %v11443
        %v11451 = vadd.f32 %v11412, %v11443
        %v11452 = vadd.f32 %v11413, %v11443
        %v11453 = vadd.f32 %v11414, %v11443
        %v11454 = vadd.f32 %v11415, %v11443
        %v11455 = vadd.f32 %v11416, %v11443
        %v11456 = vadd.f32 %v11417, %v11443
        %v11457 = vadd.f32 %v11418, %v11443
        %v11458 = vadd.f32 %v11419, %v11443
        %v11459 = vadd.f32 %v11420, %v11443
        %v11460 = vadd.f32 %v11421, %v11443
        %v11461 = vadd.f32 %v11422, %v11443
        %v11462 = vadd.f32 %v11423, %v11443
        %v11463 = vadd.f32 %v11424, %v11443
        %v11464 = vadd.f32 %v11425, %v11443
        %v11465 = vadd.f32 %v11426, %v11443
        %v11466 = vadd.f32 %v11427, %v11443
        %v11467 = vadd.f32 %v11428, %v11443
        %v11468 = vadd.f32 %v11429, %v11443
        %v11469 = vadd.f32 %v11430, %v11443
        %v11470 = vadd.f32 %v11431, %v11443
        %v11471 = vadd.f32 %v11432, %v11443
        %v11472 = vadd.f32 %v11433, %v11443
        %v11473 = vadd.f32 %v11434, %v11443
        %v11474 = vadd.f32 %v11435, %v11443
        %v11475 = vadd.f32 %v11436, %v11443
        %v11476 = vadd.f32 %v11437, %v11443
        %v11477 = vmax.f32 %v11445, 0.0
        %v11478 = vmax.f32 %v11446, 0.0
        %v11479 = vmax.f32 %v11447, 0.0
        %v11480 = vmax.f32 %v11448, 0.0
        %v11481 = vmax.f32 %v11449, 0.0
        %v11482 = vmax.f32 %v11450, 0.0
        %v11483 = vmax.f32 %v11451, 0.0
        %v11484 = vmax.f32 %v11452, 0.0
        %v11485 = vmax.f32 %v11453, 0.0
        %v11486 = vmax.f32 %v11454, 0.0
        %v11487 = vmax.f32 %v11455, 0.0
        %v11488 = vmax.f32 %v11456, 0.0
        %v11489 = vmax.f32 %v11457, 0.0
        %v11490 = vmax.f32 %v11458, 0.0
        %v11491 = vmax.f32 %v11459, 0.0
        %v11492 = vmax.f32 %v11460, 0.0
        %v11493 = vmax.f32 %v11461, 0.0
        %v11494 = vmax.f32 %v11462, 0.0
        %v11495 = vmax.f32 %v11463, 0.0
        %v11496 = vmax.f32 %v11464, 0.0
        %v11497 = vmax.f32 %v11465, 0.0
        %v11498 = vmax.f32 %v11466, 0.0
        %v11499 = vmax.f32 %v11467, 0.0
        %v11500 = vmax.f32 %v11468, 0.0
        %v11501 = vmax.f32 %v11469, 0.0
        %v11502 = vmax.f32 %v11470, 0.0
        %v11503 = vmax.f32 %v11471, 0.0
        %v11504 = vmax.f32 %v11472, 0.0
        %v11505 = vmax.f32 %v11473, 0.0
        %v11506 = vmax.f32 %v11474, 0.0
        %v11507 = vmax.f32 %v11475, 0.0
        %v11508 = vmax.f32 %v11476, 0.0
        %v11509 = vunpack.c.l.bf16 %v5719
        %v11510 = vunpack.c.h.bf16 %v5719
        %v11511 = vunpack.c.l.bf16 %v5720
        %v11512 = vunpack.c.h.bf16 %v5720
        %v11513 = vunpack.c.l.bf16 %v5721
        %v11514 = vunpack.c.h.bf16 %v5721
        %v11515 = vunpack.c.l.bf16 %v5722
        %v11516 = vunpack.c.h.bf16 %v5722
        %v11517 = vunpack.c.l.bf16 %v5723
        %v11518 = vunpack.c.h.bf16 %v5723
        %v11519 = vunpack.c.l.bf16 %v5724
        %v11520 = vunpack.c.h.bf16 %v5724
        %v11521 = vunpack.c.l.bf16 %v5725
        %v11522 = vunpack.c.h.bf16 %v5725
        %v11523 = vunpack.c.l.bf16 %v5726
        %v11524 = vunpack.c.h.bf16 %v5726
        %v11525 = vunpack.c.l.bf16 %v5727
        %v11526 = vunpack.c.h.bf16 %v5727
        %v11527 = vunpack.c.l.bf16 %v5728
        %v11528 = vunpack.c.h.bf16 %v5728
        %v11529 = vunpack.c.l.bf16 %v5729
        %v11530 = vunpack.c.h.bf16 %v5729
        %v11531 = vunpack.c.l.bf16 %v5730
        %v11532 = vunpack.c.h.bf16 %v5730
        %v11533 = vunpack.c.l.bf16 %v5731
        %v11534 = vunpack.c.h.bf16 %v5731
        %v11535 = vunpack.c.l.bf16 %v5732
        %v11536 = vunpack.c.h.bf16 %v5732
        %v11537 = vunpack.c.l.bf16 %v5733
        %v11538 = vunpack.c.h.bf16 %v5733
        %v11539 = vunpack.c.l.bf16 %v5734
        %v11540 = vunpack.c.h.bf16 %v5734
        %v11541 = vadd.f32 %v11477, %v11509
        %v11542 = vadd.f32 %v11478, %v11510
        %v11543 = vadd.f32 %v11479, %v11511
        %v11544 = vadd.f32 %v11480, %v11512
        %v11545 = vadd.f32 %v11481, %v11513
        %v11546 = vadd.f32 %v11482, %v11514
        %v11547 = vadd.f32 %v11483, %v11515
        %v11548 = vadd.f32 %v11484, %v11516
        %v11549 = vadd.f32 %v11485, %v11517
        %v11550 = vadd.f32 %v11486, %v11518
        %v11551 = vadd.f32 %v11487, %v11519
        %v11552 = vadd.f32 %v11488, %v11520
        %v11553 = vadd.f32 %v11489, %v11521
        %v11554 = vadd.f32 %v11490, %v11522
        %v11555 = vadd.f32 %v11491, %v11523
        %v11556 = vadd.f32 %v11492, %v11524
        %v11557 = vadd.f32 %v11493, %v11525
        %v11558 = vadd.f32 %v11494, %v11526
        %v11559 = vadd.f32 %v11495, %v11527
        %v11560 = vadd.f32 %v11496, %v11528
        %v11561 = vadd.f32 %v11497, %v11529
        %v11562 = vadd.f32 %v11498, %v11530
        %v11563 = vadd.f32 %v11499, %v11531
        %v11564 = vadd.f32 %v11500, %v11532
        %v11565 = vadd.f32 %v11501, %v11533
        %v11566 = vadd.f32 %v11502, %v11534
        %v11567 = vadd.f32 %v11503, %v11535
        %v11568 = vadd.f32 %v11504, %v11536
        %v11569 = vadd.f32 %v11505, %v11537
        %v11570 = vadd.f32 %v11506, %v11538
        %v11571 = vadd.f32 %v11507, %v11539
        %v11572 = vadd.f32 %v11508, %v11540
        %11573 = vst [vmem:[%s217] sm:$0xff] %v11541
        %11574 = vst [vmem:[%s217 + $0x8] sm:$0xff] %v11542
        %11575 = vst [vmem:[%s217 + $0x10] sm:$0xff] %v11543
        %11576 = vst [vmem:[%s217 + $0x18] sm:$0xff] %v11544
        %11577 = vst [vmem:[%s217 + $0x20] sm:$0xff] %v11545
        %11578 = vst [vmem:[%s217 + $0x28] sm:$0xff] %v11546
        %11579 = vst [vmem:[%s217 + $0x30] sm:$0xff] %v11547
        %11580 = vst [vmem:[%s217 + $0x38] sm:$0xff] %v11548
        %11581 = vst [vmem:[%s217 + $0x40] sm:$0xff] %v11549
        %11582 = vst [vmem:[%s217 + $0x48] sm:$0xff] %v11550
        %11583 = vst [vmem:[%s217 + $0x50] sm:$0xff] %v11551
        %11584 = vst [vmem:[%s217 + $0x58] sm:$0xff] %v11552
        %11585 = vst [vmem:[%s217 + $0x60] sm:$0xff] %v11553
        %11586 = vst [vmem:[%s217 + $0x68] sm:$0xff] %v11554
        %11587 = vst [vmem:[%s217 + $0x70] sm:$0xff] %v11555
        %11588 = vst [vmem:[%s217 + $0x78] sm:$0xff] %v11556
        %11589 = vst [vmem:[%s217 + $0x80] sm:$0xff] %v11557
        %11590 = vst [vmem:[%s217 + $0x88] sm:$0xff] %v11558
        %11591 = vst [vmem:[%s217 + $0x90] sm:$0xff] %v11559
        %11592 = vst [vmem:[%s217 + $0x98] sm:$0xff] %v11560
        %11593 = vst [vmem:[%s217 + $0xa0] sm:$0xff] %v11561
        %11594 = vst [vmem:[%s217 + $0xa8] sm:$0xff] %v11562
        %11595 = vst [vmem:[%s217 + $0xb0] sm:$0xff] %v11563
        %11596 = vst [vmem:[%s217 + $0xb8] sm:$0xff] %v11564
        %11597 = vst [vmem:[%s217 + $0xc0] sm:$0xff] %v11565
        %11598 = vst [vmem:[%s217 + $0xc8] sm:$0xff] %v11566
        %11599 = vst [vmem:[%s217 + $0xd0] sm:$0xff] %v11567
        %11600 = vst [vmem:[%s217 + $0xd8] sm:$0xff] %v11568
        %11601 = vst [vmem:[%s217 + $0xe0] sm:$0xff] %v11569
        %11602 = vst [vmem:[%s217 + $0xe8] sm:$0xff] %v11570
        %11603 = vst [vmem:[%s217 + $0xf0] sm:$0xff] %v11571
        %11604 = vst [vmem:[%s217 + $0xf8] sm:$0xff] %v11572
        %s11605 = sand.u32 %s137, 1
        %s11606 = scalar_lea.sflag [#allocation6], %s11605
        %s11607 = sand.u32 %s137, 1
        %s11608 = smul.addr %s11607, 256
        %s11609 = scalar_lea.vmem [#allocation5], %s11608
        // Predicated region
        $region41: #{fast_attention_forward.1} parent=39 // pred_check
          %p11610 = pneg %p147
        $region42: #{fast_attention_forward.1} parent=39 // pred_check_branch
          %11612 = sbr.rel (%p11610) target = $region44
        $region43: #{fast_attention_forward.1} parent=39 // pred_region
          %s11614 = ssub.s32 4096, 4096
          %11615 = vsyncadd %s11606, %s11614
          %s11616 = smul.addr %s19, 32
          %s11617 = smul.addr %s11616, 128
          %s11618 = scalar_lea.hbm %s5, %s11617
          %s11619 = sshll.u32 %s11609, 4
          %s11620 = int_to_ptr.vmem [resolvable:$true] %s11619
          %11625 = dma.vmem_to_hbm [thread:$0]  %s11620, 4096, %s11618, %s11606, 128, 128, 8
        $region44: #{fast_attention_forward.1} parent=39 // pred_fallthru
          _
      $region40: #{fast_attention_forward.1} parent=5 // pred_fallthru
        _
      %p11626 = scmp.le.s32.totalorder 2, %s14
      // Predicated region
      $region45: #{fast_attention_forward.1} parent=5 // pred_check
        %p11627 = pneg %p11626
      $region46: #{fast_attention_forward.1} parent=5 // pred_check_branch
        %11629 = sbr.rel (%p11627) target = $region48
      $region47: #{fast_attention_forward.1} parent=5 // pred_region
        %s11630 = ssub.s32 %s14, 2
        // Predicated region
        $region49: #{fast_attention_forward.1} parent=47 // pred_check
          %p11631 = pneg %p153
        $region50: #{fast_attention_forward.1} parent=47 // pred_check_branch
          %11633 = sbr.rel (%p11631) target = $region52
        $region51: #{fast_attention_forward.1} parent=47 // pred_region
          %s11634 = sand.u32 %s138, 1
          %s11635 = scalar_lea.sflag [#allocation6], %s11634
          %s11636 = sand.u32 %s138, 1
          %s11637 = smul.addr %s11636, 256
          %s11638 = scalar_lea.vmem [#allocation5], %s11637
          %11639 = dma.done %s11635, 4096
        $region52: #{fast_attention_forward.1} parent=47 // pred_fallthru
          _
      $region48: #{fast_attention_forward.1} parent=5 // pred_fallthru
        _
    $region6: #{fast_attention_forward.1} parent=1 // loop_footer
      %s18 = sadd.s32 1, %s14
    $region7: #{fast_attention_forward.1} parent=1 // loop_footer_branch
      %13 = sbr.rel target = $region3
    $region8: #{fast_attention_forward.1} parent=1 // loop_exit
      _
    %11640 = vsyncpa [#allocation6], 1
    %s11641 = scalar_lea.sflag [#allocation6], 1
    %11642 = vsyncpa %s11641, 1

</llo_original>
